<compile_context>
chip_gen: v7x
topology: tpu7x:2x2x1
jax: 0.10.0
libtpu: 0.0.40
codegen_flags: <defaults>
</compile_context>

<pallas_src>
import functools

import jax
import jax.numpy as jnp
import numpy as np
from jax.experimental import pallas as pl
from jax.experimental.pallas import tpu as pltpu

EDGE_DIM = 6
HIDDEN = 128
OUT_DIM = 64
N_PATTERNS = 5
QUARTER = HIDDEN // 4           # 32
COMBINED_DIM = HIDDEN + 2       # 130 (4 * 32 + fee + block_height)
BN_EPS = 1e-5


# --------------------------------------------------------------------------- #
# Pallas kernel: full EdgePatternEncoder forward for a tile of `tm` edges.
# --------------------------------------------------------------------------- #
def edge_pattern_kernel(
    x_ref,
    # pattern detectors
    pw1_ref, pb1_ref,          # (6,640) bf16, (1,640) f32      fused layer-1
    pw2_ref, pb2_ref,          # (5,128,64) bf16, (5,64) f32    per-head layer-2
    pw3_ref, pb3_ref,          # (5,64) f32, (1,8) f32          per-head layer-3 (VPU)
    # pattern combiner
    cw1_ref,                   # (5,128) f32   rank-1 VPU updates
    cw2_ref,                   # (128,64) bf16 MXU
    # base encoder, layer-0 already split & folded
    emb_ref,                   # (12,128) bf16 = [tx_tab@f0w_tx ; dir_tab@f0w_dir]
    av_ref,                    # (4,32) f32    = [aw1; ab1; tw1; tb1]
    wamt_ref, wtime_ref,       # (32,128) bf16 = aw2@f0w_amt, tw2@f0w_time
    vec128_ref,                # (5,128) f32   = [cb1; w_fee; w_bh; b0_fold; f1b_fold]
    f1w_ref, f2w_ref,          # (128,128), (128,64) bf16, BN folded in
    vec64_ref,                 # (5,64) f32    = [cb2; f2b_fold; atb1; atw2_row; atb2*1]
    atw1_ref,                  # (64,64) bf16
    out_ref,
):
    f32, bf16 = jnp.float32, jnp.bfloat16
    x = x_ref[...].astype(f32)                 # (tm, 6)
    tm = x.shape[0]

    def mmw(a_bf16, w_bf16):                   # MXU matmul, bf16 in / f32 acc
        return jnp.dot(a_bf16, w_bf16, preferred_element_type=f32)

    def relu_bf16(v):
        # bias-add / ReLU math stays f32 (v5e VPU has no bf16 ALU); carry at bf16.
        return jnp.maximum(v, 0.0).astype(bf16)

    # --- hoist small VMEM slabs into named locals (each read exactly once) -----
    vec128 = vec128_ref[...]
    cb1 = vec128[0:1, :]
    w_fee = vec128[1:2, :]
    w_bh = vec128[2:3, :]
    b0 = vec128[3:4, :]
    f1b = vec128[4:5, :]

    vec64 = vec64_ref[...]
    cb2 = vec64[0:1, :]
    f2b = vec64[1:2, :]
    atb1 = vec64[2:3, :]
    atw2_row = vec64[3:4, :]
    atb2 = vec64[4:5, 0:1]

    pb2 = pb2_ref[...]                          # (5,64) f32
    pw3 = pw3_ref[...]                          # (5,64) f32
    pb3 = pb3_ref[...]                          # (1,8)  f32
    cw1 = cw1_ref[...]                          # (5,128) f32

    # ---------------- pattern detectors -----------------------------------------
    # layer-1 fused across all 5 heads: (tm,6)@(6,640)
    h1 = relu_bf16(mmw(x.astype(bf16), pw1_ref[...]) + pb1_ref[...])   # (tm,640) bf16

    # layers 2+3 + combiner layer-1 done per head (static unroll, 128-aligned slices)
    hc_acc = jnp.zeros((tm, HIDDEN), f32)
    for p in range(N_PATTERNS):
        h1_p = h1[:, p * HIDDEN:(p + 1) * HIDDEN]                       # (tm,128) bf16
        h2_p = jnp.maximum(mmw(h1_p, pw2_ref[p]) + pb2[p:p + 1, :], 0.0)  # (tm,64) f32
        # layer-3 (64 -> 1) as VPU multiply + lane reduction (no N=1 MXU pass)
        logit_p = (jnp.sum(h2_p * pw3[p:p + 1, :], axis=-1, keepdims=True)
                   + pb3[0:1, p:p + 1])                                 # (tm,1)
        score_p = jax.nn.sigmoid(logit_p)
        # combiner layer-1 (K=5) as a rank-1 VPU update
        hc_acc = hc_acc + score_p * cw1[p:p + 1, :]

    hc = relu_bf16(hc_acc + cb1)                                        # (tm,128) bf16
    pattern_emb = mmw(hc, cw2_ref[...]) + cb2                           # (tm,64) f32

    # ---------------- base EdgeEncoder -------------------------------------------
    amount = x[:, 0:1]
    timestamp = x[:, 1:2]
    direction = jnp.round(x[:, 2:3]).astype(jnp.int32)
    tx_type = jnp.round(x[:, 3:4]).astype(jnp.int32)
    fee = x[:, 4:5]
    block_height = x[:, 5:6]

    # joint one-hot over 12 classes (tx_type in [0,10), direction+10 in [10,12)),
    # built directly in bf16.
    cls = jax.lax.broadcasted_iota(jnp.int32, (tm, 12), 1)
    onehot = jnp.logical_or(cls == tx_type, cls == direction + 10).astype(bf16)
    emb_contrib = mmw(onehot, emb_ref[...])                             # (tm,128)

    # amount / time first layers are rank-1 -> VPU broadcast, no MXU pass
    av = av_ref[...]
    aw1, ab1, tw1, tb1 = av[0:1, :], av[1:2, :], av[2:3, :], av[3:4, :]
    a = relu_bf16(amount * aw1 + ab1)                                   # (tm,32) bf16
    t = relu_bf16(timestamp * tw1 + tb1)                                # (tm,32) bf16
    amt_contrib = mmw(a, wamt_ref[...])                                 # (tm,128)
    time_contrib = mmw(t, wtime_ref[...])                               # (tm,128)

    # feature layer 0 (Linear over the 130-dim concat, split by input group; BN0
    # folded into f1w/f1b so layer 0 ends at the ReLU); fee/block_height rank-1 VPU.
    l0 = (emb_contrib + amt_contrib + time_contrib
          + fee * w_fee + block_height * w_bh + b0)
    h0 = relu_bf16(l0)                                                  # (tm,128) bf16

    # feature layer 1 (BN1 folded into f2w/f2b)
    h1b = relu_bf16(mmw(h0, f1w_ref[...]) + f1b)                        # (tm,128) bf16

    # feature layer 2
    base = jnp.maximum(mmw(h1b, f2w_ref[...]) + f2b, 0.0)               # (tm,64) f32

    # attention head: Linear(64,64)+ReLU, then the (64->1) projection as a
    # VPU multiply + lane reduction (avoids an N=1 MXU pass)
    ah = jnp.maximum(mmw(base.astype(bf16), atw1_ref[...]) + atb1, 0.0)
    attn = jax.nn.sigmoid(jnp.sum(ah * atw2_row, axis=-1, keepdims=True) + atb2)

    # TODO(synk): if a v5e bundle dump shows the single vst slot binding, emit bf16
    # output or repack two 64-wide rows per 128-lane row for lane-dense stores.
    out_ref[...] = (base * attn + pattern_emb).astype(out_ref.dtype)


# --------------------------------------------------------------------------- #
# Parameter fusion / folding (done ONCE, outside the per-call path)
# --------------------------------------------------------------------------- #
def pack_params(params):
    (pw1, pb1, pw2, pb2, pw3, pb3,
     cw1, cb1, cw2, cb2,
     tx_tab, dir_tab,
     aw1, ab1, aw2, ab2,
     tw1, tb1, tw2, tb2,
     f0w, f0b, f0s, f0sh,
     f1w, f1b, f1s, f1sh,
     f2w, f2b,
     atw1, atb1, atw2, atb2) = params
    bf16 = jnp.bfloat16

    # pattern heads: fuse layer-1 across patterns; layers 2/3 stay dense PER HEAD
    # (no zero-filled block diagonal -> no wasted MXU MACs).
    pw1f = jnp.transpose(pw1, (1, 0, 2)).reshape(EDGE_DIM, N_PATTERNS * HIDDEN)
    pb1f = pb1.reshape(1, N_PATTERNS * HIDDEN)
    pw2s = pw2.astype(bf16)                                     # (5,128,64)
    pb2s = pb2.reshape(N_PATTERNS, HIDDEN // 2)                 # (5,64) f32
    pw3s = pw3.reshape(N_PATTERNS, HIDDEN // 2)                 # (5,64) f32 (VPU)
    pb3p = jnp.pad(pb3.reshape(1, N_PATTERNS), ((0, 0), (0, 3)))  # (1,8) f32

    # split feature-layer-0 weight by input group of the 130-dim concat
    f0w_tx, f0w_dir = f0w[0:32], f0w[32:64]
    f0w_amt, f0w_time = f0w[64:96], f0w[96:128]
    w_fee, w_bh = f0w[128:129], f0w[129:130]

    emb_tab = jnp.concatenate([tx_tab @ f0w_tx, dir_tab @ f0w_dir], axis=0)   # (12,128)
    wamt = aw2 @ f0w_amt                                                      # (32,128)
    wtime = tw2 @ f0w_time                                                    # (32,128)
    b0 = f0b + ab2 @ f0w_amt + tb2 @ f0w_time                                 # (1,128)

    # fold eval-mode BatchNorm into the downstream Linear
    f1w_fold = f1w * f0s.reshape(-1, 1)
    f1b_fold = f1b + f0sh @ f1w
    f2w_fold = f2w * f1s.reshape(-1, 1)
    f2b_fold = f2b + f1sh @ f2w

    av = jnp.concatenate([aw1, ab1, tw1, tb1], axis=0)                        # (4,32)
    vec128 = jnp.concatenate([cb1, w_fee, w_bh, b0, f1b_fold], axis=0)        # (5,128)
    vec64 = jnp.concatenate(
        [cb2, f2b_fold, atb1, atw2.reshape(1, OUT_DIM),
         jnp.full((1, OUT_DIM), atb2[0, 0], jnp.float32)], axis=0)            # (5,64)

    return [
        pw1f.astype(bf16), pb1f, pw2s, pb2s, pw3s, pb3p,
        cw1, cw2.astype(bf16),
        emb_tab.astype(bf16), av, wamt.astype(bf16), wtime.astype(bf16),
        vec128, f1w_fold.astype(bf16), f2w_fold.astype(bf16), vec64,
        atw1.astype(bf16),
    ]


# --------------------------------------------------------------------------- #
# Wrapper: generation-aware tile policy + pallas_call
# --------------------------------------------------------------------------- #
@functools.lru_cache(maxsize=1)
def _num_tensorcores():
    """Best-effort TensorCore count (v5e/v6e = 1, v7x = 2); falls back to 1."""
    try:
        info = pltpu.get_tpu_info()
    except Exception:
        return 1
    for attr in ("num_cores", "num_tensorcores", "tensorcores_per_chip",
                 "tensor_cores_per_chip", "cores_per_chip"):
        v = getattr(info, attr, None)
        if isinstance(v, int) and v > 0:
            return v
    return 1


def _tile_policy(n, tm, n_cores):
    # 1-TC parts (v5e/v6e): grid is a sequential loop -> single full tile if it fits.
    # multi-TC parts (v7x): >= n_cores steps, balanced to an even multiple of cores.
    if n_cores > 1:
        steps = max(n_cores, pl.cdiv(n, tm))
        steps = pl.cdiv(steps, n_cores) * n_cores
        tm_eff = min(tm, ((pl.cdiv(n, steps) + 15) // 16) * 16)
    else:
        tm_eff = min(tm, ((max(n, 16) + 15) // 16) * 16)
    n_steps = pl.cdiv(n, tm_eff)
    return tm_eff, n_steps


def edge_pattern_encoder(x, packed, *, tm=512):
    n, d = x.shape
    assert d == EDGE_DIM
    n_cores = _num_tensorcores()
    tm_eff, n_steps = _tile_policy(n, tm, n_cores)
    n_pad = n_steps * tm_eff
    x_p = x if n_pad == n else jnp.pad(x, ((0, n_pad - n), (0, 0)))

    in_specs = [pl.BlockSpec((tm_eff, EDGE_DIM), lambda i: (i, 0))]
    for w in packed:
        in_specs.append(pl.BlockSpec(w.shape, lambda i, _z=(0,) * w.ndim: _z))
    out_spec = pl.BlockSpec((tm_eff, OUT_DIM), lambda i: (i, 0))

    out = pl.pallas_call(
        edge_pattern_kernel,
        out_shape=jax.ShapeDtypeStruct((n_pad, OUT_DIM), jnp.float32),
        grid_spec=pltpu.PrefetchScalarGridSpec(
            num_scalar_prefetch=0,
            grid=(n_steps,),
            in_specs=in_specs,
            out_specs=out_spec,
        ),
        compiler_params=pltpu.CompilerParams(
            dimension_semantics=("parallel",)),
    )(x_p, *packed)
    return out[:n]


# --------------------------------------------------------------------------- #
# Deterministic parameter construction (PyTorch-style Linear init)
# --------------------------------------------------------------------------- #
def make_params(key):
    keys = iter(jax.random.split(key, 128))

    def linear(in_dim, out_dim):
        bound = 1.0 / float(np.sqrt(in_dim))
        w = jax.random.uniform(next(keys), (in_dim, out_dim), jnp.float32, -bound, bound)
        b = jax.random.uniform(next(keys), (1, out_dim), jnp.float32, -bound, bound)
        return w, b

    pw1, pb1, pw2, pb2, pw3, pb3 = [], [], [], [], [], []
    for _ in range(N_PATTERNS):
        w, b = linear(EDGE_DIM, HIDDEN); pw1.append(w); pb1.append(b)
        w, b = linear(HIDDEN, HIDDEN // 2); pw2.append(w); pb2.append(b)
        w, b = linear(HIDDEN // 2, 1); pw3.append(w); pb3.append(b)
    pw1 = jnp.stack(pw1); pb1 = jnp.stack(pb1)
    pw2 = jnp.stack(pw2); pb2 = jnp.stack(pb2)
    pw3 = jnp.stack(pw3); pb3 = jnp.stack(pb3)

    cw1, cb1 = linear(N_PATTERNS, HIDDEN)
    cw2, cb2 = linear(HIDDEN, OUT_DIM)

    tx_tab = jax.random.normal(next(keys), (10, QUARTER), jnp.float32)
    dir_tab = jax.random.normal(next(keys), (2, QUARTER), jnp.float32)

    aw1, ab1 = linear(1, QUARTER)
    aw2, ab2 = linear(QUARTER, QUARTER)
    tw1, tb1 = linear(1, QUARTER)
    tw2, tb2 = linear(QUARTER, QUARTER)

    f0w, f0b = linear(COMBINED_DIM, HIDDEN)
    f1w, f1b = linear(HIDDEN, HIDDEN)
    f2w, f2b = linear(HIDDEN, OUT_DIM)

    bn_scale = jnp.full((1, HIDDEN), 1.0 / np.sqrt(1.0 + BN_EPS), jnp.float32)
    bn_shift = jnp.zeros((1, HIDDEN), jnp.float32)
    f0s, f0sh = bn_scale, bn_shift
    f1s, f1sh = bn_scale, bn_shift

    atw1, atb1 = linear(OUT_DIM, HIDDEN // 2)
    atw2, atb2 = linear(HIDDEN // 2, 1)

    return [
        pw1, pb1, pw2, pb2, pw3, pb3,
        cw1, cb1, cw2, cb2,
        tx_tab, dir_tab,
        aw1, ab1, aw2, ab2,
        tw1, tb1, tw2, tb2,
        f0w, f0b, f0s, f0sh,
        f1w, f1b, f1s, f1sh,
        f2w, f2b,
        atw1, atb1, atw2, atb2,
    ]


# --------------------------------------------------------------------------- #
# Pure-JAX reference (unfused, for numerical sanity check)
# --------------------------------------------------------------------------- #
def ref_forward(x, params):
    (pw1, pb1, pw2, pb2, pw3, pb3,
     cw1, cb1, cw2, cb2,
     tx_tab, dir_tab,
     aw1, ab1, aw2, ab2,
     tw1, tb1, tw2, tb2,
     f0w, f0b, f0s, f0sh,
     f1w, f1b, f1s, f1sh,
     f2w, f2b,
     atw1, atb1, atw2, atb2) = params
    relu = jax.nn.relu
    scores = []
    for p in range(N_PATTERNS):
        h = relu(x @ pw1[p] + pb1[p])
        h = relu(h @ pw2[p] + pb2[p])
        scores.append(jax.nn.sigmoid(h @ pw3[p] + pb3[p]))
    ps = jnp.concatenate(scores, axis=-1)
    pattern_emb = relu(ps @ cw1 + cb1) @ cw2 + cb2

    amount, timestamp = x[:, 0:1], x[:, 1:2]
    direction = x[:, 2].astype(jnp.int32)
    tx_type = x[:, 3].astype(jnp.int32)
    fee, block_height = x[:, 4:5], x[:, 5:6]
    tx_emb = tx_tab[tx_type]
    dir_emb = dir_tab[direction]
    amount_emb = relu(amount @ aw1 + ab1) @ aw2 + ab2
    time_emb = relu(timestamp @ tw1 + tb1) @ tw2 + tb2
    combined = jnp.concatenate(
        [tx_emb, dir_emb, amount_emb, time_emb, fee, block_height], axis=-1)
    h = relu(combined @ f0w + f0b) * f0s + f0sh
    h = relu(h @ f1w + f1b) * f1s + f1sh
    base = relu(h @ f2w + f2b)
    attn = jax.nn.sigmoid(relu(base @ atw1 + atb1) @ atw2 + atb2)
    return base * attn + pattern_emb


# --------------------------------------------------------------------------- #
if __name__ == "__main__":
    key = jax.random.PRNGKey(0)
    k_par, k1, k2, k3, k4, k5, k6 = jax.random.split(key, 7)

    n_edges = 200   # deliberately not a tile multiple -> exercises the padding path
    amount = jax.random.uniform(k1, (n_edges, 1), jnp.float32, 0.0, 3.0)
    timestamp = jax.random.uniform(k2, (n_edges, 1), jnp.float32, 0.0, 1.0)
    direction = jax.random.randint(k3, (n_edges, 1), 0, 2).astype(jnp.float32)
    tx_type = jax.random.randint(k4, (n_edges, 1), 0, 10).astype(jnp.float32)
    fee = jax.random.uniform(k5, (n_edges, 1), jnp.float32, 0.0, 0.5)
    block_height = jax.random.uniform(k6, (n_edges, 1), jnp.float32, 0.0, 2.0)
    x = jnp.concatenate(
        [amount, timestamp, direction, tx_type, fee, block_height], axis=1)  # (200, 6)

    params = make_params(k_par)

    # Pack / fold ONCE (hoisted out of the per-call path), then jit the forward so
    # the pallas_call is compiled once and reused.
    packed = [jax.block_until_ready(p) for p in pack_params(params)]
    fwd = jax.jit(lambda xx: edge_pattern_encoder(xx, packed, tm=512))

    out = jax.block_until_ready(fwd(x))

    ref = jax.block_until_ready(ref_forward(x, params))
    assert out.shape == (n_edges, OUT_DIM)
    # bf16 MXU weights -> slightly looser tolerance than pure-f32
    np.testing.assert_allclose(np.asarray(out), np.asarray(ref), atol=5e-2, rtol=5e-2)

    print("KERNEL_OK")
</pallas_src>

<mosaic_0001>
module attributes {stable_mosaic.version = 11 : i64} {
  func.func @edge_pattern_kernel(%arg0: i32, %arg1: memref<208x6xf32, #tpu.memory_space<vmem>>, %arg2: memref<6x640xbf16, #tpu.memory_space<vmem>>, %arg3: memref<1x640xf32, #tpu.memory_space<vmem>>, %arg4: memref<5x128x64xbf16, #tpu.memory_space<vmem>>, %arg5: memref<5x64xf32, #tpu.memory_space<vmem>>, %arg6: memref<5x64xf32, #tpu.memory_space<vmem>>, %arg7: memref<1x8xf32, #tpu.memory_space<vmem>>, %arg8: memref<5x128xf32, #tpu.memory_space<vmem>>, %arg9: memref<128x64xbf16, #tpu.memory_space<vmem>>, %arg10: memref<12x128xbf16, #tpu.memory_space<vmem>>, %arg11: memref<4x32xf32, #tpu.memory_space<vmem>>, %arg12: memref<32x128xbf16, #tpu.memory_space<vmem>>, %arg13: memref<32x128xbf16, #tpu.memory_space<vmem>>, %arg14: memref<5x128xf32, #tpu.memory_space<vmem>>, %arg15: memref<128x128xbf16, #tpu.memory_space<vmem>>, %arg16: memref<128x64xbf16, #tpu.memory_space<vmem>>, %arg17: memref<5x64xf32, #tpu.memory_space<vmem>>, %arg18: memref<64x64xbf16, #tpu.memory_space<vmem>>, %arg19: memref<208x64xf32, #tpu.memory_space<vmem>>) attributes {dimension_semantics = [#tpu.dimension_semantics<parallel>], iteration_bounds = array<i64: 1>, scalar_prefetch = 0 : i64, scratch_operands = 0 : i64, tpu.core_type = #tpu.core_type<tc>, window_params = [{transform_indices = @transform_0, window_bounds = array<i64: 208, 6>}, {pipeline_mode = #tpu.pipeline_mode<synchronous>, transform_indices = @transform_1, window_bounds = array<i64: 6, 640>}, {pipeline_mode = #tpu.pipeline_mode<synchronous>, transform_indices = @transform_2, window_bounds = array<i64: 1, 640>}, {pipeline_mode = #tpu.pipeline_mode<synchronous>, transform_indices = @transform_3, window_bounds = array<i64: 5, 128, 64>}, {pipeline_mode = #tpu.pipeline_mode<synchronous>, transform_indices = @transform_4, window_bounds = array<i64: 5, 64>}, {pipeline_mode = #tpu.pipeline_mode<synchronous>, transform_indices = @transform_5, window_bounds = array<i64: 5, 64>}, {pipeline_mode = #tpu.pipeline_mode<synchronous>, transform_indices = @transform_6, window_bounds = array<i64: 1, 8>}, {pipeline_mode = #tpu.pipeline_mode<synchronous>, transform_indices = @transform_7, window_bounds = array<i64: 5, 128>}, {pipeline_mode = #tpu.pipeline_mode<synchronous>, transform_indices = @transform_8, window_bounds = array<i64: 128, 64>}, {pipeline_mode = #tpu.pipeline_mode<synchronous>, transform_indices = @transform_9, window_bounds = array<i64: 12, 128>}, {pipeline_mode = #tpu.pipeline_mode<synchronous>, transform_indices = @transform_10, window_bounds = array<i64: 4, 32>}, {pipeline_mode = #tpu.pipeline_mode<synchronous>, transform_indices = @transform_11, window_bounds = array<i64: 32, 128>}, {pipeline_mode = #tpu.pipeline_mode<synchronous>, transform_indices = @transform_12, window_bounds = array<i64: 32, 128>}, {pipeline_mode = #tpu.pipeline_mode<synchronous>, transform_indices = @transform_13, window_bounds = array<i64: 5, 128>}, {pipeline_mode = #tpu.pipeline_mode<synchronous>, transform_indices = @transform_14, window_bounds = array<i64: 128, 128>}, {pipeline_mode = #tpu.pipeline_mode<synchronous>, transform_indices = @transform_15, window_bounds = array<i64: 128, 64>}, {pipeline_mode = #tpu.pipeline_mode<synchronous>, transform_indices = @transform_16, window_bounds = array<i64: 5, 64>}, {pipeline_mode = #tpu.pipeline_mode<synchronous>, transform_indices = @transform_17, window_bounds = array<i64: 64, 64>}, {transform_indices = @transform_18, window_bounds = array<i64: 208, 64>}]} {
    %c0 = arith.constant 0 : index
    %c0_0 = arith.constant 0 : index
    %0 = vector.load %arg1[%c0, %c0_0] : memref<208x6xf32, #tpu.memory_space<vmem>>, vector<208x6xf32>
    %c0_1 = arith.constant 0 : index
    %c0_2 = arith.constant 0 : index
    %1 = vector.load %arg14[%c0_1, %c0_2] : memref<5x128xf32, #tpu.memory_space<vmem>>, vector<5x128xf32>
    %2 = vector.extract_strided_slice %1 {offsets = [0, 0], sizes = [1, 128], strides = [1, 1]} : vector<5x128xf32> to vector<1x128xf32>
    %3 = vector.extract_strided_slice %1 {offsets = [1, 0], sizes = [1, 128], strides = [1, 1]} : vector<5x128xf32> to vector<1x128xf32>
    %4 = vector.extract_strided_slice %1 {offsets = [2, 0], sizes = [1, 128], strides = [1, 1]} : vector<5x128xf32> to vector<1x128xf32>
    %5 = vector.extract_strided_slice %1 {offsets = [3, 0], sizes = [1, 128], strides = [1, 1]} : vector<5x128xf32> to vector<1x128xf32>
    %6 = vector.extract_strided_slice %1 {offsets = [4, 0], sizes = [1, 128], strides = [1, 1]} : vector<5x128xf32> to vector<1x128xf32>
    %c0_3 = arith.constant 0 : index
    %c0_4 = arith.constant 0 : index
    %7 = vector.load %arg17[%c0_3, %c0_4] : memref<5x64xf32, #tpu.memory_space<vmem>>, vector<5x64xf32>
    %8 = vector.extract_strided_slice %7 {offsets = [0, 0], sizes = [1, 64], strides = [1, 1]} : vector<5x64xf32> to vector<1x64xf32>
    %9 = vector.extract_strided_slice %7 {offsets = [1, 0], sizes = [1, 64], strides = [1, 1]} : vector<5x64xf32> to vector<1x64xf32>
    %10 = vector.extract_strided_slice %7 {offsets = [2, 0], sizes = [1, 64], strides = [1, 1]} : vector<5x64xf32> to vector<1x64xf32>
    %11 = vector.extract_strided_slice %7 {offsets = [3, 0], sizes = [1, 64], strides = [1, 1]} : vector<5x64xf32> to vector<1x64xf32>
    %12 = vector.extract_strided_slice %7 {offsets = [4, 0], sizes = [1, 1], strides = [1, 1]} : vector<5x64xf32> to vector<1x1xf32>
    %c0_5 = arith.constant 0 : index
    %c0_6 = arith.constant 0 : index
    %13 = vector.load %arg5[%c0_5, %c0_6] : memref<5x64xf32, #tpu.memory_space<vmem>>, vector<5x64xf32>
    %c0_7 = arith.constant 0 : index
    %c0_8 = arith.constant 0 : index
    %14 = vector.load %arg6[%c0_7, %c0_8] : memref<5x64xf32, #tpu.memory_space<vmem>>, vector<5x64xf32>
    %c0_9 = arith.constant 0 : index
    %c0_10 = arith.constant 0 : index
    %15 = vector.load %arg7[%c0_9, %c0_10] : memref<1x8xf32, #tpu.memory_space<vmem>>, vector<1x8xf32>
    %c0_11 = arith.constant 0 : index
    %c0_12 = arith.constant 0 : index
    %16 = vector.load %arg8[%c0_11, %c0_12] : memref<5x128xf32, #tpu.memory_space<vmem>>, vector<5x128xf32>
    %17 = arith.truncf %0 : vector<208x6xf32> to vector<208x6xbf16>
    %c0_13 = arith.constant 0 : index
    %c0_14 = arith.constant 0 : index
    %18 = vector.load %arg2[%c0_13, %c0_14] : memref<6x640xbf16, #tpu.memory_space<vmem>>, vector<6x640xbf16>
    %cst = arith.constant dense<0.000000e+00> : vector<208x640xf32>
    %19 = tpu.matmul %17, %18, %cst {dimension_numbers = #tpu.dot_dimension_numbers<[1], [0], [0], [1], [0, 0, 1, 1], [], []>} : vector<208x6xbf16>, vector<6x640xbf16>, vector<208x640xf32> -> vector<208x640xf32>
    %c0_15 = arith.constant 0 : index
    %c0_16 = arith.constant 0 : index
    %20 = vector.load %arg3[%c0_15, %c0_16] : memref<1x640xf32, #tpu.memory_space<vmem>>, vector<1x640xf32>
    %21 = vector.broadcast %20 : vector<1x640xf32> to vector<208x640xf32>
    %22 = arith.addf %19, %21 : vector<208x640xf32>
    %cst_17 = arith.constant 0.000000e+00 : f32
    %23 = vector.broadcast %cst_17 : f32 to vector<208x640xf32>
    %24 = arith.maximumf %22, %23 : vector<208x640xf32>
    %25 = arith.truncf %24 : vector<208x640xf32> to vector<208x640xbf16>
    %cst_18 = arith.constant 0.000000e+00 : f32
    %26 = vector.broadcast %cst_18 : f32 to vector<208x128xf32>
    %27 = vector.extract_strided_slice %25 {offsets = [0, 0], sizes = [208, 128], strides = [1, 1]} : vector<208x640xbf16> to vector<208x128xbf16>
    %c0_19 = arith.constant 0 : index
    %c0_20 = arith.constant 0 : index
    %c0_21 = arith.constant 0 : index
    %28 = vector.load %arg4[%c0_19, %c0_20, %c0_21] : memref<5x128x64xbf16, #tpu.memory_space<vmem>>, vector<1x128x64xbf16>
    %29 = vector.shape_cast %28 : vector<1x128x64xbf16> to vector<128x64xbf16>
    %cst_22 = arith.constant dense<0.000000e+00> : vector<208x64xf32>
    %30 = tpu.matmul %27, %29, %cst_22 {dimension_numbers = #tpu.dot_dimension_numbers<[1], [0], [0], [1], [0, 0, 1, 1], [], []>} : vector<208x128xbf16>, vector<128x64xbf16>, vector<208x64xf32> -> vector<208x64xf32>
    %31 = vector.extract_strided_slice %13 {offsets = [0, 0], sizes = [1, 64], strides = [1, 1]} : vector<5x64xf32> to vector<1x64xf32>
    %32 = vector.broadcast %31 : vector<1x64xf32> to vector<208x64xf32>
    %33 = arith.addf %30, %32 : vector<208x64xf32>
    %cst_23 = arith.constant 0.000000e+00 : f32
    %34 = vector.broadcast %cst_23 : f32 to vector<208x64xf32>
    %35 = arith.maximumf %33, %34 : vector<208x64xf32>
    %36 = vector.extract_strided_slice %14 {offsets = [0, 0], sizes = [1, 64], strides = [1, 1]} : vector<5x64xf32> to vector<1x64xf32>
    %37 = vector.broadcast %36 : vector<1x64xf32> to vector<208x64xf32>
    %38 = arith.mulf %35, %37 : vector<208x64xf32>
    %cst_24 = arith.constant dense<0.000000e+00> : vector<208xf32>
    %39 = vector.multi_reduction <add>, %38, %cst_24 [1] : vector<208x64xf32> to vector<208xf32>
    %40 = vector.shape_cast %39 : vector<208xf32> to vector<208x1xf32>
    %41 = vector.extract_strided_slice %15 {offsets = [0, 0], sizes = [1, 1], strides = [1, 1]} : vector<1x8xf32> to vector<1x1xf32>
    %42 = vector.broadcast %41 : vector<1x1xf32> to vector<208x1xf32>
    %43 = arith.addf %40, %42 : vector<208x1xf32>
    %44 = arith.negf %43 : vector<208x1xf32>
    %45 = math.exp %44 : vector<208x1xf32>
    %cst_25 = arith.constant 1.000000e+00 : f32
    %46 = vector.broadcast %cst_25 : f32 to vector<208x1xf32>
    %47 = arith.addf %46, %45 : vector<208x1xf32>
    %48 = arith.divf %46, %47 : vector<208x1xf32>
    %49 = vector.extract_strided_slice %16 {offsets = [0, 0], sizes = [1, 128], strides = [1, 1]} : vector<5x128xf32> to vector<1x128xf32>
    %50 = vector.broadcast %48 : vector<208x1xf32> to vector<208x128xf32>
    %51 = vector.broadcast %49 : vector<1x128xf32> to vector<208x128xf32>
    %52 = arith.mulf %50, %51 : vector<208x128xf32>
    %53 = arith.addf %26, %52 : vector<208x128xf32>
    %54 = vector.extract_strided_slice %25 {offsets = [0, 128], sizes = [208, 128], strides = [1, 1]} : vector<208x640xbf16> to vector<208x128xbf16>
    %c1 = arith.constant 1 : index
    %c0_26 = arith.constant 0 : index
    %c0_27 = arith.constant 0 : index
    %55 = vector.load %arg4[%c1, %c0_26, %c0_27] : memref<5x128x64xbf16, #tpu.memory_space<vmem>>, vector<1x128x64xbf16>
    %56 = vector.shape_cast %55 : vector<1x128x64xbf16> to vector<128x64xbf16>
    %cst_28 = arith.constant dense<0.000000e+00> : vector<208x64xf32>
    %57 = tpu.matmul %54, %56, %cst_28 {dimension_numbers = #tpu.dot_dimension_numbers<[1], [0], [0], [1], [0, 0, 1, 1], [], []>} : vector<208x128xbf16>, vector<128x64xbf16>, vector<208x64xf32> -> vector<208x64xf32>
    %58 = vector.extract_strided_slice %13 {offsets = [1, 0], sizes = [1, 64], strides = [1, 1]} : vector<5x64xf32> to vector<1x64xf32>
    %59 = vector.broadcast %58 : vector<1x64xf32> to vector<208x64xf32>
    %60 = arith.addf %57, %59 : vector<208x64xf32>
    %cst_29 = arith.constant 0.000000e+00 : f32
    %61 = vector.broadcast %cst_29 : f32 to vector<208x64xf32>
    %62 = arith.maximumf %60, %61 : vector<208x64xf32>
    %63 = vector.extract_strided_slice %14 {offsets = [1, 0], sizes = [1, 64], strides = [1, 1]} : vector<5x64xf32> to vector<1x64xf32>
    %64 = vector.broadcast %63 : vector<1x64xf32> to vector<208x64xf32>
    %65 = arith.mulf %62, %64 : vector<208x64xf32>
    %cst_30 = arith.constant dense<0.000000e+00> : vector<208xf32>
    %66 = vector.multi_reduction <add>, %65, %cst_30 [1] : vector<208x64xf32> to vector<208xf32>
    %67 = vector.shape_cast %66 : vector<208xf32> to vector<208x1xf32>
    %68 = vector.extract_strided_slice %15 {offsets = [0, 1], sizes = [1, 1], strides = [1, 1]} : vector<1x8xf32> to vector<1x1xf32>
    %69 = vector.broadcast %68 : vector<1x1xf32> to vector<208x1xf32>
    %70 = arith.addf %67, %69 : vector<208x1xf32>
    %71 = arith.negf %70 : vector<208x1xf32>
    %72 = math.exp %71 : vector<208x1xf32>
    %cst_31 = arith.constant 1.000000e+00 : f32
    %73 = vector.broadcast %cst_31 : f32 to vector<208x1xf32>
    %74 = arith.addf %73, %72 : vector<208x1xf32>
    %75 = arith.divf %73, %74 : vector<208x1xf32>
    %76 = vector.extract_strided_slice %16 {offsets = [1, 0], sizes = [1, 128], strides = [1, 1]} : vector<5x128xf32> to vector<1x128xf32>
    %77 = vector.broadcast %75 : vector<208x1xf32> to vector<208x128xf32>
    %78 = vector.broadcast %76 : vector<1x128xf32> to vector<208x128xf32>
    %79 = arith.mulf %77, %78 : vector<208x128xf32>
    %80 = arith.addf %53, %79 : vector<208x128xf32>
    %81 = vector.extract_strided_slice %25 {offsets = [0, 256], sizes = [208, 128], strides = [1, 1]} : vector<208x640xbf16> to vector<208x128xbf16>
    %c2 = arith.constant 2 : index
    %c0_32 = arith.constant 0 : index
    %c0_33 = arith.constant 0 : index
    %82 = vector.load %arg4[%c2, %c0_32, %c0_33] : memref<5x128x64xbf16, #tpu.memory_space<vmem>>, vector<1x128x64xbf16>
    %83 = vector.shape_cast %82 : vector<1x128x64xbf16> to vector<128x64xbf16>
    %cst_34 = arith.constant dense<0.000000e+00> : vector<208x64xf32>
    %84 = tpu.matmul %81, %83, %cst_34 {dimension_numbers = #tpu.dot_dimension_numbers<[1], [0], [0], [1], [0, 0, 1, 1], [], []>} : vector<208x128xbf16>, vector<128x64xbf16>, vector<208x64xf32> -> vector<208x64xf32>
    %85 = vector.extract_strided_slice %13 {offsets = [2, 0], sizes = [1, 64], strides = [1, 1]} : vector<5x64xf32> to vector<1x64xf32>
    %86 = vector.broadcast %85 : vector<1x64xf32> to vector<208x64xf32>
    %87 = arith.addf %84, %86 : vector<208x64xf32>
    %cst_35 = arith.constant 0.000000e+00 : f32
    %88 = vector.broadcast %cst_35 : f32 to vector<208x64xf32>
    %89 = arith.maximumf %87, %88 : vector<208x64xf32>
    %90 = vector.extract_strided_slice %14 {offsets = [2, 0], sizes = [1, 64], strides = [1, 1]} : vector<5x64xf32> to vector<1x64xf32>
    %91 = vector.broadcast %90 : vector<1x64xf32> to vector<208x64xf32>
    %92 = arith.mulf %89, %91 : vector<208x64xf32>
    %cst_36 = arith.constant dense<0.000000e+00> : vector<208xf32>
    %93 = vector.multi_reduction <add>, %92, %cst_36 [1] : vector<208x64xf32> to vector<208xf32>
    %94 = vector.shape_cast %93 : vector<208xf32> to vector<208x1xf32>
    %95 = vector.extract_strided_slice %15 {offsets = [0, 2], sizes = [1, 1], strides = [1, 1]} : vector<1x8xf32> to vector<1x1xf32>
    %96 = vector.broadcast %95 : vector<1x1xf32> to vector<208x1xf32>
    %97 = arith.addf %94, %96 : vector<208x1xf32>
    %98 = arith.negf %97 : vector<208x1xf32>
    %99 = math.exp %98 : vector<208x1xf32>
    %cst_37 = arith.constant 1.000000e+00 : f32
    %100 = vector.broadcast %cst_37 : f32 to vector<208x1xf32>
    %101 = arith.addf %100, %99 : vector<208x1xf32>
    %102 = arith.divf %100, %101 : vector<208x1xf32>
    %103 = vector.extract_strided_slice %16 {offsets = [2, 0], sizes = [1, 128], strides = [1, 1]} : vector<5x128xf32> to vector<1x128xf32>
    %104 = vector.broadcast %102 : vector<208x1xf32> to vector<208x128xf32>
    %105 = vector.broadcast %103 : vector<1x128xf32> to vector<208x128xf32>
    %106 = arith.mulf %104, %105 : vector<208x128xf32>
    %107 = arith.addf %80, %106 : vector<208x128xf32>
    %108 = vector.extract_strided_slice %25 {offsets = [0, 384], sizes = [208, 128], strides = [1, 1]} : vector<208x640xbf16> to vector<208x128xbf16>
    %c3 = arith.constant 3 : index
    %c0_38 = arith.constant 0 : index
    %c0_39 = arith.constant 0 : index
    %109 = vector.load %arg4[%c3, %c0_38, %c0_39] : memref<5x128x64xbf16, #tpu.memory_space<vmem>>, vector<1x128x64xbf16>
    %110 = vector.shape_cast %109 : vector<1x128x64xbf16> to vector<128x64xbf16>
    %cst_40 = arith.constant dense<0.000000e+00> : vector<208x64xf32>
    %111 = tpu.matmul %108, %110, %cst_40 {dimension_numbers = #tpu.dot_dimension_numbers<[1], [0], [0], [1], [0, 0, 1, 1], [], []>} : vector<208x128xbf16>, vector<128x64xbf16>, vector<208x64xf32> -> vector<208x64xf32>
    %112 = vector.extract_strided_slice %13 {offsets = [3, 0], sizes = [1, 64], strides = [1, 1]} : vector<5x64xf32> to vector<1x64xf32>
    %113 = vector.broadcast %112 : vector<1x64xf32> to vector<208x64xf32>
    %114 = arith.addf %111, %113 : vector<208x64xf32>
    %cst_41 = arith.constant 0.000000e+00 : f32
    %115 = vector.broadcast %cst_41 : f32 to vector<208x64xf32>
    %116 = arith.maximumf %114, %115 : vector<208x64xf32>
    %117 = vector.extract_strided_slice %14 {offsets = [3, 0], sizes = [1, 64], strides = [1, 1]} : vector<5x64xf32> to vector<1x64xf32>
    %118 = vector.broadcast %117 : vector<1x64xf32> to vector<208x64xf32>
    %119 = arith.mulf %116, %118 : vector<208x64xf32>
    %cst_42 = arith.constant dense<0.000000e+00> : vector<208xf32>
    %120 = vector.multi_reduction <add>, %119, %cst_42 [1] : vector<208x64xf32> to vector<208xf32>
    %121 = vector.shape_cast %120 : vector<208xf32> to vector<208x1xf32>
    %122 = vector.extract_strided_slice %15 {offsets = [0, 3], sizes = [1, 1], strides = [1, 1]} : vector<1x8xf32> to vector<1x1xf32>
    %123 = vector.broadcast %122 : vector<1x1xf32> to vector<208x1xf32>
    %124 = arith.addf %121, %123 : vector<208x1xf32>
    %125 = arith.negf %124 : vector<208x1xf32>
    %126 = math.exp %125 : vector<208x1xf32>
    %cst_43 = arith.constant 1.000000e+00 : f32
    %127 = vector.broadcast %cst_43 : f32 to vector<208x1xf32>
    %128 = arith.addf %127, %126 : vector<208x1xf32>
    %129 = arith.divf %127, %128 : vector<208x1xf32>
    %130 = vector.extract_strided_slice %16 {offsets = [3, 0], sizes = [1, 128], strides = [1, 1]} : vector<5x128xf32> to vector<1x128xf32>
    %131 = vector.broadcast %129 : vector<208x1xf32> to vector<208x128xf32>
    %132 = vector.broadcast %130 : vector<1x128xf32> to vector<208x128xf32>
    %133 = arith.mulf %131, %132 : vector<208x128xf32>
    %134 = arith.addf %107, %133 : vector<208x128xf32>
    %135 = vector.extract_strided_slice %25 {offsets = [0, 512], sizes = [208, 128], strides = [1, 1]} : vector<208x640xbf16> to vector<208x128xbf16>
    %c4 = arith.constant 4 : index
    %c0_44 = arith.constant 0 : index
    %c0_45 = arith.constant 0 : index
    %136 = vector.load %arg4[%c4, %c0_44, %c0_45] : memref<5x128x64xbf16, #tpu.memory_space<vmem>>, vector<1x128x64xbf16>
    %137 = vector.shape_cast %136 : vector<1x128x64xbf16> to vector<128x64xbf16>
    %cst_46 = arith.constant dense<0.000000e+00> : vector<208x64xf32>
    %138 = tpu.matmul %135, %137, %cst_46 {dimension_numbers = #tpu.dot_dimension_numbers<[1], [0], [0], [1], [0, 0, 1, 1], [], []>} : vector<208x128xbf16>, vector<128x64xbf16>, vector<208x64xf32> -> vector<208x64xf32>
    %139 = vector.extract_strided_slice %13 {offsets = [4, 0], sizes = [1, 64], strides = [1, 1]} : vector<5x64xf32> to vector<1x64xf32>
    %140 = vector.broadcast %139 : vector<1x64xf32> to vector<208x64xf32>
    %141 = arith.addf %138, %140 : vector<208x64xf32>
    %cst_47 = arith.constant 0.000000e+00 : f32
    %142 = vector.broadcast %cst_47 : f32 to vector<208x64xf32>
    %143 = arith.maximumf %141, %142 : vector<208x64xf32>
    %144 = vector.extract_strided_slice %14 {offsets = [4, 0], sizes = [1, 64], strides = [1, 1]} : vector<5x64xf32> to vector<1x64xf32>
    %145 = vector.broadcast %144 : vector<1x64xf32> to vector<208x64xf32>
    %146 = arith.mulf %143, %145 : vector<208x64xf32>
    %cst_48 = arith.constant dense<0.000000e+00> : vector<208xf32>
    %147 = vector.multi_reduction <add>, %146, %cst_48 [1] : vector<208x64xf32> to vector<208xf32>
    %148 = vector.shape_cast %147 : vector<208xf32> to vector<208x1xf32>
    %149 = vector.extract_strided_slice %15 {offsets = [0, 4], sizes = [1, 1], strides = [1, 1]} : vector<1x8xf32> to vector<1x1xf32>
    %150 = vector.broadcast %149 : vector<1x1xf32> to vector<208x1xf32>
    %151 = arith.addf %148, %150 : vector<208x1xf32>
    %152 = arith.negf %151 : vector<208x1xf32>
    %153 = math.exp %152 : vector<208x1xf32>
    %cst_49 = arith.constant 1.000000e+00 : f32
    %154 = vector.broadcast %cst_49 : f32 to vector<208x1xf32>
    %155 = arith.addf %154, %153 : vector<208x1xf32>
    %156 = arith.divf %154, %155 : vector<208x1xf32>
    %157 = vector.extract_strided_slice %16 {offsets = [4, 0], sizes = [1, 128], strides = [1, 1]} : vector<5x128xf32> to vector<1x128xf32>
    %158 = vector.broadcast %156 : vector<208x1xf32> to vector<208x128xf32>
    %159 = vector.broadcast %157 : vector<1x128xf32> to vector<208x128xf32>
    %160 = arith.mulf %158, %159 : vector<208x128xf32>
    %161 = arith.addf %134, %160 : vector<208x128xf32>
    %162 = vector.broadcast %2 : vector<1x128xf32> to vector<208x128xf32>
    %163 = arith.addf %161, %162 : vector<208x128xf32>
    %cst_50 = arith.constant 0.000000e+00 : f32
    %164 = vector.broadcast %cst_50 : f32 to vector<208x128xf32>
    %165 = arith.maximumf %163, %164 : vector<208x128xf32>
    %166 = arith.truncf %165 : vector<208x128xf32> to vector<208x128xbf16>
    %c0_51 = arith.constant 0 : index
    %c0_52 = arith.constant 0 : index
    %167 = vector.load %arg9[%c0_51, %c0_52] : memref<128x64xbf16, #tpu.memory_space<vmem>>, vector<128x64xbf16>
    %cst_53 = arith.constant dense<0.000000e+00> : vector<208x64xf32>
    %168 = tpu.matmul %166, %167, %cst_53 {dimension_numbers = #tpu.dot_dimension_numbers<[1], [0], [0], [1], [0, 0, 1, 1], [], []>} : vector<208x128xbf16>, vector<128x64xbf16>, vector<208x64xf32> -> vector<208x64xf32>
    %169 = vector.broadcast %8 : vector<1x64xf32> to vector<208x64xf32>
    %170 = arith.addf %168, %169 : vector<208x64xf32>
    %171 = vector.extract_strided_slice %0 {offsets = [0, 0], sizes = [208, 1], strides = [1, 1]} : vector<208x6xf32> to vector<208x1xf32>
    %172 = vector.extract_strided_slice %0 {offsets = [0, 1], sizes = [208, 1], strides = [1, 1]} : vector<208x6xf32> to vector<208x1xf32>
    %173 = vector.extract_strided_slice %0 {offsets = [0, 2], sizes = [208, 1], strides = [1, 1]} : vector<208x6xf32> to vector<208x1xf32>
    %174 = math.roundeven %173 : vector<208x1xf32>
    %175 = arith.fptosi %174 : vector<208x1xf32> to vector<208x1xi32>
    %176 = vector.extract_strided_slice %0 {offsets = [0, 3], sizes = [208, 1], strides = [1, 1]} : vector<208x6xf32> to vector<208x1xf32>
    %177 = math.roundeven %176 : vector<208x1xf32>
    %178 = arith.fptosi %177 : vector<208x1xf32> to vector<208x1xi32>
    %179 = vector.extract_strided_slice %0 {offsets = [0, 4], sizes = [208, 1], strides = [1, 1]} : vector<208x6xf32> to vector<208x1xf32>
    %180 = vector.extract_strided_slice %0 {offsets = [0, 5], sizes = [208, 1], strides = [1, 1]} : vector<208x6xf32> to vector<208x1xf32>
    %181 = tpu.iota {dimensions = array<i32: 1>} : vector<208x12xi32>
    %182 = vector.broadcast %178 : vector<208x1xi32> to vector<208x12xi32>
    %183 = arith.cmpi eq, %181, %182 : vector<208x12xi32>
    %c10_i32 = arith.constant 10 : i32
    %184 = vector.broadcast %c10_i32 : i32 to vector<208x1xi32>
    %185 = arith.addi %175, %184 : vector<208x1xi32>
    %186 = vector.broadcast %185 : vector<208x1xi32> to vector<208x12xi32>
    %187 = arith.cmpi eq, %181, %186 : vector<208x12xi32>
    %188 = arith.ori %183, %187 : vector<208x12xi1>
    %189 = arith.extui %188 : vector<208x12xi1> to vector<208x12xi32>
    %190 = arith.sitofp %189 : vector<208x12xi32> to vector<208x12xf32>
    %191 = arith.truncf %190 : vector<208x12xf32> to vector<208x12xbf16>
    %c0_54 = arith.constant 0 : index
    %c0_55 = arith.constant 0 : index
    %192 = vector.load %arg10[%c0_54, %c0_55] : memref<12x128xbf16, #tpu.memory_space<vmem>>, vector<12x128xbf16>
    %cst_56 = arith.constant dense<0.000000e+00> : vector<208x128xf32>
    %193 = tpu.matmul %191, %192, %cst_56 {dimension_numbers = #tpu.dot_dimension_numbers<[1], [0], [0], [1], [0, 0, 1, 1], [], []>} : vector<208x12xbf16>, vector<12x128xbf16>, vector<208x128xf32> -> vector<208x128xf32>
    %c0_57 = arith.constant 0 : index
    %c0_58 = arith.constant 0 : index
    %194 = vector.load %arg11[%c0_57, %c0_58] : memref<4x32xf32, #tpu.memory_space<vmem>>, vector<4x32xf32>
    %195 = vector.extract_strided_slice %194 {offsets = [0, 0], sizes = [1, 32], strides = [1, 1]} : vector<4x32xf32> to vector<1x32xf32>
    %196 = vector.extract_strided_slice %194 {offsets = [1, 0], sizes = [1, 32], strides = [1, 1]} : vector<4x32xf32> to vector<1x32xf32>
    %197 = vector.extract_strided_slice %194 {offsets = [2, 0], sizes = [1, 32], strides = [1, 1]} : vector<4x32xf32> to vector<1x32xf32>
    %198 = vector.extract_strided_slice %194 {offsets = [3, 0], sizes = [1, 32], strides = [1, 1]} : vector<4x32xf32> to vector<1x32xf32>
    %199 = vector.broadcast %171 : vector<208x1xf32> to vector<208x32xf32>
    %200 = vector.broadcast %195 : vector<1x32xf32> to vector<208x32xf32>
    %201 = arith.mulf %199, %200 : vector<208x32xf32>
    %202 = vector.broadcast %196 : vector<1x32xf32> to vector<208x32xf32>
    %203 = arith.addf %201, %202 : vector<208x32xf32>
    %cst_59 = arith.constant 0.000000e+00 : f32
    %204 = vector.broadcast %cst_59 : f32 to vector<208x32xf32>
    %205 = arith.maximumf %203, %204 : vector<208x32xf32>
    %206 = arith.truncf %205 : vector<208x32xf32> to vector<208x32xbf16>
    %207 = vector.broadcast %172 : vector<208x1xf32> to vector<208x32xf32>
    %208 = vector.broadcast %197 : vector<1x32xf32> to vector<208x32xf32>
    %209 = arith.mulf %207, %208 : vector<208x32xf32>
    %210 = vector.broadcast %198 : vector<1x32xf32> to vector<208x32xf32>
    %211 = arith.addf %209, %210 : vector<208x32xf32>
    %cst_60 = arith.constant 0.000000e+00 : f32
    %212 = vector.broadcast %cst_60 : f32 to vector<208x32xf32>
    %213 = arith.maximumf %211, %212 : vector<208x32xf32>
    %214 = arith.truncf %213 : vector<208x32xf32> to vector<208x32xbf16>
    %c0_61 = arith.constant 0 : index
    %c0_62 = arith.constant 0 : index
    %215 = vector.load %arg12[%c0_61, %c0_62] : memref<32x128xbf16, #tpu.memory_space<vmem>>, vector<32x128xbf16>
    %cst_63 = arith.constant dense<0.000000e+00> : vector<208x128xf32>
    %216 = tpu.matmul %206, %215, %cst_63 {dimension_numbers = #tpu.dot_dimension_numbers<[1], [0], [0], [1], [0, 0, 1, 1], [], []>} : vector<208x32xbf16>, vector<32x128xbf16>, vector<208x128xf32> -> vector<208x128xf32>
    %c0_64 = arith.constant 0 : index
    %c0_65 = arith.constant 0 : index
    %217 = vector.load %arg13[%c0_64, %c0_65] : memref<32x128xbf16, #tpu.memory_space<vmem>>, vector<32x128xbf16>
    %cst_66 = arith.constant dense<0.000000e+00> : vector<208x128xf32>
    %218 = tpu.matmul %214, %217, %cst_66 {dimension_numbers = #tpu.dot_dimension_numbers<[1], [0], [0], [1], [0, 0, 1, 1], [], []>} : vector<208x32xbf16>, vector<32x128xbf16>, vector<208x128xf32> -> vector<208x128xf32>
    %219 = arith.addf %193, %216 : vector<208x128xf32>
    %220 = arith.addf %219, %218 : vector<208x128xf32>
    %221 = vector.broadcast %179 : vector<208x1xf32> to vector<208x128xf32>
    %222 = vector.broadcast %3 : vector<1x128xf32> to vector<208x128xf32>
    %223 = arith.mulf %221, %222 : vector<208x128xf32>
    %224 = arith.addf %220, %223 : vector<208x128xf32>
    %225 = vector.broadcast %180 : vector<208x1xf32> to vector<208x128xf32>
    %226 = vector.broadcast %4 : vector<1x128xf32> to vector<208x128xf32>
    %227 = arith.mulf %225, %226 : vector<208x128xf32>
    %228 = arith.addf %224, %227 : vector<208x128xf32>
    %229 = vector.broadcast %5 : vector<1x128xf32> to vector<208x128xf32>
    %230 = arith.addf %228, %229 : vector<208x128xf32>
    %cst_67 = arith.constant 0.000000e+00 : f32
    %231 = vector.broadcast %cst_67 : f32 to vector<208x128xf32>
    %232 = arith.maximumf %230, %231 : vector<208x128xf32>
    %233 = arith.truncf %232 : vector<208x128xf32> to vector<208x128xbf16>
    %c0_68 = arith.constant 0 : index
    %c0_69 = arith.constant 0 : index
    %234 = vector.load %arg15[%c0_68, %c0_69] : memref<128x128xbf16, #tpu.memory_space<vmem>>, vector<128x128xbf16>
    %cst_70 = arith.constant dense<0.000000e+00> : vector<208x128xf32>
    %235 = tpu.matmul %233, %234, %cst_70 {dimension_numbers = #tpu.dot_dimension_numbers<[1], [0], [0], [1], [0, 0, 1, 1], [], []>} : vector<208x128xbf16>, vector<128x128xbf16>, vector<208x128xf32> -> vector<208x128xf32>
    %236 = vector.broadcast %6 : vector<1x128xf32> to vector<208x128xf32>
    %237 = arith.addf %235, %236 : vector<208x128xf32>
    %cst_71 = arith.constant 0.000000e+00 : f32
    %238 = vector.broadcast %cst_71 : f32 to vector<208x128xf32>
    %239 = arith.maximumf %237, %238 : vector<208x128xf32>
    %240 = arith.truncf %239 : vector<208x128xf32> to vector<208x128xbf16>
    %c0_72 = arith.constant 0 : index
    %c0_73 = arith.constant 0 : index
    %241 = vector.load %arg16[%c0_72, %c0_73] : memref<128x64xbf16, #tpu.memory_space<vmem>>, vector<128x64xbf16>
    %cst_74 = arith.constant dense<0.000000e+00> : vector<208x64xf32>
    %242 = tpu.matmul %240, %241, %cst_74 {dimension_numbers = #tpu.dot_dimension_numbers<[1], [0], [0], [1], [0, 0, 1, 1], [], []>} : vector<208x128xbf16>, vector<128x64xbf16>, vector<208x64xf32> -> vector<208x64xf32>
    %243 = vector.broadcast %9 : vector<1x64xf32> to vector<208x64xf32>
    %244 = arith.addf %242, %243 : vector<208x64xf32>
    %cst_75 = arith.constant 0.000000e+00 : f32
    %245 = vector.broadcast %cst_75 : f32 to vector<208x64xf32>
    %246 = arith.maximumf %244, %245 : vector<208x64xf32>
    %247 = arith.truncf %246 : vector<208x64xf32> to vector<208x64xbf16>
    %c0_76 = arith.constant 0 : index
    %c0_77 = arith.constant 0 : index
    %248 = vector.load %arg18[%c0_76, %c0_77] : memref<64x64xbf16, #tpu.memory_space<vmem>>, vector<64x64xbf16>
    %cst_78 = arith.constant dense<0.000000e+00> : vector<208x64xf32>
    %249 = tpu.matmul %247, %248, %cst_78 {dimension_numbers = #tpu.dot_dimension_numbers<[1], [0], [0], [1], [0, 0, 1, 1], [], []>} : vector<208x64xbf16>, vector<64x64xbf16>, vector<208x64xf32> -> vector<208x64xf32>
    %250 = vector.broadcast %10 : vector<1x64xf32> to vector<208x64xf32>
    %251 = arith.addf %249, %250 : vector<208x64xf32>
    %cst_79 = arith.constant 0.000000e+00 : f32
    %252 = vector.broadcast %cst_79 : f32 to vector<208x64xf32>
    %253 = arith.maximumf %251, %252 : vector<208x64xf32>
    %254 = vector.broadcast %11 : vector<1x64xf32> to vector<208x64xf32>
    %255 = arith.mulf %253, %254 : vector<208x64xf32>
    %cst_80 = arith.constant dense<0.000000e+00> : vector<208xf32>
    %256 = vector.multi_reduction <add>, %255, %cst_80 [1] : vector<208x64xf32> to vector<208xf32>
    %257 = vector.shape_cast %256 : vector<208xf32> to vector<208x1xf32>
    %258 = vector.broadcast %12 : vector<1x1xf32> to vector<208x1xf32>
    %259 = arith.addf %257, %258 : vector<208x1xf32>
    %260 = arith.negf %259 : vector<208x1xf32>
    %261 = math.exp %260 : vector<208x1xf32>
    %cst_81 = arith.constant 1.000000e+00 : f32
    %262 = vector.broadcast %cst_81 : f32 to vector<208x1xf32>
    %263 = arith.addf %262, %261 : vector<208x1xf32>
    %264 = arith.divf %262, %263 : vector<208x1xf32>
    %265 = vector.broadcast %264 : vector<208x1xf32> to vector<208x64xf32>
    %266 = arith.mulf %246, %265 : vector<208x64xf32>
    %267 = arith.addf %266, %170 : vector<208x64xf32>
    %c0_82 = arith.constant 0 : index
    %c0_83 = arith.constant 0 : index
    %268 = vector.load %arg19[%c0_82, %c0_83] : memref<208x64xf32, #tpu.memory_space<vmem>>, vector<208x64xf32>
    tpu.vector_store %arg19[%c0_82, %c0_83], %267 {strides = array<i32>} : memref<208x64xf32, #tpu.memory_space<vmem>>, vector<208x64xf32>,
    return
  }
  func.func @transform_0(%arg0: i32) -> (i32, i32) {
    %c0_i32 = arith.constant 0 : i32
    %c0_i32_0 = arith.constant 0 : i32
    return %arg0, %c0_i32 : i32, i32
  }
  func.func @transform_1(%arg0: i32) -> (i32, i32) {
    %c0_i32 = arith.constant 0 : i32
    %c0_i32_0 = arith.constant 0 : i32
    %c0_i32_1 = arith.constant 0 : i32
    return %c0_i32, %c0_i32_0 : i32, i32
  }
  func.func @transform_2(%arg0: i32) -> (i32, i32) {
    %c0_i32 = arith.constant 0 : i32
    %c0_i32_0 = arith.constant 0 : i32
    %c0_i32_1 = arith.constant 0 : i32
    return %c0_i32, %c0_i32_0 : i32, i32
  }
  func.func @transform_3(%arg0: i32) -> (i32, i32, i32) {
    %c0_i32 = arith.constant 0 : i32
    %c0_i32_0 = arith.constant 0 : i32
    %c0_i32_1 = arith.constant 0 : i32
    %c0_i32_2 = arith.constant 0 : i32
    return %c0_i32, %c0_i32_0, %c0_i32_1 : i32, i32, i32
  }
  func.func @transform_4(%arg0: i32) -> (i32, i32) {
    %c0_i32 = arith.constant 0 : i32
    %c0_i32_0 = arith.constant 0 : i32
    %c0_i32_1 = arith.constant 0 : i32
    return %c0_i32, %c0_i32_0 : i32, i32
  }
  func.func @transform_5(%arg0: i32) -> (i32, i32) {
    %c0_i32 = arith.constant 0 : i32
    %c0_i32_0 = arith.constant 0 : i32
    %c0_i32_1 = arith.constant 0 : i32
    return %c0_i32, %c0_i32_0 : i32, i32
  }
  func.func @transform_6(%arg0: i32) -> (i32, i32) {
    %c0_i32 = arith.constant 0 : i32
    %c0_i32_0 = arith.constant 0 : i32
    %c0_i32_1 = arith.constant 0 : i32
    return %c0_i32, %c0_i32_0 : i32, i32
  }
  func.func @transform_7(%arg0: i32) -> (i32, i32) {
    %c0_i32 = arith.constant 0 : i32
    %c0_i32_0 = arith.constant 0 : i32
    %c0_i32_1 = arith.constant 0 : i32
    return %c0_i32, %c0_i32_0 : i32, i32
  }
  func.func @transform_8(%arg0: i32) -> (i32, i32) {
    %c0_i32 = arith.constant 0 : i32
    %c0_i32_0 = arith.constant 0 : i32
    %c0_i32_1 = arith.constant 0 : i32
    return %c0_i32, %c0_i32_0 : i32, i32
  }
  func.func @transform_9(%arg0: i32) -> (i32, i32) {
    %c0_i32 = arith.constant 0 : i32
    %c0_i32_0 = arith.constant 0 : i32
    %c0_i32_1 = arith.constant 0 : i32
    return %c0_i32, %c0_i32_0 : i32, i32
  }
  func.func @transform_10(%arg0: i32) -> (i32, i32) {
    %c0_i32 = arith.constant 0 : i32
    %c0_i32_0 = arith.constant 0 : i32
    %c0_i32_1 = arith.constant 0 : i32
    return %c0_i32, %c0_i32_0 : i32, i32
  }
  func.func @transform_11(%arg0: i32) -> (i32, i32) {
    %c0_i32 = arith.constant 0 : i32
    %c0_i32_0 = arith.constant 0 : i32
    %c0_i32_1 = arith.constant 0 : i32
    return %c0_i32, %c0_i32_0 : i32, i32
  }
  func.func @transform_12(%arg0: i32) -> (i32, i32) {
    %c0_i32 = arith.constant 0 : i32
    %c0_i32_0 = arith.constant 0 : i32
    %c0_i32_1 = arith.constant 0 : i32
    return %c0_i32, %c0_i32_0 : i32, i32
  }
  func.func @transform_13(%arg0: i32) -> (i32, i32) {
    %c0_i32 = arith.constant 0 : i32
    %c0_i32_0 = arith.constant 0 : i32
    %c0_i32_1 = arith.constant 0 : i32
    return %c0_i32, %c0_i32_0 : i32, i32
  }
  func.func @transform_14(%arg0: i32) -> (i32, i32) {
    %c0_i32 = arith.constant 0 : i32
    %c0_i32_0 = arith.constant 0 : i32
    %c0_i32_1 = arith.constant 0 : i32
    return %c0_i32, %c0_i32_0 : i32, i32
  }
  func.func @transform_15(%arg0: i32) -> (i32, i32) {
    %c0_i32 = arith.constant 0 : i32
    %c0_i32_0 = arith.constant 0 : i32
    %c0_i32_1 = arith.constant 0 : i32
    return %c0_i32, %c0_i32_0 : i32, i32
  }
  func.func @transform_16(%arg0: i32) -> (i32, i32) {
    %c0_i32 = arith.constant 0 : i32
    %c0_i32_0 = arith.constant 0 : i32
    %c0_i32_1 = arith.constant 0 : i32
    return %c0_i32, %c0_i32_0 : i32, i32
  }
  func.func @transform_17(%arg0: i32) -> (i32, i32) {
    %c0_i32 = arith.constant 0 : i32
    %c0_i32_0 = arith.constant 0 : i32
    %c0_i32_1 = arith.constant 0 : i32
    return %c0_i32, %c0_i32_0 : i32, i32
  }
  func.func @transform_18(%arg0: i32) -> (i32, i32) {
    %c0_i32 = arith.constant 0 : i32
    %c0_i32_0 = arith.constant 0 : i32
    return %arg0, %c0_i32 : i32, i32
  }
}

</mosaic_0001>

<llo_original>
// kernel: _lambda_.1
$region0: #{_lambda_.1}
  #allocation0 [shape = 'u32[]', space=smem, size = 0x4, offset = 0x4, fixed_abs, tag = 'smem constant byte address 0x4 - core index']
  #allocation1 [shape = 'u32[144,128]{1,0:T(1,128)}', space=vmem, size = 0x12000, scoped, tag = 'internal scratch']
  %s0 = inlined_call_operand.vmem [shape: f32[208,6], index: 0, kind: input, shape index: {}]
  %s1 = inlined_call_operand.vmem [shape: bf16[6,640], index: 1, kind: input, shape index: {}]
  %s2 = inlined_call_operand.hbm [shape: f32[1,640], index: 2, kind: input, shape index: {}]
  %s3 = inlined_call_operand.vmem [shape: bf16[5,128,64], index: 3, kind: input, shape index: {}]
  %s4 = inlined_call_operand.vmem [shape: f32[5,64], index: 4, kind: input, shape index: {}]
  %s5 = inlined_call_operand.vmem [shape: f32[5,64], index: 5, kind: input, shape index: {}]
  %s6 = inlined_call_operand.vmem [shape: f32[1,8], index: 6, kind: input, shape index: {}]
  %s7 = inlined_call_operand.vmem [shape: f32[5,128], index: 7, kind: input, shape index: {}]
  %s8 = inlined_call_operand.vmem [shape: bf16[128,64], index: 8, kind: input, shape index: {}]
  %s9 = inlined_call_operand.vmem [shape: bf16[12,128], index: 9, kind: input, shape index: {}]
  %s10 = inlined_call_operand.vmem [shape: f32[4,32], index: 10, kind: input, shape index: {}]
  %s11 = inlined_call_operand.vmem [shape: bf16[32,128], index: 11, kind: input, shape index: {}]
  %s12 = inlined_call_operand.vmem [shape: bf16[32,128], index: 12, kind: input, shape index: {}]
  %s13 = inlined_call_operand.vmem [shape: f32[5,128], index: 13, kind: input, shape index: {}]
  %s14 = inlined_call_operand.vmem [shape: bf16[128,128], index: 14, kind: input, shape index: {}]
  %s15 = inlined_call_operand.vmem [shape: bf16[128,64], index: 15, kind: input, shape index: {}]
  %s16 = inlined_call_operand.vmem [shape: f32[5,64], index: 16, kind: input, shape index: {}]
  %s17 = inlined_call_operand.vmem [shape: bf16[64,64], index: 17, kind: input, shape index: {}]
  %s18 = inlined_call_operand.vmem [shape: f32[208,64], index: 18, kind: output, shape index: {}]
  %s19 = sld [smem:[#allocation0]]
  $region86: #{_lambda_.1} parent=0
    _
  %s21 = ssub.s32 1, %s19
  %s22 = scalar_select 0, %s21, %s19
  $region1: #{_lambda_.1} parent=0
    #allocation2 [shape = 'u8[2560]{0}', space=vmem, size = 0xc00, scoped, tag = 'input window, operand 2, single buffered']
    #allocation3 [shape = 's32[1]{0}', space=sflag, size = 0x4, scoped, tag = 'scoped memory for _lambda_.1']
    %23 = vsyncpa [#allocation3], 0
    // Predicated region
    $region2: #{_lambda_.1} parent=1 // pred_check
      _
    $region3: #{_lambda_.1} parent=1 // pred_check_branch
      %25 = sbr.rel (0) target = $region5
    $region4: #{_lambda_.1} parent=1 // pred_region
      _
    $region5: #{_lambda_.1} parent=1 // pred_fallthru
      _
    // Predicated region
    $region6: #{_lambda_.1} parent=1 // pred_check
      _
    $region7: #{_lambda_.1} parent=1 // pred_check_branch
      %27 = sbr.rel (0) target = $region9
    $region8: #{_lambda_.1} parent=1 // pred_region
      _
    $region9: #{_lambda_.1} parent=1 // pred_fallthru
      _
    // Predicated region
    $region10: #{_lambda_.1} parent=1 // pred_check
      _
    $region11: #{_lambda_.1} parent=1 // pred_check_branch
      %29 = sbr.rel (0) target = $region13
    $region12: #{_lambda_.1} parent=1 // pred_region
      %s31 = ssub.s32 80, 80
      %32 = vsyncadd [#allocation3], %s31
      %s34 = sshll.u32 [#allocation2], 4
      %s35 = int_to_ptr.vmem [resolvable:$true] %s34
      %37 = dma.hbm_to_vmem [thread:$0]  %s2, 80, %s35, [#allocation3]
    $region13: #{_lambda_.1} parent=1 // pred_fallthru
      _
    // Predicated region
    $region14: #{_lambda_.1} parent=1 // pred_check
      _
    $region15: #{_lambda_.1} parent=1 // pred_check_branch
      %39 = sbr.rel (0) target = $region17
    $region16: #{_lambda_.1} parent=1 // pred_region
      _
    $region17: #{_lambda_.1} parent=1 // pred_fallthru
      _
    // Predicated region
    $region18: #{_lambda_.1} parent=1 // pred_check
      _
    $region19: #{_lambda_.1} parent=1 // pred_check_branch
      %41 = sbr.rel (0) target = $region21
    $region20: #{_lambda_.1} parent=1 // pred_region
      _
    $region21: #{_lambda_.1} parent=1 // pred_fallthru
      _
    // Predicated region
    $region22: #{_lambda_.1} parent=1 // pred_check
      _
    $region23: #{_lambda_.1} parent=1 // pred_check_branch
      %43 = sbr.rel (0) target = $region25
    $region24: #{_lambda_.1} parent=1 // pred_region
      _
    $region25: #{_lambda_.1} parent=1 // pred_fallthru
      _
    // Predicated region
    $region26: #{_lambda_.1} parent=1 // pred_check
      _
    $region27: #{_lambda_.1} parent=1 // pred_check_branch
      %45 = sbr.rel (0) target = $region29
    $region28: #{_lambda_.1} parent=1 // pred_region
      _
    $region29: #{_lambda_.1} parent=1 // pred_fallthru
      _
    // Predicated region
    $region30: #{_lambda_.1} parent=1 // pred_check
      _
    $region31: #{_lambda_.1} parent=1 // pred_check_branch
      %47 = sbr.rel (0) target = $region33
    $region32: #{_lambda_.1} parent=1 // pred_region
      _
    $region33: #{_lambda_.1} parent=1 // pred_fallthru
      _
    // Predicated region
    $region34: #{_lambda_.1} parent=1 // pred_check
      _
    $region35: #{_lambda_.1} parent=1 // pred_check_branch
      %49 = sbr.rel (0) target = $region37
    $region36: #{_lambda_.1} parent=1 // pred_region
      _
    $region37: #{_lambda_.1} parent=1 // pred_fallthru
      _
    // Predicated region
    $region38: #{_lambda_.1} parent=1 // pred_check
      _
    $region39: #{_lambda_.1} parent=1 // pred_check_branch
      %51 = sbr.rel (0) target = $region41
    $region40: #{_lambda_.1} parent=1 // pred_region
      _
    $region41: #{_lambda_.1} parent=1 // pred_fallthru
      _
    // Predicated region
    $region42: #{_lambda_.1} parent=1 // pred_check
      _
    $region43: #{_lambda_.1} parent=1 // pred_check_branch
      %53 = sbr.rel (0) target = $region45
    $region44: #{_lambda_.1} parent=1 // pred_region
      _
    $region45: #{_lambda_.1} parent=1 // pred_fallthru
      _
    // Predicated region
    $region46: #{_lambda_.1} parent=1 // pred_check
      _
    $region47: #{_lambda_.1} parent=1 // pred_check_branch
      %55 = sbr.rel (0) target = $region49
    $region48: #{_lambda_.1} parent=1 // pred_region
      _
    $region49: #{_lambda_.1} parent=1 // pred_fallthru
      _
    // Predicated region
    $region50: #{_lambda_.1} parent=1 // pred_check
      _
    $region51: #{_lambda_.1} parent=1 // pred_check_branch
      %57 = sbr.rel (0) target = $region53
    $region52: #{_lambda_.1} parent=1 // pred_region
      _
    $region53: #{_lambda_.1} parent=1 // pred_fallthru
      _
    // Predicated region
    $region54: #{_lambda_.1} parent=1 // pred_check
      _
    $region55: #{_lambda_.1} parent=1 // pred_check_branch
      %59 = sbr.rel (0) target = $region57
    $region56: #{_lambda_.1} parent=1 // pred_region
      _
    $region57: #{_lambda_.1} parent=1 // pred_fallthru
      _
    // Predicated region
    $region58: #{_lambda_.1} parent=1 // pred_check
      _
    $region59: #{_lambda_.1} parent=1 // pred_check_branch
      %61 = sbr.rel (0) target = $region61
    $region60: #{_lambda_.1} parent=1 // pred_region
      _
    $region61: #{_lambda_.1} parent=1 // pred_fallthru
      _
    // Predicated region
    $region62: #{_lambda_.1} parent=1 // pred_check
      _
    $region63: #{_lambda_.1} parent=1 // pred_check_branch
      %63 = sbr.rel (0) target = $region65
    $region64: #{_lambda_.1} parent=1 // pred_region
      _
    $region65: #{_lambda_.1} parent=1 // pred_fallthru
      _
    // Predicated region
    $region66: #{_lambda_.1} parent=1 // pred_check
      _
    $region67: #{_lambda_.1} parent=1 // pred_check_branch
      %65 = sbr.rel (0) target = $region69
    $region68: #{_lambda_.1} parent=1 // pred_region
      _
    $region69: #{_lambda_.1} parent=1 // pred_fallthru
      _
    // Predicated region
    $region70: #{_lambda_.1} parent=1 // pred_check
      _
    $region71: #{_lambda_.1} parent=1 // pred_check_branch
      %67 = sbr.rel (0) target = $region73
    $region72: #{_lambda_.1} parent=1 // pred_region
      _
    $region73: #{_lambda_.1} parent=1 // pred_fallthru
      _
    // Predicated region
    $region74: #{_lambda_.1} parent=1 // pred_check
      _
    $region75: #{_lambda_.1} parent=1 // pred_check_branch
      %69 = sbr.rel (0) target = $region77
    $region76: #{_lambda_.1} parent=1 // pred_region
      %70 = dma.done [#allocation3], 80
    $region77: #{_lambda_.1} parent=1 // pred_fallthru
      _
    %v72 = vld [vmem:[%s0] sm:$0xff]
    %v73 = vld [vmem:[%s0 + $0x8] sm:$0xff]
    %v74 = vld [vmem:[%s0 + $0x10] sm:$0xff]
    %v75 = vld [vmem:[%s0 + $0x18] sm:$0xff]
    %v76 = vld [vmem:[%s0 + $0x20] sm:$0xff]
    %v77 = vld [vmem:[%s0 + $0x28] sm:$0xff]
    %v78 = vld [vmem:[%s0 + $0x30] sm:$0xff]
    %v79 = vld [vmem:[%s0 + $0x38] sm:$0xff]
    %v80 = vld [vmem:[%s0 + $0x40] sm:$0xff]
    %v81 = vld [vmem:[%s0 + $0x48] sm:$0xff]
    %v82 = vld [vmem:[%s0 + $0x50] sm:$0xff]
    %v83 = vld [vmem:[%s0 + $0x58] sm:$0xff]
    %v84 = vld [vmem:[%s0 + $0x60] sm:$0xff]
    %v85 = vld [vmem:[%s0 + $0x68] sm:$0xff]
    %v86 = vld [vmem:[%s0 + $0x70] sm:$0xff]
    %v87 = vld [vmem:[%s0 + $0x78] sm:$0xff]
    %v88 = vld [vmem:[%s0 + $0x80] sm:$0xff]
    %v89 = vld [vmem:[%s0 + $0x88] sm:$0xff]
    %v90 = vld [vmem:[%s0 + $0x90] sm:$0xff]
    %v91 = vld [vmem:[%s0 + $0x98] sm:$0xff]
    %v92 = vld [vmem:[%s0 + $0xa0] sm:$0xff]
    %v93 = vld [vmem:[%s0 + $0xa8] sm:$0xff]
    %v94 = vld [vmem:[%s0 + $0xb0] sm:$0xff]
    %v95 = vld [vmem:[%s0 + $0xb8] sm:$0xff]
    %v96 = vld [vmem:[%s0 + $0xc0] sm:$0xff]
    %v97 = vld [vmem:[%s0 + $0xc8] sm:$0xff]
    %v98 = vld [vmem:[%s13] sm:$0x1f]
    %v99 = vld [vmem:[%s16] sm:$0x1f]
    %v100 = vld [vmem:[%s4] sm:$0x1f]
    %v101 = vld [vmem:[%s5] sm:$0x1f]
    %v102 = vld [vmem:[%s6] sm:$0x1]
    %v103 = vld [vmem:[%s7] sm:$0x1f]
    %v104 = vpack.c.bf16 %v73, %v72
    %v105 = vpack.c.bf16 %v75, %v74
    %v106 = vpack.c.bf16 %v77, %v76
    %v107 = vpack.c.bf16 %v79, %v78
    %v108 = vpack.c.bf16 %v81, %v80
    %v109 = vpack.c.bf16 %v83, %v82
    %v110 = vpack.c.bf16 %v85, %v84
    %v111 = vpack.c.bf16 %v87, %v86
    %v112 = vpack.c.bf16 %v89, %v88
    %v113 = vpack.c.bf16 %v91, %v90
    %v114 = vpack.c.bf16 %v93, %v92
    %v115 = vpack.c.bf16 %v95, %v94
    %v116 = vpack.c.bf16 %v97, %v96
    %v117 = vld [vmem:[%s1] sm:$0x77]
    %v118 = vld [vmem:[%s1 + $0x8] sm:$0x77]
    %v119 = vld [vmem:[%s1 + $0x10] sm:$0x7]
    %v120 = vld [vmem:[#allocation2] sm:$0x1f]
    %v122 = vlaneseq
    %v123 = vshrl.u32 %v122, 7
    %v124 = vsub.s32 0, %v123
    %v125 = vrot.slane %v120, %v124
    %v126 = vlaneseq
    %v127 = vshrl.u32 %v126, 7
    %v128 = vsub.s32 1, %v127
    %v129 = vrot.slane %v120, %v128
    %v130 = vlaneseq
    %v131 = vshrl.u32 %v130, 7
    %v132 = vsub.s32 2, %v131
    %v133 = vrot.slane %v120, %v132
    %v134 = vlaneseq
    %v135 = vshrl.u32 %v134, 7
    %v136 = vsub.s32 3, %v135
    %v137 = vrot.slane %v120, %v136
    %v138 = vlaneseq
    %v139 = vshrl.u32 %v138, 7
    %v140 = vsub.s32 4, %v139
    %v141 = vrot.slane %v120, %v140
    %v150 = vunpack.c.l.b16 %v117
    %v151 = vunpack.c.h.b16 %v117
    %v152 = vunpack.c.l.b16 %v118
    %v153 = vunpack.c.h.b16 %v118
    %v154 = vunpack.c.l.b16 %v119
    %v155 = vpack.c.b16 %v150, %v150
    %v156 = vpack.c.b16 %v151, %v151
    %v157 = vpack.c.b16 %v152, %v152
    %v158 = vpack.c.b16 %v153, %v153
    %v159 = vpack.c.b16 %v154, %v154
    %vm160 = vcmask 48128
    %v162 = vsel %vm160, %v104, 0
    %v165 = vsel %vm160, %v105, 0
    %v168 = vsel %vm160, %v106, 0
    %v171 = vsel %vm160, %v107, 0
    %v174 = vsel %vm160, %v108, 0
    %v177 = vsel %vm160, %v109, 0
    %v180 = vsel %vm160, %v110, 0
    %v183 = vsel %vm160, %v111, 0
    %v186 = vsel %vm160, %v112, 0
    %v189 = vsel %vm160, %v113, 0
    %v192 = vsel %vm160, %v114, 0
    %v195 = vsel %vm160, %v115, 0
    %v198 = vsel %vm160, %v116, 0
    %vm200 = vcmask 1042432
    %v202 = vsel %vm200, %v155, 0
    %v205 = vsel %vm200, %v156, 0
    %v208 = vsel %vm200, %v157, 0
    %v211 = vsel %vm200, %v158, 0
    %v214 = vsel %vm200, %v159, 0
    %216 = vmatprep.subr.bf16.mxu0 %v205
    %217 = vmatpush1.bf16.msra.mxu0 %v202
    %218 = vmatprep.subr.bf16.mxu0 0
    %219 = vmatpush1.bf16.msra.mxu0 0
    %220 = vmatprep.subr.bf16.mxu0 0
    %221 = vmatpush1.bf16.msra.mxu0 0
    %222 = vmatprep.subr.bf16.mxu0 0
    %223 = vmatpush1.bf16.msra.mxu0 0
    %224 = vmatprep.subr.bf16.mxu0 0
    %225 = vmatpush1.bf16.msra.mxu0 0
    %226 = vmatprep.subr.bf16.mxu0 0
    %227 = vmatpush1.bf16.msra.mxu0 0
    %228 = vmatprep.subr.bf16.mxu0 0
    %229 = vmatpush1.bf16.msra.mxu0 0
    %230 = vmatprep.subr.bf16.mxu0 0
    %231 = vmatpush1.bf16.msra.mxu0 0
    %232 = vmatprep.subr.bf16.mxu0 0
    %233 = vmatpush1.bf16.msra.mxu0 0
    %234 = vmatprep.subr.bf16.mxu0 0
    %235 = vmatpush1.bf16.msra.mxu0 0
    %236 = vmatprep.subr.bf16.mxu0 0
    %237 = vmatpush1.bf16.msra.mxu0 0
    %238 = vmatprep.subr.bf16.mxu0 0
    %239 = vmatpush1.bf16.msra.mxu0 0
    %240 = vmatprep.subr.bf16.mxu0 0
    %241 = vmatpush1.bf16.msra.mxu0 0
    %242 = vmatprep.subr.bf16.mxu0 0
    %243 = vmatpush1.bf16.msra.mxu0 0
    %244 = vmatprep.subr.bf16.mxu0 0
    %245 = vmatpush1.bf16.msra.mxu0 0
    %246 = vmatprep.subr.bf16.mxu0 0
    %247 = vmatpush1.bf16.msra.mxu0 0
    %248 = vmatprep.mubr.bf16.mxu0 0
    %249 = vmatmul.mubr.bf16.gmra.mrb[0].mxu0 %v162
    %v250 = vpop.f32.mrb[0].mxu0
    %v251 = vadd.f32 %v125, %v250
    %v252 = vpop.f32.mrb[0].mxu0
    %v253 = vadd.f32 %v129, %v252
    %v254 = vpop.f32.mrb[0].mxu0
    %v255 = vadd.f32 %v125, %v254
    %v256 = vpop.f32.mrb[0].mxu0
    %v257 = vadd.f32 %v129, %v256
    %258 = vmatprep.mubr.bf16.mxu0 0
    %259 = vmatmul.mubr.bf16.gmra.mrb[0].mxu0 %v165
    %v260 = vpop.f32.mrb[0].mxu0
    %v261 = vadd.f32 %v125, %v260
    %v262 = vpop.f32.mrb[0].mxu0
    %v263 = vadd.f32 %v129, %v262
    %v264 = vpop.f32.mrb[0].mxu0
    %v265 = vadd.f32 %v125, %v264
    %v266 = vpop.f32.mrb[0].mxu0
    %v267 = vadd.f32 %v129, %v266
    %268 = vmatprep.mubr.bf16.mxu0 0
    %269 = vmatmul.mubr.bf16.gmra.mrb[0].mxu0 %v168
    %v270 = vpop.f32.mrb[0].mxu0
    %v271 = vadd.f32 %v125, %v270
    %v272 = vpop.f32.mrb[0].mxu0
    %v273 = vadd.f32 %v129, %v272
    %v274 = vpop.f32.mrb[0].mxu0
    %v275 = vadd.f32 %v125, %v274
    %v276 = vpop.f32.mrb[0].mxu0
    %v277 = vadd.f32 %v129, %v276
    %278 = vmatprep.mubr.bf16.mxu0 0
    %279 = vmatmul.mubr.bf16.gmra.mrb[0].mxu0 %v171
    %v280 = vpop.f32.mrb[0].mxu0
    %v281 = vadd.f32 %v125, %v280
    %v282 = vpop.f32.mrb[0].mxu0
    %v283 = vadd.f32 %v129, %v282
    %v284 = vpop.f32.mrb[0].mxu0
    %v285 = vadd.f32 %v125, %v284
    %v286 = vpop.f32.mrb[0].mxu0
    %v287 = vadd.f32 %v129, %v286
    %288 = vmatprep.mubr.bf16.mxu0 0
    %289 = vmatmul.mubr.bf16.gmra.mrb[0].mxu0 %v174
    %v290 = vpop.f32.mrb[0].mxu0
    %v291 = vadd.f32 %v125, %v290
    %v292 = vpop.f32.mrb[0].mxu0
    %v293 = vadd.f32 %v129, %v292
    %v294 = vpop.f32.mrb[0].mxu0
    %v295 = vadd.f32 %v125, %v294
    %v296 = vpop.f32.mrb[0].mxu0
    %v297 = vadd.f32 %v129, %v296
    %298 = vmatprep.mubr.bf16.mxu0 0
    %299 = vmatmul.mubr.bf16.gmra.mrb[0].mxu0 %v177
    %v300 = vpop.f32.mrb[0].mxu0
    %v301 = vadd.f32 %v125, %v300
    %v302 = vpop.f32.mrb[0].mxu0
    %v303 = vadd.f32 %v129, %v302
    %v304 = vpop.f32.mrb[0].mxu0
    %v305 = vadd.f32 %v125, %v304
    %v306 = vpop.f32.mrb[0].mxu0
    %v307 = vadd.f32 %v129, %v306
    %308 = vmatprep.mubr.bf16.mxu0 0
    %309 = vmatmul.mubr.bf16.gmra.mrb[0].mxu0 %v180
    %v310 = vpop.f32.mrb[0].mxu0
    %v311 = vadd.f32 %v125, %v310
    %v312 = vpop.f32.mrb[0].mxu0
    %v313 = vadd.f32 %v129, %v312
    %v314 = vpop.f32.mrb[0].mxu0
    %v315 = vadd.f32 %v125, %v314
    %v316 = vpop.f32.mrb[0].mxu0
    %v317 = vadd.f32 %v129, %v316
    %318 = vmatprep.mubr.bf16.mxu0 0
    %319 = vmatmul.mubr.bf16.gmra.mrb[0].mxu0 %v183
    %v320 = vpop.f32.mrb[0].mxu0
    %v321 = vadd.f32 %v125, %v320
    %v322 = vpop.f32.mrb[0].mxu0
    %v323 = vadd.f32 %v129, %v322
    %v324 = vpop.f32.mrb[0].mxu0
    %v325 = vadd.f32 %v125, %v324
    %v326 = vpop.f32.mrb[0].mxu0
    %v327 = vadd.f32 %v129, %v326
    %328 = vmatprep.mubr.bf16.mxu0 0
    %329 = vmatmul.mubr.bf16.gmra.mrb[0].mxu0 %v186
    %v330 = vpop.f32.mrb[0].mxu0
    %v331 = vadd.f32 %v125, %v330
    %v332 = vpop.f32.mrb[0].mxu0
    %v333 = vadd.f32 %v129, %v332
    %v334 = vpop.f32.mrb[0].mxu0
    %v335 = vadd.f32 %v125, %v334
    %v336 = vpop.f32.mrb[0].mxu0
    %v337 = vadd.f32 %v129, %v336
    %338 = vmatprep.mubr.bf16.mxu0 0
    %339 = vmatmul.mubr.bf16.gmra.mrb[0].mxu0 %v189
    %v340 = vpop.f32.mrb[0].mxu0
    %v341 = vadd.f32 %v125, %v340
    %v342 = vpop.f32.mrb[0].mxu0
    %v343 = vadd.f32 %v129, %v342
    %v344 = vpop.f32.mrb[0].mxu0
    %v345 = vadd.f32 %v125, %v344
    %v346 = vpop.f32.mrb[0].mxu0
    %v347 = vadd.f32 %v129, %v346
    %348 = vmatprep.mubr.bf16.mxu0 0
    %349 = vmatmul.mubr.bf16.gmra.mrb[0].mxu0 %v192
    %v350 = vpop.f32.mrb[0].mxu0
    %v351 = vadd.f32 %v125, %v350
    %v352 = vpop.f32.mrb[0].mxu0
    %v353 = vadd.f32 %v129, %v352
    %v354 = vpop.f32.mrb[0].mxu0
    %v355 = vadd.f32 %v125, %v354
    %v356 = vpop.f32.mrb[0].mxu0
    %v357 = vadd.f32 %v129, %v356
    %358 = vmatprep.mubr.bf16.mxu0 0
    %359 = vmatmul.mubr.bf16.gmra.mrb[0].mxu0 %v195
    %v360 = vpop.f32.mrb[0].mxu0
    %v361 = vadd.f32 %v125, %v360
    %v362 = vpop.f32.mrb[0].mxu0
    %v363 = vadd.f32 %v129, %v362
    %v364 = vpop.f32.mrb[0].mxu0
    %v365 = vadd.f32 %v125, %v364
    %v366 = vpop.f32.mrb[0].mxu0
    %v367 = vadd.f32 %v129, %v366
    %368 = vmatprep.mubr.bf16.mxu0 0
    %369 = vmatmul.mubr.bf16.gmra.mrb[0].mxu0 %v198
    %v370 = vpop.f32.mrb[0].mxu0
    %v371 = vadd.f32 %v125, %v370
    %v372 = vpop.f32.mrb[0].mxu0
    %v373 = vadd.f32 %v129, %v372
    %v374 = vpop.f32.mrb[0].mxu0
    %v375 = vadd.f32 %v125, %v374
    %v376 = vpop.f32.mrb[0].mxu0
    %v377 = vadd.f32 %v129, %v376
    %378 = vdwg.mxu0
    %379 = vmatprep.subr.bf16.mxu0 %v211
    %380 = vmatpush1.bf16.msra.mxu0 %v208
    %381 = vmatprep.subr.bf16.mxu0 0
    %382 = vmatpush1.bf16.msra.mxu0 0
    %383 = vmatprep.subr.bf16.mxu0 0
    %384 = vmatpush1.bf16.msra.mxu0 0
    %385 = vmatprep.subr.bf16.mxu0 0
    %386 = vmatpush1.bf16.msra.mxu0 0
    %387 = vmatprep.subr.bf16.mxu0 0
    %388 = vmatpush1.bf16.msra.mxu0 0
    %389 = vmatprep.subr.bf16.mxu0 0
    %390 = vmatpush1.bf16.msra.mxu0 0
    %391 = vmatprep.subr.bf16.mxu0 0
    %392 = vmatpush1.bf16.msra.mxu0 0
    %393 = vmatprep.subr.bf16.mxu0 0
    %394 = vmatpush1.bf16.msra.mxu0 0
    %395 = vmatprep.subr.bf16.mxu0 0
    %396 = vmatpush1.bf16.msra.mxu0 0
    %397 = vmatprep.subr.bf16.mxu0 0
    %398 = vmatpush1.bf16.msra.mxu0 0
    %399 = vmatprep.subr.bf16.mxu0 0
    %400 = vmatpush1.bf16.msra.mxu0 0
    %401 = vmatprep.subr.bf16.mxu0 0
    %402 = vmatpush1.bf16.msra.mxu0 0
    %403 = vmatprep.subr.bf16.mxu0 0
    %404 = vmatpush1.bf16.msra.mxu0 0
    %405 = vmatprep.subr.bf16.mxu0 0
    %406 = vmatpush1.bf16.msra.mxu0 0
    %407 = vmatprep.subr.bf16.mxu0 0
    %408 = vmatpush1.bf16.msra.mxu0 0
    %409 = vmatprep.subr.bf16.mxu0 0
    %410 = vmatpush1.bf16.msra.mxu0 0
    %411 = vmatprep.mubr.bf16.mxu0 0
    %412 = vmatmul.mubr.bf16.gmra.mrb[0].mxu0 %v162
    %v413 = vpop.f32.mrb[0].mxu0
    %v414 = vadd.f32 %v133, %v413
    %v415 = vpop.f32.mrb[0].mxu0
    %v416 = vadd.f32 %v137, %v415
    %v417 = vpop.f32.mrb[0].mxu0
    %v418 = vadd.f32 %v133, %v417
    %v419 = vpop.f32.mrb[0].mxu0
    %v420 = vadd.f32 %v137, %v419
    %421 = vmatprep.mubr.bf16.mxu0 0
    %422 = vmatmul.mubr.bf16.gmra.mrb[0].mxu0 %v165
    %v423 = vpop.f32.mrb[0].mxu0
    %v424 = vadd.f32 %v133, %v423
    %v425 = vpop.f32.mrb[0].mxu0
    %v426 = vadd.f32 %v137, %v425
    %v427 = vpop.f32.mrb[0].mxu0
    %v428 = vadd.f32 %v133, %v427
    %v429 = vpop.f32.mrb[0].mxu0
    %v430 = vadd.f32 %v137, %v429
    %431 = vmatprep.mubr.bf16.mxu0 0
    %432 = vmatmul.mubr.bf16.gmra.mrb[0].mxu0 %v168
    %v433 = vpop.f32.mrb[0].mxu0
    %v434 = vadd.f32 %v133, %v433
    %v435 = vpop.f32.mrb[0].mxu0
    %v436 = vadd.f32 %v137, %v435
    %v437 = vpop.f32.mrb[0].mxu0
    %v438 = vadd.f32 %v133, %v437
    %v439 = vpop.f32.mrb[0].mxu0
    %v440 = vadd.f32 %v137, %v439
    %441 = vmatprep.mubr.bf16.mxu0 0
    %442 = vmatmul.mubr.bf16.gmra.mrb[0].mxu0 %v171
    %v443 = vpop.f32.mrb[0].mxu0
    %v444 = vadd.f32 %v133, %v443
    %v445 = vpop.f32.mrb[0].mxu0
    %v446 = vadd.f32 %v137, %v445
    %v447 = vpop.f32.mrb[0].mxu0
    %v448 = vadd.f32 %v133, %v447
    %v449 = vpop.f32.mrb[0].mxu0
    %v450 = vadd.f32 %v137, %v449
    %451 = vmatprep.mubr.bf16.mxu0 0
    %452 = vmatmul.mubr.bf16.gmra.mrb[0].mxu0 %v174
    %v453 = vpop.f32.mrb[0].mxu0
    %v454 = vadd.f32 %v133, %v453
    %v455 = vpop.f32.mrb[0].mxu0
    %v456 = vadd.f32 %v137, %v455
    %v457 = vpop.f32.mrb[0].mxu0
    %v458 = vadd.f32 %v133, %v457
    %v459 = vpop.f32.mrb[0].mxu0
    %v460 = vadd.f32 %v137, %v459
    %461 = vmatprep.mubr.bf16.mxu0 0
    %462 = vmatmul.mubr.bf16.gmra.mrb[0].mxu0 %v177
    %v463 = vpop.f32.mrb[0].mxu0
    %v464 = vadd.f32 %v133, %v463
    %v465 = vpop.f32.mrb[0].mxu0
    %v466 = vadd.f32 %v137, %v465
    %v467 = vpop.f32.mrb[0].mxu0
    %v468 = vadd.f32 %v133, %v467
    %v469 = vpop.f32.mrb[0].mxu0
    %v470 = vadd.f32 %v137, %v469
    %471 = vmatprep.mubr.bf16.mxu0 0
    %472 = vmatmul.mubr.bf16.gmra.mrb[0].mxu0 %v180
    %v473 = vpop.f32.mrb[0].mxu0
    %v474 = vadd.f32 %v133, %v473
    %v475 = vpop.f32.mrb[0].mxu0
    %v476 = vadd.f32 %v137, %v475
    %v477 = vpop.f32.mrb[0].mxu0
    %v478 = vadd.f32 %v133, %v477
    %v479 = vpop.f32.mrb[0].mxu0
    %v480 = vadd.f32 %v137, %v479
    %481 = vmatprep.mubr.bf16.mxu0 0
    %482 = vmatmul.mubr.bf16.gmra.mrb[0].mxu0 %v183
    %v483 = vpop.f32.mrb[0].mxu0
    %v484 = vadd.f32 %v133, %v483
    %v485 = vpop.f32.mrb[0].mxu0
    %v486 = vadd.f32 %v137, %v485
    %v487 = vpop.f32.mrb[0].mxu0
    %v488 = vadd.f32 %v133, %v487
    %v489 = vpop.f32.mrb[0].mxu0
    %v490 = vadd.f32 %v137, %v489
    %491 = vmatprep.mubr.bf16.mxu0 0
    %492 = vmatmul.mubr.bf16.gmra.mrb[0].mxu0 %v186
    %v493 = vpop.f32.mrb[0].mxu0
    %v494 = vadd.f32 %v133, %v493
    %v495 = vpop.f32.mrb[0].mxu0
    %v496 = vadd.f32 %v137, %v495
    %v497 = vpop.f32.mrb[0].mxu0
    %v498 = vadd.f32 %v133, %v497
    %v499 = vpop.f32.mrb[0].mxu0
    %v500 = vadd.f32 %v137, %v499
    %501 = vmatprep.mubr.bf16.mxu0 0
    %502 = vmatmul.mubr.bf16.gmra.mrb[0].mxu0 %v189
    %v503 = vpop.f32.mrb[0].mxu0
    %v504 = vadd.f32 %v133, %v503
    %v505 = vpop.f32.mrb[0].mxu0
    %v506 = vadd.f32 %v137, %v505
    %v507 = vpop.f32.mrb[0].mxu0
    %v508 = vadd.f32 %v133, %v507
    %v509 = vpop.f32.mrb[0].mxu0
    %v510 = vadd.f32 %v137, %v509
    %511 = vmatprep.mubr.bf16.mxu0 0
    %512 = vmatmul.mubr.bf16.gmra.mrb[0].mxu0 %v192
    %v513 = vpop.f32.mrb[0].mxu0
    %v514 = vadd.f32 %v133, %v513
    %v515 = vpop.f32.mrb[0].mxu0
    %v516 = vadd.f32 %v137, %v515
    %v517 = vpop.f32.mrb[0].mxu0
    %v518 = vadd.f32 %v133, %v517
    %v519 = vpop.f32.mrb[0].mxu0
    %v520 = vadd.f32 %v137, %v519
    %521 = vmatprep.mubr.bf16.mxu0 0
    %522 = vmatmul.mubr.bf16.gmra.mrb[0].mxu0 %v195
    %v523 = vpop.f32.mrb[0].mxu0
    %v524 = vadd.f32 %v133, %v523
    %v525 = vpop.f32.mrb[0].mxu0
    %v526 = vadd.f32 %v137, %v525
    %v527 = vpop.f32.mrb[0].mxu0
    %v528 = vadd.f32 %v133, %v527
    %v529 = vpop.f32.mrb[0].mxu0
    %v530 = vadd.f32 %v137, %v529
    %531 = vmatprep.mubr.bf16.mxu0 0
    %532 = vmatmul.mubr.bf16.gmra.mrb[0].mxu0 %v198
    %v533 = vpop.f32.mrb[0].mxu0
    %v534 = vadd.f32 %v133, %v533
    %v535 = vpop.f32.mrb[0].mxu0
    %v536 = vadd.f32 %v137, %v535
    %v537 = vpop.f32.mrb[0].mxu0
    %v538 = vadd.f32 %v133, %v537
    %v539 = vpop.f32.mrb[0].mxu0
    %v540 = vadd.f32 %v137, %v539
    %541 = vdwg.mxu0
    %542 = vmatprep.subr.bf16.mxu0 0
    %543 = vmatpush1.bf16.msra.mxu0 %v214
    %544 = vmatprep.subr.bf16.mxu0 0
    %545 = vmatpush1.bf16.msra.mxu0 0
    %546 = vmatprep.subr.bf16.mxu0 0
    %547 = vmatpush1.bf16.msra.mxu0 0
    %548 = vmatprep.subr.bf16.mxu0 0
    %549 = vmatpush1.bf16.msra.mxu0 0
    %550 = vmatprep.subr.bf16.mxu0 0
    %551 = vmatpush1.bf16.msra.mxu0 0
    %552 = vmatprep.subr.bf16.mxu0 0
    %553 = vmatpush1.bf16.msra.mxu0 0
    %554 = vmatprep.subr.bf16.mxu0 0
    %555 = vmatpush1.bf16.msra.mxu0 0
    %556 = vmatprep.subr.bf16.mxu0 0
    %557 = vmatpush1.bf16.msra.mxu0 0
    %558 = vmatprep.subr.bf16.mxu0 0
    %559 = vmatpush1.bf16.msra.mxu0 0
    %560 = vmatprep.subr.bf16.mxu0 0
    %561 = vmatpush1.bf16.msra.mxu0 0
    %562 = vmatprep.subr.bf16.mxu0 0
    %563 = vmatpush1.bf16.msra.mxu0 0
    %564 = vmatprep.subr.bf16.mxu0 0
    %565 = vmatpush1.bf16.msra.mxu0 0
    %566 = vmatprep.subr.bf16.mxu0 0
    %567 = vmatpush1.bf16.msra.mxu0 0
    %568 = vmatprep.subr.bf16.mxu0 0
    %569 = vmatpush1.bf16.msra.mxu0 0
    %570 = vmatprep.subr.bf16.mxu0 0
    %571 = vmatpush1.bf16.msra.mxu0 0
    %572 = vmatprep.subr.bf16.mxu0 0
    %573 = vmatpush1.bf16.msra.mxu0 0
    %574 = vmatprep.mubr.bf16.mxu0 0
    %575 = vmatmul.mubr.bf16.gmra.mrb[0].mxu0 %v162
    %v576 = vpop.f32.mrb[0].mxu0
    %v577 = vadd.f32 %v141, %v576
    %v578 = vpop.f32.mrb[0].mxu0
    %v579 = vpop.f32.mrb[0].mxu0
    %v580 = vadd.f32 %v141, %v579
    %v581 = vpop.f32.mrb[0].mxu0
    %582 = vmatprep.mubr.bf16.mxu0 0
    %583 = vmatmul.mubr.bf16.gmra.mrb[0].mxu0 %v165
    %v584 = vpop.f32.mrb[0].mxu0
    %v585 = vadd.f32 %v141, %v584
    %v586 = vpop.f32.mrb[0].mxu0
    %v587 = vpop.f32.mrb[0].mxu0
    %v588 = vadd.f32 %v141, %v587
    %v589 = vpop.f32.mrb[0].mxu0
    %590 = vmatprep.mubr.bf16.mxu0 0
    %591 = vmatmul.mubr.bf16.gmra.mrb[0].mxu0 %v168
    %v592 = vpop.f32.mrb[0].mxu0
    %v593 = vadd.f32 %v141, %v592
    %v594 = vpop.f32.mrb[0].mxu0
    %v595 = vpop.f32.mrb[0].mxu0
    %v596 = vadd.f32 %v141, %v595
    %v597 = vpop.f32.mrb[0].mxu0
    %598 = vmatprep.mubr.bf16.mxu0 0
    %599 = vmatmul.mubr.bf16.gmra.mrb[0].mxu0 %v171
    %v600 = vpop.f32.mrb[0].mxu0
    %v601 = vadd.f32 %v141, %v600
    %v602 = vpop.f32.mrb[0].mxu0
    %v603 = vpop.f32.mrb[0].mxu0
    %v604 = vadd.f32 %v141, %v603
    %v605 = vpop.f32.mrb[0].mxu0
    %606 = vmatprep.mubr.bf16.mxu0 0
    %607 = vmatmul.mubr.bf16.gmra.mrb[0].mxu0 %v174
    %v608 = vpop.f32.mrb[0].mxu0
    %v609 = vadd.f32 %v141, %v608
    %v610 = vpop.f32.mrb[0].mxu0
    %v611 = vpop.f32.mrb[0].mxu0
    %v612 = vadd.f32 %v141, %v611
    %v613 = vpop.f32.mrb[0].mxu0
    %614 = vmatprep.mubr.bf16.mxu0 0
    %615 = vmatmul.mubr.bf16.gmra.mrb[0].mxu0 %v177
    %v616 = vpop.f32.mrb[0].mxu0
    %v617 = vadd.f32 %v141, %v616
    %v618 = vpop.f32.mrb[0].mxu0
    %v619 = vpop.f32.mrb[0].mxu0
    %v620 = vadd.f32 %v141, %v619
    %v621 = vpop.f32.mrb[0].mxu0
    %622 = vmatprep.mubr.bf16.mxu0 0
    %623 = vmatmul.mubr.bf16.gmra.mrb[0].mxu0 %v180
    %v624 = vpop.f32.mrb[0].mxu0
    %v625 = vadd.f32 %v141, %v624
    %v626 = vpop.f32.mrb[0].mxu0
    %v627 = vpop.f32.mrb[0].mxu0
    %v628 = vadd.f32 %v141, %v627
    %v629 = vpop.f32.mrb[0].mxu0
    %630 = vmatprep.mubr.bf16.mxu0 0
    %631 = vmatmul.mubr.bf16.gmra.mrb[0].mxu0 %v183
    %v632 = vpop.f32.mrb[0].mxu0
    %v633 = vadd.f32 %v141, %v632
    %v634 = vpop.f32.mrb[0].mxu0
    %v635 = vpop.f32.mrb[0].mxu0
    %v636 = vadd.f32 %v141, %v635
    %v637 = vpop.f32.mrb[0].mxu0
    %638 = vmatprep.mubr.bf16.mxu0 0
    %639 = vmatmul.mubr.bf16.gmra.mrb[0].mxu0 %v186
    %v640 = vpop.f32.mrb[0].mxu0
    %v641 = vadd.f32 %v141, %v640
    %v642 = vpop.f32.mrb[0].mxu0
    %v643 = vpop.f32.mrb[0].mxu0
    %v644 = vadd.f32 %v141, %v643
    %v645 = vpop.f32.mrb[0].mxu0
    %646 = vmatprep.mubr.bf16.mxu0 0
    %647 = vmatmul.mubr.bf16.gmra.mrb[0].mxu0 %v189
    %v648 = vpop.f32.mrb[0].mxu0
    %v649 = vadd.f32 %v141, %v648
    %v650 = vpop.f32.mrb[0].mxu0
    %v651 = vpop.f32.mrb[0].mxu0
    %v652 = vadd.f32 %v141, %v651
    %v653 = vpop.f32.mrb[0].mxu0
    %654 = vmatprep.mubr.bf16.mxu0 0
    %655 = vmatmul.mubr.bf16.gmra.mrb[0].mxu0 %v192
    %v656 = vpop.f32.mrb[0].mxu0
    %v657 = vadd.f32 %v141, %v656
    %v658 = vpop.f32.mrb[0].mxu0
    %v659 = vpop.f32.mrb[0].mxu0
    %v660 = vadd.f32 %v141, %v659
    %v661 = vpop.f32.mrb[0].mxu0
    %662 = vmatprep.mubr.bf16.mxu0 0
    %663 = vmatmul.mubr.bf16.gmra.mrb[0].mxu0 %v195
    %v664 = vpop.f32.mrb[0].mxu0
    %v665 = vadd.f32 %v141, %v664
    %v666 = vpop.f32.mrb[0].mxu0
    %v667 = vpop.f32.mrb[0].mxu0
    %v668 = vadd.f32 %v141, %v667
    %v669 = vpop.f32.mrb[0].mxu0
    %670 = vmatprep.mubr.bf16.mxu0 0
    %671 = vmatmul.mubr.bf16.gmra.mrb[0].mxu0 %v198
    %v672 = vpop.f32.mrb[0].mxu0
    %v673 = vadd.f32 %v141, %v672
    %v674 = vpop.f32.mrb[0].mxu0
    %v675 = vpop.f32.mrb[0].mxu0
    %v676 = vadd.f32 %v141, %v675
    %v677 = vpop.f32.mrb[0].mxu0
    %678 = vdwg.mxu0
    %v679 = vmax.f32 %v251, 0.0
    %v680 = vmax.f32 %v253, 0.0
    %v681 = vmax.f32 %v414, 0.0
    %v682 = vmax.f32 %v416, 0.0
    %v683 = vmax.f32 %v577, 0.0
    %v684 = vmax.f32 %v255, 0.0
    %v685 = vmax.f32 %v257, 0.0
    %v686 = vmax.f32 %v418, 0.0
    %v687 = vmax.f32 %v420, 0.0
    %v688 = vmax.f32 %v580, 0.0
    %v689 = vmax.f32 %v261, 0.0
    %v690 = vmax.f32 %v263, 0.0
    %v691 = vmax.f32 %v424, 0.0
    %v692 = vmax.f32 %v426, 0.0
    %v693 = vmax.f32 %v585, 0.0
    %v694 = vmax.f32 %v265, 0.0
    %v695 = vmax.f32 %v267, 0.0
    %v696 = vmax.f32 %v428, 0.0
    %v697 = vmax.f32 %v430, 0.0
    %v698 = vmax.f32 %v588, 0.0
    %v699 = vmax.f32 %v271, 0.0
    %v700 = vmax.f32 %v273, 0.0
    %v701 = vmax.f32 %v434, 0.0
    %v702 = vmax.f32 %v436, 0.0
    %v703 = vmax.f32 %v593, 0.0
    %v704 = vmax.f32 %v275, 0.0
    %v705 = vmax.f32 %v277, 0.0
    %v706 = vmax.f32 %v438, 0.0
    %v707 = vmax.f32 %v440, 0.0
    %v708 = vmax.f32 %v596, 0.0
    %v709 = vmax.f32 %v281, 0.0
    %v710 = vmax.f32 %v283, 0.0
    %v711 = vmax.f32 %v444, 0.0
    %v712 = vmax.f32 %v446, 0.0
    %v713 = vmax.f32 %v601, 0.0
    %v714 = vmax.f32 %v285, 0.0
    %v715 = vmax.f32 %v287, 0.0
    %v716 = vmax.f32 %v448, 0.0
    %v717 = vmax.f32 %v450, 0.0
    %v718 = vmax.f32 %v604, 0.0
    %v719 = vmax.f32 %v291, 0.0
    %v720 = vmax.f32 %v293, 0.0
    %v721 = vmax.f32 %v454, 0.0
    %v722 = vmax.f32 %v456, 0.0
    %v723 = vmax.f32 %v609, 0.0
    %v724 = vmax.f32 %v295, 0.0
    %v725 = vmax.f32 %v297, 0.0
    %v726 = vmax.f32 %v458, 0.0
    %v727 = vmax.f32 %v460, 0.0
    %v728 = vmax.f32 %v612, 0.0
    %v729 = vmax.f32 %v301, 0.0
    %v730 = vmax.f32 %v303, 0.0
    %v731 = vmax.f32 %v464, 0.0
    %v732 = vmax.f32 %v466, 0.0
    %v733 = vmax.f32 %v617, 0.0
    %v734 = vmax.f32 %v305, 0.0
    %v735 = vmax.f32 %v307, 0.0
    %v736 = vmax.f32 %v468, 0.0
    %v737 = vmax.f32 %v470, 0.0
    %v738 = vmax.f32 %v620, 0.0
    %v739 = vmax.f32 %v311, 0.0
    %v740 = vmax.f32 %v313, 0.0
    %v741 = vmax.f32 %v474, 0.0
    %v742 = vmax.f32 %v476, 0.0
    %v743 = vmax.f32 %v625, 0.0
    %v744 = vmax.f32 %v315, 0.0
    %v745 = vmax.f32 %v317, 0.0
    %v746 = vmax.f32 %v478, 0.0
    %v747 = vmax.f32 %v480, 0.0
    %v748 = vmax.f32 %v628, 0.0
    %v749 = vmax.f32 %v321, 0.0
    %v750 = vmax.f32 %v323, 0.0
    %v751 = vmax.f32 %v484, 0.0
    %v752 = vmax.f32 %v486, 0.0
    %v753 = vmax.f32 %v633, 0.0
    %v754 = vmax.f32 %v325, 0.0
    %v755 = vmax.f32 %v327, 0.0
    %v756 = vmax.f32 %v488, 0.0
    %v757 = vmax.f32 %v490, 0.0
    %v758 = vmax.f32 %v636, 0.0
    %v759 = vmax.f32 %v331, 0.0
    %v760 = vmax.f32 %v333, 0.0
    %v761 = vmax.f32 %v494, 0.0
    %v762 = vmax.f32 %v496, 0.0
    %v763 = vmax.f32 %v641, 0.0
    %v764 = vmax.f32 %v335, 0.0
    %v765 = vmax.f32 %v337, 0.0
    %v766 = vmax.f32 %v498, 0.0
    %v767 = vmax.f32 %v500, 0.0
    %v768 = vmax.f32 %v644, 0.0
    %v769 = vmax.f32 %v341, 0.0
    %v770 = vmax.f32 %v343, 0.0
    %v771 = vmax.f32 %v504, 0.0
    %v772 = vmax.f32 %v506, 0.0
    %v773 = vmax.f32 %v649, 0.0
    %v774 = vmax.f32 %v345, 0.0
    %v775 = vmax.f32 %v347, 0.0
    %v776 = vmax.f32 %v508, 0.0
    %v777 = vmax.f32 %v510, 0.0
    %v778 = vmax.f32 %v652, 0.0
    %v779 = vmax.f32 %v351, 0.0
    %v780 = vmax.f32 %v353, 0.0
    %v781 = vmax.f32 %v514, 0.0
    %v782 = vmax.f32 %v516, 0.0
    %v783 = vmax.f32 %v657, 0.0
    %v784 = vmax.f32 %v355, 0.0
    %v785 = vmax.f32 %v357, 0.0
    %v786 = vmax.f32 %v518, 0.0
    %v787 = vmax.f32 %v520, 0.0
    %v788 = vmax.f32 %v660, 0.0
    %v789 = vmax.f32 %v361, 0.0
    %v790 = vmax.f32 %v363, 0.0
    %v791 = vmax.f32 %v524, 0.0
    %v792 = vmax.f32 %v526, 0.0
    %v793 = vmax.f32 %v665, 0.0
    %v794 = vmax.f32 %v365, 0.0
    %v795 = vmax.f32 %v367, 0.0
    %v796 = vmax.f32 %v528, 0.0
    %v797 = vmax.f32 %v530, 0.0
    %v798 = vmax.f32 %v668, 0.0
    %v799 = vmax.f32 %v371, 0.0
    %v800 = vmax.f32 %v373, 0.0
    %v801 = vmax.f32 %v534, 0.0
    %v802 = vmax.f32 %v536, 0.0
    %v803 = vmax.f32 %v673, 0.0
    %v804 = vmax.f32 %v375, 0.0
    %v805 = vmax.f32 %v377, 0.0
    %v806 = vmax.f32 %v538, 0.0
    %v807 = vmax.f32 %v540, 0.0
    %v808 = vmax.f32 %v676, 0.0
    %v809 = vpack.c.bf16 %v684, %v679
    %v810 = vpack.c.bf16 %v685, %v680
    %v811 = vpack.c.bf16 %v686, %v681
    %v812 = vpack.c.bf16 %v687, %v682
    %v813 = vpack.c.bf16 %v688, %v683
    %v814 = vpack.c.bf16 %v694, %v689
    %v815 = vpack.c.bf16 %v695, %v690
    %v816 = vpack.c.bf16 %v696, %v691
    %v817 = vpack.c.bf16 %v697, %v692
    %v818 = vpack.c.bf16 %v698, %v693
    %v819 = vpack.c.bf16 %v704, %v699
    %v820 = vpack.c.bf16 %v705, %v700
    %v821 = vpack.c.bf16 %v706, %v701
    %v822 = vpack.c.bf16 %v707, %v702
    %v823 = vpack.c.bf16 %v708, %v703
    %v824 = vpack.c.bf16 %v714, %v709
    %v825 = vpack.c.bf16 %v715, %v710
    %v826 = vpack.c.bf16 %v716, %v711
    %v827 = vpack.c.bf16 %v717, %v712
    %v828 = vpack.c.bf16 %v718, %v713
    %v829 = vpack.c.bf16 %v724, %v719
    %v830 = vpack.c.bf16 %v725, %v720
    %v831 = vpack.c.bf16 %v726, %v721
    %v832 = vpack.c.bf16 %v727, %v722
    %v833 = vpack.c.bf16 %v728, %v723
    %v834 = vpack.c.bf16 %v734, %v729
    %v835 = vpack.c.bf16 %v735, %v730
    %v836 = vpack.c.bf16 %v736, %v731
    %v837 = vpack.c.bf16 %v737, %v732
    %v838 = vpack.c.bf16 %v738, %v733
    %v839 = vpack.c.bf16 %v744, %v739
    %v840 = vpack.c.bf16 %v745, %v740
    %v841 = vpack.c.bf16 %v746, %v741
    %v842 = vpack.c.bf16 %v747, %v742
    %v843 = vpack.c.bf16 %v748, %v743
    %v844 = vpack.c.bf16 %v754, %v749
    %v845 = vpack.c.bf16 %v755, %v750
    %v846 = vpack.c.bf16 %v756, %v751
    %v847 = vpack.c.bf16 %v757, %v752
    %v848 = vpack.c.bf16 %v758, %v753
    %v849 = vpack.c.bf16 %v764, %v759
    %v850 = vpack.c.bf16 %v765, %v760
    %v851 = vpack.c.bf16 %v766, %v761
    %v852 = vpack.c.bf16 %v767, %v762
    %v853 = vpack.c.bf16 %v768, %v763
    %v854 = vpack.c.bf16 %v774, %v769
    %v855 = vpack.c.bf16 %v775, %v770
    %v856 = vpack.c.bf16 %v776, %v771
    %v857 = vpack.c.bf16 %v777, %v772
    %v858 = vpack.c.bf16 %v778, %v773
    %v859 = vpack.c.bf16 %v784, %v779
    %v860 = vpack.c.bf16 %v785, %v780
    %v861 = vpack.c.bf16 %v786, %v781
    %v862 = vpack.c.bf16 %v787, %v782
    %v863 = vpack.c.bf16 %v788, %v783
    %v864 = vpack.c.bf16 %v794, %v789
    %v865 = vpack.c.bf16 %v795, %v790
    %v866 = vpack.c.bf16 %v796, %v791
    %v867 = vpack.c.bf16 %v797, %v792
    %v868 = vpack.c.bf16 %v798, %v793
    %v869 = vpack.c.bf16 %v804, %v799
    %v870 = vpack.c.bf16 %v805, %v800
    %v871 = vpack.c.bf16 %v806, %v801
    %v872 = vpack.c.bf16 %v807, %v802
    %v873 = vpack.c.bf16 %v808, %v803
    %v874 = vld [vmem:[%s3] sm:$0xf]
    %v875 = vld [vmem:[%s3 + $0x4] sm:$0xf]
    %v876 = vld [vmem:[%s3 + $0x8] sm:$0xf]
    %v877 = vld [vmem:[%s3 + $0xc] sm:$0xf]
    %v878 = vld [vmem:[%s3 + $0x10] sm:$0xf]
    %v879 = vld [vmem:[%s3 + $0x14] sm:$0xf]
    %v880 = vld [vmem:[%s3 + $0x18] sm:$0xf]
    %v881 = vld [vmem:[%s3 + $0x1c] sm:$0xf]
    %v882 = vld [vmem:[%s3 + $0x20] sm:$0xf]
    %v883 = vld [vmem:[%s3 + $0x24] sm:$0xf]
    %v884 = vld [vmem:[%s3 + $0x28] sm:$0xf]
    %v885 = vld [vmem:[%s3 + $0x2c] sm:$0xf]
    %v886 = vld [vmem:[%s3 + $0x30] sm:$0xf]
    %v887 = vld [vmem:[%s3 + $0x34] sm:$0xf]
    %v888 = vld [vmem:[%s3 + $0x38] sm:$0xf]
    %v889 = vld [vmem:[%s3 + $0x3c] sm:$0xf]
    %v890 = vlaneseq
    %v891 = vshrl.u32 %v890, 7
    %v892 = vsub.s32 0, %v891
    %v893 = vrot.slane %v100, %v892
    %v910 = vunpack.c.l.b16 %v874
    %v911 = vunpack.c.l.b16 %v875
    %v912 = vunpack.c.l.b16 %v876
    %v913 = vunpack.c.l.b16 %v877
    %v914 = vunpack.c.l.b16 %v878
    %v915 = vunpack.c.l.b16 %v879
    %v916 = vunpack.c.l.b16 %v880
    %v917 = vunpack.c.l.b16 %v881
    %v918 = vunpack.c.l.b16 %v882
    %v919 = vunpack.c.l.b16 %v883
    %v920 = vunpack.c.l.b16 %v884
    %v921 = vunpack.c.l.b16 %v885
    %v922 = vunpack.c.l.b16 %v886
    %v923 = vunpack.c.l.b16 %v887
    %v924 = vunpack.c.l.b16 %v888
    %v925 = vunpack.c.l.b16 %v889
    %v926 = vpack.c.b16 %v911, %v910
    %v927 = vpack.c.b16 %v913, %v912
    %v928 = vpack.c.b16 %v915, %v914
    %v929 = vpack.c.b16 %v917, %v916
    %v930 = vpack.c.b16 %v919, %v918
    %v931 = vpack.c.b16 %v921, %v920
    %v932 = vpack.c.b16 %v923, %v922
    %v933 = vpack.c.b16 %v925, %v924
    %942 = vmatprep.subr.bf16.mxu0 0
    %943 = vmatpush1.bf16.msra.mxu0 %v926
    %944 = vmatprep.subr.bf16.mxu0 0
    %945 = vmatpush1.bf16.msra.mxu0 %v927
    %946 = vmatprep.subr.bf16.mxu0 0
    %947 = vmatpush1.bf16.msra.mxu0 %v928
    %948 = vmatprep.subr.bf16.mxu0 0
    %949 = vmatpush1.bf16.msra.mxu0 %v929
    %950 = vmatprep.subr.bf16.mxu0 0
    %951 = vmatpush1.bf16.msra.mxu0 %v930
    %952 = vmatprep.subr.bf16.mxu0 0
    %953 = vmatpush1.bf16.msra.mxu0 %v931
    %954 = vmatprep.subr.bf16.mxu0 0
    %955 = vmatpush1.bf16.msra.mxu0 %v932
    %956 = vmatprep.subr.bf16.mxu0 0
    %957 = vmatpush1.bf16.msra.mxu0 %v933
    %958 = vmatprep.subr.bf16.mxu0 0
    %959 = vmatpush1.bf16.msra.mxu0 0
    %960 = vmatprep.subr.bf16.mxu0 0
    %961 = vmatpush1.bf16.msra.mxu0 0
    %962 = vmatprep.subr.bf16.mxu0 0
    %963 = vmatpush1.bf16.msra.mxu0 0
    %964 = vmatprep.subr.bf16.mxu0 0
    %965 = vmatpush1.bf16.msra.mxu0 0
    %966 = vmatprep.subr.bf16.mxu0 0
    %967 = vmatpush1.bf16.msra.mxu0 0
    %968 = vmatprep.subr.bf16.mxu0 0
    %969 = vmatpush1.bf16.msra.mxu0 0
    %970 = vmatprep.subr.bf16.mxu0 0
    %971 = vmatpush1.bf16.msra.mxu0 0
    %972 = vmatprep.subr.bf16.mxu0 0
    %973 = vmatpush1.bf16.msra.mxu0 0
    %974 = vmatprep.mubr.bf16.mxu0 0
    %975 = vmatmul.mubr.bf16.gmra.mrb[0].mxu0 %v809
    %v976 = vpop.f32.mrb[0].mxu0
    %v977 = vadd.f32 %v893, %v976
    %v978 = vpop.f32.mrb[0].mxu0
    %v979 = vpop.f32.mrb[0].mxu0
    %v980 = vadd.f32 %v893, %v979
    %v981 = vpop.f32.mrb[0].mxu0
    %982 = vmatprep.mubr.bf16.mxu0 0
    %983 = vmatmul.mubr.bf16.gmra.mrb[0].mxu0 %v814
    %v984 = vpop.f32.mrb[0].mxu0
    %v985 = vadd.f32 %v893, %v984
    %v986 = vpop.f32.mrb[0].mxu0
    %v987 = vpop.f32.mrb[0].mxu0
    %v988 = vadd.f32 %v893, %v987
    %v989 = vpop.f32.mrb[0].mxu0
    %990 = vmatprep.mubr.bf16.mxu0 0
    %991 = vmatmul.mubr.bf16.gmra.mrb[0].mxu0 %v819
    %v992 = vpop.f32.mrb[0].mxu0
    %v993 = vadd.f32 %v893, %v992
    %v994 = vpop.f32.mrb[0].mxu0
    %v995 = vpop.f32.mrb[0].mxu0
    %v996 = vadd.f32 %v893, %v995
    %v997 = vpop.f32.mrb[0].mxu0
    %998 = vmatprep.mubr.bf16.mxu0 0
    %999 = vmatmul.mubr.bf16.gmra.mrb[0].mxu0 %v824
    %v1000 = vpop.f32.mrb[0].mxu0
    %v1001 = vadd.f32 %v893, %v1000
    %v1002 = vpop.f32.mrb[0].mxu0
    %v1003 = vpop.f32.mrb[0].mxu0
    %v1004 = vadd.f32 %v893, %v1003
    %v1005 = vpop.f32.mrb[0].mxu0
    %1006 = vmatprep.mubr.bf16.mxu0 0
    %1007 = vmatmul.mubr.bf16.gmra.mrb[0].mxu0 %v829
    %v1008 = vpop.f32.mrb[0].mxu0
    %v1009 = vadd.f32 %v893, %v1008
    %v1010 = vpop.f32.mrb[0].mxu0
    %v1011 = vpop.f32.mrb[0].mxu0
    %v1012 = vadd.f32 %v893, %v1011
    %v1013 = vpop.f32.mrb[0].mxu0
    %1014 = vmatprep.mubr.bf16.mxu0 0
    %1015 = vmatmul.mubr.bf16.gmra.mrb[0].mxu0 %v834
    %v1016 = vpop.f32.mrb[0].mxu0
    %v1017 = vadd.f32 %v893, %v1016
    %v1018 = vpop.f32.mrb[0].mxu0
    %v1019 = vpop.f32.mrb[0].mxu0
    %v1020 = vadd.f32 %v893, %v1019
    %v1021 = vpop.f32.mrb[0].mxu0
    %1022 = vmatprep.mubr.bf16.mxu0 0
    %1023 = vmatmul.mubr.bf16.gmra.mrb[0].mxu0 %v839
    %v1024 = vpop.f32.mrb[0].mxu0
    %v1025 = vadd.f32 %v893, %v1024
    %v1026 = vpop.f32.mrb[0].mxu0
    %v1027 = vpop.f32.mrb[0].mxu0
    %v1028 = vadd.f32 %v893, %v1027
    %v1029 = vpop.f32.mrb[0].mxu0
    %1030 = vmatprep.mubr.bf16.mxu0 0
    %1031 = vmatmul.mubr.bf16.gmra.mrb[0].mxu0 %v844
    %v1032 = vpop.f32.mrb[0].mxu0
    %v1033 = vadd.f32 %v893, %v1032
    %v1034 = vpop.f32.mrb[0].mxu0
    %v1035 = vpop.f32.mrb[0].mxu0
    %v1036 = vadd.f32 %v893, %v1035
    %v1037 = vpop.f32.mrb[0].mxu0
    %1038 = vmatprep.mubr.bf16.mxu0 0
    %1039 = vmatmul.mubr.bf16.gmra.mrb[0].mxu0 %v849
    %v1040 = vpop.f32.mrb[0].mxu0
    %v1041 = vadd.f32 %v893, %v1040
    %v1042 = vpop.f32.mrb[0].mxu0
    %v1043 = vpop.f32.mrb[0].mxu0
    %v1044 = vadd.f32 %v893, %v1043
    %v1045 = vpop.f32.mrb[0].mxu0
    %1046 = vmatprep.mubr.bf16.mxu0 0
    %1047 = vmatmul.mubr.bf16.gmra.mrb[0].mxu0 %v854
    %v1048 = vpop.f32.mrb[0].mxu0
    %v1049 = vadd.f32 %v893, %v1048
    %v1050 = vpop.f32.mrb[0].mxu0
    %v1051 = vpop.f32.mrb[0].mxu0
    %v1052 = vadd.f32 %v893, %v1051
    %v1053 = vpop.f32.mrb[0].mxu0
    %1054 = vmatprep.mubr.bf16.mxu0 0
    %1055 = vmatmul.mubr.bf16.gmra.mrb[0].mxu0 %v859
    %v1056 = vpop.f32.mrb[0].mxu0
    %v1057 = vadd.f32 %v893, %v1056
    %v1058 = vpop.f32.mrb[0].mxu0
    %v1059 = vpop.f32.mrb[0].mxu0
    %v1060 = vadd.f32 %v893, %v1059
    %v1061 = vpop.f32.mrb[0].mxu0
    %1062 = vmatprep.mubr.bf16.mxu0 0
    %1063 = vmatmul.mubr.bf16.gmra.mrb[0].mxu0 %v864
    %v1064 = vpop.f32.mrb[0].mxu0
    %v1065 = vadd.f32 %v893, %v1064
    %v1066 = vpop.f32.mrb[0].mxu0
    %v1067 = vpop.f32.mrb[0].mxu0
    %v1068 = vadd.f32 %v893, %v1067
    %v1069 = vpop.f32.mrb[0].mxu0
    %1070 = vmatprep.mubr.bf16.mxu0 0
    %1071 = vmatmul.mubr.bf16.gmra.mrb[0].mxu0 %v869
    %v1072 = vpop.f32.mrb[0].mxu0
    %v1073 = vadd.f32 %v893, %v1072
    %v1074 = vpop.f32.mrb[0].mxu0
    %v1075 = vpop.f32.mrb[0].mxu0
    %v1076 = vadd.f32 %v893, %v1075
    %v1077 = vpop.f32.mrb[0].mxu0
    %1078 = vdwg.mxu0
    %v1079 = vmax.f32 %v977, 0.0
    %v1080 = vmax.f32 %v980, 0.0
    %v1081 = vmax.f32 %v985, 0.0
    %v1082 = vmax.f32 %v988, 0.0
    %v1083 = vmax.f32 %v993, 0.0
    %v1084 = vmax.f32 %v996, 0.0
    %v1085 = vmax.f32 %v1001, 0.0
    %v1086 = vmax.f32 %v1004, 0.0
    %v1087 = vmax.f32 %v1009, 0.0
    %v1088 = vmax.f32 %v1012, 0.0
    %v1089 = vmax.f32 %v1017, 0.0
    %v1090 = vmax.f32 %v1020, 0.0
    %v1091 = vmax.f32 %v1025, 0.0
    %v1092 = vmax.f32 %v1028, 0.0
    %v1093 = vmax.f32 %v1033, 0.0
    %v1094 = vmax.f32 %v1036, 0.0
    %v1095 = vmax.f32 %v1041, 0.0
    %v1096 = vmax.f32 %v1044, 0.0
    %v1097 = vmax.f32 %v1049, 0.0
    %v1098 = vmax.f32 %v1052, 0.0
    %v1099 = vmax.f32 %v1057, 0.0
    %v1100 = vmax.f32 %v1060, 0.0
    %v1101 = vmax.f32 %v1065, 0.0
    %v1102 = vmax.f32 %v1068, 0.0
    %v1103 = vmax.f32 %v1073, 0.0
    %v1104 = vmax.f32 %v1076, 0.0
    %v1105 = vlaneseq
    %v1106 = vshrl.u32 %v1105, 7
    %v1107 = vsub.s32 0, %v1106
    %v1108 = vrot.slane %v101, %v1107
    %v1109 = vmul.f32 %v1079, %v1108
    %v1110 = vmul.f32 %v1080, %v1108
    %v1111 = vmul.f32 %v1081, %v1108
    %v1112 = vmul.f32 %v1082, %v1108
    %v1113 = vmul.f32 %v1083, %v1108
    %v1114 = vmul.f32 %v1084, %v1108
    %v1115 = vmul.f32 %v1085, %v1108
    %v1116 = vmul.f32 %v1086, %v1108
    %v1117 = vmul.f32 %v1087, %v1108
    %v1118 = vmul.f32 %v1088, %v1108
    %v1119 = vmul.f32 %v1089, %v1108
    %v1120 = vmul.f32 %v1090, %v1108
    %v1121 = vmul.f32 %v1091, %v1108
    %v1122 = vmul.f32 %v1092, %v1108
    %v1123 = vmul.f32 %v1093, %v1108
    %v1124 = vmul.f32 %v1094, %v1108
    %v1125 = vmul.f32 %v1095, %v1108
    %v1126 = vmul.f32 %v1096, %v1108
    %v1127 = vmul.f32 %v1097, %v1108
    %v1128 = vmul.f32 %v1098, %v1108
    %v1129 = vmul.f32 %v1099, %v1108
    %v1130 = vmul.f32 %v1100, %v1108
    %v1131 = vmul.f32 %v1101, %v1108
    %v1132 = vmul.f32 %v1102, %v1108
    %v1133 = vmul.f32 %v1103, %v1108
    %v1134 = vmul.f32 %v1104, %v1108
    %vm1135 = vcmask 523264
    %v1136 = vsel %vm1135, %v1109, 0.0
    %1137 = vadd.xlane.f32.xlu0 %v1136
    %v1138 = vpop.xlane.xlu0 %1137
    %v1139 = vsel %vm1135, %v1110, 0.0
    %1140 = vadd.xlane.f32.xlu0 %v1139
    %v1141 = vpop.xlane.xlu0 %1140
    %v1142 = vsel %vm1135, %v1111, 0.0
    %1143 = vadd.xlane.f32.xlu0 %v1142
    %v1144 = vpop.xlane.xlu0 %1143
    %v1145 = vsel %vm1135, %v1112, 0.0
    %1146 = vadd.xlane.f32.xlu0 %v1145
    %v1147 = vpop.xlane.xlu0 %1146
    %v1148 = vsel %vm1135, %v1113, 0.0
    %1149 = vadd.xlane.f32.xlu0 %v1148
    %v1150 = vpop.xlane.xlu0 %1149
    %v1151 = vsel %vm1135, %v1114, 0.0
    %1152 = vadd.xlane.f32.xlu0 %v1151
    %v1153 = vpop.xlane.xlu0 %1152
    %v1154 = vsel %vm1135, %v1115, 0.0
    %1155 = vadd.xlane.f32.xlu0 %v1154
    %v1156 = vpop.xlane.xlu0 %1155
    %v1157 = vsel %vm1135, %v1116, 0.0
    %1158 = vadd.xlane.f32.xlu0 %v1157
    %v1159 = vpop.xlane.xlu0 %1158
    %v1160 = vsel %vm1135, %v1117, 0.0
    %1161 = vadd.xlane.f32.xlu0 %v1160
    %v1162 = vpop.xlane.xlu0 %1161
    %v1163 = vsel %vm1135, %v1118, 0.0
    %1164 = vadd.xlane.f32.xlu0 %v1163
    %v1165 = vpop.xlane.xlu0 %1164
    %v1166 = vsel %vm1135, %v1119, 0.0
    %1167 = vadd.xlane.f32.xlu0 %v1166
    %v1168 = vpop.xlane.xlu0 %1167
    %v1169 = vsel %vm1135, %v1120, 0.0
    %1170 = vadd.xlane.f32.xlu0 %v1169
    %v1171 = vpop.xlane.xlu0 %1170
    %v1172 = vsel %vm1135, %v1121, 0.0
    %1173 = vadd.xlane.f32.xlu0 %v1172
    %v1174 = vpop.xlane.xlu0 %1173
    %v1175 = vsel %vm1135, %v1122, 0.0
    %1176 = vadd.xlane.f32.xlu0 %v1175
    %v1177 = vpop.xlane.xlu0 %1176
    %v1178 = vsel %vm1135, %v1123, 0.0
    %1179 = vadd.xlane.f32.xlu0 %v1178
    %v1180 = vpop.xlane.xlu0 %1179
    %v1181 = vsel %vm1135, %v1124, 0.0
    %1182 = vadd.xlane.f32.xlu0 %v1181
    %v1183 = vpop.xlane.xlu0 %1182
    %v1184 = vsel %vm1135, %v1125, 0.0
    %1185 = vadd.xlane.f32.xlu0 %v1184
    %v1186 = vpop.xlane.xlu0 %1185
    %v1187 = vsel %vm1135, %v1126, 0.0
    %1188 = vadd.xlane.f32.xlu0 %v1187
    %v1189 = vpop.xlane.xlu0 %1188
    %v1190 = vsel %vm1135, %v1127, 0.0
    %1191 = vadd.xlane.f32.xlu0 %v1190
    %v1192 = vpop.xlane.xlu0 %1191
    %v1193 = vsel %vm1135, %v1128, 0.0
    %1194 = vadd.xlane.f32.xlu0 %v1193
    %v1195 = vpop.xlane.xlu0 %1194
    %v1196 = vsel %vm1135, %v1129, 0.0
    %1197 = vadd.xlane.f32.xlu0 %v1196
    %v1198 = vpop.xlane.xlu0 %1197
    %v1199 = vsel %vm1135, %v1130, 0.0
    %1200 = vadd.xlane.f32.xlu0 %v1199
    %v1201 = vpop.xlane.xlu0 %1200
    %v1202 = vsel %vm1135, %v1131, 0.0
    %1203 = vadd.xlane.f32.xlu0 %v1202
    %v1204 = vpop.xlane.xlu0 %1203
    %v1205 = vsel %vm1135, %v1132, 0.0
    %1206 = vadd.xlane.f32.xlu0 %v1205
    %v1207 = vpop.xlane.xlu0 %1206
    %v1208 = vsel %vm1135, %v1133, 0.0
    %1209 = vadd.xlane.f32.xlu0 %v1208
    %v1210 = vpop.xlane.xlu0 %1209
    %v1211 = vsel %vm1135, %v1134, 0.0
    %1212 = vadd.xlane.f32.xlu0 %v1211
    %v1213 = vpop.xlane.xlu0 %1212
    %v1215 = vlaneseq
    %v1216 = vshrl.u32 %v1215, 7
    %v1217 = vsub.s32 0, %v1216
    %v1218 = vrot.slane %v102, %v1217
    %v1220 = vadd.f32 %v1138, %v1218
    %v1221 = vadd.f32 %v1141, %v1218
    %v1222 = vadd.f32 %v1144, %v1218
    %v1223 = vadd.f32 %v1147, %v1218
    %v1224 = vadd.f32 %v1150, %v1218
    %v1225 = vadd.f32 %v1153, %v1218
    %v1226 = vadd.f32 %v1156, %v1218
    %v1227 = vadd.f32 %v1159, %v1218
    %v1228 = vadd.f32 %v1162, %v1218
    %v1229 = vadd.f32 %v1165, %v1218
    %v1230 = vadd.f32 %v1168, %v1218
    %v1231 = vadd.f32 %v1171, %v1218
    %v1232 = vadd.f32 %v1174, %v1218
    %v1233 = vadd.f32 %v1177, %v1218
    %v1234 = vadd.f32 %v1180, %v1218
    %v1235 = vadd.f32 %v1183, %v1218
    %v1236 = vadd.f32 %v1186, %v1218
    %v1237 = vadd.f32 %v1189, %v1218
    %v1238 = vadd.f32 %v1192, %v1218
    %v1239 = vadd.f32 %v1195, %v1218
    %v1240 = vadd.f32 %v1198, %v1218
    %v1241 = vadd.f32 %v1201, %v1218
    %v1242 = vadd.f32 %v1204, %v1218
    %v1243 = vadd.f32 %v1207, %v1218
    %v1244 = vadd.f32 %v1210, %v1218
    %v1245 = vadd.f32 %v1213, %v1218
    %v1246 = vxor.u32 %v1220, 2147483648
    %v1247 = vxor.u32 %v1221, 2147483648
    %v1248 = vxor.u32 %v1222, 2147483648
    %v1249 = vxor.u32 %v1223, 2147483648
    %v1250 = vxor.u32 %v1224, 2147483648
    %v1251 = vxor.u32 %v1225, 2147483648
    %v1252 = vxor.u32 %v1226, 2147483648
    %v1253 = vxor.u32 %v1227, 2147483648
    %v1254 = vxor.u32 %v1228, 2147483648
    %v1255 = vxor.u32 %v1229, 2147483648
    %v1256 = vxor.u32 %v1230, 2147483648
    %v1257 = vxor.u32 %v1231, 2147483648
    %v1258 = vxor.u32 %v1232, 2147483648
    %v1259 = vxor.u32 %v1233, 2147483648
    %v1260 = vxor.u32 %v1234, 2147483648
    %v1261 = vxor.u32 %v1235, 2147483648
    %v1262 = vxor.u32 %v1236, 2147483648
    %v1263 = vxor.u32 %v1237, 2147483648
    %v1264 = vxor.u32 %v1238, 2147483648
    %v1265 = vxor.u32 %v1239, 2147483648
    %v1266 = vxor.u32 %v1240, 2147483648
    %v1267 = vxor.u32 %v1241, 2147483648
    %v1268 = vxor.u32 %v1242, 2147483648
    %v1269 = vxor.u32 %v1243, 2147483648
    %v1270 = vxor.u32 %v1244, 2147483648
    %v1271 = vxor.u32 %v1245, 2147483648
    %v1272 = vmul.f32 %v1246, 1.442695
    %v1273 = vpow.pop %v1272
    %v1274 = vmul.f32 %v1247, 1.442695
    %v1275 = vpow.pop %v1274
    %v1276 = vmul.f32 %v1248, 1.442695
    %v1277 = vpow.pop %v1276
    %v1278 = vmul.f32 %v1249, 1.442695
    %v1279 = vpow.pop %v1278
    %v1280 = vmul.f32 %v1250, 1.442695
    %v1281 = vpow.pop %v1280
    %v1282 = vmul.f32 %v1251, 1.442695
    %v1283 = vpow.pop %v1282
    %v1284 = vmul.f32 %v1252, 1.442695
    %v1285 = vpow.pop %v1284
    %v1286 = vmul.f32 %v1253, 1.442695
    %v1287 = vpow.pop %v1286
    %v1288 = vmul.f32 %v1254, 1.442695
    %v1289 = vpow.pop %v1288
    %v1290 = vmul.f32 %v1255, 1.442695
    %v1291 = vpow.pop %v1290
    %v1292 = vmul.f32 %v1256, 1.442695
    %v1293 = vpow.pop %v1292
    %v1294 = vmul.f32 %v1257, 1.442695
    %v1295 = vpow.pop %v1294
    %v1296 = vmul.f32 %v1258, 1.442695
    %v1297 = vpow.pop %v1296
    %v1298 = vmul.f32 %v1259, 1.442695
    %v1299 = vpow.pop %v1298
    %v1300 = vmul.f32 %v1260, 1.442695
    %v1301 = vpow.pop %v1300
    %v1302 = vmul.f32 %v1261, 1.442695
    %v1303 = vpow.pop %v1302
    %v1304 = vmul.f32 %v1262, 1.442695
    %v1305 = vpow.pop %v1304
    %v1306 = vmul.f32 %v1263, 1.442695
    %v1307 = vpow.pop %v1306
    %v1308 = vmul.f32 %v1264, 1.442695
    %v1309 = vpow.pop %v1308
    %v1310 = vmul.f32 %v1265, 1.442695
    %v1311 = vpow.pop %v1310
    %v1312 = vmul.f32 %v1266, 1.442695
    %v1313 = vpow.pop %v1312
    %v1314 = vmul.f32 %v1267, 1.442695
    %v1315 = vpow.pop %v1314
    %v1316 = vmul.f32 %v1268, 1.442695
    %v1317 = vpow.pop %v1316
    %v1318 = vmul.f32 %v1269, 1.442695
    %v1319 = vpow.pop %v1318
    %v1320 = vmul.f32 %v1270, 1.442695
    %v1321 = vpow.pop %v1320
    %v1322 = vmul.f32 %v1271, 1.442695
    %v1323 = vpow.pop %v1322
    %v1324 = vadd.f32 %v1273, 1.0
    %v1325 = vadd.f32 %v1275, 1.0
    %v1326 = vadd.f32 %v1277, 1.0
    %v1327 = vadd.f32 %v1279, 1.0
    %v1328 = vadd.f32 %v1281, 1.0
    %v1329 = vadd.f32 %v1283, 1.0
    %v1330 = vadd.f32 %v1285, 1.0
    %v1331 = vadd.f32 %v1287, 1.0
    %v1332 = vadd.f32 %v1289, 1.0
    %v1333 = vadd.f32 %v1291, 1.0
    %v1334 = vadd.f32 %v1293, 1.0
    %v1335 = vadd.f32 %v1295, 1.0
    %v1336 = vadd.f32 %v1297, 1.0
    %v1337 = vadd.f32 %v1299, 1.0
    %v1338 = vadd.f32 %v1301, 1.0
    %v1339 = vadd.f32 %v1303, 1.0
    %v1340 = vadd.f32 %v1305, 1.0
    %v1341 = vadd.f32 %v1307, 1.0
    %v1342 = vadd.f32 %v1309, 1.0
    %v1343 = vadd.f32 %v1311, 1.0
    %v1344 = vadd.f32 %v1313, 1.0
    %v1345 = vadd.f32 %v1315, 1.0
    %v1346 = vadd.f32 %v1317, 1.0
    %v1347 = vadd.f32 %v1319, 1.0
    %v1348 = vadd.f32 %v1321, 1.0
    %v1349 = vadd.f32 %v1323, 1.0
    %v1350 = vrcp.pop %v1324
    %v1351 = vmul.f32 1.0, %v1350
    %v1352 = vrcp.pop %v1325
    %v1353 = vmul.f32 1.0, %v1352
    %v1354 = vrcp.pop %v1326
    %v1355 = vmul.f32 1.0, %v1354
    %v1356 = vrcp.pop %v1327
    %v1357 = vmul.f32 1.0, %v1356
    %v1358 = vrcp.pop %v1328
    %v1359 = vmul.f32 1.0, %v1358
    %v1360 = vrcp.pop %v1329
    %v1361 = vmul.f32 1.0, %v1360
    %v1362 = vrcp.pop %v1330
    %v1363 = vmul.f32 1.0, %v1362
    %v1364 = vrcp.pop %v1331
    %v1365 = vmul.f32 1.0, %v1364
    %v1366 = vrcp.pop %v1332
    %v1367 = vmul.f32 1.0, %v1366
    %v1368 = vrcp.pop %v1333
    %v1369 = vmul.f32 1.0, %v1368
    %v1370 = vrcp.pop %v1334
    %v1371 = vmul.f32 1.0, %v1370
    %v1372 = vrcp.pop %v1335
    %v1373 = vmul.f32 1.0, %v1372
    %v1374 = vrcp.pop %v1336
    %v1375 = vmul.f32 1.0, %v1374
    %v1376 = vrcp.pop %v1337
    %v1377 = vmul.f32 1.0, %v1376
    %v1378 = vrcp.pop %v1338
    %v1379 = vmul.f32 1.0, %v1378
    %v1380 = vrcp.pop %v1339
    %v1381 = vmul.f32 1.0, %v1380
    %v1382 = vrcp.pop %v1340
    %v1383 = vmul.f32 1.0, %v1382
    %v1384 = vrcp.pop %v1341
    %v1385 = vmul.f32 1.0, %v1384
    %v1386 = vrcp.pop %v1342
    %v1387 = vmul.f32 1.0, %v1386
    %v1388 = vrcp.pop %v1343
    %v1389 = vmul.f32 1.0, %v1388
    %v1390 = vrcp.pop %v1344
    %v1391 = vmul.f32 1.0, %v1390
    %v1392 = vrcp.pop %v1345
    %v1393 = vmul.f32 1.0, %v1392
    %v1394 = vrcp.pop %v1346
    %v1395 = vmul.f32 1.0, %v1394
    %v1396 = vrcp.pop %v1347
    %v1397 = vmul.f32 1.0, %v1396
    %v1398 = vrcp.pop %v1348
    %v1399 = vmul.f32 1.0, %v1398
    %v1400 = vrcp.pop %v1349
    %v1401 = vmul.f32 1.0, %v1400
    %1403 = vset.pattern.permute.xlu0 0
    %1404 = vperm.xlu0 %1403, %v1351
    %v1405 = vpop.permute.xlu0 %1404
    %1408 = vset.pattern.permute.xlu0 0
    %1409 = vperm.xlu0 %1408, %v1353
    %v1410 = vpop.permute.xlu0 %1409
    %1413 = vset.pattern.permute.xlu0 0
    %1414 = vperm.xlu0 %1413, %v1355
    %v1415 = vpop.permute.xlu0 %1414
    %1418 = vset.pattern.permute.xlu0 0
    %1419 = vperm.xlu0 %1418, %v1357
    %v1420 = vpop.permute.xlu0 %1419
    %1423 = vset.pattern.permute.xlu0 0
    %1424 = vperm.xlu0 %1423, %v1359
    %v1425 = vpop.permute.xlu0 %1424
    %1428 = vset.pattern.permute.xlu0 0
    %1429 = vperm.xlu0 %1428, %v1361
    %v1430 = vpop.permute.xlu0 %1429
    %1433 = vset.pattern.permute.xlu0 0
    %1434 = vperm.xlu0 %1433, %v1363
    %v1435 = vpop.permute.xlu0 %1434
    %1438 = vset.pattern.permute.xlu0 0
    %1439 = vperm.xlu0 %1438, %v1365
    %v1440 = vpop.permute.xlu0 %1439
    %1443 = vset.pattern.permute.xlu0 0
    %1444 = vperm.xlu0 %1443, %v1367
    %v1445 = vpop.permute.xlu0 %1444
    %1448 = vset.pattern.permute.xlu0 0
    %1449 = vperm.xlu0 %1448, %v1369
    %v1450 = vpop.permute.xlu0 %1449
    %1453 = vset.pattern.permute.xlu0 0
    %1454 = vperm.xlu0 %1453, %v1371
    %v1455 = vpop.permute.xlu0 %1454
    %1458 = vset.pattern.permute.xlu0 0
    %1459 = vperm.xlu0 %1458, %v1373
    %v1460 = vpop.permute.xlu0 %1459
    %1463 = vset.pattern.permute.xlu0 0
    %1464 = vperm.xlu0 %1463, %v1375
    %v1465 = vpop.permute.xlu0 %1464
    %1468 = vset.pattern.permute.xlu0 0
    %1469 = vperm.xlu0 %1468, %v1377
    %v1470 = vpop.permute.xlu0 %1469
    %1473 = vset.pattern.permute.xlu0 0
    %1474 = vperm.xlu0 %1473, %v1379
    %v1475 = vpop.permute.xlu0 %1474
    %1478 = vset.pattern.permute.xlu0 0
    %1479 = vperm.xlu0 %1478, %v1381
    %v1480 = vpop.permute.xlu0 %1479
    %1483 = vset.pattern.permute.xlu0 0
    %1484 = vperm.xlu0 %1483, %v1383
    %v1485 = vpop.permute.xlu0 %1484
    %1488 = vset.pattern.permute.xlu0 0
    %1489 = vperm.xlu0 %1488, %v1385
    %v1490 = vpop.permute.xlu0 %1489
    %1493 = vset.pattern.permute.xlu0 0
    %1494 = vperm.xlu0 %1493, %v1387
    %v1495 = vpop.permute.xlu0 %1494
    %1498 = vset.pattern.permute.xlu0 0
    %1499 = vperm.xlu0 %1498, %v1389
    %v1500 = vpop.permute.xlu0 %1499
    %1503 = vset.pattern.permute.xlu0 0
    %1504 = vperm.xlu0 %1503, %v1391
    %v1505 = vpop.permute.xlu0 %1504
    %1508 = vset.pattern.permute.xlu0 0
    %1509 = vperm.xlu0 %1508, %v1393
    %v1510 = vpop.permute.xlu0 %1509
    %1513 = vset.pattern.permute.xlu0 0
    %1514 = vperm.xlu0 %1513, %v1395
    %v1515 = vpop.permute.xlu0 %1514
    %1518 = vset.pattern.permute.xlu0 0
    %1519 = vperm.xlu0 %1518, %v1397
    %v1520 = vpop.permute.xlu0 %1519
    %1523 = vset.pattern.permute.xlu0 0
    %1524 = vperm.xlu0 %1523, %v1399
    %v1525 = vpop.permute.xlu0 %1524
    %1528 = vset.pattern.permute.xlu0 0
    %1529 = vperm.xlu0 %1528, %v1401
    %v1530 = vpop.permute.xlu0 %1529
    %v1532 = vlaneseq
    %v1533 = vshrl.u32 %v1532, 7
    %v1534 = vsub.s32 0, %v1533
    %v1535 = vrot.slane %v103, %v1534
    %v1536 = vmul.f32 %v1405, %v1535
    %v1537 = vmul.f32 %v1410, %v1535
    %v1538 = vmul.f32 %v1415, %v1535
    %v1539 = vmul.f32 %v1420, %v1535
    %v1540 = vmul.f32 %v1425, %v1535
    %v1541 = vmul.f32 %v1430, %v1535
    %v1542 = vmul.f32 %v1435, %v1535
    %v1543 = vmul.f32 %v1440, %v1535
    %v1544 = vmul.f32 %v1445, %v1535
    %v1545 = vmul.f32 %v1450, %v1535
    %v1546 = vmul.f32 %v1455, %v1535
    %v1547 = vmul.f32 %v1460, %v1535
    %v1548 = vmul.f32 %v1465, %v1535
    %v1549 = vmul.f32 %v1470, %v1535
    %v1550 = vmul.f32 %v1475, %v1535
    %v1551 = vmul.f32 %v1480, %v1535
    %v1552 = vmul.f32 %v1485, %v1535
    %v1553 = vmul.f32 %v1490, %v1535
    %v1554 = vmul.f32 %v1495, %v1535
    %v1555 = vmul.f32 %v1500, %v1535
    %v1556 = vmul.f32 %v1505, %v1535
    %v1557 = vmul.f32 %v1510, %v1535
    %v1558 = vmul.f32 %v1515, %v1535
    %v1559 = vmul.f32 %v1520, %v1535
    %v1560 = vmul.f32 %v1525, %v1535
    %v1561 = vmul.f32 %v1530, %v1535
    %v1562 = vadd.f32 %v1536, 0.0
    %v1563 = vadd.f32 %v1537, 0.0
    %v1564 = vadd.f32 %v1538, 0.0
    %v1565 = vadd.f32 %v1539, 0.0
    %v1566 = vadd.f32 %v1540, 0.0
    %v1567 = vadd.f32 %v1541, 0.0
    %v1568 = vadd.f32 %v1542, 0.0
    %v1569 = vadd.f32 %v1543, 0.0
    %v1570 = vadd.f32 %v1544, 0.0
    %v1571 = vadd.f32 %v1545, 0.0
    %v1572 = vadd.f32 %v1546, 0.0
    %v1573 = vadd.f32 %v1547, 0.0
    %v1574 = vadd.f32 %v1548, 0.0
    %v1575 = vadd.f32 %v1549, 0.0
    %v1576 = vadd.f32 %v1550, 0.0
    %v1577 = vadd.f32 %v1551, 0.0
    %v1578 = vadd.f32 %v1552, 0.0
    %v1579 = vadd.f32 %v1553, 0.0
    %v1580 = vadd.f32 %v1554, 0.0
    %v1581 = vadd.f32 %v1555, 0.0
    %v1582 = vadd.f32 %v1556, 0.0
    %v1583 = vadd.f32 %v1557, 0.0
    %v1584 = vadd.f32 %v1558, 0.0
    %v1585 = vadd.f32 %v1559, 0.0
    %v1586 = vadd.f32 %v1560, 0.0
    %v1587 = vadd.f32 %v1561, 0.0
    %s1588 = scalar_lea.vmem %s3, 64
    %v1589 = vld [vmem:[%s1588] sm:$0xf]
    %v1590 = vld [vmem:[%s1588 + $0x4] sm:$0xf]
    %v1591 = vld [vmem:[%s1588 + $0x8] sm:$0xf]
    %v1592 = vld [vmem:[%s1588 + $0xc] sm:$0xf]
    %v1593 = vld [vmem:[%s1588 + $0x10] sm:$0xf]
    %v1594 = vld [vmem:[%s1588 + $0x14] sm:$0xf]
    %v1595 = vld [vmem:[%s1588 + $0x18] sm:$0xf]
    %v1596 = vld [vmem:[%s1588 + $0x1c] sm:$0xf]
    %v1597 = vld [vmem:[%s1588 + $0x20] sm:$0xf]
    %v1598 = vld [vmem:[%s1588 + $0x24] sm:$0xf]
    %v1599 = vld [vmem:[%s1588 + $0x28] sm:$0xf]
    %v1600 = vld [vmem:[%s1588 + $0x2c] sm:$0xf]
    %v1601 = vld [vmem:[%s1588 + $0x30] sm:$0xf]
    %v1602 = vld [vmem:[%s1588 + $0x34] sm:$0xf]
    %v1603 = vld [vmem:[%s1588 + $0x38] sm:$0xf]
    %v1604 = vld [vmem:[%s1588 + $0x3c] sm:$0xf]
    %v1605 = vlaneseq
    %v1606 = vshrl.u32 %v1605, 7
    %v1607 = vsub.s32 1, %v1606
    %v1608 = vrot.slane %v100, %v1607
    %v1625 = vunpack.c.l.b16 %v1589
    %v1626 = vunpack.c.l.b16 %v1590
    %v1627 = vunpack.c.l.b16 %v1591
    %v1628 = vunpack.c.l.b16 %v1592
    %v1629 = vunpack.c.l.b16 %v1593
    %v1630 = vunpack.c.l.b16 %v1594
    %v1631 = vunpack.c.l.b16 %v1595
    %v1632 = vunpack.c.l.b16 %v1596
    %v1633 = vunpack.c.l.b16 %v1597
    %v1634 = vunpack.c.l.b16 %v1598
    %v1635 = vunpack.c.l.b16 %v1599
    %v1636 = vunpack.c.l.b16 %v1600
    %v1637 = vunpack.c.l.b16 %v1601
    %v1638 = vunpack.c.l.b16 %v1602
    %v1639 = vunpack.c.l.b16 %v1603
    %v1640 = vunpack.c.l.b16 %v1604
    %v1641 = vpack.c.b16 %v1626, %v1625
    %v1642 = vpack.c.b16 %v1628, %v1627
    %v1643 = vpack.c.b16 %v1630, %v1629
    %v1644 = vpack.c.b16 %v1632, %v1631
    %v1645 = vpack.c.b16 %v1634, %v1633
    %v1646 = vpack.c.b16 %v1636, %v1635
    %v1647 = vpack.c.b16 %v1638, %v1637
    %v1648 = vpack.c.b16 %v1640, %v1639
    %1657 = vmatprep.subr.bf16.mxu0 0
    %1658 = vmatpush1.bf16.msra.mxu0 %v1641
    %1659 = vmatprep.subr.bf16.mxu0 0
    %1660 = vmatpush1.bf16.msra.mxu0 %v1642
    %1661 = vmatprep.subr.bf16.mxu0 0
    %1662 = vmatpush1.bf16.msra.mxu0 %v1643
    %1663 = vmatprep.subr.bf16.mxu0 0
    %1664 = vmatpush1.bf16.msra.mxu0 %v1644
    %1665 = vmatprep.subr.bf16.mxu0 0
    %1666 = vmatpush1.bf16.msra.mxu0 %v1645
    %1667 = vmatprep.subr.bf16.mxu0 0
    %1668 = vmatpush1.bf16.msra.mxu0 %v1646
    %1669 = vmatprep.subr.bf16.mxu0 0
    %1670 = vmatpush1.bf16.msra.mxu0 %v1647
    %1671 = vmatprep.subr.bf16.mxu0 0
    %1672 = vmatpush1.bf16.msra.mxu0 %v1648
    %1673 = vmatprep.subr.bf16.mxu0 0
    %1674 = vmatpush1.bf16.msra.mxu0 0
    %1675 = vmatprep.subr.bf16.mxu0 0
    %1676 = vmatpush1.bf16.msra.mxu0 0
    %1677 = vmatprep.subr.bf16.mxu0 0
    %1678 = vmatpush1.bf16.msra.mxu0 0
    %1679 = vmatprep.subr.bf16.mxu0 0
    %1680 = vmatpush1.bf16.msra.mxu0 0
    %1681 = vmatprep.subr.bf16.mxu0 0
    %1682 = vmatpush1.bf16.msra.mxu0 0
    %1683 = vmatprep.subr.bf16.mxu0 0
    %1684 = vmatpush1.bf16.msra.mxu0 0
    %1685 = vmatprep.subr.bf16.mxu0 0
    %1686 = vmatpush1.bf16.msra.mxu0 0
    %1687 = vmatprep.subr.bf16.mxu0 0
    %1688 = vmatpush1.bf16.msra.mxu0 0
    %1689 = vmatprep.mubr.bf16.mxu0 0
    %1690 = vmatmul.mubr.bf16.gmra.mrb[0].mxu0 %v810
    %v1691 = vpop.f32.mrb[0].mxu0
    %v1692 = vadd.f32 %v1608, %v1691
    %v1693 = vpop.f32.mrb[0].mxu0
    %v1694 = vpop.f32.mrb[0].mxu0
    %v1695 = vadd.f32 %v1608, %v1694
    %v1696 = vpop.f32.mrb[0].mxu0
    %1697 = vmatprep.mubr.bf16.mxu0 0
    %1698 = vmatmul.mubr.bf16.gmra.mrb[0].mxu0 %v815
    %v1699 = vpop.f32.mrb[0].mxu0
    %v1700 = vadd.f32 %v1608, %v1699
    %v1701 = vpop.f32.mrb[0].mxu0
    %v1702 = vpop.f32.mrb[0].mxu0
    %v1703 = vadd.f32 %v1608, %v1702
    %v1704 = vpop.f32.mrb[0].mxu0
    %1705 = vmatprep.mubr.bf16.mxu0 0
    %1706 = vmatmul.mubr.bf16.gmra.mrb[0].mxu0 %v820
    %v1707 = vpop.f32.mrb[0].mxu0
    %v1708 = vadd.f32 %v1608, %v1707
    %v1709 = vpop.f32.mrb[0].mxu0
    %v1710 = vpop.f32.mrb[0].mxu0
    %v1711 = vadd.f32 %v1608, %v1710
    %v1712 = vpop.f32.mrb[0].mxu0
    %1713 = vmatprep.mubr.bf16.mxu0 0
    %1714 = vmatmul.mubr.bf16.gmra.mrb[0].mxu0 %v825
    %v1715 = vpop.f32.mrb[0].mxu0
    %v1716 = vadd.f32 %v1608, %v1715
    %v1717 = vpop.f32.mrb[0].mxu0
    %v1718 = vpop.f32.mrb[0].mxu0
    %v1719 = vadd.f32 %v1608, %v1718
    %v1720 = vpop.f32.mrb[0].mxu0
    %1721 = vmatprep.mubr.bf16.mxu0 0
    %1722 = vmatmul.mubr.bf16.gmra.mrb[0].mxu0 %v830
    %v1723 = vpop.f32.mrb[0].mxu0
    %v1724 = vadd.f32 %v1608, %v1723
    %v1725 = vpop.f32.mrb[0].mxu0
    %v1726 = vpop.f32.mrb[0].mxu0
    %v1727 = vadd.f32 %v1608, %v1726
    %v1728 = vpop.f32.mrb[0].mxu0
    %1729 = vmatprep.mubr.bf16.mxu0 0
    %1730 = vmatmul.mubr.bf16.gmra.mrb[0].mxu0 %v835
    %v1731 = vpop.f32.mrb[0].mxu0
    %v1732 = vadd.f32 %v1608, %v1731
    %v1733 = vpop.f32.mrb[0].mxu0
    %v1734 = vpop.f32.mrb[0].mxu0
    %v1735 = vadd.f32 %v1608, %v1734
    %v1736 = vpop.f32.mrb[0].mxu0
    %1737 = vmatprep.mubr.bf16.mxu0 0
    %1738 = vmatmul.mubr.bf16.gmra.mrb[0].mxu0 %v840
    %v1739 = vpop.f32.mrb[0].mxu0
    %v1740 = vadd.f32 %v1608, %v1739
    %v1741 = vpop.f32.mrb[0].mxu0
    %v1742 = vpop.f32.mrb[0].mxu0
    %v1743 = vadd.f32 %v1608, %v1742
    %v1744 = vpop.f32.mrb[0].mxu0
    %1745 = vmatprep.mubr.bf16.mxu0 0
    %1746 = vmatmul.mubr.bf16.gmra.mrb[0].mxu0 %v845
    %v1747 = vpop.f32.mrb[0].mxu0
    %v1748 = vadd.f32 %v1608, %v1747
    %v1749 = vpop.f32.mrb[0].mxu0
    %v1750 = vpop.f32.mrb[0].mxu0
    %v1751 = vadd.f32 %v1608, %v1750
    %v1752 = vpop.f32.mrb[0].mxu0
    %1753 = vmatprep.mubr.bf16.mxu0 0
    %1754 = vmatmul.mubr.bf16.gmra.mrb[0].mxu0 %v850
    %v1755 = vpop.f32.mrb[0].mxu0
    %v1756 = vadd.f32 %v1608, %v1755
    %v1757 = vpop.f32.mrb[0].mxu0
    %v1758 = vpop.f32.mrb[0].mxu0
    %v1759 = vadd.f32 %v1608, %v1758
    %v1760 = vpop.f32.mrb[0].mxu0
    %1761 = vmatprep.mubr.bf16.mxu0 0
    %1762 = vmatmul.mubr.bf16.gmra.mrb[0].mxu0 %v855
    %v1763 = vpop.f32.mrb[0].mxu0
    %v1764 = vadd.f32 %v1608, %v1763
    %v1765 = vpop.f32.mrb[0].mxu0
    %v1766 = vpop.f32.mrb[0].mxu0
    %v1767 = vadd.f32 %v1608, %v1766
    %v1768 = vpop.f32.mrb[0].mxu0
    %1769 = vmatprep.mubr.bf16.mxu0 0
    %1770 = vmatmul.mubr.bf16.gmra.mrb[0].mxu0 %v860
    %v1771 = vpop.f32.mrb[0].mxu0
    %v1772 = vadd.f32 %v1608, %v1771
    %v1773 = vpop.f32.mrb[0].mxu0
    %v1774 = vpop.f32.mrb[0].mxu0
    %v1775 = vadd.f32 %v1608, %v1774
    %v1776 = vpop.f32.mrb[0].mxu0
    %1777 = vmatprep.mubr.bf16.mxu0 0
    %1778 = vmatmul.mubr.bf16.gmra.mrb[0].mxu0 %v865
    %v1779 = vpop.f32.mrb[0].mxu0
    %v1780 = vadd.f32 %v1608, %v1779
    %v1781 = vpop.f32.mrb[0].mxu0
    %v1782 = vpop.f32.mrb[0].mxu0
    %v1783 = vadd.f32 %v1608, %v1782
    %v1784 = vpop.f32.mrb[0].mxu0
    %1785 = vmatprep.mubr.bf16.mxu0 0
    %1786 = vmatmul.mubr.bf16.gmra.mrb[0].mxu0 %v870
    %v1787 = vpop.f32.mrb[0].mxu0
    %v1788 = vadd.f32 %v1608, %v1787
    %v1789 = vpop.f32.mrb[0].mxu0
    %v1790 = vpop.f32.mrb[0].mxu0
    %v1791 = vadd.f32 %v1608, %v1790
    %v1792 = vpop.f32.mrb[0].mxu0
    %1793 = vdwg.mxu0
    %v1794 = vmax.f32 %v1692, 0.0
    %v1795 = vmax.f32 %v1695, 0.0
    %v1796 = vmax.f32 %v1700, 0.0
    %v1797 = vmax.f32 %v1703, 0.0
    %v1798 = vmax.f32 %v1708, 0.0
    %v1799 = vmax.f32 %v1711, 0.0
    %v1800 = vmax.f32 %v1716, 0.0
    %v1801 = vmax.f32 %v1719, 0.0
    %v1802 = vmax.f32 %v1724, 0.0
    %v1803 = vmax.f32 %v1727, 0.0
    %v1804 = vmax.f32 %v1732, 0.0
    %v1805 = vmax.f32 %v1735, 0.0
    %v1806 = vmax.f32 %v1740, 0.0
    %v1807 = vmax.f32 %v1743, 0.0
    %v1808 = vmax.f32 %v1748, 0.0
    %v1809 = vmax.f32 %v1751, 0.0
    %v1810 = vmax.f32 %v1756, 0.0
    %v1811 = vmax.f32 %v1759, 0.0
    %v1812 = vmax.f32 %v1764, 0.0
    %v1813 = vmax.f32 %v1767, 0.0
    %v1814 = vmax.f32 %v1772, 0.0
    %v1815 = vmax.f32 %v1775, 0.0
    %v1816 = vmax.f32 %v1780, 0.0
    %v1817 = vmax.f32 %v1783, 0.0
    %v1818 = vmax.f32 %v1788, 0.0
    %v1819 = vmax.f32 %v1791, 0.0
    %v1820 = vlaneseq
    %v1821 = vshrl.u32 %v1820, 7
    %v1822 = vsub.s32 1, %v1821
    %v1823 = vrot.slane %v101, %v1822
    %v1824 = vmul.f32 %v1794, %v1823
    %v1825 = vmul.f32 %v1795, %v1823
    %v1826 = vmul.f32 %v1796, %v1823
    %v1827 = vmul.f32 %v1797, %v1823
    %v1828 = vmul.f32 %v1798, %v1823
    %v1829 = vmul.f32 %v1799, %v1823
    %v1830 = vmul.f32 %v1800, %v1823
    %v1831 = vmul.f32 %v1801, %v1823
    %v1832 = vmul.f32 %v1802, %v1823
    %v1833 = vmul.f32 %v1803, %v1823
    %v1834 = vmul.f32 %v1804, %v1823
    %v1835 = vmul.f32 %v1805, %v1823
    %v1836 = vmul.f32 %v1806, %v1823
    %v1837 = vmul.f32 %v1807, %v1823
    %v1838 = vmul.f32 %v1808, %v1823
    %v1839 = vmul.f32 %v1809, %v1823
    %v1840 = vmul.f32 %v1810, %v1823
    %v1841 = vmul.f32 %v1811, %v1823
    %v1842 = vmul.f32 %v1812, %v1823
    %v1843 = vmul.f32 %v1813, %v1823
    %v1844 = vmul.f32 %v1814, %v1823
    %v1845 = vmul.f32 %v1815, %v1823
    %v1846 = vmul.f32 %v1816, %v1823
    %v1847 = vmul.f32 %v1817, %v1823
    %v1848 = vmul.f32 %v1818, %v1823
    %v1849 = vmul.f32 %v1819, %v1823
    %v1850 = vsel %vm1135, %v1824, 0.0
    %1851 = vadd.xlane.f32.xlu0 %v1850
    %v1852 = vpop.xlane.xlu0 %1851
    %v1853 = vsel %vm1135, %v1825, 0.0
    %1854 = vadd.xlane.f32.xlu0 %v1853
    %v1855 = vpop.xlane.xlu0 %1854
    %v1856 = vsel %vm1135, %v1826, 0.0
    %1857 = vadd.xlane.f32.xlu0 %v1856
    %v1858 = vpop.xlane.xlu0 %1857
    %v1859 = vsel %vm1135, %v1827, 0.0
    %1860 = vadd.xlane.f32.xlu0 %v1859
    %v1861 = vpop.xlane.xlu0 %1860
    %v1862 = vsel %vm1135, %v1828, 0.0
    %1863 = vadd.xlane.f32.xlu0 %v1862
    %v1864 = vpop.xlane.xlu0 %1863
    %v1865 = vsel %vm1135, %v1829, 0.0
    %1866 = vadd.xlane.f32.xlu0 %v1865
    %v1867 = vpop.xlane.xlu0 %1866
    %v1868 = vsel %vm1135, %v1830, 0.0
    %1869 = vadd.xlane.f32.xlu0 %v1868
    %v1870 = vpop.xlane.xlu0 %1869
    %v1871 = vsel %vm1135, %v1831, 0.0
    %1872 = vadd.xlane.f32.xlu0 %v1871
    %v1873 = vpop.xlane.xlu0 %1872
    %v1874 = vsel %vm1135, %v1832, 0.0
    %1875 = vadd.xlane.f32.xlu0 %v1874
    %v1876 = vpop.xlane.xlu0 %1875
    %v1877 = vsel %vm1135, %v1833, 0.0
    %1878 = vadd.xlane.f32.xlu0 %v1877
    %v1879 = vpop.xlane.xlu0 %1878
    %v1880 = vsel %vm1135, %v1834, 0.0
    %1881 = vadd.xlane.f32.xlu0 %v1880
    %v1882 = vpop.xlane.xlu0 %1881
    %v1883 = vsel %vm1135, %v1835, 0.0
    %1884 = vadd.xlane.f32.xlu0 %v1883
    %v1885 = vpop.xlane.xlu0 %1884
    %v1886 = vsel %vm1135, %v1836, 0.0
    %1887 = vadd.xlane.f32.xlu0 %v1886
    %v1888 = vpop.xlane.xlu0 %1887
    %v1889 = vsel %vm1135, %v1837, 0.0
    %1890 = vadd.xlane.f32.xlu0 %v1889
    %v1891 = vpop.xlane.xlu0 %1890
    %v1892 = vsel %vm1135, %v1838, 0.0
    %1893 = vadd.xlane.f32.xlu0 %v1892
    %v1894 = vpop.xlane.xlu0 %1893
    %v1895 = vsel %vm1135, %v1839, 0.0
    %1896 = vadd.xlane.f32.xlu0 %v1895
    %v1897 = vpop.xlane.xlu0 %1896
    %v1898 = vsel %vm1135, %v1840, 0.0
    %1899 = vadd.xlane.f32.xlu0 %v1898
    %v1900 = vpop.xlane.xlu0 %1899
    %v1901 = vsel %vm1135, %v1841, 0.0
    %1902 = vadd.xlane.f32.xlu0 %v1901
    %v1903 = vpop.xlane.xlu0 %1902
    %v1904 = vsel %vm1135, %v1842, 0.0
    %1905 = vadd.xlane.f32.xlu0 %v1904
    %v1906 = vpop.xlane.xlu0 %1905
    %v1907 = vsel %vm1135, %v1843, 0.0
    %1908 = vadd.xlane.f32.xlu0 %v1907
    %v1909 = vpop.xlane.xlu0 %1908
    %v1910 = vsel %vm1135, %v1844, 0.0
    %1911 = vadd.xlane.f32.xlu0 %v1910
    %v1912 = vpop.xlane.xlu0 %1911
    %v1913 = vsel %vm1135, %v1845, 0.0
    %1914 = vadd.xlane.f32.xlu0 %v1913
    %v1915 = vpop.xlane.xlu0 %1914
    %v1916 = vsel %vm1135, %v1846, 0.0
    %1917 = vadd.xlane.f32.xlu0 %v1916
    %v1918 = vpop.xlane.xlu0 %1917
    %v1919 = vsel %vm1135, %v1847, 0.0
    %1920 = vadd.xlane.f32.xlu0 %v1919
    %v1921 = vpop.xlane.xlu0 %1920
    %v1922 = vsel %vm1135, %v1848, 0.0
    %1923 = vadd.xlane.f32.xlu0 %v1922
    %v1924 = vpop.xlane.xlu0 %1923
    %v1925 = vsel %vm1135, %v1849, 0.0
    %1926 = vadd.xlane.f32.xlu0 %v1925
    %v1927 = vpop.xlane.xlu0 %1926
    %v1928 = vadd.f32 %v1852, %v1218
    %v1929 = vadd.f32 %v1855, %v1218
    %v1930 = vadd.f32 %v1858, %v1218
    %v1931 = vadd.f32 %v1861, %v1218
    %v1932 = vadd.f32 %v1864, %v1218
    %v1933 = vadd.f32 %v1867, %v1218
    %v1934 = vadd.f32 %v1870, %v1218
    %v1935 = vadd.f32 %v1873, %v1218
    %v1936 = vadd.f32 %v1876, %v1218
    %v1937 = vadd.f32 %v1879, %v1218
    %v1938 = vadd.f32 %v1882, %v1218
    %v1939 = vadd.f32 %v1885, %v1218
    %v1940 = vadd.f32 %v1888, %v1218
    %v1941 = vadd.f32 %v1891, %v1218
    %v1942 = vadd.f32 %v1894, %v1218
    %v1943 = vadd.f32 %v1897, %v1218
    %v1944 = vadd.f32 %v1900, %v1218
    %v1945 = vadd.f32 %v1903, %v1218
    %v1946 = vadd.f32 %v1906, %v1218
    %v1947 = vadd.f32 %v1909, %v1218
    %v1948 = vadd.f32 %v1912, %v1218
    %v1949 = vadd.f32 %v1915, %v1218
    %v1950 = vadd.f32 %v1918, %v1218
    %v1951 = vadd.f32 %v1921, %v1218
    %v1952 = vadd.f32 %v1924, %v1218
    %v1953 = vadd.f32 %v1927, %v1218
    %v1954 = vxor.u32 %v1928, 2147483648
    %v1955 = vxor.u32 %v1929, 2147483648
    %v1956 = vxor.u32 %v1930, 2147483648
    %v1957 = vxor.u32 %v1931, 2147483648
    %v1958 = vxor.u32 %v1932, 2147483648
    %v1959 = vxor.u32 %v1933, 2147483648
    %v1960 = vxor.u32 %v1934, 2147483648
    %v1961 = vxor.u32 %v1935, 2147483648
    %v1962 = vxor.u32 %v1936, 2147483648
    %v1963 = vxor.u32 %v1937, 2147483648
    %v1964 = vxor.u32 %v1938, 2147483648
    %v1965 = vxor.u32 %v1939, 2147483648
    %v1966 = vxor.u32 %v1940, 2147483648
    %v1967 = vxor.u32 %v1941, 2147483648
    %v1968 = vxor.u32 %v1942, 2147483648
    %v1969 = vxor.u32 %v1943, 2147483648
    %v1970 = vxor.u32 %v1944, 2147483648
    %v1971 = vxor.u32 %v1945, 2147483648
    %v1972 = vxor.u32 %v1946, 2147483648
    %v1973 = vxor.u32 %v1947, 2147483648
    %v1974 = vxor.u32 %v1948, 2147483648
    %v1975 = vxor.u32 %v1949, 2147483648
    %v1976 = vxor.u32 %v1950, 2147483648
    %v1977 = vxor.u32 %v1951, 2147483648
    %v1978 = vxor.u32 %v1952, 2147483648
    %v1979 = vxor.u32 %v1953, 2147483648
    %v1980 = vmul.f32 %v1954, 1.442695
    %v1981 = vpow.pop %v1980
    %v1982 = vmul.f32 %v1955, 1.442695
    %v1983 = vpow.pop %v1982
    %v1984 = vmul.f32 %v1956, 1.442695
    %v1985 = vpow.pop %v1984
    %v1986 = vmul.f32 %v1957, 1.442695
    %v1987 = vpow.pop %v1986
    %v1988 = vmul.f32 %v1958, 1.442695
    %v1989 = vpow.pop %v1988
    %v1990 = vmul.f32 %v1959, 1.442695
    %v1991 = vpow.pop %v1990
    %v1992 = vmul.f32 %v1960, 1.442695
    %v1993 = vpow.pop %v1992
    %v1994 = vmul.f32 %v1961, 1.442695
    %v1995 = vpow.pop %v1994
    %v1996 = vmul.f32 %v1962, 1.442695
    %v1997 = vpow.pop %v1996
    %v1998 = vmul.f32 %v1963, 1.442695
    %v1999 = vpow.pop %v1998
    %v2000 = vmul.f32 %v1964, 1.442695
    %v2001 = vpow.pop %v2000
    %v2002 = vmul.f32 %v1965, 1.442695
    %v2003 = vpow.pop %v2002
    %v2004 = vmul.f32 %v1966, 1.442695
    %v2005 = vpow.pop %v2004
    %v2006 = vmul.f32 %v1967, 1.442695
    %v2007 = vpow.pop %v2006
    %v2008 = vmul.f32 %v1968, 1.442695
    %v2009 = vpow.pop %v2008
    %v2010 = vmul.f32 %v1969, 1.442695
    %v2011 = vpow.pop %v2010
    %v2012 = vmul.f32 %v1970, 1.442695
    %v2013 = vpow.pop %v2012
    %v2014 = vmul.f32 %v1971, 1.442695
    %v2015 = vpow.pop %v2014
    %v2016 = vmul.f32 %v1972, 1.442695
    %v2017 = vpow.pop %v2016
    %v2018 = vmul.f32 %v1973, 1.442695
    %v2019 = vpow.pop %v2018
    %v2020 = vmul.f32 %v1974, 1.442695
    %v2021 = vpow.pop %v2020
    %v2022 = vmul.f32 %v1975, 1.442695
    %v2023 = vpow.pop %v2022
    %v2024 = vmul.f32 %v1976, 1.442695
    %v2025 = vpow.pop %v2024
    %v2026 = vmul.f32 %v1977, 1.442695
    %v2027 = vpow.pop %v2026
    %v2028 = vmul.f32 %v1978, 1.442695
    %v2029 = vpow.pop %v2028
    %v2030 = vmul.f32 %v1979, 1.442695
    %v2031 = vpow.pop %v2030
    %v2032 = vadd.f32 %v1981, 1.0
    %v2033 = vadd.f32 %v1983, 1.0
    %v2034 = vadd.f32 %v1985, 1.0
    %v2035 = vadd.f32 %v1987, 1.0
    %v2036 = vadd.f32 %v1989, 1.0
    %v2037 = vadd.f32 %v1991, 1.0
    %v2038 = vadd.f32 %v1993, 1.0
    %v2039 = vadd.f32 %v1995, 1.0
    %v2040 = vadd.f32 %v1997, 1.0
    %v2041 = vadd.f32 %v1999, 1.0
    %v2042 = vadd.f32 %v2001, 1.0
    %v2043 = vadd.f32 %v2003, 1.0
    %v2044 = vadd.f32 %v2005, 1.0
    %v2045 = vadd.f32 %v2007, 1.0
    %v2046 = vadd.f32 %v2009, 1.0
    %v2047 = vadd.f32 %v2011, 1.0
    %v2048 = vadd.f32 %v2013, 1.0
    %v2049 = vadd.f32 %v2015, 1.0
    %v2050 = vadd.f32 %v2017, 1.0
    %v2051 = vadd.f32 %v2019, 1.0
    %v2052 = vadd.f32 %v2021, 1.0
    %v2053 = vadd.f32 %v2023, 1.0
    %v2054 = vadd.f32 %v2025, 1.0
    %v2055 = vadd.f32 %v2027, 1.0
    %v2056 = vadd.f32 %v2029, 1.0
    %v2057 = vadd.f32 %v2031, 1.0
    %v2058 = vrcp.pop %v2032
    %v2059 = vmul.f32 1.0, %v2058
    %v2060 = vrcp.pop %v2033
    %v2061 = vmul.f32 1.0, %v2060
    %v2062 = vrcp.pop %v2034
    %v2063 = vmul.f32 1.0, %v2062
    %v2064 = vrcp.pop %v2035
    %v2065 = vmul.f32 1.0, %v2064
    %v2066 = vrcp.pop %v2036
    %v2067 = vmul.f32 1.0, %v2066
    %v2068 = vrcp.pop %v2037
    %v2069 = vmul.f32 1.0, %v2068
    %v2070 = vrcp.pop %v2038
    %v2071 = vmul.f32 1.0, %v2070
    %v2072 = vrcp.pop %v2039
    %v2073 = vmul.f32 1.0, %v2072
    %v2074 = vrcp.pop %v2040
    %v2075 = vmul.f32 1.0, %v2074
    %v2076 = vrcp.pop %v2041
    %v2077 = vmul.f32 1.0, %v2076
    %v2078 = vrcp.pop %v2042
    %v2079 = vmul.f32 1.0, %v2078
    %v2080 = vrcp.pop %v2043
    %v2081 = vmul.f32 1.0, %v2080
    %v2082 = vrcp.pop %v2044
    %v2083 = vmul.f32 1.0, %v2082
    %v2084 = vrcp.pop %v2045
    %v2085 = vmul.f32 1.0, %v2084
    %v2086 = vrcp.pop %v2046
    %v2087 = vmul.f32 1.0, %v2086
    %v2088 = vrcp.pop %v2047
    %v2089 = vmul.f32 1.0, %v2088
    %v2090 = vrcp.pop %v2048
    %v2091 = vmul.f32 1.0, %v2090
    %v2092 = vrcp.pop %v2049
    %v2093 = vmul.f32 1.0, %v2092
    %v2094 = vrcp.pop %v2050
    %v2095 = vmul.f32 1.0, %v2094
    %v2096 = vrcp.pop %v2051
    %v2097 = vmul.f32 1.0, %v2096
    %v2098 = vrcp.pop %v2052
    %v2099 = vmul.f32 1.0, %v2098
    %v2100 = vrcp.pop %v2053
    %v2101 = vmul.f32 1.0, %v2100
    %v2102 = vrcp.pop %v2054
    %v2103 = vmul.f32 1.0, %v2102
    %v2104 = vrcp.pop %v2055
    %v2105 = vmul.f32 1.0, %v2104
    %v2106 = vrcp.pop %v2056
    %v2107 = vmul.f32 1.0, %v2106
    %v2108 = vrcp.pop %v2057
    %v2109 = vmul.f32 1.0, %v2108
    %2111 = vset.pattern.permute.xlu0 1
    %2112 = vperm.xlu0 %2111, %v2059
    %v2113 = vpop.permute.xlu0 %2112
    %2116 = vset.pattern.permute.xlu0 1
    %2117 = vperm.xlu0 %2116, %v2061
    %v2118 = vpop.permute.xlu0 %2117
    %2121 = vset.pattern.permute.xlu0 1
    %2122 = vperm.xlu0 %2121, %v2063
    %v2123 = vpop.permute.xlu0 %2122
    %2126 = vset.pattern.permute.xlu0 1
    %2127 = vperm.xlu0 %2126, %v2065
    %v2128 = vpop.permute.xlu0 %2127
    %2131 = vset.pattern.permute.xlu0 1
    %2132 = vperm.xlu0 %2131, %v2067
    %v2133 = vpop.permute.xlu0 %2132
    %2136 = vset.pattern.permute.xlu0 1
    %2137 = vperm.xlu0 %2136, %v2069
    %v2138 = vpop.permute.xlu0 %2137
    %2141 = vset.pattern.permute.xlu0 1
    %2142 = vperm.xlu0 %2141, %v2071
    %v2143 = vpop.permute.xlu0 %2142
    %2146 = vset.pattern.permute.xlu0 1
    %2147 = vperm.xlu0 %2146, %v2073
    %v2148 = vpop.permute.xlu0 %2147
    %2151 = vset.pattern.permute.xlu0 1
    %2152 = vperm.xlu0 %2151, %v2075
    %v2153 = vpop.permute.xlu0 %2152
    %2156 = vset.pattern.permute.xlu0 1
    %2157 = vperm.xlu0 %2156, %v2077
    %v2158 = vpop.permute.xlu0 %2157
    %2161 = vset.pattern.permute.xlu0 1
    %2162 = vperm.xlu0 %2161, %v2079
    %v2163 = vpop.permute.xlu0 %2162
    %2166 = vset.pattern.permute.xlu0 1
    %2167 = vperm.xlu0 %2166, %v2081
    %v2168 = vpop.permute.xlu0 %2167
    %2171 = vset.pattern.permute.xlu0 1
    %2172 = vperm.xlu0 %2171, %v2083
    %v2173 = vpop.permute.xlu0 %2172
    %2176 = vset.pattern.permute.xlu0 1
    %2177 = vperm.xlu0 %2176, %v2085
    %v2178 = vpop.permute.xlu0 %2177
    %2181 = vset.pattern.permute.xlu0 1
    %2182 = vperm.xlu0 %2181, %v2087
    %v2183 = vpop.permute.xlu0 %2182
    %2186 = vset.pattern.permute.xlu0 1
    %2187 = vperm.xlu0 %2186, %v2089
    %v2188 = vpop.permute.xlu0 %2187
    %2191 = vset.pattern.permute.xlu0 1
    %2192 = vperm.xlu0 %2191, %v2091
    %v2193 = vpop.permute.xlu0 %2192
    %2196 = vset.pattern.permute.xlu0 1
    %2197 = vperm.xlu0 %2196, %v2093
    %v2198 = vpop.permute.xlu0 %2197
    %2201 = vset.pattern.permute.xlu0 1
    %2202 = vperm.xlu0 %2201, %v2095
    %v2203 = vpop.permute.xlu0 %2202
    %2206 = vset.pattern.permute.xlu0 1
    %2207 = vperm.xlu0 %2206, %v2097
    %v2208 = vpop.permute.xlu0 %2207
    %2211 = vset.pattern.permute.xlu0 1
    %2212 = vperm.xlu0 %2211, %v2099
    %v2213 = vpop.permute.xlu0 %2212
    %2216 = vset.pattern.permute.xlu0 1
    %2217 = vperm.xlu0 %2216, %v2101
    %v2218 = vpop.permute.xlu0 %2217
    %2221 = vset.pattern.permute.xlu0 1
    %2222 = vperm.xlu0 %2221, %v2103
    %v2223 = vpop.permute.xlu0 %2222
    %2226 = vset.pattern.permute.xlu0 1
    %2227 = vperm.xlu0 %2226, %v2105
    %v2228 = vpop.permute.xlu0 %2227
    %2231 = vset.pattern.permute.xlu0 1
    %2232 = vperm.xlu0 %2231, %v2107
    %v2233 = vpop.permute.xlu0 %2232
    %2236 = vset.pattern.permute.xlu0 1
    %2237 = vperm.xlu0 %2236, %v2109
    %v2238 = vpop.permute.xlu0 %2237
    %v2240 = vlaneseq
    %v2241 = vshrl.u32 %v2240, 7
    %v2242 = vsub.s32 1, %v2241
    %v2243 = vrot.slane %v103, %v2242
    %v2244 = vmul.f32 %v2113, %v2243
    %v2245 = vmul.f32 %v2118, %v2243
    %v2246 = vmul.f32 %v2123, %v2243
    %v2247 = vmul.f32 %v2128, %v2243
    %v2248 = vmul.f32 %v2133, %v2243
    %v2249 = vmul.f32 %v2138, %v2243
    %v2250 = vmul.f32 %v2143, %v2243
    %v2251 = vmul.f32 %v2148, %v2243
    %v2252 = vmul.f32 %v2153, %v2243
    %v2253 = vmul.f32 %v2158, %v2243
    %v2254 = vmul.f32 %v2163, %v2243
    %v2255 = vmul.f32 %v2168, %v2243
    %v2256 = vmul.f32 %v2173, %v2243
    %v2257 = vmul.f32 %v2178, %v2243
    %v2258 = vmul.f32 %v2183, %v2243
    %v2259 = vmul.f32 %v2188, %v2243
    %v2260 = vmul.f32 %v2193, %v2243
    %v2261 = vmul.f32 %v2198, %v2243
    %v2262 = vmul.f32 %v2203, %v2243
    %v2263 = vmul.f32 %v2208, %v2243
    %v2264 = vmul.f32 %v2213, %v2243
    %v2265 = vmul.f32 %v2218, %v2243
    %v2266 = vmul.f32 %v2223, %v2243
    %v2267 = vmul.f32 %v2228, %v2243
    %v2268 = vmul.f32 %v2233, %v2243
    %v2269 = vmul.f32 %v2238, %v2243
    %v2270 = vadd.f32 %v1562, %v2244
    %v2271 = vadd.f32 %v1563, %v2245
    %v2272 = vadd.f32 %v1564, %v2246
    %v2273 = vadd.f32 %v1565, %v2247
    %v2274 = vadd.f32 %v1566, %v2248
    %v2275 = vadd.f32 %v1567, %v2249
    %v2276 = vadd.f32 %v1568, %v2250
    %v2277 = vadd.f32 %v1569, %v2251
    %v2278 = vadd.f32 %v1570, %v2252
    %v2279 = vadd.f32 %v1571, %v2253
    %v2280 = vadd.f32 %v1572, %v2254
    %v2281 = vadd.f32 %v1573, %v2255
    %v2282 = vadd.f32 %v1574, %v2256
    %v2283 = vadd.f32 %v1575, %v2257
    %v2284 = vadd.f32 %v1576, %v2258
    %v2285 = vadd.f32 %v1577, %v2259
    %v2286 = vadd.f32 %v1578, %v2260
    %v2287 = vadd.f32 %v1579, %v2261
    %v2288 = vadd.f32 %v1580, %v2262
    %v2289 = vadd.f32 %v1581, %v2263
    %v2290 = vadd.f32 %v1582, %v2264
    %v2291 = vadd.f32 %v1583, %v2265
    %v2292 = vadd.f32 %v1584, %v2266
    %v2293 = vadd.f32 %v1585, %v2267
    %v2294 = vadd.f32 %v1586, %v2268
    %v2295 = vadd.f32 %v1587, %v2269
    %s2296 = scalar_lea.vmem %s3, 128
    %v2297 = vld [vmem:[%s2296] sm:$0xf]
    %v2298 = vld [vmem:[%s2296 + $0x4] sm:$0xf]
    %v2299 = vld [vmem:[%s2296 + $0x8] sm:$0xf]
    %v2300 = vld [vmem:[%s2296 + $0xc] sm:$0xf]
    %v2301 = vld [vmem:[%s2296 + $0x10] sm:$0xf]
    %v2302 = vld [vmem:[%s2296 + $0x14] sm:$0xf]
    %v2303 = vld [vmem:[%s2296 + $0x18] sm:$0xf]
    %v2304 = vld [vmem:[%s2296 + $0x1c] sm:$0xf]
    %v2305 = vld [vmem:[%s2296 + $0x20] sm:$0xf]
    %v2306 = vld [vmem:[%s2296 + $0x24] sm:$0xf]
    %v2307 = vld [vmem:[%s2296 + $0x28] sm:$0xf]
    %v2308 = vld [vmem:[%s2296 + $0x2c] sm:$0xf]
    %v2309 = vld [vmem:[%s2296 + $0x30] sm:$0xf]
    %v2310 = vld [vmem:[%s2296 + $0x34] sm:$0xf]
    %v2311 = vld [vmem:[%s2296 + $0x38] sm:$0xf]
    %v2312 = vld [vmem:[%s2296 + $0x3c] sm:$0xf]
    %v2313 = vlaneseq
    %v2314 = vshrl.u32 %v2313, 7
    %v2315 = vsub.s32 2, %v2314
    %v2316 = vrot.slane %v100, %v2315
    %v2333 = vunpack.c.l.b16 %v2297
    %v2334 = vunpack.c.l.b16 %v2298
    %v2335 = vunpack.c.l.b16 %v2299
    %v2336 = vunpack.c.l.b16 %v2300
    %v2337 = vunpack.c.l.b16 %v2301
    %v2338 = vunpack.c.l.b16 %v2302
    %v2339 = vunpack.c.l.b16 %v2303
    %v2340 = vunpack.c.l.b16 %v2304
    %v2341 = vunpack.c.l.b16 %v2305
    %v2342 = vunpack.c.l.b16 %v2306
    %v2343 = vunpack.c.l.b16 %v2307
    %v2344 = vunpack.c.l.b16 %v2308
    %v2345 = vunpack.c.l.b16 %v2309
    %v2346 = vunpack.c.l.b16 %v2310
    %v2347 = vunpack.c.l.b16 %v2311
    %v2348 = vunpack.c.l.b16 %v2312
    %v2349 = vpack.c.b16 %v2334, %v2333
    %v2350 = vpack.c.b16 %v2336, %v2335
    %v2351 = vpack.c.b16 %v2338, %v2337
    %v2352 = vpack.c.b16 %v2340, %v2339
    %v2353 = vpack.c.b16 %v2342, %v2341
    %v2354 = vpack.c.b16 %v2344, %v2343
    %v2355 = vpack.c.b16 %v2346, %v2345
    %v2356 = vpack.c.b16 %v2348, %v2347
    %2365 = vmatprep.subr.bf16.mxu0 0
    %2366 = vmatpush1.bf16.msra.mxu0 %v2349
    %2367 = vmatprep.subr.bf16.mxu0 0
    %2368 = vmatpush1.bf16.msra.mxu0 %v2350
    %2369 = vmatprep.subr.bf16.mxu0 0
    %2370 = vmatpush1.bf16.msra.mxu0 %v2351
    %2371 = vmatprep.subr.bf16.mxu0 0
    %2372 = vmatpush1.bf16.msra.mxu0 %v2352
    %2373 = vmatprep.subr.bf16.mxu0 0
    %2374 = vmatpush1.bf16.msra.mxu0 %v2353
    %2375 = vmatprep.subr.bf16.mxu0 0
    %2376 = vmatpush1.bf16.msra.mxu0 %v2354
    %2377 = vmatprep.subr.bf16.mxu0 0
    %2378 = vmatpush1.bf16.msra.mxu0 %v2355
    %2379 = vmatprep.subr.bf16.mxu0 0
    %2380 = vmatpush1.bf16.msra.mxu0 %v2356
    %2381 = vmatprep.subr.bf16.mxu0 0
    %2382 = vmatpush1.bf16.msra.mxu0 0
    %2383 = vmatprep.subr.bf16.mxu0 0
    %2384 = vmatpush1.bf16.msra.mxu0 0
    %2385 = vmatprep.subr.bf16.mxu0 0
    %2386 = vmatpush1.bf16.msra.mxu0 0
    %2387 = vmatprep.subr.bf16.mxu0 0
    %2388 = vmatpush1.bf16.msra.mxu0 0
    %2389 = vmatprep.subr.bf16.mxu0 0
    %2390 = vmatpush1.bf16.msra.mxu0 0
    %2391 = vmatprep.subr.bf16.mxu0 0
    %2392 = vmatpush1.bf16.msra.mxu0 0
    %2393 = vmatprep.subr.bf16.mxu0 0
    %2394 = vmatpush1.bf16.msra.mxu0 0
    %2395 = vmatprep.subr.bf16.mxu0 0
    %2396 = vmatpush1.bf16.msra.mxu0 0
    %2397 = vmatprep.mubr.bf16.mxu0 0
    %2398 = vmatmul.mubr.bf16.gmra.mrb[0].mxu0 %v811
    %v2399 = vpop.f32.mrb[0].mxu0
    %v2400 = vadd.f32 %v2316, %v2399
    %v2401 = vpop.f32.mrb[0].mxu0
    %v2402 = vpop.f32.mrb[0].mxu0
    %v2403 = vadd.f32 %v2316, %v2402
    %v2404 = vpop.f32.mrb[0].mxu0
    %2405 = vmatprep.mubr.bf16.mxu0 0
    %2406 = vmatmul.mubr.bf16.gmra.mrb[0].mxu0 %v816
    %v2407 = vpop.f32.mrb[0].mxu0
    %v2408 = vadd.f32 %v2316, %v2407
    %v2409 = vpop.f32.mrb[0].mxu0
    %v2410 = vpop.f32.mrb[0].mxu0
    %v2411 = vadd.f32 %v2316, %v2410
    %v2412 = vpop.f32.mrb[0].mxu0
    %2413 = vmatprep.mubr.bf16.mxu0 0
    %2414 = vmatmul.mubr.bf16.gmra.mrb[0].mxu0 %v821
    %v2415 = vpop.f32.mrb[0].mxu0
    %v2416 = vadd.f32 %v2316, %v2415
    %v2417 = vpop.f32.mrb[0].mxu0
    %v2418 = vpop.f32.mrb[0].mxu0
    %v2419 = vadd.f32 %v2316, %v2418
    %v2420 = vpop.f32.mrb[0].mxu0
    %2421 = vmatprep.mubr.bf16.mxu0 0
    %2422 = vmatmul.mubr.bf16.gmra.mrb[0].mxu0 %v826
    %v2423 = vpop.f32.mrb[0].mxu0
    %v2424 = vadd.f32 %v2316, %v2423
    %v2425 = vpop.f32.mrb[0].mxu0
    %v2426 = vpop.f32.mrb[0].mxu0
    %v2427 = vadd.f32 %v2316, %v2426
    %v2428 = vpop.f32.mrb[0].mxu0
    %2429 = vmatprep.mubr.bf16.mxu0 0
    %2430 = vmatmul.mubr.bf16.gmra.mrb[0].mxu0 %v831
    %v2431 = vpop.f32.mrb[0].mxu0
    %v2432 = vadd.f32 %v2316, %v2431
    %v2433 = vpop.f32.mrb[0].mxu0
    %v2434 = vpop.f32.mrb[0].mxu0
    %v2435 = vadd.f32 %v2316, %v2434
    %v2436 = vpop.f32.mrb[0].mxu0
    %2437 = vmatprep.mubr.bf16.mxu0 0
    %2438 = vmatmul.mubr.bf16.gmra.mrb[0].mxu0 %v836
    %v2439 = vpop.f32.mrb[0].mxu0
    %v2440 = vadd.f32 %v2316, %v2439
    %v2441 = vpop.f32.mrb[0].mxu0
    %v2442 = vpop.f32.mrb[0].mxu0
    %v2443 = vadd.f32 %v2316, %v2442
    %v2444 = vpop.f32.mrb[0].mxu0
    %2445 = vmatprep.mubr.bf16.mxu0 0
    %2446 = vmatmul.mubr.bf16.gmra.mrb[0].mxu0 %v841
    %v2447 = vpop.f32.mrb[0].mxu0
    %v2448 = vadd.f32 %v2316, %v2447
    %v2449 = vpop.f32.mrb[0].mxu0
    %v2450 = vpop.f32.mrb[0].mxu0
    %v2451 = vadd.f32 %v2316, %v2450
    %v2452 = vpop.f32.mrb[0].mxu0
    %2453 = vmatprep.mubr.bf16.mxu0 0
    %2454 = vmatmul.mubr.bf16.gmra.mrb[0].mxu0 %v846
    %v2455 = vpop.f32.mrb[0].mxu0
    %v2456 = vadd.f32 %v2316, %v2455
    %v2457 = vpop.f32.mrb[0].mxu0
    %v2458 = vpop.f32.mrb[0].mxu0
    %v2459 = vadd.f32 %v2316, %v2458
    %v2460 = vpop.f32.mrb[0].mxu0
    %2461 = vmatprep.mubr.bf16.mxu0 0
    %2462 = vmatmul.mubr.bf16.gmra.mrb[0].mxu0 %v851
    %v2463 = vpop.f32.mrb[0].mxu0
    %v2464 = vadd.f32 %v2316, %v2463
    %v2465 = vpop.f32.mrb[0].mxu0
    %v2466 = vpop.f32.mrb[0].mxu0
    %v2467 = vadd.f32 %v2316, %v2466
    %v2468 = vpop.f32.mrb[0].mxu0
    %2469 = vmatprep.mubr.bf16.mxu0 0
    %2470 = vmatmul.mubr.bf16.gmra.mrb[0].mxu0 %v856
    %v2471 = vpop.f32.mrb[0].mxu0
    %v2472 = vadd.f32 %v2316, %v2471
    %v2473 = vpop.f32.mrb[0].mxu0
    %v2474 = vpop.f32.mrb[0].mxu0
    %v2475 = vadd.f32 %v2316, %v2474
    %v2476 = vpop.f32.mrb[0].mxu0
    %2477 = vmatprep.mubr.bf16.mxu0 0
    %2478 = vmatmul.mubr.bf16.gmra.mrb[0].mxu0 %v861
    %v2479 = vpop.f32.mrb[0].mxu0
    %v2480 = vadd.f32 %v2316, %v2479
    %v2481 = vpop.f32.mrb[0].mxu0
    %v2482 = vpop.f32.mrb[0].mxu0
    %v2483 = vadd.f32 %v2316, %v2482
    %v2484 = vpop.f32.mrb[0].mxu0
    %2485 = vmatprep.mubr.bf16.mxu0 0
    %2486 = vmatmul.mubr.bf16.gmra.mrb[0].mxu0 %v866
    %v2487 = vpop.f32.mrb[0].mxu0
    %v2488 = vadd.f32 %v2316, %v2487
    %v2489 = vpop.f32.mrb[0].mxu0
    %v2490 = vpop.f32.mrb[0].mxu0
    %v2491 = vadd.f32 %v2316, %v2490
    %v2492 = vpop.f32.mrb[0].mxu0
    %2493 = vmatprep.mubr.bf16.mxu0 0
    %2494 = vmatmul.mubr.bf16.gmra.mrb[0].mxu0 %v871
    %v2495 = vpop.f32.mrb[0].mxu0
    %v2496 = vadd.f32 %v2316, %v2495
    %v2497 = vpop.f32.mrb[0].mxu0
    %v2498 = vpop.f32.mrb[0].mxu0
    %v2499 = vadd.f32 %v2316, %v2498
    %v2500 = vpop.f32.mrb[0].mxu0
    %2501 = vdwg.mxu0
    %v2502 = vmax.f32 %v2400, 0.0
    %v2503 = vmax.f32 %v2403, 0.0
    %v2504 = vmax.f32 %v2408, 0.0
    %v2505 = vmax.f32 %v2411, 0.0
    %v2506 = vmax.f32 %v2416, 0.0
    %v2507 = vmax.f32 %v2419, 0.0
    %v2508 = vmax.f32 %v2424, 0.0
    %v2509 = vmax.f32 %v2427, 0.0
    %v2510 = vmax.f32 %v2432, 0.0
    %v2511 = vmax.f32 %v2435, 0.0
    %v2512 = vmax.f32 %v2440, 0.0
    %v2513 = vmax.f32 %v2443, 0.0
    %v2514 = vmax.f32 %v2448, 0.0
    %v2515 = vmax.f32 %v2451, 0.0
    %v2516 = vmax.f32 %v2456, 0.0
    %v2517 = vmax.f32 %v2459, 0.0
    %v2518 = vmax.f32 %v2464, 0.0
    %v2519 = vmax.f32 %v2467, 0.0
    %v2520 = vmax.f32 %v2472, 0.0
    %v2521 = vmax.f32 %v2475, 0.0
    %v2522 = vmax.f32 %v2480, 0.0
    %v2523 = vmax.f32 %v2483, 0.0
    %v2524 = vmax.f32 %v2488, 0.0
    %v2525 = vmax.f32 %v2491, 0.0
    %v2526 = vmax.f32 %v2496, 0.0
    %v2527 = vmax.f32 %v2499, 0.0
    %v2528 = vlaneseq
    %v2529 = vshrl.u32 %v2528, 7
    %v2530 = vsub.s32 2, %v2529
    %v2531 = vrot.slane %v101, %v2530
    %v2532 = vmul.f32 %v2502, %v2531
    %v2533 = vmul.f32 %v2503, %v2531
    %v2534 = vmul.f32 %v2504, %v2531
    %v2535 = vmul.f32 %v2505, %v2531
    %v2536 = vmul.f32 %v2506, %v2531
    %v2537 = vmul.f32 %v2507, %v2531
    %v2538 = vmul.f32 %v2508, %v2531
    %v2539 = vmul.f32 %v2509, %v2531
    %v2540 = vmul.f32 %v2510, %v2531
    %v2541 = vmul.f32 %v2511, %v2531
    %v2542 = vmul.f32 %v2512, %v2531
    %v2543 = vmul.f32 %v2513, %v2531
    %v2544 = vmul.f32 %v2514, %v2531
    %v2545 = vmul.f32 %v2515, %v2531
    %v2546 = vmul.f32 %v2516, %v2531
    %v2547 = vmul.f32 %v2517, %v2531
    %v2548 = vmul.f32 %v2518, %v2531
    %v2549 = vmul.f32 %v2519, %v2531
    %v2550 = vmul.f32 %v2520, %v2531
    %v2551 = vmul.f32 %v2521, %v2531
    %v2552 = vmul.f32 %v2522, %v2531
    %v2553 = vmul.f32 %v2523, %v2531
    %v2554 = vmul.f32 %v2524, %v2531
    %v2555 = vmul.f32 %v2525, %v2531
    %v2556 = vmul.f32 %v2526, %v2531
    %v2557 = vmul.f32 %v2527, %v2531
    %v2558 = vsel %vm1135, %v2532, 0.0
    %2559 = vadd.xlane.f32.xlu0 %v2558
    %v2560 = vpop.xlane.xlu0 %2559
    %v2561 = vsel %vm1135, %v2533, 0.0
    %2562 = vadd.xlane.f32.xlu0 %v2561
    %v2563 = vpop.xlane.xlu0 %2562
    %v2564 = vsel %vm1135, %v2534, 0.0
    %2565 = vadd.xlane.f32.xlu0 %v2564
    %v2566 = vpop.xlane.xlu0 %2565
    %v2567 = vsel %vm1135, %v2535, 0.0
    %2568 = vadd.xlane.f32.xlu0 %v2567
    %v2569 = vpop.xlane.xlu0 %2568
    %v2570 = vsel %vm1135, %v2536, 0.0
    %2571 = vadd.xlane.f32.xlu0 %v2570
    %v2572 = vpop.xlane.xlu0 %2571
    %v2573 = vsel %vm1135, %v2537, 0.0
    %2574 = vadd.xlane.f32.xlu0 %v2573
    %v2575 = vpop.xlane.xlu0 %2574
    %v2576 = vsel %vm1135, %v2538, 0.0
    %2577 = vadd.xlane.f32.xlu0 %v2576
    %v2578 = vpop.xlane.xlu0 %2577
    %v2579 = vsel %vm1135, %v2539, 0.0
    %2580 = vadd.xlane.f32.xlu0 %v2579
    %v2581 = vpop.xlane.xlu0 %2580
    %v2582 = vsel %vm1135, %v2540, 0.0
    %2583 = vadd.xlane.f32.xlu0 %v2582
    %v2584 = vpop.xlane.xlu0 %2583
    %v2585 = vsel %vm1135, %v2541, 0.0
    %2586 = vadd.xlane.f32.xlu0 %v2585
    %v2587 = vpop.xlane.xlu0 %2586
    %v2588 = vsel %vm1135, %v2542, 0.0
    %2589 = vadd.xlane.f32.xlu0 %v2588
    %v2590 = vpop.xlane.xlu0 %2589
    %v2591 = vsel %vm1135, %v2543, 0.0
    %2592 = vadd.xlane.f32.xlu0 %v2591
    %v2593 = vpop.xlane.xlu0 %2592
    %v2594 = vsel %vm1135, %v2544, 0.0
    %2595 = vadd.xlane.f32.xlu0 %v2594
    %v2596 = vpop.xlane.xlu0 %2595
    %v2597 = vsel %vm1135, %v2545, 0.0
    %2598 = vadd.xlane.f32.xlu0 %v2597
    %v2599 = vpop.xlane.xlu0 %2598
    %v2600 = vsel %vm1135, %v2546, 0.0
    %2601 = vadd.xlane.f32.xlu0 %v2600
    %v2602 = vpop.xlane.xlu0 %2601
    %v2603 = vsel %vm1135, %v2547, 0.0
    %2604 = vadd.xlane.f32.xlu0 %v2603
    %v2605 = vpop.xlane.xlu0 %2604
    %v2606 = vsel %vm1135, %v2548, 0.0
    %2607 = vadd.xlane.f32.xlu0 %v2606
    %v2608 = vpop.xlane.xlu0 %2607
    %v2609 = vsel %vm1135, %v2549, 0.0
    %2610 = vadd.xlane.f32.xlu0 %v2609
    %v2611 = vpop.xlane.xlu0 %2610
    %v2612 = vsel %vm1135, %v2550, 0.0
    %2613 = vadd.xlane.f32.xlu0 %v2612
    %v2614 = vpop.xlane.xlu0 %2613
    %v2615 = vsel %vm1135, %v2551, 0.0
    %2616 = vadd.xlane.f32.xlu0 %v2615
    %v2617 = vpop.xlane.xlu0 %2616
    %v2618 = vsel %vm1135, %v2552, 0.0
    %2619 = vadd.xlane.f32.xlu0 %v2618
    %v2620 = vpop.xlane.xlu0 %2619
    %v2621 = vsel %vm1135, %v2553, 0.0
    %2622 = vadd.xlane.f32.xlu0 %v2621
    %v2623 = vpop.xlane.xlu0 %2622
    %v2624 = vsel %vm1135, %v2554, 0.0
    %2625 = vadd.xlane.f32.xlu0 %v2624
    %v2626 = vpop.xlane.xlu0 %2625
    %v2627 = vsel %vm1135, %v2555, 0.0
    %2628 = vadd.xlane.f32.xlu0 %v2627
    %v2629 = vpop.xlane.xlu0 %2628
    %v2630 = vsel %vm1135, %v2556, 0.0
    %2631 = vadd.xlane.f32.xlu0 %v2630
    %v2632 = vpop.xlane.xlu0 %2631
    %v2633 = vsel %vm1135, %v2557, 0.0
    %2634 = vadd.xlane.f32.xlu0 %v2633
    %v2635 = vpop.xlane.xlu0 %2634
    %v2636 = vadd.f32 %v2560, %v1218
    %v2637 = vadd.f32 %v2563, %v1218
    %v2638 = vadd.f32 %v2566, %v1218
    %v2639 = vadd.f32 %v2569, %v1218
    %v2640 = vadd.f32 %v2572, %v1218
    %v2641 = vadd.f32 %v2575, %v1218
    %v2642 = vadd.f32 %v2578, %v1218
    %v2643 = vadd.f32 %v2581, %v1218
    %v2644 = vadd.f32 %v2584, %v1218
    %v2645 = vadd.f32 %v2587, %v1218
    %v2646 = vadd.f32 %v2590, %v1218
    %v2647 = vadd.f32 %v2593, %v1218
    %v2648 = vadd.f32 %v2596, %v1218
    %v2649 = vadd.f32 %v2599, %v1218
    %v2650 = vadd.f32 %v2602, %v1218
    %v2651 = vadd.f32 %v2605, %v1218
    %v2652 = vadd.f32 %v2608, %v1218
    %v2653 = vadd.f32 %v2611, %v1218
    %v2654 = vadd.f32 %v2614, %v1218
    %v2655 = vadd.f32 %v2617, %v1218
    %v2656 = vadd.f32 %v2620, %v1218
    %v2657 = vadd.f32 %v2623, %v1218
    %v2658 = vadd.f32 %v2626, %v1218
    %v2659 = vadd.f32 %v2629, %v1218
    %v2660 = vadd.f32 %v2632, %v1218
    %v2661 = vadd.f32 %v2635, %v1218
    %v2662 = vxor.u32 %v2636, 2147483648
    %v2663 = vxor.u32 %v2637, 2147483648
    %v2664 = vxor.u32 %v2638, 2147483648
    %v2665 = vxor.u32 %v2639, 2147483648
    %v2666 = vxor.u32 %v2640, 2147483648
    %v2667 = vxor.u32 %v2641, 2147483648
    %v2668 = vxor.u32 %v2642, 2147483648
    %v2669 = vxor.u32 %v2643, 2147483648
    %v2670 = vxor.u32 %v2644, 2147483648
    %v2671 = vxor.u32 %v2645, 2147483648
    %v2672 = vxor.u32 %v2646, 2147483648
    %v2673 = vxor.u32 %v2647, 2147483648
    %v2674 = vxor.u32 %v2648, 2147483648
    %v2675 = vxor.u32 %v2649, 2147483648
    %v2676 = vxor.u32 %v2650, 2147483648
    %v2677 = vxor.u32 %v2651, 2147483648
    %v2678 = vxor.u32 %v2652, 2147483648
    %v2679 = vxor.u32 %v2653, 2147483648
    %v2680 = vxor.u32 %v2654, 2147483648
    %v2681 = vxor.u32 %v2655, 2147483648
    %v2682 = vxor.u32 %v2656, 2147483648
    %v2683 = vxor.u32 %v2657, 2147483648
    %v2684 = vxor.u32 %v2658, 2147483648
    %v2685 = vxor.u32 %v2659, 2147483648
    %v2686 = vxor.u32 %v2660, 2147483648
    %v2687 = vxor.u32 %v2661, 2147483648
    %v2688 = vmul.f32 %v2662, 1.442695
    %v2689 = vpow.pop %v2688
    %v2690 = vmul.f32 %v2663, 1.442695
    %v2691 = vpow.pop %v2690
    %v2692 = vmul.f32 %v2664, 1.442695
    %v2693 = vpow.pop %v2692
    %v2694 = vmul.f32 %v2665, 1.442695
    %v2695 = vpow.pop %v2694
    %v2696 = vmul.f32 %v2666, 1.442695
    %v2697 = vpow.pop %v2696
    %v2698 = vmul.f32 %v2667, 1.442695
    %v2699 = vpow.pop %v2698
    %v2700 = vmul.f32 %v2668, 1.442695
    %v2701 = vpow.pop %v2700
    %v2702 = vmul.f32 %v2669, 1.442695
    %v2703 = vpow.pop %v2702
    %v2704 = vmul.f32 %v2670, 1.442695
    %v2705 = vpow.pop %v2704
    %v2706 = vmul.f32 %v2671, 1.442695
    %v2707 = vpow.pop %v2706
    %v2708 = vmul.f32 %v2672, 1.442695
    %v2709 = vpow.pop %v2708
    %v2710 = vmul.f32 %v2673, 1.442695
    %v2711 = vpow.pop %v2710
    %v2712 = vmul.f32 %v2674, 1.442695
    %v2713 = vpow.pop %v2712
    %v2714 = vmul.f32 %v2675, 1.442695
    %v2715 = vpow.pop %v2714
    %v2716 = vmul.f32 %v2676, 1.442695
    %v2717 = vpow.pop %v2716
    %v2718 = vmul.f32 %v2677, 1.442695
    %v2719 = vpow.pop %v2718
    %v2720 = vmul.f32 %v2678, 1.442695
    %v2721 = vpow.pop %v2720
    %v2722 = vmul.f32 %v2679, 1.442695
    %v2723 = vpow.pop %v2722
    %v2724 = vmul.f32 %v2680, 1.442695
    %v2725 = vpow.pop %v2724
    %v2726 = vmul.f32 %v2681, 1.442695
    %v2727 = vpow.pop %v2726
    %v2728 = vmul.f32 %v2682, 1.442695
    %v2729 = vpow.pop %v2728
    %v2730 = vmul.f32 %v2683, 1.442695
    %v2731 = vpow.pop %v2730
    %v2732 = vmul.f32 %v2684, 1.442695
    %v2733 = vpow.pop %v2732
    %v2734 = vmul.f32 %v2685, 1.442695
    %v2735 = vpow.pop %v2734
    %v2736 = vmul.f32 %v2686, 1.442695
    %v2737 = vpow.pop %v2736
    %v2738 = vmul.f32 %v2687, 1.442695
    %v2739 = vpow.pop %v2738
    %v2740 = vadd.f32 %v2689, 1.0
    %v2741 = vadd.f32 %v2691, 1.0
    %v2742 = vadd.f32 %v2693, 1.0
    %v2743 = vadd.f32 %v2695, 1.0
    %v2744 = vadd.f32 %v2697, 1.0
    %v2745 = vadd.f32 %v2699, 1.0
    %v2746 = vadd.f32 %v2701, 1.0
    %v2747 = vadd.f32 %v2703, 1.0
    %v2748 = vadd.f32 %v2705, 1.0
    %v2749 = vadd.f32 %v2707, 1.0
    %v2750 = vadd.f32 %v2709, 1.0
    %v2751 = vadd.f32 %v2711, 1.0
    %v2752 = vadd.f32 %v2713, 1.0
    %v2753 = vadd.f32 %v2715, 1.0
    %v2754 = vadd.f32 %v2717, 1.0
    %v2755 = vadd.f32 %v2719, 1.0
    %v2756 = vadd.f32 %v2721, 1.0
    %v2757 = vadd.f32 %v2723, 1.0
    %v2758 = vadd.f32 %v2725, 1.0
    %v2759 = vadd.f32 %v2727, 1.0
    %v2760 = vadd.f32 %v2729, 1.0
    %v2761 = vadd.f32 %v2731, 1.0
    %v2762 = vadd.f32 %v2733, 1.0
    %v2763 = vadd.f32 %v2735, 1.0
    %v2764 = vadd.f32 %v2737, 1.0
    %v2765 = vadd.f32 %v2739, 1.0
    %v2766 = vrcp.pop %v2740
    %v2767 = vmul.f32 1.0, %v2766
    %v2768 = vrcp.pop %v2741
    %v2769 = vmul.f32 1.0, %v2768
    %v2770 = vrcp.pop %v2742
    %v2771 = vmul.f32 1.0, %v2770
    %v2772 = vrcp.pop %v2743
    %v2773 = vmul.f32 1.0, %v2772
    %v2774 = vrcp.pop %v2744
    %v2775 = vmul.f32 1.0, %v2774
    %v2776 = vrcp.pop %v2745
    %v2777 = vmul.f32 1.0, %v2776
    %v2778 = vrcp.pop %v2746
    %v2779 = vmul.f32 1.0, %v2778
    %v2780 = vrcp.pop %v2747
    %v2781 = vmul.f32 1.0, %v2780
    %v2782 = vrcp.pop %v2748
    %v2783 = vmul.f32 1.0, %v2782
    %v2784 = vrcp.pop %v2749
    %v2785 = vmul.f32 1.0, %v2784
    %v2786 = vrcp.pop %v2750
    %v2787 = vmul.f32 1.0, %v2786
    %v2788 = vrcp.pop %v2751
    %v2789 = vmul.f32 1.0, %v2788
    %v2790 = vrcp.pop %v2752
    %v2791 = vmul.f32 1.0, %v2790
    %v2792 = vrcp.pop %v2753
    %v2793 = vmul.f32 1.0, %v2792
    %v2794 = vrcp.pop %v2754
    %v2795 = vmul.f32 1.0, %v2794
    %v2796 = vrcp.pop %v2755
    %v2797 = vmul.f32 1.0, %v2796
    %v2798 = vrcp.pop %v2756
    %v2799 = vmul.f32 1.0, %v2798
    %v2800 = vrcp.pop %v2757
    %v2801 = vmul.f32 1.0, %v2800
    %v2802 = vrcp.pop %v2758
    %v2803 = vmul.f32 1.0, %v2802
    %v2804 = vrcp.pop %v2759
    %v2805 = vmul.f32 1.0, %v2804
    %v2806 = vrcp.pop %v2760
    %v2807 = vmul.f32 1.0, %v2806
    %v2808 = vrcp.pop %v2761
    %v2809 = vmul.f32 1.0, %v2808
    %v2810 = vrcp.pop %v2762
    %v2811 = vmul.f32 1.0, %v2810
    %v2812 = vrcp.pop %v2763
    %v2813 = vmul.f32 1.0, %v2812
    %v2814 = vrcp.pop %v2764
    %v2815 = vmul.f32 1.0, %v2814
    %v2816 = vrcp.pop %v2765
    %v2817 = vmul.f32 1.0, %v2816
    %2819 = vset.pattern.permute.xlu0 2
    %2820 = vperm.xlu0 %2819, %v2767
    %v2821 = vpop.permute.xlu0 %2820
    %2824 = vset.pattern.permute.xlu0 2
    %2825 = vperm.xlu0 %2824, %v2769
    %v2826 = vpop.permute.xlu0 %2825
    %2829 = vset.pattern.permute.xlu0 2
    %2830 = vperm.xlu0 %2829, %v2771
    %v2831 = vpop.permute.xlu0 %2830
    %2834 = vset.pattern.permute.xlu0 2
    %2835 = vperm.xlu0 %2834, %v2773
    %v2836 = vpop.permute.xlu0 %2835
    %2839 = vset.pattern.permute.xlu0 2
    %2840 = vperm.xlu0 %2839, %v2775
    %v2841 = vpop.permute.xlu0 %2840
    %2844 = vset.pattern.permute.xlu0 2
    %2845 = vperm.xlu0 %2844, %v2777
    %v2846 = vpop.permute.xlu0 %2845
    %2849 = vset.pattern.permute.xlu0 2
    %2850 = vperm.xlu0 %2849, %v2779
    %v2851 = vpop.permute.xlu0 %2850
    %2854 = vset.pattern.permute.xlu0 2
    %2855 = vperm.xlu0 %2854, %v2781
    %v2856 = vpop.permute.xlu0 %2855
    %2859 = vset.pattern.permute.xlu0 2
    %2860 = vperm.xlu0 %2859, %v2783
    %v2861 = vpop.permute.xlu0 %2860
    %2864 = vset.pattern.permute.xlu0 2
    %2865 = vperm.xlu0 %2864, %v2785
    %v2866 = vpop.permute.xlu0 %2865
    %2869 = vset.pattern.permute.xlu0 2
    %2870 = vperm.xlu0 %2869, %v2787
    %v2871 = vpop.permute.xlu0 %2870
    %2874 = vset.pattern.permute.xlu0 2
    %2875 = vperm.xlu0 %2874, %v2789
    %v2876 = vpop.permute.xlu0 %2875
    %2879 = vset.pattern.permute.xlu0 2
    %2880 = vperm.xlu0 %2879, %v2791
    %v2881 = vpop.permute.xlu0 %2880
    %2884 = vset.pattern.permute.xlu0 2
    %2885 = vperm.xlu0 %2884, %v2793
    %v2886 = vpop.permute.xlu0 %2885
    %2889 = vset.pattern.permute.xlu0 2
    %2890 = vperm.xlu0 %2889, %v2795
    %v2891 = vpop.permute.xlu0 %2890
    %2894 = vset.pattern.permute.xlu0 2
    %2895 = vperm.xlu0 %2894, %v2797
    %v2896 = vpop.permute.xlu0 %2895
    %2899 = vset.pattern.permute.xlu0 2
    %2900 = vperm.xlu0 %2899, %v2799
    %v2901 = vpop.permute.xlu0 %2900
    %2904 = vset.pattern.permute.xlu0 2
    %2905 = vperm.xlu0 %2904, %v2801
    %v2906 = vpop.permute.xlu0 %2905
    %2909 = vset.pattern.permute.xlu0 2
    %2910 = vperm.xlu0 %2909, %v2803
    %v2911 = vpop.permute.xlu0 %2910
    %2914 = vset.pattern.permute.xlu0 2
    %2915 = vperm.xlu0 %2914, %v2805
    %v2916 = vpop.permute.xlu0 %2915
    %2919 = vset.pattern.permute.xlu0 2
    %2920 = vperm.xlu0 %2919, %v2807
    %v2921 = vpop.permute.xlu0 %2920
    %2924 = vset.pattern.permute.xlu0 2
    %2925 = vperm.xlu0 %2924, %v2809
    %v2926 = vpop.permute.xlu0 %2925
    %2929 = vset.pattern.permute.xlu0 2
    %2930 = vperm.xlu0 %2929, %v2811
    %v2931 = vpop.permute.xlu0 %2930
    %2934 = vset.pattern.permute.xlu0 2
    %2935 = vperm.xlu0 %2934, %v2813
    %v2936 = vpop.permute.xlu0 %2935
    %2939 = vset.pattern.permute.xlu0 2
    %2940 = vperm.xlu0 %2939, %v2815
    %v2941 = vpop.permute.xlu0 %2940
    %2944 = vset.pattern.permute.xlu0 2
    %2945 = vperm.xlu0 %2944, %v2817
    %v2946 = vpop.permute.xlu0 %2945
    %v2948 = vlaneseq
    %v2949 = vshrl.u32 %v2948, 7
    %v2950 = vsub.s32 2, %v2949
    %v2951 = vrot.slane %v103, %v2950
    %v2952 = vmul.f32 %v2821, %v2951
    %v2953 = vmul.f32 %v2826, %v2951
    %v2954 = vmul.f32 %v2831, %v2951
    %v2955 = vmul.f32 %v2836, %v2951
    %v2956 = vmul.f32 %v2841, %v2951
    %v2957 = vmul.f32 %v2846, %v2951
    %v2958 = vmul.f32 %v2851, %v2951
    %v2959 = vmul.f32 %v2856, %v2951
    %v2960 = vmul.f32 %v2861, %v2951
    %v2961 = vmul.f32 %v2866, %v2951
    %v2962 = vmul.f32 %v2871, %v2951
    %v2963 = vmul.f32 %v2876, %v2951
    %v2964 = vmul.f32 %v2881, %v2951
    %v2965 = vmul.f32 %v2886, %v2951
    %v2966 = vmul.f32 %v2891, %v2951
    %v2967 = vmul.f32 %v2896, %v2951
    %v2968 = vmul.f32 %v2901, %v2951
    %v2969 = vmul.f32 %v2906, %v2951
    %v2970 = vmul.f32 %v2911, %v2951
    %v2971 = vmul.f32 %v2916, %v2951
    %v2972 = vmul.f32 %v2921, %v2951
    %v2973 = vmul.f32 %v2926, %v2951
    %v2974 = vmul.f32 %v2931, %v2951
    %v2975 = vmul.f32 %v2936, %v2951
    %v2976 = vmul.f32 %v2941, %v2951
    %v2977 = vmul.f32 %v2946, %v2951
    %v2978 = vadd.f32 %v2270, %v2952
    %v2979 = vadd.f32 %v2271, %v2953
    %v2980 = vadd.f32 %v2272, %v2954
    %v2981 = vadd.f32 %v2273, %v2955
    %v2982 = vadd.f32 %v2274, %v2956
    %v2983 = vadd.f32 %v2275, %v2957
    %v2984 = vadd.f32 %v2276, %v2958
    %v2985 = vadd.f32 %v2277, %v2959
    %v2986 = vadd.f32 %v2278, %v2960
    %v2987 = vadd.f32 %v2279, %v2961
    %v2988 = vadd.f32 %v2280, %v2962
    %v2989 = vadd.f32 %v2281, %v2963
    %v2990 = vadd.f32 %v2282, %v2964
    %v2991 = vadd.f32 %v2283, %v2965
    %v2992 = vadd.f32 %v2284, %v2966
    %v2993 = vadd.f32 %v2285, %v2967
    %v2994 = vadd.f32 %v2286, %v2968
    %v2995 = vadd.f32 %v2287, %v2969
    %v2996 = vadd.f32 %v2288, %v2970
    %v2997 = vadd.f32 %v2289, %v2971
    %v2998 = vadd.f32 %v2290, %v2972
    %v2999 = vadd.f32 %v2291, %v2973
    %v3000 = vadd.f32 %v2292, %v2974
    %v3001 = vadd.f32 %v2293, %v2975
    %v3002 = vadd.f32 %v2294, %v2976
    %v3003 = vadd.f32 %v2295, %v2977
    %s3004 = scalar_lea.vmem %s3, 192
    %v3005 = vld [vmem:[%s3004] sm:$0xf]
    %v3006 = vld [vmem:[%s3004 + $0x4] sm:$0xf]
    %v3007 = vld [vmem:[%s3004 + $0x8] sm:$0xf]
    %v3008 = vld [vmem:[%s3004 + $0xc] sm:$0xf]
    %v3009 = vld [vmem:[%s3004 + $0x10] sm:$0xf]
    %v3010 = vld [vmem:[%s3004 + $0x14] sm:$0xf]
    %v3011 = vld [vmem:[%s3004 + $0x18] sm:$0xf]
    %v3012 = vld [vmem:[%s3004 + $0x1c] sm:$0xf]
    %v3013 = vld [vmem:[%s3004 + $0x20] sm:$0xf]
    %v3014 = vld [vmem:[%s3004 + $0x24] sm:$0xf]
    %v3015 = vld [vmem:[%s3004 + $0x28] sm:$0xf]
    %v3016 = vld [vmem:[%s3004 + $0x2c] sm:$0xf]
    %v3017 = vld [vmem:[%s3004 + $0x30] sm:$0xf]
    %v3018 = vld [vmem:[%s3004 + $0x34] sm:$0xf]
    %v3019 = vld [vmem:[%s3004 + $0x38] sm:$0xf]
    %v3020 = vld [vmem:[%s3004 + $0x3c] sm:$0xf]
    %v3021 = vlaneseq
    %v3022 = vshrl.u32 %v3021, 7
    %v3023 = vsub.s32 3, %v3022
    %v3024 = vrot.slane %v100, %v3023
    %v3041 = vunpack.c.l.b16 %v3005
    %v3042 = vunpack.c.l.b16 %v3006
    %v3043 = vunpack.c.l.b16 %v3007
    %v3044 = vunpack.c.l.b16 %v3008
    %v3045 = vunpack.c.l.b16 %v3009
    %v3046 = vunpack.c.l.b16 %v3010
    %v3047 = vunpack.c.l.b16 %v3011
    %v3048 = vunpack.c.l.b16 %v3012
    %v3049 = vunpack.c.l.b16 %v3013
    %v3050 = vunpack.c.l.b16 %v3014
    %v3051 = vunpack.c.l.b16 %v3015
    %v3052 = vunpack.c.l.b16 %v3016
    %v3053 = vunpack.c.l.b16 %v3017
    %v3054 = vunpack.c.l.b16 %v3018
    %v3055 = vunpack.c.l.b16 %v3019
    %v3056 = vunpack.c.l.b16 %v3020
    %v3057 = vpack.c.b16 %v3042, %v3041
    %v3058 = vpack.c.b16 %v3044, %v3043
    %v3059 = vpack.c.b16 %v3046, %v3045
    %v3060 = vpack.c.b16 %v3048, %v3047
    %v3061 = vpack.c.b16 %v3050, %v3049
    %v3062 = vpack.c.b16 %v3052, %v3051
    %v3063 = vpack.c.b16 %v3054, %v3053
    %v3064 = vpack.c.b16 %v3056, %v3055
    %3073 = vmatprep.subr.bf16.mxu0 0
    %3074 = vmatpush1.bf16.msra.mxu0 %v3057
    %3075 = vmatprep.subr.bf16.mxu0 0
    %3076 = vmatpush1.bf16.msra.mxu0 %v3058
    %3077 = vmatprep.subr.bf16.mxu0 0
    %3078 = vmatpush1.bf16.msra.mxu0 %v3059
    %3079 = vmatprep.subr.bf16.mxu0 0
    %3080 = vmatpush1.bf16.msra.mxu0 %v3060
    %3081 = vmatprep.subr.bf16.mxu0 0
    %3082 = vmatpush1.bf16.msra.mxu0 %v3061
    %3083 = vmatprep.subr.bf16.mxu0 0
    %3084 = vmatpush1.bf16.msra.mxu0 %v3062
    %3085 = vmatprep.subr.bf16.mxu0 0
    %3086 = vmatpush1.bf16.msra.mxu0 %v3063
    %3087 = vmatprep.subr.bf16.mxu0 0
    %3088 = vmatpush1.bf16.msra.mxu0 %v3064
    %3089 = vmatprep.subr.bf16.mxu0 0
    %3090 = vmatpush1.bf16.msra.mxu0 0
    %3091 = vmatprep.subr.bf16.mxu0 0
    %3092 = vmatpush1.bf16.msra.mxu0 0
    %3093 = vmatprep.subr.bf16.mxu0 0
    %3094 = vmatpush1.bf16.msra.mxu0 0
    %3095 = vmatprep.subr.bf16.mxu0 0
    %3096 = vmatpush1.bf16.msra.mxu0 0
    %3097 = vmatprep.subr.bf16.mxu0 0
    %3098 = vmatpush1.bf16.msra.mxu0 0
    %3099 = vmatprep.subr.bf16.mxu0 0
    %3100 = vmatpush1.bf16.msra.mxu0 0
    %3101 = vmatprep.subr.bf16.mxu0 0
    %3102 = vmatpush1.bf16.msra.mxu0 0
    %3103 = vmatprep.subr.bf16.mxu0 0
    %3104 = vmatpush1.bf16.msra.mxu0 0
    %3105 = vmatprep.mubr.bf16.mxu0 0
    %3106 = vmatmul.mubr.bf16.gmra.mrb[0].mxu0 %v812
    %v3107 = vpop.f32.mrb[0].mxu0
    %v3108 = vadd.f32 %v3024, %v3107
    %v3109 = vpop.f32.mrb[0].mxu0
    %v3110 = vpop.f32.mrb[0].mxu0
    %v3111 = vadd.f32 %v3024, %v3110
    %v3112 = vpop.f32.mrb[0].mxu0
    %3113 = vmatprep.mubr.bf16.mxu0 0
    %3114 = vmatmul.mubr.bf16.gmra.mrb[0].mxu0 %v817
    %v3115 = vpop.f32.mrb[0].mxu0
    %v3116 = vadd.f32 %v3024, %v3115
    %v3117 = vpop.f32.mrb[0].mxu0
    %v3118 = vpop.f32.mrb[0].mxu0
    %v3119 = vadd.f32 %v3024, %v3118
    %v3120 = vpop.f32.mrb[0].mxu0
    %3121 = vmatprep.mubr.bf16.mxu0 0
    %3122 = vmatmul.mubr.bf16.gmra.mrb[0].mxu0 %v822
    %v3123 = vpop.f32.mrb[0].mxu0
    %v3124 = vadd.f32 %v3024, %v3123
    %v3125 = vpop.f32.mrb[0].mxu0
    %v3126 = vpop.f32.mrb[0].mxu0
    %v3127 = vadd.f32 %v3024, %v3126
    %v3128 = vpop.f32.mrb[0].mxu0
    %3129 = vmatprep.mubr.bf16.mxu0 0
    %3130 = vmatmul.mubr.bf16.gmra.mrb[0].mxu0 %v827
    %v3131 = vpop.f32.mrb[0].mxu0
    %v3132 = vadd.f32 %v3024, %v3131
    %v3133 = vpop.f32.mrb[0].mxu0
    %v3134 = vpop.f32.mrb[0].mxu0
    %v3135 = vadd.f32 %v3024, %v3134
    %v3136 = vpop.f32.mrb[0].mxu0
    %3137 = vmatprep.mubr.bf16.mxu0 0
    %3138 = vmatmul.mubr.bf16.gmra.mrb[0].mxu0 %v832
    %v3139 = vpop.f32.mrb[0].mxu0
    %v3140 = vadd.f32 %v3024, %v3139
    %v3141 = vpop.f32.mrb[0].mxu0
    %v3142 = vpop.f32.mrb[0].mxu0
    %v3143 = vadd.f32 %v3024, %v3142
    %v3144 = vpop.f32.mrb[0].mxu0
    %3145 = vmatprep.mubr.bf16.mxu0 0
    %3146 = vmatmul.mubr.bf16.gmra.mrb[0].mxu0 %v837
    %v3147 = vpop.f32.mrb[0].mxu0
    %v3148 = vadd.f32 %v3024, %v3147
    %v3149 = vpop.f32.mrb[0].mxu0
    %v3150 = vpop.f32.mrb[0].mxu0
    %v3151 = vadd.f32 %v3024, %v3150
    %v3152 = vpop.f32.mrb[0].mxu0
    %3153 = vmatprep.mubr.bf16.mxu0 0
    %3154 = vmatmul.mubr.bf16.gmra.mrb[0].mxu0 %v842
    %v3155 = vpop.f32.mrb[0].mxu0
    %v3156 = vadd.f32 %v3024, %v3155
    %v3157 = vpop.f32.mrb[0].mxu0
    %v3158 = vpop.f32.mrb[0].mxu0
    %v3159 = vadd.f32 %v3024, %v3158
    %v3160 = vpop.f32.mrb[0].mxu0
    %3161 = vmatprep.mubr.bf16.mxu0 0
    %3162 = vmatmul.mubr.bf16.gmra.mrb[0].mxu0 %v847
    %v3163 = vpop.f32.mrb[0].mxu0
    %v3164 = vadd.f32 %v3024, %v3163
    %v3165 = vpop.f32.mrb[0].mxu0
    %v3166 = vpop.f32.mrb[0].mxu0
    %v3167 = vadd.f32 %v3024, %v3166
    %v3168 = vpop.f32.mrb[0].mxu0
    %3169 = vmatprep.mubr.bf16.mxu0 0
    %3170 = vmatmul.mubr.bf16.gmra.mrb[0].mxu0 %v852
    %v3171 = vpop.f32.mrb[0].mxu0
    %v3172 = vadd.f32 %v3024, %v3171
    %v3173 = vpop.f32.mrb[0].mxu0
    %v3174 = vpop.f32.mrb[0].mxu0
    %v3175 = vadd.f32 %v3024, %v3174
    %v3176 = vpop.f32.mrb[0].mxu0
    %3177 = vmatprep.mubr.bf16.mxu0 0
    %3178 = vmatmul.mubr.bf16.gmra.mrb[0].mxu0 %v857
    %v3179 = vpop.f32.mrb[0].mxu0
    %v3180 = vadd.f32 %v3024, %v3179
    %v3181 = vpop.f32.mrb[0].mxu0
    %v3182 = vpop.f32.mrb[0].mxu0
    %v3183 = vadd.f32 %v3024, %v3182
    %v3184 = vpop.f32.mrb[0].mxu0
    %3185 = vmatprep.mubr.bf16.mxu0 0
    %3186 = vmatmul.mubr.bf16.gmra.mrb[0].mxu0 %v862
    %v3187 = vpop.f32.mrb[0].mxu0
    %v3188 = vadd.f32 %v3024, %v3187
    %v3189 = vpop.f32.mrb[0].mxu0
    %v3190 = vpop.f32.mrb[0].mxu0
    %v3191 = vadd.f32 %v3024, %v3190
    %v3192 = vpop.f32.mrb[0].mxu0
    %3193 = vmatprep.mubr.bf16.mxu0 0
    %3194 = vmatmul.mubr.bf16.gmra.mrb[0].mxu0 %v867
    %v3195 = vpop.f32.mrb[0].mxu0
    %v3196 = vadd.f32 %v3024, %v3195
    %v3197 = vpop.f32.mrb[0].mxu0
    %v3198 = vpop.f32.mrb[0].mxu0
    %v3199 = vadd.f32 %v3024, %v3198
    %v3200 = vpop.f32.mrb[0].mxu0
    %3201 = vmatprep.mubr.bf16.mxu0 0
    %3202 = vmatmul.mubr.bf16.gmra.mrb[0].mxu0 %v872
    %v3203 = vpop.f32.mrb[0].mxu0
    %v3204 = vadd.f32 %v3024, %v3203
    %v3205 = vpop.f32.mrb[0].mxu0
    %v3206 = vpop.f32.mrb[0].mxu0
    %v3207 = vadd.f32 %v3024, %v3206
    %v3208 = vpop.f32.mrb[0].mxu0
    %3209 = vdwg.mxu0
    %v3210 = vmax.f32 %v3108, 0.0
    %v3211 = vmax.f32 %v3111, 0.0
    %v3212 = vmax.f32 %v3116, 0.0
    %v3213 = vmax.f32 %v3119, 0.0
    %v3214 = vmax.f32 %v3124, 0.0
    %v3215 = vmax.f32 %v3127, 0.0
    %v3216 = vmax.f32 %v3132, 0.0
    %v3217 = vmax.f32 %v3135, 0.0
    %v3218 = vmax.f32 %v3140, 0.0
    %v3219 = vmax.f32 %v3143, 0.0
    %v3220 = vmax.f32 %v3148, 0.0
    %v3221 = vmax.f32 %v3151, 0.0
    %v3222 = vmax.f32 %v3156, 0.0
    %v3223 = vmax.f32 %v3159, 0.0
    %v3224 = vmax.f32 %v3164, 0.0
    %v3225 = vmax.f32 %v3167, 0.0
    %v3226 = vmax.f32 %v3172, 0.0
    %v3227 = vmax.f32 %v3175, 0.0
    %v3228 = vmax.f32 %v3180, 0.0
    %v3229 = vmax.f32 %v3183, 0.0
    %v3230 = vmax.f32 %v3188, 0.0
    %v3231 = vmax.f32 %v3191, 0.0
    %v3232 = vmax.f32 %v3196, 0.0
    %v3233 = vmax.f32 %v3199, 0.0
    %v3234 = vmax.f32 %v3204, 0.0
    %v3235 = vmax.f32 %v3207, 0.0
    %v3236 = vlaneseq
    %v3237 = vshrl.u32 %v3236, 7
    %v3238 = vsub.s32 3, %v3237
    %v3239 = vrot.slane %v101, %v3238
    %v3240 = vmul.f32 %v3210, %v3239
    %v3241 = vmul.f32 %v3211, %v3239
    %v3242 = vmul.f32 %v3212, %v3239
    %v3243 = vmul.f32 %v3213, %v3239
    %v3244 = vmul.f32 %v3214, %v3239
    %v3245 = vmul.f32 %v3215, %v3239
    %v3246 = vmul.f32 %v3216, %v3239
    %v3247 = vmul.f32 %v3217, %v3239
    %v3248 = vmul.f32 %v3218, %v3239
    %v3249 = vmul.f32 %v3219, %v3239
    %v3250 = vmul.f32 %v3220, %v3239
    %v3251 = vmul.f32 %v3221, %v3239
    %v3252 = vmul.f32 %v3222, %v3239
    %v3253 = vmul.f32 %v3223, %v3239
    %v3254 = vmul.f32 %v3224, %v3239
    %v3255 = vmul.f32 %v3225, %v3239
    %v3256 = vmul.f32 %v3226, %v3239
    %v3257 = vmul.f32 %v3227, %v3239
    %v3258 = vmul.f32 %v3228, %v3239
    %v3259 = vmul.f32 %v3229, %v3239
    %v3260 = vmul.f32 %v3230, %v3239
    %v3261 = vmul.f32 %v3231, %v3239
    %v3262 = vmul.f32 %v3232, %v3239
    %v3263 = vmul.f32 %v3233, %v3239
    %v3264 = vmul.f32 %v3234, %v3239
    %v3265 = vmul.f32 %v3235, %v3239
    %v3266 = vsel %vm1135, %v3240, 0.0
    %3267 = vadd.xlane.f32.xlu0 %v3266
    %v3268 = vpop.xlane.xlu0 %3267
    %v3269 = vsel %vm1135, %v3241, 0.0
    %3270 = vadd.xlane.f32.xlu0 %v3269
    %v3271 = vpop.xlane.xlu0 %3270
    %v3272 = vsel %vm1135, %v3242, 0.0
    %3273 = vadd.xlane.f32.xlu0 %v3272
    %v3274 = vpop.xlane.xlu0 %3273
    %v3275 = vsel %vm1135, %v3243, 0.0
    %3276 = vadd.xlane.f32.xlu0 %v3275
    %v3277 = vpop.xlane.xlu0 %3276
    %v3278 = vsel %vm1135, %v3244, 0.0
    %3279 = vadd.xlane.f32.xlu0 %v3278
    %v3280 = vpop.xlane.xlu0 %3279
    %v3281 = vsel %vm1135, %v3245, 0.0
    %3282 = vadd.xlane.f32.xlu0 %v3281
    %v3283 = vpop.xlane.xlu0 %3282
    %v3284 = vsel %vm1135, %v3246, 0.0
    %3285 = vadd.xlane.f32.xlu0 %v3284
    %v3286 = vpop.xlane.xlu0 %3285
    %v3287 = vsel %vm1135, %v3247, 0.0
    %3288 = vadd.xlane.f32.xlu0 %v3287
    %v3289 = vpop.xlane.xlu0 %3288
    %v3290 = vsel %vm1135, %v3248, 0.0
    %3291 = vadd.xlane.f32.xlu0 %v3290
    %v3292 = vpop.xlane.xlu0 %3291
    %v3293 = vsel %vm1135, %v3249, 0.0
    %3294 = vadd.xlane.f32.xlu0 %v3293
    %v3295 = vpop.xlane.xlu0 %3294
    %v3296 = vsel %vm1135, %v3250, 0.0
    %3297 = vadd.xlane.f32.xlu0 %v3296
    %v3298 = vpop.xlane.xlu0 %3297
    %v3299 = vsel %vm1135, %v3251, 0.0
    %3300 = vadd.xlane.f32.xlu0 %v3299
    %v3301 = vpop.xlane.xlu0 %3300
    %v3302 = vsel %vm1135, %v3252, 0.0
    %3303 = vadd.xlane.f32.xlu0 %v3302
    %v3304 = vpop.xlane.xlu0 %3303
    %v3305 = vsel %vm1135, %v3253, 0.0
    %3306 = vadd.xlane.f32.xlu0 %v3305
    %v3307 = vpop.xlane.xlu0 %3306
    %v3308 = vsel %vm1135, %v3254, 0.0
    %3309 = vadd.xlane.f32.xlu0 %v3308
    %v3310 = vpop.xlane.xlu0 %3309
    %v3311 = vsel %vm1135, %v3255, 0.0
    %3312 = vadd.xlane.f32.xlu0 %v3311
    %v3313 = vpop.xlane.xlu0 %3312
    %v3314 = vsel %vm1135, %v3256, 0.0
    %3315 = vadd.xlane.f32.xlu0 %v3314
    %v3316 = vpop.xlane.xlu0 %3315
    %v3317 = vsel %vm1135, %v3257, 0.0
    %3318 = vadd.xlane.f32.xlu0 %v3317
    %v3319 = vpop.xlane.xlu0 %3318
    %v3320 = vsel %vm1135, %v3258, 0.0
    %3321 = vadd.xlane.f32.xlu0 %v3320
    %v3322 = vpop.xlane.xlu0 %3321
    %v3323 = vsel %vm1135, %v3259, 0.0
    %3324 = vadd.xlane.f32.xlu0 %v3323
    %v3325 = vpop.xlane.xlu0 %3324
    %v3326 = vsel %vm1135, %v3260, 0.0
    %3327 = vadd.xlane.f32.xlu0 %v3326
    %v3328 = vpop.xlane.xlu0 %3327
    %v3329 = vsel %vm1135, %v3261, 0.0
    %3330 = vadd.xlane.f32.xlu0 %v3329
    %v3331 = vpop.xlane.xlu0 %3330
    %v3332 = vsel %vm1135, %v3262, 0.0
    %3333 = vadd.xlane.f32.xlu0 %v3332
    %v3334 = vpop.xlane.xlu0 %3333
    %v3335 = vsel %vm1135, %v3263, 0.0
    %3336 = vadd.xlane.f32.xlu0 %v3335
    %v3337 = vpop.xlane.xlu0 %3336
    %v3338 = vsel %vm1135, %v3264, 0.0
    %3339 = vadd.xlane.f32.xlu0 %v3338
    %v3340 = vpop.xlane.xlu0 %3339
    %v3341 = vsel %vm1135, %v3265, 0.0
    %3342 = vadd.xlane.f32.xlu0 %v3341
    %v3343 = vpop.xlane.xlu0 %3342
    %v3344 = vadd.f32 %v3268, %v1218
    %v3345 = vadd.f32 %v3271, %v1218
    %v3346 = vadd.f32 %v3274, %v1218
    %v3347 = vadd.f32 %v3277, %v1218
    %v3348 = vadd.f32 %v3280, %v1218
    %v3349 = vadd.f32 %v3283, %v1218
    %v3350 = vadd.f32 %v3286, %v1218
    %v3351 = vadd.f32 %v3289, %v1218
    %v3352 = vadd.f32 %v3292, %v1218
    %v3353 = vadd.f32 %v3295, %v1218
    %v3354 = vadd.f32 %v3298, %v1218
    %v3355 = vadd.f32 %v3301, %v1218
    %v3356 = vadd.f32 %v3304, %v1218
    %v3357 = vadd.f32 %v3307, %v1218
    %v3358 = vadd.f32 %v3310, %v1218
    %v3359 = vadd.f32 %v3313, %v1218
    %v3360 = vadd.f32 %v3316, %v1218
    %v3361 = vadd.f32 %v3319, %v1218
    %v3362 = vadd.f32 %v3322, %v1218
    %v3363 = vadd.f32 %v3325, %v1218
    %v3364 = vadd.f32 %v3328, %v1218
    %v3365 = vadd.f32 %v3331, %v1218
    %v3366 = vadd.f32 %v3334, %v1218
    %v3367 = vadd.f32 %v3337, %v1218
    %v3368 = vadd.f32 %v3340, %v1218
    %v3369 = vadd.f32 %v3343, %v1218
    %v3370 = vxor.u32 %v3344, 2147483648
    %v3371 = vxor.u32 %v3345, 2147483648
    %v3372 = vxor.u32 %v3346, 2147483648
    %v3373 = vxor.u32 %v3347, 2147483648
    %v3374 = vxor.u32 %v3348, 2147483648
    %v3375 = vxor.u32 %v3349, 2147483648
    %v3376 = vxor.u32 %v3350, 2147483648
    %v3377 = vxor.u32 %v3351, 2147483648
    %v3378 = vxor.u32 %v3352, 2147483648
    %v3379 = vxor.u32 %v3353, 2147483648
    %v3380 = vxor.u32 %v3354, 2147483648
    %v3381 = vxor.u32 %v3355, 2147483648
    %v3382 = vxor.u32 %v3356, 2147483648
    %v3383 = vxor.u32 %v3357, 2147483648
    %v3384 = vxor.u32 %v3358, 2147483648
    %v3385 = vxor.u32 %v3359, 2147483648
    %v3386 = vxor.u32 %v3360, 2147483648
    %v3387 = vxor.u32 %v3361, 2147483648
    %v3388 = vxor.u32 %v3362, 2147483648
    %v3389 = vxor.u32 %v3363, 2147483648
    %v3390 = vxor.u32 %v3364, 2147483648
    %v3391 = vxor.u32 %v3365, 2147483648
    %v3392 = vxor.u32 %v3366, 2147483648
    %v3393 = vxor.u32 %v3367, 2147483648
    %v3394 = vxor.u32 %v3368, 2147483648
    %v3395 = vxor.u32 %v3369, 2147483648
    %v3396 = vmul.f32 %v3370, 1.442695
    %v3397 = vpow.pop %v3396
    %v3398 = vmul.f32 %v3371, 1.442695
    %v3399 = vpow.pop %v3398
    %v3400 = vmul.f32 %v3372, 1.442695
    %v3401 = vpow.pop %v3400
    %v3402 = vmul.f32 %v3373, 1.442695
    %v3403 = vpow.pop %v3402
    %v3404 = vmul.f32 %v3374, 1.442695
    %v3405 = vpow.pop %v3404
    %v3406 = vmul.f32 %v3375, 1.442695
    %v3407 = vpow.pop %v3406
    %v3408 = vmul.f32 %v3376, 1.442695
    %v3409 = vpow.pop %v3408
    %v3410 = vmul.f32 %v3377, 1.442695
    %v3411 = vpow.pop %v3410
    %v3412 = vmul.f32 %v3378, 1.442695
    %v3413 = vpow.pop %v3412
    %v3414 = vmul.f32 %v3379, 1.442695
    %v3415 = vpow.pop %v3414
    %v3416 = vmul.f32 %v3380, 1.442695
    %v3417 = vpow.pop %v3416
    %v3418 = vmul.f32 %v3381, 1.442695
    %v3419 = vpow.pop %v3418
    %v3420 = vmul.f32 %v3382, 1.442695
    %v3421 = vpow.pop %v3420
    %v3422 = vmul.f32 %v3383, 1.442695
    %v3423 = vpow.pop %v3422
    %v3424 = vmul.f32 %v3384, 1.442695
    %v3425 = vpow.pop %v3424
    %v3426 = vmul.f32 %v3385, 1.442695
    %v3427 = vpow.pop %v3426
    %v3428 = vmul.f32 %v3386, 1.442695
    %v3429 = vpow.pop %v3428
    %v3430 = vmul.f32 %v3387, 1.442695
    %v3431 = vpow.pop %v3430
    %v3432 = vmul.f32 %v3388, 1.442695
    %v3433 = vpow.pop %v3432
    %v3434 = vmul.f32 %v3389, 1.442695
    %v3435 = vpow.pop %v3434
    %v3436 = vmul.f32 %v3390, 1.442695
    %v3437 = vpow.pop %v3436
    %v3438 = vmul.f32 %v3391, 1.442695
    %v3439 = vpow.pop %v3438
    %v3440 = vmul.f32 %v3392, 1.442695
    %v3441 = vpow.pop %v3440
    %v3442 = vmul.f32 %v3393, 1.442695
    %v3443 = vpow.pop %v3442
    %v3444 = vmul.f32 %v3394, 1.442695
    %v3445 = vpow.pop %v3444
    %v3446 = vmul.f32 %v3395, 1.442695
    %v3447 = vpow.pop %v3446
    %v3448 = vadd.f32 %v3397, 1.0
    %v3449 = vadd.f32 %v3399, 1.0
    %v3450 = vadd.f32 %v3401, 1.0
    %v3451 = vadd.f32 %v3403, 1.0
    %v3452 = vadd.f32 %v3405, 1.0
    %v3453 = vadd.f32 %v3407, 1.0
    %v3454 = vadd.f32 %v3409, 1.0
    %v3455 = vadd.f32 %v3411, 1.0
    %v3456 = vadd.f32 %v3413, 1.0
    %v3457 = vadd.f32 %v3415, 1.0
    %v3458 = vadd.f32 %v3417, 1.0
    %v3459 = vadd.f32 %v3419, 1.0
    %v3460 = vadd.f32 %v3421, 1.0
    %v3461 = vadd.f32 %v3423, 1.0
    %v3462 = vadd.f32 %v3425, 1.0
    %v3463 = vadd.f32 %v3427, 1.0
    %v3464 = vadd.f32 %v3429, 1.0
    %v3465 = vadd.f32 %v3431, 1.0
    %v3466 = vadd.f32 %v3433, 1.0
    %v3467 = vadd.f32 %v3435, 1.0
    %v3468 = vadd.f32 %v3437, 1.0
    %v3469 = vadd.f32 %v3439, 1.0
    %v3470 = vadd.f32 %v3441, 1.0
    %v3471 = vadd.f32 %v3443, 1.0
    %v3472 = vadd.f32 %v3445, 1.0
    %v3473 = vadd.f32 %v3447, 1.0
    %v3474 = vrcp.pop %v3448
    %v3475 = vmul.f32 1.0, %v3474
    %v3476 = vrcp.pop %v3449
    %v3477 = vmul.f32 1.0, %v3476
    %v3478 = vrcp.pop %v3450
    %v3479 = vmul.f32 1.0, %v3478
    %v3480 = vrcp.pop %v3451
    %v3481 = vmul.f32 1.0, %v3480
    %v3482 = vrcp.pop %v3452
    %v3483 = vmul.f32 1.0, %v3482
    %v3484 = vrcp.pop %v3453
    %v3485 = vmul.f32 1.0, %v3484
    %v3486 = vrcp.pop %v3454
    %v3487 = vmul.f32 1.0, %v3486
    %v3488 = vrcp.pop %v3455
    %v3489 = vmul.f32 1.0, %v3488
    %v3490 = vrcp.pop %v3456
    %v3491 = vmul.f32 1.0, %v3490
    %v3492 = vrcp.pop %v3457
    %v3493 = vmul.f32 1.0, %v3492
    %v3494 = vrcp.pop %v3458
    %v3495 = vmul.f32 1.0, %v3494
    %v3496 = vrcp.pop %v3459
    %v3497 = vmul.f32 1.0, %v3496
    %v3498 = vrcp.pop %v3460
    %v3499 = vmul.f32 1.0, %v3498
    %v3500 = vrcp.pop %v3461
    %v3501 = vmul.f32 1.0, %v3500
    %v3502 = vrcp.pop %v3462
    %v3503 = vmul.f32 1.0, %v3502
    %v3504 = vrcp.pop %v3463
    %v3505 = vmul.f32 1.0, %v3504
    %v3506 = vrcp.pop %v3464
    %v3507 = vmul.f32 1.0, %v3506
    %v3508 = vrcp.pop %v3465
    %v3509 = vmul.f32 1.0, %v3508
    %v3510 = vrcp.pop %v3466
    %v3511 = vmul.f32 1.0, %v3510
    %v3512 = vrcp.pop %v3467
    %v3513 = vmul.f32 1.0, %v3512
    %v3514 = vrcp.pop %v3468
    %v3515 = vmul.f32 1.0, %v3514
    %v3516 = vrcp.pop %v3469
    %v3517 = vmul.f32 1.0, %v3516
    %v3518 = vrcp.pop %v3470
    %v3519 = vmul.f32 1.0, %v3518
    %v3520 = vrcp.pop %v3471
    %v3521 = vmul.f32 1.0, %v3520
    %v3522 = vrcp.pop %v3472
    %v3523 = vmul.f32 1.0, %v3522
    %v3524 = vrcp.pop %v3473
    %v3525 = vmul.f32 1.0, %v3524
    %3527 = vset.pattern.permute.xlu0 3
    %3528 = vperm.xlu0 %3527, %v3475
    %v3529 = vpop.permute.xlu0 %3528
    %3532 = vset.pattern.permute.xlu0 3
    %3533 = vperm.xlu0 %3532, %v3477
    %v3534 = vpop.permute.xlu0 %3533
    %3537 = vset.pattern.permute.xlu0 3
    %3538 = vperm.xlu0 %3537, %v3479
    %v3539 = vpop.permute.xlu0 %3538
    %3542 = vset.pattern.permute.xlu0 3
    %3543 = vperm.xlu0 %3542, %v3481
    %v3544 = vpop.permute.xlu0 %3543
    %3547 = vset.pattern.permute.xlu0 3
    %3548 = vperm.xlu0 %3547, %v3483
    %v3549 = vpop.permute.xlu0 %3548
    %3552 = vset.pattern.permute.xlu0 3
    %3553 = vperm.xlu0 %3552, %v3485
    %v3554 = vpop.permute.xlu0 %3553
    %3557 = vset.pattern.permute.xlu0 3
    %3558 = vperm.xlu0 %3557, %v3487
    %v3559 = vpop.permute.xlu0 %3558
    %3562 = vset.pattern.permute.xlu0 3
    %3563 = vperm.xlu0 %3562, %v3489
    %v3564 = vpop.permute.xlu0 %3563
    %3567 = vset.pattern.permute.xlu0 3
    %3568 = vperm.xlu0 %3567, %v3491
    %v3569 = vpop.permute.xlu0 %3568
    %3572 = vset.pattern.permute.xlu0 3
    %3573 = vperm.xlu0 %3572, %v3493
    %v3574 = vpop.permute.xlu0 %3573
    %3577 = vset.pattern.permute.xlu0 3
    %3578 = vperm.xlu0 %3577, %v3495
    %v3579 = vpop.permute.xlu0 %3578
    %3582 = vset.pattern.permute.xlu0 3
    %3583 = vperm.xlu0 %3582, %v3497
    %v3584 = vpop.permute.xlu0 %3583
    %3587 = vset.pattern.permute.xlu0 3
    %3588 = vperm.xlu0 %3587, %v3499
    %v3589 = vpop.permute.xlu0 %3588
    %3592 = vset.pattern.permute.xlu0 3
    %3593 = vperm.xlu0 %3592, %v3501
    %v3594 = vpop.permute.xlu0 %3593
    %3597 = vset.pattern.permute.xlu0 3
    %3598 = vperm.xlu0 %3597, %v3503
    %v3599 = vpop.permute.xlu0 %3598
    %3602 = vset.pattern.permute.xlu0 3
    %3603 = vperm.xlu0 %3602, %v3505
    %v3604 = vpop.permute.xlu0 %3603
    %3607 = vset.pattern.permute.xlu0 3
    %3608 = vperm.xlu0 %3607, %v3507
    %v3609 = vpop.permute.xlu0 %3608
    %3612 = vset.pattern.permute.xlu0 3
    %3613 = vperm.xlu0 %3612, %v3509
    %v3614 = vpop.permute.xlu0 %3613
    %3617 = vset.pattern.permute.xlu0 3
    %3618 = vperm.xlu0 %3617, %v3511
    %v3619 = vpop.permute.xlu0 %3618
    %3622 = vset.pattern.permute.xlu0 3
    %3623 = vperm.xlu0 %3622, %v3513
    %v3624 = vpop.permute.xlu0 %3623
    %3627 = vset.pattern.permute.xlu0 3
    %3628 = vperm.xlu0 %3627, %v3515
    %v3629 = vpop.permute.xlu0 %3628
    %3632 = vset.pattern.permute.xlu0 3
    %3633 = vperm.xlu0 %3632, %v3517
    %v3634 = vpop.permute.xlu0 %3633
    %3637 = vset.pattern.permute.xlu0 3
    %3638 = vperm.xlu0 %3637, %v3519
    %v3639 = vpop.permute.xlu0 %3638
    %3642 = vset.pattern.permute.xlu0 3
    %3643 = vperm.xlu0 %3642, %v3521
    %v3644 = vpop.permute.xlu0 %3643
    %3647 = vset.pattern.permute.xlu0 3
    %3648 = vperm.xlu0 %3647, %v3523
    %v3649 = vpop.permute.xlu0 %3648
    %3652 = vset.pattern.permute.xlu0 3
    %3653 = vperm.xlu0 %3652, %v3525
    %v3654 = vpop.permute.xlu0 %3653
    %v3656 = vlaneseq
    %v3657 = vshrl.u32 %v3656, 7
    %v3658 = vsub.s32 3, %v3657
    %v3659 = vrot.slane %v103, %v3658
    %v3660 = vmul.f32 %v3529, %v3659
    %v3661 = vmul.f32 %v3534, %v3659
    %v3662 = vmul.f32 %v3539, %v3659
    %v3663 = vmul.f32 %v3544, %v3659
    %v3664 = vmul.f32 %v3549, %v3659
    %v3665 = vmul.f32 %v3554, %v3659
    %v3666 = vmul.f32 %v3559, %v3659
    %v3667 = vmul.f32 %v3564, %v3659
    %v3668 = vmul.f32 %v3569, %v3659
    %v3669 = vmul.f32 %v3574, %v3659
    %v3670 = vmul.f32 %v3579, %v3659
    %v3671 = vmul.f32 %v3584, %v3659
    %v3672 = vmul.f32 %v3589, %v3659
    %v3673 = vmul.f32 %v3594, %v3659
    %v3674 = vmul.f32 %v3599, %v3659
    %v3675 = vmul.f32 %v3604, %v3659
    %v3676 = vmul.f32 %v3609, %v3659
    %v3677 = vmul.f32 %v3614, %v3659
    %v3678 = vmul.f32 %v3619, %v3659
    %v3679 = vmul.f32 %v3624, %v3659
    %v3680 = vmul.f32 %v3629, %v3659
    %v3681 = vmul.f32 %v3634, %v3659
    %v3682 = vmul.f32 %v3639, %v3659
    %v3683 = vmul.f32 %v3644, %v3659
    %v3684 = vmul.f32 %v3649, %v3659
    %v3685 = vmul.f32 %v3654, %v3659
    %v3686 = vadd.f32 %v2978, %v3660
    %v3687 = vadd.f32 %v2979, %v3661
    %v3688 = vadd.f32 %v2980, %v3662
    %v3689 = vadd.f32 %v2981, %v3663
    %v3690 = vadd.f32 %v2982, %v3664
    %v3691 = vadd.f32 %v2983, %v3665
    %v3692 = vadd.f32 %v2984, %v3666
    %v3693 = vadd.f32 %v2985, %v3667
    %v3694 = vadd.f32 %v2986, %v3668
    %v3695 = vadd.f32 %v2987, %v3669
    %v3696 = vadd.f32 %v2988, %v3670
    %v3697 = vadd.f32 %v2989, %v3671
    %v3698 = vadd.f32 %v2990, %v3672
    %v3699 = vadd.f32 %v2991, %v3673
    %v3700 = vadd.f32 %v2992, %v3674
    %v3701 = vadd.f32 %v2993, %v3675
    %v3702 = vadd.f32 %v2994, %v3676
    %v3703 = vadd.f32 %v2995, %v3677
    %v3704 = vadd.f32 %v2996, %v3678
    %v3705 = vadd.f32 %v2997, %v3679
    %v3706 = vadd.f32 %v2998, %v3680
    %v3707 = vadd.f32 %v2999, %v3681
    %v3708 = vadd.f32 %v3000, %v3682
    %v3709 = vadd.f32 %v3001, %v3683
    %v3710 = vadd.f32 %v3002, %v3684
    %v3711 = vadd.f32 %v3003, %v3685
    %s3712 = scalar_lea.vmem %s3, 256
    %v3713 = vld [vmem:[%s3712] sm:$0xf]
    %v3714 = vld [vmem:[%s3712 + $0x4] sm:$0xf]
    %v3715 = vld [vmem:[%s3712 + $0x8] sm:$0xf]
    %v3716 = vld [vmem:[%s3712 + $0xc] sm:$0xf]
    %v3717 = vld [vmem:[%s3712 + $0x10] sm:$0xf]
    %v3718 = vld [vmem:[%s3712 + $0x14] sm:$0xf]
    %v3719 = vld [vmem:[%s3712 + $0x18] sm:$0xf]
    %v3720 = vld [vmem:[%s3712 + $0x1c] sm:$0xf]
    %v3721 = vld [vmem:[%s3712 + $0x20] sm:$0xf]
    %v3722 = vld [vmem:[%s3712 + $0x24] sm:$0xf]
    %v3723 = vld [vmem:[%s3712 + $0x28] sm:$0xf]
    %v3724 = vld [vmem:[%s3712 + $0x2c] sm:$0xf]
    %v3725 = vld [vmem:[%s3712 + $0x30] sm:$0xf]
    %v3726 = vld [vmem:[%s3712 + $0x34] sm:$0xf]
    %v3727 = vld [vmem:[%s3712 + $0x38] sm:$0xf]
    %v3728 = vld [vmem:[%s3712 + $0x3c] sm:$0xf]
    %v3729 = vlaneseq
    %v3730 = vshrl.u32 %v3729, 7
    %v3731 = vsub.s32 4, %v3730
    %v3732 = vrot.slane %v100, %v3731
    %v3749 = vunpack.c.l.b16 %v3713
    %v3750 = vunpack.c.l.b16 %v3714
    %v3751 = vunpack.c.l.b16 %v3715
    %v3752 = vunpack.c.l.b16 %v3716
    %v3753 = vunpack.c.l.b16 %v3717
    %v3754 = vunpack.c.l.b16 %v3718
    %v3755 = vunpack.c.l.b16 %v3719
    %v3756 = vunpack.c.l.b16 %v3720
    %v3757 = vunpack.c.l.b16 %v3721
    %v3758 = vunpack.c.l.b16 %v3722
    %v3759 = vunpack.c.l.b16 %v3723
    %v3760 = vunpack.c.l.b16 %v3724
    %v3761 = vunpack.c.l.b16 %v3725
    %v3762 = vunpack.c.l.b16 %v3726
    %v3763 = vunpack.c.l.b16 %v3727
    %v3764 = vunpack.c.l.b16 %v3728
    %v3765 = vpack.c.b16 %v3750, %v3749
    %v3766 = vpack.c.b16 %v3752, %v3751
    %v3767 = vpack.c.b16 %v3754, %v3753
    %v3768 = vpack.c.b16 %v3756, %v3755
    %v3769 = vpack.c.b16 %v3758, %v3757
    %v3770 = vpack.c.b16 %v3760, %v3759
    %v3771 = vpack.c.b16 %v3762, %v3761
    %v3772 = vpack.c.b16 %v3764, %v3763
    %3781 = vmatprep.subr.bf16.mxu0 0
    %3782 = vmatpush1.bf16.msra.mxu0 %v3765
    %3783 = vmatprep.subr.bf16.mxu0 0
    %3784 = vmatpush1.bf16.msra.mxu0 %v3766
    %3785 = vmatprep.subr.bf16.mxu0 0
    %3786 = vmatpush1.bf16.msra.mxu0 %v3767
    %3787 = vmatprep.subr.bf16.mxu0 0
    %3788 = vmatpush1.bf16.msra.mxu0 %v3768
    %3789 = vmatprep.subr.bf16.mxu0 0
    %3790 = vmatpush1.bf16.msra.mxu0 %v3769
    %3791 = vmatprep.subr.bf16.mxu0 0
    %3792 = vmatpush1.bf16.msra.mxu0 %v3770
    %3793 = vmatprep.subr.bf16.mxu0 0
    %3794 = vmatpush1.bf16.msra.mxu0 %v3771
    %3795 = vmatprep.subr.bf16.mxu0 0
    %3796 = vmatpush1.bf16.msra.mxu0 %v3772
    %3797 = vmatprep.subr.bf16.mxu0 0
    %3798 = vmatpush1.bf16.msra.mxu0 0
    %3799 = vmatprep.subr.bf16.mxu0 0
    %3800 = vmatpush1.bf16.msra.mxu0 0
    %3801 = vmatprep.subr.bf16.mxu0 0
    %3802 = vmatpush1.bf16.msra.mxu0 0
    %3803 = vmatprep.subr.bf16.mxu0 0
    %3804 = vmatpush1.bf16.msra.mxu0 0
    %3805 = vmatprep.subr.bf16.mxu0 0
    %3806 = vmatpush1.bf16.msra.mxu0 0
    %3807 = vmatprep.subr.bf16.mxu0 0
    %3808 = vmatpush1.bf16.msra.mxu0 0
    %3809 = vmatprep.subr.bf16.mxu0 0
    %3810 = vmatpush1.bf16.msra.mxu0 0
    %3811 = vmatprep.subr.bf16.mxu0 0
    %3812 = vmatpush1.bf16.msra.mxu0 0
    %3813 = vmatprep.mubr.bf16.mxu0 0
    %3814 = vmatmul.mubr.bf16.gmra.mrb[0].mxu0 %v813
    %v3815 = vpop.f32.mrb[0].mxu0
    %v3816 = vadd.f32 %v3732, %v3815
    %v3817 = vpop.f32.mrb[0].mxu0
    %v3818 = vpop.f32.mrb[0].mxu0
    %v3819 = vadd.f32 %v3732, %v3818
    %v3820 = vpop.f32.mrb[0].mxu0
    %3821 = vmatprep.mubr.bf16.mxu0 0
    %3822 = vmatmul.mubr.bf16.gmra.mrb[0].mxu0 %v818
    %v3823 = vpop.f32.mrb[0].mxu0
    %v3824 = vadd.f32 %v3732, %v3823
    %v3825 = vpop.f32.mrb[0].mxu0
    %v3826 = vpop.f32.mrb[0].mxu0
    %v3827 = vadd.f32 %v3732, %v3826
    %v3828 = vpop.f32.mrb[0].mxu0
    %3829 = vmatprep.mubr.bf16.mxu0 0
    %3830 = vmatmul.mubr.bf16.gmra.mrb[0].mxu0 %v823
    %v3831 = vpop.f32.mrb[0].mxu0
    %v3832 = vadd.f32 %v3732, %v3831
    %v3833 = vpop.f32.mrb[0].mxu0
    %v3834 = vpop.f32.mrb[0].mxu0
    %v3835 = vadd.f32 %v3732, %v3834
    %v3836 = vpop.f32.mrb[0].mxu0
    %3837 = vmatprep.mubr.bf16.mxu0 0
    %3838 = vmatmul.mubr.bf16.gmra.mrb[0].mxu0 %v828
    %v3839 = vpop.f32.mrb[0].mxu0
    %v3840 = vadd.f32 %v3732, %v3839
    %v3841 = vpop.f32.mrb[0].mxu0
    %v3842 = vpop.f32.mrb[0].mxu0
    %v3843 = vadd.f32 %v3732, %v3842
    %v3844 = vpop.f32.mrb[0].mxu0
    %3845 = vmatprep.mubr.bf16.mxu0 0
    %3846 = vmatmul.mubr.bf16.gmra.mrb[0].mxu0 %v833
    %v3847 = vpop.f32.mrb[0].mxu0
    %v3848 = vadd.f32 %v3732, %v3847
    %v3849 = vpop.f32.mrb[0].mxu0
    %v3850 = vpop.f32.mrb[0].mxu0
    %v3851 = vadd.f32 %v3732, %v3850
    %v3852 = vpop.f32.mrb[0].mxu0
    %3853 = vmatprep.mubr.bf16.mxu0 0
    %3854 = vmatmul.mubr.bf16.gmra.mrb[0].mxu0 %v838
    %v3855 = vpop.f32.mrb[0].mxu0
    %v3856 = vadd.f32 %v3732, %v3855
    %v3857 = vpop.f32.mrb[0].mxu0
    %v3858 = vpop.f32.mrb[0].mxu0
    %v3859 = vadd.f32 %v3732, %v3858
    %v3860 = vpop.f32.mrb[0].mxu0
    %3861 = vmatprep.mubr.bf16.mxu0 0
    %3862 = vmatmul.mubr.bf16.gmra.mrb[0].mxu0 %v843
    %v3863 = vpop.f32.mrb[0].mxu0
    %v3864 = vadd.f32 %v3732, %v3863
    %v3865 = vpop.f32.mrb[0].mxu0
    %v3866 = vpop.f32.mrb[0].mxu0
    %v3867 = vadd.f32 %v3732, %v3866
    %v3868 = vpop.f32.mrb[0].mxu0
    %3869 = vmatprep.mubr.bf16.mxu0 0
    %3870 = vmatmul.mubr.bf16.gmra.mrb[0].mxu0 %v848
    %v3871 = vpop.f32.mrb[0].mxu0
    %v3872 = vadd.f32 %v3732, %v3871
    %v3873 = vpop.f32.mrb[0].mxu0
    %v3874 = vpop.f32.mrb[0].mxu0
    %v3875 = vadd.f32 %v3732, %v3874
    %v3876 = vpop.f32.mrb[0].mxu0
    %3877 = vmatprep.mubr.bf16.mxu0 0
    %3878 = vmatmul.mubr.bf16.gmra.mrb[0].mxu0 %v853
    %v3879 = vpop.f32.mrb[0].mxu0
    %v3880 = vadd.f32 %v3732, %v3879
    %v3881 = vpop.f32.mrb[0].mxu0
    %v3882 = vpop.f32.mrb[0].mxu0
    %v3883 = vadd.f32 %v3732, %v3882
    %v3884 = vpop.f32.mrb[0].mxu0
    %3885 = vmatprep.mubr.bf16.mxu0 0
    %3886 = vmatmul.mubr.bf16.gmra.mrb[0].mxu0 %v858
    %v3887 = vpop.f32.mrb[0].mxu0
    %v3888 = vadd.f32 %v3732, %v3887
    %v3889 = vpop.f32.mrb[0].mxu0
    %v3890 = vpop.f32.mrb[0].mxu0
    %v3891 = vadd.f32 %v3732, %v3890
    %v3892 = vpop.f32.mrb[0].mxu0
    %3893 = vmatprep.mubr.bf16.mxu0 0
    %3894 = vmatmul.mubr.bf16.gmra.mrb[0].mxu0 %v863
    %v3895 = vpop.f32.mrb[0].mxu0
    %v3896 = vadd.f32 %v3732, %v3895
    %v3897 = vpop.f32.mrb[0].mxu0
    %v3898 = vpop.f32.mrb[0].mxu0
    %v3899 = vadd.f32 %v3732, %v3898
    %v3900 = vpop.f32.mrb[0].mxu0
    %3901 = vmatprep.mubr.bf16.mxu0 0
    %3902 = vmatmul.mubr.bf16.gmra.mrb[0].mxu0 %v868
    %v3903 = vpop.f32.mrb[0].mxu0
    %v3904 = vadd.f32 %v3732, %v3903
    %v3905 = vpop.f32.mrb[0].mxu0
    %v3906 = vpop.f32.mrb[0].mxu0
    %v3907 = vadd.f32 %v3732, %v3906
    %v3908 = vpop.f32.mrb[0].mxu0
    %3909 = vmatprep.mubr.bf16.mxu0 0
    %3910 = vmatmul.mubr.bf16.gmra.mrb[0].mxu0 %v873
    %v3911 = vpop.f32.mrb[0].mxu0
    %v3912 = vadd.f32 %v3732, %v3911
    %v3913 = vpop.f32.mrb[0].mxu0
    %v3914 = vpop.f32.mrb[0].mxu0
    %v3915 = vadd.f32 %v3732, %v3914
    %v3916 = vpop.f32.mrb[0].mxu0
    %3917 = vdwg.mxu0
    %v3918 = vmax.f32 %v3816, 0.0
    %v3919 = vmax.f32 %v3819, 0.0
    %v3920 = vmax.f32 %v3824, 0.0
    %v3921 = vmax.f32 %v3827, 0.0
    %v3922 = vmax.f32 %v3832, 0.0
    %v3923 = vmax.f32 %v3835, 0.0
    %v3924 = vmax.f32 %v3840, 0.0
    %v3925 = vmax.f32 %v3843, 0.0
    %v3926 = vmax.f32 %v3848, 0.0
    %v3927 = vmax.f32 %v3851, 0.0
    %v3928 = vmax.f32 %v3856, 0.0
    %v3929 = vmax.f32 %v3859, 0.0
    %v3930 = vmax.f32 %v3864, 0.0
    %v3931 = vmax.f32 %v3867, 0.0
    %v3932 = vmax.f32 %v3872, 0.0
    %v3933 = vmax.f32 %v3875, 0.0
    %v3934 = vmax.f32 %v3880, 0.0
    %v3935 = vmax.f32 %v3883, 0.0
    %v3936 = vmax.f32 %v3888, 0.0
    %v3937 = vmax.f32 %v3891, 0.0
    %v3938 = vmax.f32 %v3896, 0.0
    %v3939 = vmax.f32 %v3899, 0.0
    %v3940 = vmax.f32 %v3904, 0.0
    %v3941 = vmax.f32 %v3907, 0.0
    %v3942 = vmax.f32 %v3912, 0.0
    %v3943 = vmax.f32 %v3915, 0.0
    %v3944 = vlaneseq
    %v3945 = vshrl.u32 %v3944, 7
    %v3946 = vsub.s32 4, %v3945
    %v3947 = vrot.slane %v101, %v3946
    %v3948 = vmul.f32 %v3918, %v3947
    %v3949 = vmul.f32 %v3919, %v3947
    %v3950 = vmul.f32 %v3920, %v3947
    %v3951 = vmul.f32 %v3921, %v3947
    %v3952 = vmul.f32 %v3922, %v3947
    %v3953 = vmul.f32 %v3923, %v3947
    %v3954 = vmul.f32 %v3924, %v3947
    %v3955 = vmul.f32 %v3925, %v3947
    %v3956 = vmul.f32 %v3926, %v3947
    %v3957 = vmul.f32 %v3927, %v3947
    %v3958 = vmul.f32 %v3928, %v3947
    %v3959 = vmul.f32 %v3929, %v3947
    %v3960 = vmul.f32 %v3930, %v3947
    %v3961 = vmul.f32 %v3931, %v3947
    %v3962 = vmul.f32 %v3932, %v3947
    %v3963 = vmul.f32 %v3933, %v3947
    %v3964 = vmul.f32 %v3934, %v3947
    %v3965 = vmul.f32 %v3935, %v3947
    %v3966 = vmul.f32 %v3936, %v3947
    %v3967 = vmul.f32 %v3937, %v3947
    %v3968 = vmul.f32 %v3938, %v3947
    %v3969 = vmul.f32 %v3939, %v3947
    %v3970 = vmul.f32 %v3940, %v3947
    %v3971 = vmul.f32 %v3941, %v3947
    %v3972 = vmul.f32 %v3942, %v3947
    %v3973 = vmul.f32 %v3943, %v3947
    %v3974 = vsel %vm1135, %v3948, 0.0
    %3975 = vadd.xlane.f32.xlu0 %v3974
    %v3976 = vpop.xlane.xlu0 %3975
    %v3977 = vsel %vm1135, %v3949, 0.0
    %3978 = vadd.xlane.f32.xlu0 %v3977
    %v3979 = vpop.xlane.xlu0 %3978
    %v3980 = vsel %vm1135, %v3950, 0.0
    %3981 = vadd.xlane.f32.xlu0 %v3980
    %v3982 = vpop.xlane.xlu0 %3981
    %v3983 = vsel %vm1135, %v3951, 0.0
    %3984 = vadd.xlane.f32.xlu0 %v3983
    %v3985 = vpop.xlane.xlu0 %3984
    %v3986 = vsel %vm1135, %v3952, 0.0
    %3987 = vadd.xlane.f32.xlu0 %v3986
    %v3988 = vpop.xlane.xlu0 %3987
    %v3989 = vsel %vm1135, %v3953, 0.0
    %3990 = vadd.xlane.f32.xlu0 %v3989
    %v3991 = vpop.xlane.xlu0 %3990
    %v3992 = vsel %vm1135, %v3954, 0.0
    %3993 = vadd.xlane.f32.xlu0 %v3992
    %v3994 = vpop.xlane.xlu0 %3993
    %v3995 = vsel %vm1135, %v3955, 0.0
    %3996 = vadd.xlane.f32.xlu0 %v3995
    %v3997 = vpop.xlane.xlu0 %3996
    %v3998 = vsel %vm1135, %v3956, 0.0
    %3999 = vadd.xlane.f32.xlu0 %v3998
    %v4000 = vpop.xlane.xlu0 %3999
    %v4001 = vsel %vm1135, %v3957, 0.0
    %4002 = vadd.xlane.f32.xlu0 %v4001
    %v4003 = vpop.xlane.xlu0 %4002
    %v4004 = vsel %vm1135, %v3958, 0.0
    %4005 = vadd.xlane.f32.xlu0 %v4004
    %v4006 = vpop.xlane.xlu0 %4005
    %v4007 = vsel %vm1135, %v3959, 0.0
    %4008 = vadd.xlane.f32.xlu0 %v4007
    %v4009 = vpop.xlane.xlu0 %4008
    %v4010 = vsel %vm1135, %v3960, 0.0
    %4011 = vadd.xlane.f32.xlu0 %v4010
    %v4012 = vpop.xlane.xlu0 %4011
    %v4013 = vsel %vm1135, %v3961, 0.0
    %4014 = vadd.xlane.f32.xlu0 %v4013
    %v4015 = vpop.xlane.xlu0 %4014
    %v4016 = vsel %vm1135, %v3962, 0.0
    %4017 = vadd.xlane.f32.xlu0 %v4016
    %v4018 = vpop.xlane.xlu0 %4017
    %v4019 = vsel %vm1135, %v3963, 0.0
    %4020 = vadd.xlane.f32.xlu0 %v4019
    %v4021 = vpop.xlane.xlu0 %4020
    %v4022 = vsel %vm1135, %v3964, 0.0
    %4023 = vadd.xlane.f32.xlu0 %v4022
    %v4024 = vpop.xlane.xlu0 %4023
    %v4025 = vsel %vm1135, %v3965, 0.0
    %4026 = vadd.xlane.f32.xlu0 %v4025
    %v4027 = vpop.xlane.xlu0 %4026
    %v4028 = vsel %vm1135, %v3966, 0.0
    %4029 = vadd.xlane.f32.xlu0 %v4028
    %v4030 = vpop.xlane.xlu0 %4029
    %v4031 = vsel %vm1135, %v3967, 0.0
    %4032 = vadd.xlane.f32.xlu0 %v4031
    %v4033 = vpop.xlane.xlu0 %4032
    %v4034 = vsel %vm1135, %v3968, 0.0
    %4035 = vadd.xlane.f32.xlu0 %v4034
    %v4036 = vpop.xlane.xlu0 %4035
    %v4037 = vsel %vm1135, %v3969, 0.0
    %4038 = vadd.xlane.f32.xlu0 %v4037
    %v4039 = vpop.xlane.xlu0 %4038
    %v4040 = vsel %vm1135, %v3970, 0.0
    %4041 = vadd.xlane.f32.xlu0 %v4040
    %v4042 = vpop.xlane.xlu0 %4041
    %v4043 = vsel %vm1135, %v3971, 0.0
    %4044 = vadd.xlane.f32.xlu0 %v4043
    %v4045 = vpop.xlane.xlu0 %4044
    %v4046 = vsel %vm1135, %v3972, 0.0
    %4047 = vadd.xlane.f32.xlu0 %v4046
    %v4048 = vpop.xlane.xlu0 %4047
    %v4049 = vsel %vm1135, %v3973, 0.0
    %4050 = vadd.xlane.f32.xlu0 %v4049
    %v4051 = vpop.xlane.xlu0 %4050
    %v4052 = vadd.f32 %v3976, %v1218
    %v4053 = vadd.f32 %v3979, %v1218
    %v4054 = vadd.f32 %v3982, %v1218
    %v4055 = vadd.f32 %v3985, %v1218
    %v4056 = vadd.f32 %v3988, %v1218
    %v4057 = vadd.f32 %v3991, %v1218
    %v4058 = vadd.f32 %v3994, %v1218
    %v4059 = vadd.f32 %v3997, %v1218
    %v4060 = vadd.f32 %v4000, %v1218
    %v4061 = vadd.f32 %v4003, %v1218
    %v4062 = vadd.f32 %v4006, %v1218
    %v4063 = vadd.f32 %v4009, %v1218
    %v4064 = vadd.f32 %v4012, %v1218
    %v4065 = vadd.f32 %v4015, %v1218
    %v4066 = vadd.f32 %v4018, %v1218
    %v4067 = vadd.f32 %v4021, %v1218
    %v4068 = vadd.f32 %v4024, %v1218
    %v4069 = vadd.f32 %v4027, %v1218
    %v4070 = vadd.f32 %v4030, %v1218
    %v4071 = vadd.f32 %v4033, %v1218
    %v4072 = vadd.f32 %v4036, %v1218
    %v4073 = vadd.f32 %v4039, %v1218
    %v4074 = vadd.f32 %v4042, %v1218
    %v4075 = vadd.f32 %v4045, %v1218
    %v4076 = vadd.f32 %v4048, %v1218
    %v4077 = vadd.f32 %v4051, %v1218
    %v4078 = vxor.u32 %v4052, 2147483648
    %v4079 = vxor.u32 %v4053, 2147483648
    %v4080 = vxor.u32 %v4054, 2147483648
    %v4081 = vxor.u32 %v4055, 2147483648
    %v4082 = vxor.u32 %v4056, 2147483648
    %v4083 = vxor.u32 %v4057, 2147483648
    %v4084 = vxor.u32 %v4058, 2147483648
    %v4085 = vxor.u32 %v4059, 2147483648
    %v4086 = vxor.u32 %v4060, 2147483648
    %v4087 = vxor.u32 %v4061, 2147483648
    %v4088 = vxor.u32 %v4062, 2147483648
    %v4089 = vxor.u32 %v4063, 2147483648
    %v4090 = vxor.u32 %v4064, 2147483648
    %v4091 = vxor.u32 %v4065, 2147483648
    %v4092 = vxor.u32 %v4066, 2147483648
    %v4093 = vxor.u32 %v4067, 2147483648
    %v4094 = vxor.u32 %v4068, 2147483648
    %v4095 = vxor.u32 %v4069, 2147483648
    %v4096 = vxor.u32 %v4070, 2147483648
    %v4097 = vxor.u32 %v4071, 2147483648
    %v4098 = vxor.u32 %v4072, 2147483648
    %v4099 = vxor.u32 %v4073, 2147483648
    %v4100 = vxor.u32 %v4074, 2147483648
    %v4101 = vxor.u32 %v4075, 2147483648
    %v4102 = vxor.u32 %v4076, 2147483648
    %v4103 = vxor.u32 %v4077, 2147483648
    %v4104 = vmul.f32 %v4078, 1.442695
    %v4105 = vpow.pop %v4104
    %v4106 = vmul.f32 %v4079, 1.442695
    %v4107 = vpow.pop %v4106
    %v4108 = vmul.f32 %v4080, 1.442695
    %v4109 = vpow.pop %v4108
    %v4110 = vmul.f32 %v4081, 1.442695
    %v4111 = vpow.pop %v4110
    %v4112 = vmul.f32 %v4082, 1.442695
    %v4113 = vpow.pop %v4112
    %v4114 = vmul.f32 %v4083, 1.442695
    %v4115 = vpow.pop %v4114
    %v4116 = vmul.f32 %v4084, 1.442695
    %v4117 = vpow.pop %v4116
    %v4118 = vmul.f32 %v4085, 1.442695
    %v4119 = vpow.pop %v4118
    %v4120 = vmul.f32 %v4086, 1.442695
    %v4121 = vpow.pop %v4120
    %v4122 = vmul.f32 %v4087, 1.442695
    %v4123 = vpow.pop %v4122
    %v4124 = vmul.f32 %v4088, 1.442695
    %v4125 = vpow.pop %v4124
    %v4126 = vmul.f32 %v4089, 1.442695
    %v4127 = vpow.pop %v4126
    %v4128 = vmul.f32 %v4090, 1.442695
    %v4129 = vpow.pop %v4128
    %v4130 = vmul.f32 %v4091, 1.442695
    %v4131 = vpow.pop %v4130
    %v4132 = vmul.f32 %v4092, 1.442695
    %v4133 = vpow.pop %v4132
    %v4134 = vmul.f32 %v4093, 1.442695
    %v4135 = vpow.pop %v4134
    %v4136 = vmul.f32 %v4094, 1.442695
    %v4137 = vpow.pop %v4136
    %v4138 = vmul.f32 %v4095, 1.442695
    %v4139 = vpow.pop %v4138
    %v4140 = vmul.f32 %v4096, 1.442695
    %v4141 = vpow.pop %v4140
    %v4142 = vmul.f32 %v4097, 1.442695
    %v4143 = vpow.pop %v4142
    %v4144 = vmul.f32 %v4098, 1.442695
    %v4145 = vpow.pop %v4144
    %v4146 = vmul.f32 %v4099, 1.442695
    %v4147 = vpow.pop %v4146
    %v4148 = vmul.f32 %v4100, 1.442695
    %v4149 = vpow.pop %v4148
    %v4150 = vmul.f32 %v4101, 1.442695
    %v4151 = vpow.pop %v4150
    %v4152 = vmul.f32 %v4102, 1.442695
    %v4153 = vpow.pop %v4152
    %v4154 = vmul.f32 %v4103, 1.442695
    %v4155 = vpow.pop %v4154
    %v4156 = vadd.f32 %v4105, 1.0
    %v4157 = vadd.f32 %v4107, 1.0
    %v4158 = vadd.f32 %v4109, 1.0
    %v4159 = vadd.f32 %v4111, 1.0
    %v4160 = vadd.f32 %v4113, 1.0
    %v4161 = vadd.f32 %v4115, 1.0
    %v4162 = vadd.f32 %v4117, 1.0
    %v4163 = vadd.f32 %v4119, 1.0
    %v4164 = vadd.f32 %v4121, 1.0
    %v4165 = vadd.f32 %v4123, 1.0
    %v4166 = vadd.f32 %v4125, 1.0
    %v4167 = vadd.f32 %v4127, 1.0
    %v4168 = vadd.f32 %v4129, 1.0
    %v4169 = vadd.f32 %v4131, 1.0
    %v4170 = vadd.f32 %v4133, 1.0
    %v4171 = vadd.f32 %v4135, 1.0
    %v4172 = vadd.f32 %v4137, 1.0
    %v4173 = vadd.f32 %v4139, 1.0
    %v4174 = vadd.f32 %v4141, 1.0
    %v4175 = vadd.f32 %v4143, 1.0
    %v4176 = vadd.f32 %v4145, 1.0
    %v4177 = vadd.f32 %v4147, 1.0
    %v4178 = vadd.f32 %v4149, 1.0
    %v4179 = vadd.f32 %v4151, 1.0
    %v4180 = vadd.f32 %v4153, 1.0
    %v4181 = vadd.f32 %v4155, 1.0
    %v4182 = vrcp.pop %v4156
    %v4183 = vmul.f32 1.0, %v4182
    %v4184 = vrcp.pop %v4157
    %v4185 = vmul.f32 1.0, %v4184
    %v4186 = vrcp.pop %v4158
    %v4187 = vmul.f32 1.0, %v4186
    %v4188 = vrcp.pop %v4159
    %v4189 = vmul.f32 1.0, %v4188
    %v4190 = vrcp.pop %v4160
    %v4191 = vmul.f32 1.0, %v4190
    %v4192 = vrcp.pop %v4161
    %v4193 = vmul.f32 1.0, %v4192
    %v4194 = vrcp.pop %v4162
    %v4195 = vmul.f32 1.0, %v4194
    %v4196 = vrcp.pop %v4163
    %v4197 = vmul.f32 1.0, %v4196
    %v4198 = vrcp.pop %v4164
    %v4199 = vmul.f32 1.0, %v4198
    %v4200 = vrcp.pop %v4165
    %v4201 = vmul.f32 1.0, %v4200
    %v4202 = vrcp.pop %v4166
    %v4203 = vmul.f32 1.0, %v4202
    %v4204 = vrcp.pop %v4167
    %v4205 = vmul.f32 1.0, %v4204
    %v4206 = vrcp.pop %v4168
    %v4207 = vmul.f32 1.0, %v4206
    %v4208 = vrcp.pop %v4169
    %v4209 = vmul.f32 1.0, %v4208
    %v4210 = vrcp.pop %v4170
    %v4211 = vmul.f32 1.0, %v4210
    %v4212 = vrcp.pop %v4171
    %v4213 = vmul.f32 1.0, %v4212
    %v4214 = vrcp.pop %v4172
    %v4215 = vmul.f32 1.0, %v4214
    %v4216 = vrcp.pop %v4173
    %v4217 = vmul.f32 1.0, %v4216
    %v4218 = vrcp.pop %v4174
    %v4219 = vmul.f32 1.0, %v4218
    %v4220 = vrcp.pop %v4175
    %v4221 = vmul.f32 1.0, %v4220
    %v4222 = vrcp.pop %v4176
    %v4223 = vmul.f32 1.0, %v4222
    %v4224 = vrcp.pop %v4177
    %v4225 = vmul.f32 1.0, %v4224
    %v4226 = vrcp.pop %v4178
    %v4227 = vmul.f32 1.0, %v4226
    %v4228 = vrcp.pop %v4179
    %v4229 = vmul.f32 1.0, %v4228
    %v4230 = vrcp.pop %v4180
    %v4231 = vmul.f32 1.0, %v4230
    %v4232 = vrcp.pop %v4181
    %v4233 = vmul.f32 1.0, %v4232
    %4235 = vset.pattern.permute.xlu0 4
    %4236 = vperm.xlu0 %4235, %v4183
    %v4237 = vpop.permute.xlu0 %4236
    %4240 = vset.pattern.permute.xlu0 4
    %4241 = vperm.xlu0 %4240, %v4185
    %v4242 = vpop.permute.xlu0 %4241
    %4245 = vset.pattern.permute.xlu0 4
    %4246 = vperm.xlu0 %4245, %v4187
    %v4247 = vpop.permute.xlu0 %4246
    %4250 = vset.pattern.permute.xlu0 4
    %4251 = vperm.xlu0 %4250, %v4189
    %v4252 = vpop.permute.xlu0 %4251
    %4255 = vset.pattern.permute.xlu0 4
    %4256 = vperm.xlu0 %4255, %v4191
    %v4257 = vpop.permute.xlu0 %4256
    %4260 = vset.pattern.permute.xlu0 4
    %4261 = vperm.xlu0 %4260, %v4193
    %v4262 = vpop.permute.xlu0 %4261
    %4265 = vset.pattern.permute.xlu0 4
    %4266 = vperm.xlu0 %4265, %v4195
    %v4267 = vpop.permute.xlu0 %4266
    %4270 = vset.pattern.permute.xlu0 4
    %4271 = vperm.xlu0 %4270, %v4197
    %v4272 = vpop.permute.xlu0 %4271
    %4275 = vset.pattern.permute.xlu0 4
    %4276 = vperm.xlu0 %4275, %v4199
    %v4277 = vpop.permute.xlu0 %4276
    %4280 = vset.pattern.permute.xlu0 4
    %4281 = vperm.xlu0 %4280, %v4201
    %v4282 = vpop.permute.xlu0 %4281
    %4285 = vset.pattern.permute.xlu0 4
    %4286 = vperm.xlu0 %4285, %v4203
    %v4287 = vpop.permute.xlu0 %4286
    %4290 = vset.pattern.permute.xlu0 4
    %4291 = vperm.xlu0 %4290, %v4205
    %v4292 = vpop.permute.xlu0 %4291
    %4295 = vset.pattern.permute.xlu0 4
    %4296 = vperm.xlu0 %4295, %v4207
    %v4297 = vpop.permute.xlu0 %4296
    %4300 = vset.pattern.permute.xlu0 4
    %4301 = vperm.xlu0 %4300, %v4209
    %v4302 = vpop.permute.xlu0 %4301
    %4305 = vset.pattern.permute.xlu0 4
    %4306 = vperm.xlu0 %4305, %v4211
    %v4307 = vpop.permute.xlu0 %4306
    %4310 = vset.pattern.permute.xlu0 4
    %4311 = vperm.xlu0 %4310, %v4213
    %v4312 = vpop.permute.xlu0 %4311
    %4315 = vset.pattern.permute.xlu0 4
    %4316 = vperm.xlu0 %4315, %v4215
    %v4317 = vpop.permute.xlu0 %4316
    %4320 = vset.pattern.permute.xlu0 4
    %4321 = vperm.xlu0 %4320, %v4217
    %v4322 = vpop.permute.xlu0 %4321
    %4325 = vset.pattern.permute.xlu0 4
    %4326 = vperm.xlu0 %4325, %v4219
    %v4327 = vpop.permute.xlu0 %4326
    %4330 = vset.pattern.permute.xlu0 4
    %4331 = vperm.xlu0 %4330, %v4221
    %v4332 = vpop.permute.xlu0 %4331
    %4335 = vset.pattern.permute.xlu0 4
    %4336 = vperm.xlu0 %4335, %v4223
    %v4337 = vpop.permute.xlu0 %4336
    %4340 = vset.pattern.permute.xlu0 4
    %4341 = vperm.xlu0 %4340, %v4225
    %v4342 = vpop.permute.xlu0 %4341
    %4345 = vset.pattern.permute.xlu0 4
    %4346 = vperm.xlu0 %4345, %v4227
    %v4347 = vpop.permute.xlu0 %4346
    %4350 = vset.pattern.permute.xlu0 4
    %4351 = vperm.xlu0 %4350, %v4229
    %v4352 = vpop.permute.xlu0 %4351
    %4355 = vset.pattern.permute.xlu0 4
    %4356 = vperm.xlu0 %4355, %v4231
    %v4357 = vpop.permute.xlu0 %4356
    %4360 = vset.pattern.permute.xlu0 4
    %4361 = vperm.xlu0 %4360, %v4233
    %v4362 = vpop.permute.xlu0 %4361
    %v4364 = vlaneseq
    %v4365 = vshrl.u32 %v4364, 7
    %v4366 = vsub.s32 4, %v4365
    %v4367 = vrot.slane %v103, %v4366
    %v4368 = vmul.f32 %v4237, %v4367
    %v4369 = vmul.f32 %v4242, %v4367
    %v4370 = vmul.f32 %v4247, %v4367
    %v4371 = vmul.f32 %v4252, %v4367
    %v4372 = vmul.f32 %v4257, %v4367
    %v4373 = vmul.f32 %v4262, %v4367
    %v4374 = vmul.f32 %v4267, %v4367
    %v4375 = vmul.f32 %v4272, %v4367
    %v4376 = vmul.f32 %v4277, %v4367
    %v4377 = vmul.f32 %v4282, %v4367
    %v4378 = vmul.f32 %v4287, %v4367
    %v4379 = vmul.f32 %v4292, %v4367
    %v4380 = vmul.f32 %v4297, %v4367
    %v4381 = vmul.f32 %v4302, %v4367
    %v4382 = vmul.f32 %v4307, %v4367
    %v4383 = vmul.f32 %v4312, %v4367
    %v4384 = vmul.f32 %v4317, %v4367
    %v4385 = vmul.f32 %v4322, %v4367
    %v4386 = vmul.f32 %v4327, %v4367
    %v4387 = vmul.f32 %v4332, %v4367
    %v4388 = vmul.f32 %v4337, %v4367
    %v4389 = vmul.f32 %v4342, %v4367
    %v4390 = vmul.f32 %v4347, %v4367
    %v4391 = vmul.f32 %v4352, %v4367
    %v4392 = vmul.f32 %v4357, %v4367
    %v4393 = vmul.f32 %v4362, %v4367
    %v4394 = vadd.f32 %v3686, %v4368
    %v4395 = vadd.f32 %v3687, %v4369
    %v4396 = vadd.f32 %v3688, %v4370
    %v4397 = vadd.f32 %v3689, %v4371
    %v4398 = vadd.f32 %v3690, %v4372
    %v4399 = vadd.f32 %v3691, %v4373
    %v4400 = vadd.f32 %v3692, %v4374
    %v4401 = vadd.f32 %v3693, %v4375
    %v4402 = vadd.f32 %v3694, %v4376
    %v4403 = vadd.f32 %v3695, %v4377
    %v4404 = vadd.f32 %v3696, %v4378
    %v4405 = vadd.f32 %v3697, %v4379
    %v4406 = vadd.f32 %v3698, %v4380
    %v4407 = vadd.f32 %v3699, %v4381
    %v4408 = vadd.f32 %v3700, %v4382
    %v4409 = vadd.f32 %v3701, %v4383
    %v4410 = vadd.f32 %v3702, %v4384
    %v4411 = vadd.f32 %v3703, %v4385
    %v4412 = vadd.f32 %v3704, %v4386
    %v4413 = vadd.f32 %v3705, %v4387
    %v4414 = vadd.f32 %v3706, %v4388
    %v4415 = vadd.f32 %v3707, %v4389
    %v4416 = vadd.f32 %v3708, %v4390
    %v4417 = vadd.f32 %v3709, %v4391
    %v4418 = vadd.f32 %v3710, %v4392
    %v4419 = vadd.f32 %v3711, %v4393
    %v4420 = vlaneseq
    %v4421 = vshrl.u32 %v4420, 7
    %v4422 = vsub.s32 0, %v4421
    %v4423 = vrot.slane %v98, %v4422
    %v4424 = vadd.f32 %v4394, %v4423
    %v4425 = vadd.f32 %v4395, %v4423
    %v4426 = vadd.f32 %v4396, %v4423
    %v4427 = vadd.f32 %v4397, %v4423
    %v4428 = vadd.f32 %v4398, %v4423
    %v4429 = vadd.f32 %v4399, %v4423
    %v4430 = vadd.f32 %v4400, %v4423
    %v4431 = vadd.f32 %v4401, %v4423
    %v4432 = vadd.f32 %v4402, %v4423
    %v4433 = vadd.f32 %v4403, %v4423
    %v4434 = vadd.f32 %v4404, %v4423
    %v4435 = vadd.f32 %v4405, %v4423
    %v4436 = vadd.f32 %v4406, %v4423
    %v4437 = vadd.f32 %v4407, %v4423
    %v4438 = vadd.f32 %v4408, %v4423
    %v4439 = vadd.f32 %v4409, %v4423
    %v4440 = vadd.f32 %v4410, %v4423
    %v4441 = vadd.f32 %v4411, %v4423
    %v4442 = vadd.f32 %v4412, %v4423
    %v4443 = vadd.f32 %v4413, %v4423
    %v4444 = vadd.f32 %v4414, %v4423
    %v4445 = vadd.f32 %v4415, %v4423
    %v4446 = vadd.f32 %v4416, %v4423
    %v4447 = vadd.f32 %v4417, %v4423
    %v4448 = vadd.f32 %v4418, %v4423
    %v4449 = vadd.f32 %v4419, %v4423
    %v4450 = vmax.f32 %v4424, 0.0
    %v4451 = vmax.f32 %v4425, 0.0
    %v4452 = vmax.f32 %v4426, 0.0
    %v4453 = vmax.f32 %v4427, 0.0
    %v4454 = vmax.f32 %v4428, 0.0
    %v4455 = vmax.f32 %v4429, 0.0
    %v4456 = vmax.f32 %v4430, 0.0
    %v4457 = vmax.f32 %v4431, 0.0
    %v4458 = vmax.f32 %v4432, 0.0
    %v4459 = vmax.f32 %v4433, 0.0
    %v4460 = vmax.f32 %v4434, 0.0
    %v4461 = vmax.f32 %v4435, 0.0
    %v4462 = vmax.f32 %v4436, 0.0
    %v4463 = vmax.f32 %v4437, 0.0
    %v4464 = vmax.f32 %v4438, 0.0
    %v4465 = vmax.f32 %v4439, 0.0
    %v4466 = vmax.f32 %v4440, 0.0
    %v4467 = vmax.f32 %v4441, 0.0
    %v4468 = vmax.f32 %v4442, 0.0
    %v4469 = vmax.f32 %v4443, 0.0
    %v4470 = vmax.f32 %v4444, 0.0
    %v4471 = vmax.f32 %v4445, 0.0
    %v4472 = vmax.f32 %v4446, 0.0
    %v4473 = vmax.f32 %v4447, 0.0
    %v4474 = vmax.f32 %v4448, 0.0
    %v4475 = vmax.f32 %v4449, 0.0
    %v4476 = vpack.c.bf16 %v4451, %v4450
    %v4477 = vpack.c.bf16 %v4453, %v4452
    %v4478 = vpack.c.bf16 %v4455, %v4454
    %v4479 = vpack.c.bf16 %v4457, %v4456
    %v4480 = vpack.c.bf16 %v4459, %v4458
    %v4481 = vpack.c.bf16 %v4461, %v4460
    %v4482 = vpack.c.bf16 %v4463, %v4462
    %v4483 = vpack.c.bf16 %v4465, %v4464
    %v4484 = vpack.c.bf16 %v4467, %v4466
    %v4485 = vpack.c.bf16 %v4469, %v4468
    %v4486 = vpack.c.bf16 %v4471, %v4470
    %v4487 = vpack.c.bf16 %v4473, %v4472
    %v4488 = vpack.c.bf16 %v4475, %v4474
    %v4489 = vld [vmem:[%s8] sm:$0xf]
    %v4490 = vld [vmem:[%s8 + $0x4] sm:$0xf]
    %v4491 = vld [vmem:[%s8 + $0x8] sm:$0xf]
    %v4492 = vld [vmem:[%s8 + $0xc] sm:$0xf]
    %v4493 = vld [vmem:[%s8 + $0x10] sm:$0xf]
    %v4494 = vld [vmem:[%s8 + $0x14] sm:$0xf]
    %v4495 = vld [vmem:[%s8 + $0x18] sm:$0xf]
    %v4496 = vld [vmem:[%s8 + $0x1c] sm:$0xf]
    %v4497 = vld [vmem:[%s8 + $0x20] sm:$0xf]
    %v4498 = vld [vmem:[%s8 + $0x24] sm:$0xf]
    %v4499 = vld [vmem:[%s8 + $0x28] sm:$0xf]
    %v4500 = vld [vmem:[%s8 + $0x2c] sm:$0xf]
    %v4501 = vld [vmem:[%s8 + $0x30] sm:$0xf]
    %v4502 = vld [vmem:[%s8 + $0x34] sm:$0xf]
    %v4503 = vld [vmem:[%s8 + $0x38] sm:$0xf]
    %v4504 = vld [vmem:[%s8 + $0x3c] sm:$0xf]
    %v4505 = vlaneseq
    %v4506 = vshrl.u32 %v4505, 7
    %v4507 = vsub.s32 0, %v4506
    %v4508 = vrot.slane %v99, %v4507
    %v4525 = vunpack.c.l.b16 %v4489
    %v4526 = vunpack.c.l.b16 %v4490
    %v4527 = vunpack.c.l.b16 %v4491
    %v4528 = vunpack.c.l.b16 %v4492
    %v4529 = vunpack.c.l.b16 %v4493
    %v4530 = vunpack.c.l.b16 %v4494
    %v4531 = vunpack.c.l.b16 %v4495
    %v4532 = vunpack.c.l.b16 %v4496
    %v4533 = vunpack.c.l.b16 %v4497
    %v4534 = vunpack.c.l.b16 %v4498
    %v4535 = vunpack.c.l.b16 %v4499
    %v4536 = vunpack.c.l.b16 %v4500
    %v4537 = vunpack.c.l.b16 %v4501
    %v4538 = vunpack.c.l.b16 %v4502
    %v4539 = vunpack.c.l.b16 %v4503
    %v4540 = vunpack.c.l.b16 %v4504
    %v4541 = vpack.c.b16 %v4526, %v4525
    %v4542 = vpack.c.b16 %v4528, %v4527
    %v4543 = vpack.c.b16 %v4530, %v4529
    %v4544 = vpack.c.b16 %v4532, %v4531
    %v4545 = vpack.c.b16 %v4534, %v4533
    %v4546 = vpack.c.b16 %v4536, %v4535
    %v4547 = vpack.c.b16 %v4538, %v4537
    %v4548 = vpack.c.b16 %v4540, %v4539
    %4557 = vmatprep.subr.bf16.mxu0 0
    %4558 = vmatpush1.bf16.msra.mxu0 %v4541
    %4559 = vmatprep.subr.bf16.mxu0 0
    %4560 = vmatpush1.bf16.msra.mxu0 %v4542
    %4561 = vmatprep.subr.bf16.mxu0 0
    %4562 = vmatpush1.bf16.msra.mxu0 %v4543
    %4563 = vmatprep.subr.bf16.mxu0 0
    %4564 = vmatpush1.bf16.msra.mxu0 %v4544
    %4565 = vmatprep.subr.bf16.mxu0 0
    %4566 = vmatpush1.bf16.msra.mxu0 %v4545
    %4567 = vmatprep.subr.bf16.mxu0 0
    %4568 = vmatpush1.bf16.msra.mxu0 %v4546
    %4569 = vmatprep.subr.bf16.mxu0 0
    %4570 = vmatpush1.bf16.msra.mxu0 %v4547
    %4571 = vmatprep.subr.bf16.mxu0 0
    %4572 = vmatpush1.bf16.msra.mxu0 %v4548
    %4573 = vmatprep.subr.bf16.mxu0 0
    %4574 = vmatpush1.bf16.msra.mxu0 0
    %4575 = vmatprep.subr.bf16.mxu0 0
    %4576 = vmatpush1.bf16.msra.mxu0 0
    %4577 = vmatprep.subr.bf16.mxu0 0
    %4578 = vmatpush1.bf16.msra.mxu0 0
    %4579 = vmatprep.subr.bf16.mxu0 0
    %4580 = vmatpush1.bf16.msra.mxu0 0
    %4581 = vmatprep.subr.bf16.mxu0 0
    %4582 = vmatpush1.bf16.msra.mxu0 0
    %4583 = vmatprep.subr.bf16.mxu0 0
    %4584 = vmatpush1.bf16.msra.mxu0 0
    %4585 = vmatprep.subr.bf16.mxu0 0
    %4586 = vmatpush1.bf16.msra.mxu0 0
    %4587 = vmatprep.subr.bf16.mxu0 0
    %4588 = vmatpush1.bf16.msra.mxu0 0
    %4589 = vmatprep.mubr.bf16.mxu0 0
    %4590 = vmatmul.mubr.bf16.gmra.mrb[0].mxu0 %v4476
    %v4591 = vpop.f32.mrb[0].mxu0
    %v4592 = vadd.f32 %v4508, %v4591
    %v4593 = vpop.f32.mrb[0].mxu0
    %v4594 = vpop.f32.mrb[0].mxu0
    %v4595 = vadd.f32 %v4508, %v4594
    %v4596 = vpop.f32.mrb[0].mxu0
    %4597 = vmatprep.mubr.bf16.mxu0 0
    %4598 = vmatmul.mubr.bf16.gmra.mrb[0].mxu0 %v4477
    %v4599 = vpop.f32.mrb[0].mxu0
    %v4600 = vadd.f32 %v4508, %v4599
    %v4601 = vpop.f32.mrb[0].mxu0
    %v4602 = vpop.f32.mrb[0].mxu0
    %v4603 = vadd.f32 %v4508, %v4602
    %v4604 = vpop.f32.mrb[0].mxu0
    %4605 = vmatprep.mubr.bf16.mxu0 0
    %4606 = vmatmul.mubr.bf16.gmra.mrb[0].mxu0 %v4478
    %v4607 = vpop.f32.mrb[0].mxu0
    %v4608 = vadd.f32 %v4508, %v4607
    %v4609 = vpop.f32.mrb[0].mxu0
    %v4610 = vpop.f32.mrb[0].mxu0
    %v4611 = vadd.f32 %v4508, %v4610
    %v4612 = vpop.f32.mrb[0].mxu0
    %4613 = vmatprep.mubr.bf16.mxu0 0
    %4614 = vmatmul.mubr.bf16.gmra.mrb[0].mxu0 %v4479
    %v4615 = vpop.f32.mrb[0].mxu0
    %v4616 = vadd.f32 %v4508, %v4615
    %v4617 = vpop.f32.mrb[0].mxu0
    %v4618 = vpop.f32.mrb[0].mxu0
    %v4619 = vadd.f32 %v4508, %v4618
    %v4620 = vpop.f32.mrb[0].mxu0
    %4621 = vmatprep.mubr.bf16.mxu0 0
    %4622 = vmatmul.mubr.bf16.gmra.mrb[0].mxu0 %v4480
    %v4623 = vpop.f32.mrb[0].mxu0
    %v4624 = vadd.f32 %v4508, %v4623
    %v4625 = vpop.f32.mrb[0].mxu0
    %v4626 = vpop.f32.mrb[0].mxu0
    %v4627 = vadd.f32 %v4508, %v4626
    %v4628 = vpop.f32.mrb[0].mxu0
    %4629 = vmatprep.mubr.bf16.mxu0 0
    %4630 = vmatmul.mubr.bf16.gmra.mrb[0].mxu0 %v4481
    %v4631 = vpop.f32.mrb[0].mxu0
    %v4632 = vadd.f32 %v4508, %v4631
    %v4633 = vpop.f32.mrb[0].mxu0
    %v4634 = vpop.f32.mrb[0].mxu0
    %v4635 = vadd.f32 %v4508, %v4634
    %v4636 = vpop.f32.mrb[0].mxu0
    %4637 = vmatprep.mubr.bf16.mxu0 0
    %4638 = vmatmul.mubr.bf16.gmra.mrb[0].mxu0 %v4482
    %v4639 = vpop.f32.mrb[0].mxu0
    %v4640 = vadd.f32 %v4508, %v4639
    %v4641 = vpop.f32.mrb[0].mxu0
    %v4642 = vpop.f32.mrb[0].mxu0
    %v4643 = vadd.f32 %v4508, %v4642
    %v4644 = vpop.f32.mrb[0].mxu0
    %4645 = vmatprep.mubr.bf16.mxu0 0
    %4646 = vmatmul.mubr.bf16.gmra.mrb[0].mxu0 %v4483
    %v4647 = vpop.f32.mrb[0].mxu0
    %v4648 = vadd.f32 %v4508, %v4647
    %v4649 = vpop.f32.mrb[0].mxu0
    %v4650 = vpop.f32.mrb[0].mxu0
    %v4651 = vadd.f32 %v4508, %v4650
    %v4652 = vpop.f32.mrb[0].mxu0
    %4653 = vmatprep.mubr.bf16.mxu0 0
    %4654 = vmatmul.mubr.bf16.gmra.mrb[0].mxu0 %v4484
    %v4655 = vpop.f32.mrb[0].mxu0
    %v4656 = vadd.f32 %v4508, %v4655
    %v4657 = vpop.f32.mrb[0].mxu0
    %v4658 = vpop.f32.mrb[0].mxu0
    %v4659 = vadd.f32 %v4508, %v4658
    %v4660 = vpop.f32.mrb[0].mxu0
    %4661 = vmatprep.mubr.bf16.mxu0 0
    %4662 = vmatmul.mubr.bf16.gmra.mrb[0].mxu0 %v4485
    %v4663 = vpop.f32.mrb[0].mxu0
    %v4664 = vadd.f32 %v4508, %v4663
    %v4665 = vpop.f32.mrb[0].mxu0
    %v4666 = vpop.f32.mrb[0].mxu0
    %v4667 = vadd.f32 %v4508, %v4666
    %v4668 = vpop.f32.mrb[0].mxu0
    %4669 = vmatprep.mubr.bf16.mxu0 0
    %4670 = vmatmul.mubr.bf16.gmra.mrb[0].mxu0 %v4486
    %v4671 = vpop.f32.mrb[0].mxu0
    %v4672 = vadd.f32 %v4508, %v4671
    %v4673 = vpop.f32.mrb[0].mxu0
    %v4674 = vpop.f32.mrb[0].mxu0
    %v4675 = vadd.f32 %v4508, %v4674
    %v4676 = vpop.f32.mrb[0].mxu0
    %4677 = vmatprep.mubr.bf16.mxu0 0
    %4678 = vmatmul.mubr.bf16.gmra.mrb[0].mxu0 %v4487
    %v4679 = vpop.f32.mrb[0].mxu0
    %v4680 = vadd.f32 %v4508, %v4679
    %v4681 = vpop.f32.mrb[0].mxu0
    %v4682 = vpop.f32.mrb[0].mxu0
    %v4683 = vadd.f32 %v4508, %v4682
    %v4684 = vpop.f32.mrb[0].mxu0
    %4685 = vmatprep.mubr.bf16.mxu0 0
    %4686 = vmatmul.mubr.bf16.gmra.mrb[0].mxu0 %v4488
    %v4687 = vpop.f32.mrb[0].mxu0
    %v4688 = vadd.f32 %v4508, %v4687
    %v4689 = vpop.f32.mrb[0].mxu0
    %v4690 = vpop.f32.mrb[0].mxu0
    %v4691 = vadd.f32 %v4508, %v4690
    %v4692 = vpop.f32.mrb[0].mxu0
    %4693 = vdwg.mxu0
    %v4694 = vcvt.f32.s32.ties.to.even %v72
    %v4695 = vcvt.f32.s32.ties.to.even %v73
    %v4696 = vcvt.f32.s32.ties.to.even %v74
    %v4697 = vcvt.f32.s32.ties.to.even %v75
    %v4698 = vcvt.f32.s32.ties.to.even %v76
    %v4699 = vcvt.f32.s32.ties.to.even %v77
    %v4700 = vcvt.f32.s32.ties.to.even %v78
    %v4701 = vcvt.f32.s32.ties.to.even %v79
    %v4702 = vcvt.f32.s32.ties.to.even %v80
    %v4703 = vcvt.f32.s32.ties.to.even %v81
    %v4704 = vcvt.f32.s32.ties.to.even %v82
    %v4705 = vcvt.f32.s32.ties.to.even %v83
    %v4706 = vcvt.f32.s32.ties.to.even %v84
    %v4707 = vcvt.f32.s32.ties.to.even %v85
    %v4708 = vcvt.f32.s32.ties.to.even %v86
    %v4709 = vcvt.f32.s32.ties.to.even %v87
    %v4710 = vcvt.f32.s32.ties.to.even %v88
    %v4711 = vcvt.f32.s32.ties.to.even %v89
    %v4712 = vcvt.f32.s32.ties.to.even %v90
    %v4713 = vcvt.f32.s32.ties.to.even %v91
    %v4714 = vcvt.f32.s32.ties.to.even %v92
    %v4715 = vcvt.f32.s32.ties.to.even %v93
    %v4716 = vcvt.f32.s32.ties.to.even %v94
    %v4717 = vcvt.f32.s32.ties.to.even %v95
    %v4718 = vcvt.f32.s32.ties.to.even %v96
    %v4719 = vcvt.f32.s32.ties.to.even %v97
    %v4720 = vlaneseq
    %v4721 = vand.u32 %v4720, 127
    %4722 = vset.pattern.permute.xlu0 3
    %4723 = vperm.xlu0 %4722, %v4694
    %v4724 = vpop.permute.xlu0 %4723
    %4725 = vset.pattern.permute.xlu0 3
    %4726 = vperm.xlu0 %4725, %v4695
    %v4727 = vpop.permute.xlu0 %4726
    %4728 = vset.pattern.permute.xlu0 3
    %4729 = vperm.xlu0 %4728, %v4696
    %v4730 = vpop.permute.xlu0 %4729
    %4731 = vset.pattern.permute.xlu0 3
    %4732 = vperm.xlu0 %4731, %v4697
    %v4733 = vpop.permute.xlu0 %4732
    %4734 = vset.pattern.permute.xlu0 3
    %4735 = vperm.xlu0 %4734, %v4698
    %v4736 = vpop.permute.xlu0 %4735
    %4737 = vset.pattern.permute.xlu0 3
    %4738 = vperm.xlu0 %4737, %v4699
    %v4739 = vpop.permute.xlu0 %4738
    %4740 = vset.pattern.permute.xlu0 3
    %4741 = vperm.xlu0 %4740, %v4700
    %v4742 = vpop.permute.xlu0 %4741
    %4743 = vset.pattern.permute.xlu0 3
    %4744 = vperm.xlu0 %4743, %v4701
    %v4745 = vpop.permute.xlu0 %4744
    %4746 = vset.pattern.permute.xlu0 3
    %4747 = vperm.xlu0 %4746, %v4702
    %v4748 = vpop.permute.xlu0 %4747
    %4749 = vset.pattern.permute.xlu0 3
    %4750 = vperm.xlu0 %4749, %v4703
    %v4751 = vpop.permute.xlu0 %4750
    %4752 = vset.pattern.permute.xlu0 3
    %4753 = vperm.xlu0 %4752, %v4704
    %v4754 = vpop.permute.xlu0 %4753
    %4755 = vset.pattern.permute.xlu0 3
    %4756 = vperm.xlu0 %4755, %v4705
    %v4757 = vpop.permute.xlu0 %4756
    %4758 = vset.pattern.permute.xlu0 3
    %4759 = vperm.xlu0 %4758, %v4706
    %v4760 = vpop.permute.xlu0 %4759
    %4761 = vset.pattern.permute.xlu0 3
    %4762 = vperm.xlu0 %4761, %v4707
    %v4763 = vpop.permute.xlu0 %4762
    %4764 = vset.pattern.permute.xlu0 3
    %4765 = vperm.xlu0 %4764, %v4708
    %v4766 = vpop.permute.xlu0 %4765
    %4767 = vset.pattern.permute.xlu0 3
    %4768 = vperm.xlu0 %4767, %v4709
    %v4769 = vpop.permute.xlu0 %4768
    %4770 = vset.pattern.permute.xlu0 3
    %4771 = vperm.xlu0 %4770, %v4710
    %v4772 = vpop.permute.xlu0 %4771
    %4773 = vset.pattern.permute.xlu0 3
    %4774 = vperm.xlu0 %4773, %v4711
    %v4775 = vpop.permute.xlu0 %4774
    %4776 = vset.pattern.permute.xlu0 3
    %4777 = vperm.xlu0 %4776, %v4712
    %v4778 = vpop.permute.xlu0 %4777
    %4779 = vset.pattern.permute.xlu0 3
    %4780 = vperm.xlu0 %4779, %v4713
    %v4781 = vpop.permute.xlu0 %4780
    %4782 = vset.pattern.permute.xlu0 3
    %4783 = vperm.xlu0 %4782, %v4714
    %v4784 = vpop.permute.xlu0 %4783
    %4785 = vset.pattern.permute.xlu0 3
    %4786 = vperm.xlu0 %4785, %v4715
    %v4787 = vpop.permute.xlu0 %4786
    %4788 = vset.pattern.permute.xlu0 3
    %4789 = vperm.xlu0 %4788, %v4716
    %v4790 = vpop.permute.xlu0 %4789
    %4791 = vset.pattern.permute.xlu0 3
    %4792 = vperm.xlu0 %4791, %v4717
    %v4793 = vpop.permute.xlu0 %4792
    %4794 = vset.pattern.permute.xlu0 3
    %4795 = vperm.xlu0 %4794, %v4718
    %v4796 = vpop.permute.xlu0 %4795
    %4797 = vset.pattern.permute.xlu0 3
    %4798 = vperm.xlu0 %4797, %v4719
    %v4799 = vpop.permute.xlu0 %4798
    %vm4800 = vcmp.eq.s32.totalorder %v4721, %v4724
    %vm4801 = vcmp.eq.s32.totalorder %v4721, %v4727
    %vm4802 = vcmp.eq.s32.totalorder %v4721, %v4730
    %vm4803 = vcmp.eq.s32.totalorder %v4721, %v4733
    %vm4804 = vcmp.eq.s32.totalorder %v4721, %v4736
    %vm4805 = vcmp.eq.s32.totalorder %v4721, %v4739
    %vm4806 = vcmp.eq.s32.totalorder %v4721, %v4742
    %vm4807 = vcmp.eq.s32.totalorder %v4721, %v4745
    %vm4808 = vcmp.eq.s32.totalorder %v4721, %v4748
    %vm4809 = vcmp.eq.s32.totalorder %v4721, %v4751
    %vm4810 = vcmp.eq.s32.totalorder %v4721, %v4754
    %vm4811 = vcmp.eq.s32.totalorder %v4721, %v4757
    %vm4812 = vcmp.eq.s32.totalorder %v4721, %v4760
    %vm4813 = vcmp.eq.s32.totalorder %v4721, %v4763
    %vm4814 = vcmp.eq.s32.totalorder %v4721, %v4766
    %vm4815 = vcmp.eq.s32.totalorder %v4721, %v4769
    %vm4816 = vcmp.eq.s32.totalorder %v4721, %v4772
    %vm4817 = vcmp.eq.s32.totalorder %v4721, %v4775
    %vm4818 = vcmp.eq.s32.totalorder %v4721, %v4778
    %vm4819 = vcmp.eq.s32.totalorder %v4721, %v4781
    %vm4820 = vcmp.eq.s32.totalorder %v4721, %v4784
    %vm4821 = vcmp.eq.s32.totalorder %v4721, %v4787
    %vm4822 = vcmp.eq.s32.totalorder %v4721, %v4790
    %vm4823 = vcmp.eq.s32.totalorder %v4721, %v4793
    %vm4824 = vcmp.eq.s32.totalorder %v4721, %v4796
    %vm4825 = vcmp.eq.s32.totalorder %v4721, %v4799
    %v4826 = vadd.s32 %v4694, 10
    %v4827 = vadd.s32 %v4695, 10
    %v4828 = vadd.s32 %v4696, 10
    %v4829 = vadd.s32 %v4697, 10
    %v4830 = vadd.s32 %v4698, 10
    %v4831 = vadd.s32 %v4699, 10
    %v4832 = vadd.s32 %v4700, 10
    %v4833 = vadd.s32 %v4701, 10
    %v4834 = vadd.s32 %v4702, 10
    %v4835 = vadd.s32 %v4703, 10
    %v4836 = vadd.s32 %v4704, 10
    %v4837 = vadd.s32 %v4705, 10
    %v4838 = vadd.s32 %v4706, 10
    %v4839 = vadd.s32 %v4707, 10
    %v4840 = vadd.s32 %v4708, 10
    %v4841 = vadd.s32 %v4709, 10
    %v4842 = vadd.s32 %v4710, 10
    %v4843 = vadd.s32 %v4711, 10
    %v4844 = vadd.s32 %v4712, 10
    %v4845 = vadd.s32 %v4713, 10
    %v4846 = vadd.s32 %v4714, 10
    %v4847 = vadd.s32 %v4715, 10
    %v4848 = vadd.s32 %v4716, 10
    %v4849 = vadd.s32 %v4717, 10
    %v4850 = vadd.s32 %v4718, 10
    %v4851 = vadd.s32 %v4719, 10
    %4852 = vset.pattern.permute.xlu0 2
    %4853 = vperm.xlu0 %4852, %v4826
    %v4854 = vpop.permute.xlu0 %4853
    %4855 = vset.pattern.permute.xlu0 2
    %4856 = vperm.xlu0 %4855, %v4827
    %v4857 = vpop.permute.xlu0 %4856
    %4858 = vset.pattern.permute.xlu0 2
    %4859 = vperm.xlu0 %4858, %v4828
    %v4860 = vpop.permute.xlu0 %4859
    %4861 = vset.pattern.permute.xlu0 2
    %4862 = vperm.xlu0 %4861, %v4829
    %v4863 = vpop.permute.xlu0 %4862
    %4864 = vset.pattern.permute.xlu0 2
    %4865 = vperm.xlu0 %4864, %v4830
    %v4866 = vpop.permute.xlu0 %4865
    %4867 = vset.pattern.permute.xlu0 2
    %4868 = vperm.xlu0 %4867, %v4831
    %v4869 = vpop.permute.xlu0 %4868
    %4870 = vset.pattern.permute.xlu0 2
    %4871 = vperm.xlu0 %4870, %v4832
    %v4872 = vpop.permute.xlu0 %4871
    %4873 = vset.pattern.permute.xlu0 2
    %4874 = vperm.xlu0 %4873, %v4833
    %v4875 = vpop.permute.xlu0 %4874
    %4876 = vset.pattern.permute.xlu0 2
    %4877 = vperm.xlu0 %4876, %v4834
    %v4878 = vpop.permute.xlu0 %4877
    %4879 = vset.pattern.permute.xlu0 2
    %4880 = vperm.xlu0 %4879, %v4835
    %v4881 = vpop.permute.xlu0 %4880
    %4882 = vset.pattern.permute.xlu0 2
    %4883 = vperm.xlu0 %4882, %v4836
    %v4884 = vpop.permute.xlu0 %4883
    %4885 = vset.pattern.permute.xlu0 2
    %4886 = vperm.xlu0 %4885, %v4837
    %v4887 = vpop.permute.xlu0 %4886
    %4888 = vset.pattern.permute.xlu0 2
    %4889 = vperm.xlu0 %4888, %v4838
    %v4890 = vpop.permute.xlu0 %4889
    %4891 = vset.pattern.permute.xlu0 2
    %4892 = vperm.xlu0 %4891, %v4839
    %v4893 = vpop.permute.xlu0 %4892
    %4894 = vset.pattern.permute.xlu0 2
    %4895 = vperm.xlu0 %4894, %v4840
    %v4896 = vpop.permute.xlu0 %4895
    %4897 = vset.pattern.permute.xlu0 2
    %4898 = vperm.xlu0 %4897, %v4841
    %v4899 = vpop.permute.xlu0 %4898
    %4900 = vset.pattern.permute.xlu0 2
    %4901 = vperm.xlu0 %4900, %v4842
    %v4902 = vpop.permute.xlu0 %4901
    %4903 = vset.pattern.permute.xlu0 2
    %4904 = vperm.xlu0 %4903, %v4843
    %v4905 = vpop.permute.xlu0 %4904
    %4906 = vset.pattern.permute.xlu0 2
    %4907 = vperm.xlu0 %4906, %v4844
    %v4908 = vpop.permute.xlu0 %4907
    %4909 = vset.pattern.permute.xlu0 2
    %4910 = vperm.xlu0 %4909, %v4845
    %v4911 = vpop.permute.xlu0 %4910
    %4912 = vset.pattern.permute.xlu0 2
    %4913 = vperm.xlu0 %4912, %v4846
    %v4914 = vpop.permute.xlu0 %4913
    %4915 = vset.pattern.permute.xlu0 2
    %4916 = vperm.xlu0 %4915, %v4847
    %v4917 = vpop.permute.xlu0 %4916
    %4918 = vset.pattern.permute.xlu0 2
    %4919 = vperm.xlu0 %4918, %v4848
    %v4920 = vpop.permute.xlu0 %4919
    %4921 = vset.pattern.permute.xlu0 2
    %4922 = vperm.xlu0 %4921, %v4849
    %v4923 = vpop.permute.xlu0 %4922
    %4924 = vset.pattern.permute.xlu0 2
    %4925 = vperm.xlu0 %4924, %v4850
    %v4926 = vpop.permute.xlu0 %4925
    %4927 = vset.pattern.permute.xlu0 2
    %4928 = vperm.xlu0 %4927, %v4851
    %v4929 = vpop.permute.xlu0 %4928
    %vm4930 = vcmp.eq.s32.totalorder %v4721, %v4854
    %vm4931 = vcmp.eq.s32.totalorder %v4721, %v4857
    %vm4932 = vcmp.eq.s32.totalorder %v4721, %v4860
    %vm4933 = vcmp.eq.s32.totalorder %v4721, %v4863
    %vm4934 = vcmp.eq.s32.totalorder %v4721, %v4866
    %vm4935 = vcmp.eq.s32.totalorder %v4721, %v4869
    %vm4936 = vcmp.eq.s32.totalorder %v4721, %v4872
    %vm4937 = vcmp.eq.s32.totalorder %v4721, %v4875
    %vm4938 = vcmp.eq.s32.totalorder %v4721, %v4878
    %vm4939 = vcmp.eq.s32.totalorder %v4721, %v4881
    %vm4940 = vcmp.eq.s32.totalorder %v4721, %v4884
    %vm4941 = vcmp.eq.s32.totalorder %v4721, %v4887
    %vm4942 = vcmp.eq.s32.totalorder %v4721, %v4890
    %vm4943 = vcmp.eq.s32.totalorder %v4721, %v4893
    %vm4944 = vcmp.eq.s32.totalorder %v4721, %v4896
    %vm4945 = vcmp.eq.s32.totalorder %v4721, %v4899
    %vm4946 = vcmp.eq.s32.totalorder %v4721, %v4902
    %vm4947 = vcmp.eq.s32.totalorder %v4721, %v4905
    %vm4948 = vcmp.eq.s32.totalorder %v4721, %v4908
    %vm4949 = vcmp.eq.s32.totalorder %v4721, %v4911
    %vm4950 = vcmp.eq.s32.totalorder %v4721, %v4914
    %vm4951 = vcmp.eq.s32.totalorder %v4721, %v4917
    %vm4952 = vcmp.eq.s32.totalorder %v4721, %v4920
    %vm4953 = vcmp.eq.s32.totalorder %v4721, %v4923
    %vm4954 = vcmp.eq.s32.totalorder %v4721, %v4926
    %vm4955 = vcmp.eq.s32.totalorder %v4721, %v4929
    %vm4956 = vmor %vm4800, %vm4930
    %vm4957 = vmor %vm4801, %vm4931
    %vm4958 = vmor %vm4802, %vm4932
    %vm4959 = vmor %vm4803, %vm4933
    %vm4960 = vmor %vm4804, %vm4934
    %vm4961 = vmor %vm4805, %vm4935
    %vm4962 = vmor %vm4806, %vm4936
    %vm4963 = vmor %vm4807, %vm4937
    %vm4964 = vmor %vm4808, %vm4938
    %vm4965 = vmor %vm4809, %vm4939
    %vm4966 = vmor %vm4810, %vm4940
    %vm4967 = vmor %vm4811, %vm4941
    %vm4968 = vmor %vm4812, %vm4942
    %vm4969 = vmor %vm4813, %vm4943
    %vm4970 = vmor %vm4814, %vm4944
    %vm4971 = vmor %vm4815, %vm4945
    %vm4972 = vmor %vm4816, %vm4946
    %vm4973 = vmor %vm4817, %vm4947
    %vm4974 = vmor %vm4818, %vm4948
    %vm4975 = vmor %vm4819, %vm4949
    %vm4976 = vmor %vm4820, %vm4950
    %vm4977 = vmor %vm4821, %vm4951
    %vm4978 = vmor %vm4822, %vm4952
    %vm4979 = vmor %vm4823, %vm4953
    %vm4980 = vmor %vm4824, %vm4954
    %vm4981 = vmor %vm4825, %vm4955
    %v4982 = vsel %vm4956, 1, 0
    %v4983 = vsel %vm4957, 1, 0
    %v4984 = vsel %vm4958, 1, 0
    %v4985 = vsel %vm4959, 1, 0
    %v4986 = vsel %vm4960, 1, 0
    %v4987 = vsel %vm4961, 1, 0
    %v4988 = vsel %vm4962, 1, 0
    %v4989 = vsel %vm4963, 1, 0
    %v4990 = vsel %vm4964, 1, 0
    %v4991 = vsel %vm4965, 1, 0
    %v4992 = vsel %vm4966, 1, 0
    %v4993 = vsel %vm4967, 1, 0
    %v4994 = vsel %vm4968, 1, 0
    %v4995 = vsel %vm4969, 1, 0
    %v4996 = vsel %vm4970, 1, 0
    %v4997 = vsel %vm4971, 1, 0
    %v4998 = vsel %vm4972, 1, 0
    %v4999 = vsel %vm4973, 1, 0
    %v5000 = vsel %vm4974, 1, 0
    %v5001 = vsel %vm4975, 1, 0
    %v5002 = vsel %vm4976, 1, 0
    %v5003 = vsel %vm4977, 1, 0
    %v5004 = vsel %vm4978, 1, 0
    %v5005 = vsel %vm4979, 1, 0
    %v5006 = vsel %vm4980, 1, 0
    %v5007 = vsel %vm4981, 1, 0
    %v5008 = vcvt.s32.f32 %v4982
    %v5009 = vcvt.s32.f32 %v4983
    %v5010 = vcvt.s32.f32 %v4984
    %v5011 = vcvt.s32.f32 %v4985
    %v5012 = vcvt.s32.f32 %v4986
    %v5013 = vcvt.s32.f32 %v4987
    %v5014 = vcvt.s32.f32 %v4988
    %v5015 = vcvt.s32.f32 %v4989
    %v5016 = vcvt.s32.f32 %v4990
    %v5017 = vcvt.s32.f32 %v4991
    %v5018 = vcvt.s32.f32 %v4992
    %v5019 = vcvt.s32.f32 %v4993
    %v5020 = vcvt.s32.f32 %v4994
    %v5021 = vcvt.s32.f32 %v4995
    %v5022 = vcvt.s32.f32 %v4996
    %v5023 = vcvt.s32.f32 %v4997
    %v5024 = vcvt.s32.f32 %v4998
    %v5025 = vcvt.s32.f32 %v4999
    %v5026 = vcvt.s32.f32 %v5000
    %v5027 = vcvt.s32.f32 %v5001
    %v5028 = vcvt.s32.f32 %v5002
    %v5029 = vcvt.s32.f32 %v5003
    %v5030 = vcvt.s32.f32 %v5004
    %v5031 = vcvt.s32.f32 %v5005
    %v5032 = vcvt.s32.f32 %v5006
    %v5033 = vcvt.s32.f32 %v5007
    %v5034 = vpack.c.bf16 %v5009, %v5008
    %v5035 = vpack.c.bf16 %v5011, %v5010
    %v5036 = vpack.c.bf16 %v5013, %v5012
    %v5037 = vpack.c.bf16 %v5015, %v5014
    %v5038 = vpack.c.bf16 %v5017, %v5016
    %v5039 = vpack.c.bf16 %v5019, %v5018
    %v5040 = vpack.c.bf16 %v5021, %v5020
    %v5041 = vpack.c.bf16 %v5023, %v5022
    %v5042 = vpack.c.bf16 %v5025, %v5024
    %v5043 = vpack.c.bf16 %v5027, %v5026
    %v5044 = vpack.c.bf16 %v5029, %v5028
    %v5045 = vpack.c.bf16 %v5031, %v5030
    %v5046 = vpack.c.bf16 %v5033, %v5032
    %v5047 = vld [vmem:[%s9] sm:$0xf]
    %v5048 = vld [vmem:[%s9 + $0x4] sm:$0x3]
    %v5049 = vld [vmem:[%s10] sm:$0xf]
    %5051 = vset.pattern.permute.xlu0 0
    %5052 = vperm.xlu0 %5051, %v72
    %v5053 = vpop.permute.xlu0 %5052
    %5056 = vset.pattern.permute.xlu0 0
    %5057 = vperm.xlu0 %5056, %v73
    %v5058 = vpop.permute.xlu0 %5057
    %5061 = vset.pattern.permute.xlu0 0
    %5062 = vperm.xlu0 %5061, %v74
    %v5063 = vpop.permute.xlu0 %5062
    %5066 = vset.pattern.permute.xlu0 0
    %5067 = vperm.xlu0 %5066, %v75
    %v5068 = vpop.permute.xlu0 %5067
    %5071 = vset.pattern.permute.xlu0 0
    %5072 = vperm.xlu0 %5071, %v76
    %v5073 = vpop.permute.xlu0 %5072
    %5076 = vset.pattern.permute.xlu0 0
    %5077 = vperm.xlu0 %5076, %v77
    %v5078 = vpop.permute.xlu0 %5077
    %5081 = vset.pattern.permute.xlu0 0
    %5082 = vperm.xlu0 %5081, %v78
    %v5083 = vpop.permute.xlu0 %5082
    %5086 = vset.pattern.permute.xlu0 0
    %5087 = vperm.xlu0 %5086, %v79
    %v5088 = vpop.permute.xlu0 %5087
    %5091 = vset.pattern.permute.xlu0 0
    %5092 = vperm.xlu0 %5091, %v80
    %v5093 = vpop.permute.xlu0 %5092
    %5096 = vset.pattern.permute.xlu0 0
    %5097 = vperm.xlu0 %5096, %v81
    %v5098 = vpop.permute.xlu0 %5097
    %5101 = vset.pattern.permute.xlu0 0
    %5102 = vperm.xlu0 %5101, %v82
    %v5103 = vpop.permute.xlu0 %5102
    %5106 = vset.pattern.permute.xlu0 0
    %5107 = vperm.xlu0 %5106, %v83
    %v5108 = vpop.permute.xlu0 %5107
    %5111 = vset.pattern.permute.xlu0 0
    %5112 = vperm.xlu0 %5111, %v84
    %v5113 = vpop.permute.xlu0 %5112
    %5116 = vset.pattern.permute.xlu0 0
    %5117 = vperm.xlu0 %5116, %v85
    %v5118 = vpop.permute.xlu0 %5117
    %5121 = vset.pattern.permute.xlu0 0
    %5122 = vperm.xlu0 %5121, %v86
    %v5123 = vpop.permute.xlu0 %5122
    %5126 = vset.pattern.permute.xlu0 0
    %5127 = vperm.xlu0 %5126, %v87
    %v5128 = vpop.permute.xlu0 %5127
    %5131 = vset.pattern.permute.xlu0 0
    %5132 = vperm.xlu0 %5131, %v88
    %v5133 = vpop.permute.xlu0 %5132
    %5136 = vset.pattern.permute.xlu0 0
    %5137 = vperm.xlu0 %5136, %v89
    %v5138 = vpop.permute.xlu0 %5137
    %5141 = vset.pattern.permute.xlu0 0
    %5142 = vperm.xlu0 %5141, %v90
    %v5143 = vpop.permute.xlu0 %5142
    %5146 = vset.pattern.permute.xlu0 0
    %5147 = vperm.xlu0 %5146, %v91
    %v5148 = vpop.permute.xlu0 %5147
    %5151 = vset.pattern.permute.xlu0 0
    %5152 = vperm.xlu0 %5151, %v92
    %v5153 = vpop.permute.xlu0 %5152
    %5156 = vset.pattern.permute.xlu0 0
    %5157 = vperm.xlu0 %5156, %v93
    %v5158 = vpop.permute.xlu0 %5157
    %5161 = vset.pattern.permute.xlu0 0
    %5162 = vperm.xlu0 %5161, %v94
    %v5163 = vpop.permute.xlu0 %5162
    %5166 = vset.pattern.permute.xlu0 0
    %5167 = vperm.xlu0 %5166, %v95
    %v5168 = vpop.permute.xlu0 %5167
    %5171 = vset.pattern.permute.xlu0 0
    %5172 = vperm.xlu0 %5171, %v96
    %v5173 = vpop.permute.xlu0 %5172
    %5176 = vset.pattern.permute.xlu0 0
    %5177 = vperm.xlu0 %5176, %v97
    %v5178 = vpop.permute.xlu0 %5177
    %v5180 = vlaneseq
    %v5181 = vshrl.u32 %v5180, 7
    %v5182 = vsub.s32 0, %v5181
    %v5183 = vrot.slane %v5049, %v5182
    %v5184 = vmul.f32 %v5053, %v5183
    %v5185 = vmul.f32 %v5058, %v5183
    %v5186 = vmul.f32 %v5063, %v5183
    %v5187 = vmul.f32 %v5068, %v5183
    %v5188 = vmul.f32 %v5073, %v5183
    %v5189 = vmul.f32 %v5078, %v5183
    %v5190 = vmul.f32 %v5083, %v5183
    %v5191 = vmul.f32 %v5088, %v5183
    %v5192 = vmul.f32 %v5093, %v5183
    %v5193 = vmul.f32 %v5098, %v5183
    %v5194 = vmul.f32 %v5103, %v5183
    %v5195 = vmul.f32 %v5108, %v5183
    %v5196 = vmul.f32 %v5113, %v5183
    %v5197 = vmul.f32 %v5118, %v5183
    %v5198 = vmul.f32 %v5123, %v5183
    %v5199 = vmul.f32 %v5128, %v5183
    %v5200 = vmul.f32 %v5133, %v5183
    %v5201 = vmul.f32 %v5138, %v5183
    %v5202 = vmul.f32 %v5143, %v5183
    %v5203 = vmul.f32 %v5148, %v5183
    %v5204 = vmul.f32 %v5153, %v5183
    %v5205 = vmul.f32 %v5158, %v5183
    %v5206 = vmul.f32 %v5163, %v5183
    %v5207 = vmul.f32 %v5168, %v5183
    %v5208 = vmul.f32 %v5173, %v5183
    %v5209 = vmul.f32 %v5178, %v5183
    %v5210 = vlaneseq
    %v5211 = vshrl.u32 %v5210, 7
    %v5212 = vsub.s32 1, %v5211
    %v5213 = vrot.slane %v5049, %v5212
    %v5214 = vadd.f32 %v5184, %v5213
    %v5215 = vadd.f32 %v5185, %v5213
    %v5216 = vadd.f32 %v5186, %v5213
    %v5217 = vadd.f32 %v5187, %v5213
    %v5218 = vadd.f32 %v5188, %v5213
    %v5219 = vadd.f32 %v5189, %v5213
    %v5220 = vadd.f32 %v5190, %v5213
    %v5221 = vadd.f32 %v5191, %v5213
    %v5222 = vadd.f32 %v5192, %v5213
    %v5223 = vadd.f32 %v5193, %v5213
    %v5224 = vadd.f32 %v5194, %v5213
    %v5225 = vadd.f32 %v5195, %v5213
    %v5226 = vadd.f32 %v5196, %v5213
    %v5227 = vadd.f32 %v5197, %v5213
    %v5228 = vadd.f32 %v5198, %v5213
    %v5229 = vadd.f32 %v5199, %v5213
    %v5230 = vadd.f32 %v5200, %v5213
    %v5231 = vadd.f32 %v5201, %v5213
    %v5232 = vadd.f32 %v5202, %v5213
    %v5233 = vadd.f32 %v5203, %v5213
    %v5234 = vadd.f32 %v5204, %v5213
    %v5235 = vadd.f32 %v5205, %v5213
    %v5236 = vadd.f32 %v5206, %v5213
    %v5237 = vadd.f32 %v5207, %v5213
    %v5238 = vadd.f32 %v5208, %v5213
    %v5239 = vadd.f32 %v5209, %v5213
    %v5240 = vmax.f32 %v5214, 0.0
    %v5241 = vmax.f32 %v5215, 0.0
    %v5242 = vmax.f32 %v5216, 0.0
    %v5243 = vmax.f32 %v5217, 0.0
    %v5244 = vmax.f32 %v5218, 0.0
    %v5245 = vmax.f32 %v5219, 0.0
    %v5246 = vmax.f32 %v5220, 0.0
    %v5247 = vmax.f32 %v5221, 0.0
    %v5248 = vmax.f32 %v5222, 0.0
    %v5249 = vmax.f32 %v5223, 0.0
    %v5250 = vmax.f32 %v5224, 0.0
    %v5251 = vmax.f32 %v5225, 0.0
    %v5252 = vmax.f32 %v5226, 0.0
    %v5253 = vmax.f32 %v5227, 0.0
    %v5254 = vmax.f32 %v5228, 0.0
    %v5255 = vmax.f32 %v5229, 0.0
    %v5256 = vmax.f32 %v5230, 0.0
    %v5257 = vmax.f32 %v5231, 0.0
    %v5258 = vmax.f32 %v5232, 0.0
    %v5259 = vmax.f32 %v5233, 0.0
    %v5260 = vmax.f32 %v5234, 0.0
    %v5261 = vmax.f32 %v5235, 0.0
    %v5262 = vmax.f32 %v5236, 0.0
    %v5263 = vmax.f32 %v5237, 0.0
    %v5264 = vmax.f32 %v5238, 0.0
    %v5265 = vmax.f32 %v5239, 0.0
    %v5266 = vpack.c.bf16 %v5241, %v5240
    %v5267 = vpack.c.bf16 %v5243, %v5242
    %v5268 = vpack.c.bf16 %v5245, %v5244
    %v5269 = vpack.c.bf16 %v5247, %v5246
    %v5270 = vpack.c.bf16 %v5249, %v5248
    %v5271 = vpack.c.bf16 %v5251, %v5250
    %v5272 = vpack.c.bf16 %v5253, %v5252
    %v5273 = vpack.c.bf16 %v5255, %v5254
    %v5274 = vpack.c.bf16 %v5257, %v5256
    %v5275 = vpack.c.bf16 %v5259, %v5258
    %v5276 = vpack.c.bf16 %v5261, %v5260
    %v5277 = vpack.c.bf16 %v5263, %v5262
    %v5278 = vpack.c.bf16 %v5265, %v5264
    %5279 = vset.pattern.permute.xlu0 1
    %5280 = vperm.xlu0 %5279, %v72
    %v5281 = vpop.permute.xlu0 %5280
    %5283 = vset.pattern.permute.xlu0 1
    %5284 = vperm.xlu0 %5283, %v73
    %v5285 = vpop.permute.xlu0 %5284
    %5287 = vset.pattern.permute.xlu0 1
    %5288 = vperm.xlu0 %5287, %v74
    %v5289 = vpop.permute.xlu0 %5288
    %5291 = vset.pattern.permute.xlu0 1
    %5292 = vperm.xlu0 %5291, %v75
    %v5293 = vpop.permute.xlu0 %5292
    %5295 = vset.pattern.permute.xlu0 1
    %5296 = vperm.xlu0 %5295, %v76
    %v5297 = vpop.permute.xlu0 %5296
    %5299 = vset.pattern.permute.xlu0 1
    %5300 = vperm.xlu0 %5299, %v77
    %v5301 = vpop.permute.xlu0 %5300
    %5303 = vset.pattern.permute.xlu0 1
    %5304 = vperm.xlu0 %5303, %v78
    %v5305 = vpop.permute.xlu0 %5304
    %5307 = vset.pattern.permute.xlu0 1
    %5308 = vperm.xlu0 %5307, %v79
    %v5309 = vpop.permute.xlu0 %5308
    %5311 = vset.pattern.permute.xlu0 1
    %5312 = vperm.xlu0 %5311, %v80
    %v5313 = vpop.permute.xlu0 %5312
    %5315 = vset.pattern.permute.xlu0 1
    %5316 = vperm.xlu0 %5315, %v81
    %v5317 = vpop.permute.xlu0 %5316
    %5319 = vset.pattern.permute.xlu0 1
    %5320 = vperm.xlu0 %5319, %v82
    %v5321 = vpop.permute.xlu0 %5320
    %5323 = vset.pattern.permute.xlu0 1
    %5324 = vperm.xlu0 %5323, %v83
    %v5325 = vpop.permute.xlu0 %5324
    %5327 = vset.pattern.permute.xlu0 1
    %5328 = vperm.xlu0 %5327, %v84
    %v5329 = vpop.permute.xlu0 %5328
    %5331 = vset.pattern.permute.xlu0 1
    %5332 = vperm.xlu0 %5331, %v85
    %v5333 = vpop.permute.xlu0 %5332
    %5335 = vset.pattern.permute.xlu0 1
    %5336 = vperm.xlu0 %5335, %v86
    %v5337 = vpop.permute.xlu0 %5336
    %5339 = vset.pattern.permute.xlu0 1
    %5340 = vperm.xlu0 %5339, %v87
    %v5341 = vpop.permute.xlu0 %5340
    %5343 = vset.pattern.permute.xlu0 1
    %5344 = vperm.xlu0 %5343, %v88
    %v5345 = vpop.permute.xlu0 %5344
    %5347 = vset.pattern.permute.xlu0 1
    %5348 = vperm.xlu0 %5347, %v89
    %v5349 = vpop.permute.xlu0 %5348
    %5351 = vset.pattern.permute.xlu0 1
    %5352 = vperm.xlu0 %5351, %v90
    %v5353 = vpop.permute.xlu0 %5352
    %5355 = vset.pattern.permute.xlu0 1
    %5356 = vperm.xlu0 %5355, %v91
    %v5357 = vpop.permute.xlu0 %5356
    %5359 = vset.pattern.permute.xlu0 1
    %5360 = vperm.xlu0 %5359, %v92
    %v5361 = vpop.permute.xlu0 %5360
    %5363 = vset.pattern.permute.xlu0 1
    %5364 = vperm.xlu0 %5363, %v93
    %v5365 = vpop.permute.xlu0 %5364
    %5367 = vset.pattern.permute.xlu0 1
    %5368 = vperm.xlu0 %5367, %v94
    %v5369 = vpop.permute.xlu0 %5368
    %5371 = vset.pattern.permute.xlu0 1
    %5372 = vperm.xlu0 %5371, %v95
    %v5373 = vpop.permute.xlu0 %5372
    %5375 = vset.pattern.permute.xlu0 1
    %5376 = vperm.xlu0 %5375, %v96
    %v5377 = vpop.permute.xlu0 %5376
    %5379 = vset.pattern.permute.xlu0 1
    %5380 = vperm.xlu0 %5379, %v97
    %v5381 = vpop.permute.xlu0 %5380
    %v5383 = vlaneseq
    %v5384 = vshrl.u32 %v5383, 7
    %v5385 = vsub.s32 2, %v5384
    %v5386 = vrot.slane %v5049, %v5385
    %v5387 = vmul.f32 %v5281, %v5386
    %v5388 = vmul.f32 %v5285, %v5386
    %v5389 = vmul.f32 %v5289, %v5386
    %v5390 = vmul.f32 %v5293, %v5386
    %v5391 = vmul.f32 %v5297, %v5386
    %v5392 = vmul.f32 %v5301, %v5386
    %v5393 = vmul.f32 %v5305, %v5386
    %v5394 = vmul.f32 %v5309, %v5386
    %v5395 = vmul.f32 %v5313, %v5386
    %v5396 = vmul.f32 %v5317, %v5386
    %v5397 = vmul.f32 %v5321, %v5386
    %v5398 = vmul.f32 %v5325, %v5386
    %v5399 = vmul.f32 %v5329, %v5386
    %v5400 = vmul.f32 %v5333, %v5386
    %v5401 = vmul.f32 %v5337, %v5386
    %v5402 = vmul.f32 %v5341, %v5386
    %v5403 = vmul.f32 %v5345, %v5386
    %v5404 = vmul.f32 %v5349, %v5386
    %v5405 = vmul.f32 %v5353, %v5386
    %v5406 = vmul.f32 %v5357, %v5386
    %v5407 = vmul.f32 %v5361, %v5386
    %v5408 = vmul.f32 %v5365, %v5386
    %v5409 = vmul.f32 %v5369, %v5386
    %v5410 = vmul.f32 %v5373, %v5386
    %v5411 = vmul.f32 %v5377, %v5386
    %v5412 = vmul.f32 %v5381, %v5386
    %v5413 = vlaneseq
    %v5414 = vshrl.u32 %v5413, 7
    %v5415 = vsub.s32 3, %v5414
    %v5416 = vrot.slane %v5049, %v5415
    %v5417 = vadd.f32 %v5387, %v5416
    %v5418 = vadd.f32 %v5388, %v5416
    %v5419 = vadd.f32 %v5389, %v5416
    %v5420 = vadd.f32 %v5390, %v5416
    %v5421 = vadd.f32 %v5391, %v5416
    %v5422 = vadd.f32 %v5392, %v5416
    %v5423 = vadd.f32 %v5393, %v5416
    %v5424 = vadd.f32 %v5394, %v5416
    %v5425 = vadd.f32 %v5395, %v5416
    %v5426 = vadd.f32 %v5396, %v5416
    %v5427 = vadd.f32 %v5397, %v5416
    %v5428 = vadd.f32 %v5398, %v5416
    %v5429 = vadd.f32 %v5399, %v5416
    %v5430 = vadd.f32 %v5400, %v5416
    %v5431 = vadd.f32 %v5401, %v5416
    %v5432 = vadd.f32 %v5402, %v5416
    %v5433 = vadd.f32 %v5403, %v5416
    %v5434 = vadd.f32 %v5404, %v5416
    %v5435 = vadd.f32 %v5405, %v5416
    %v5436 = vadd.f32 %v5406, %v5416
    %v5437 = vadd.f32 %v5407, %v5416
    %v5438 = vadd.f32 %v5408, %v5416
    %v5439 = vadd.f32 %v5409, %v5416
    %v5440 = vadd.f32 %v5410, %v5416
    %v5441 = vadd.f32 %v5411, %v5416
    %v5442 = vadd.f32 %v5412, %v5416
    %v5443 = vmax.f32 %v5417, 0.0
    %v5444 = vmax.f32 %v5418, 0.0
    %v5445 = vmax.f32 %v5419, 0.0
    %v5446 = vmax.f32 %v5420, 0.0
    %v5447 = vmax.f32 %v5421, 0.0
    %v5448 = vmax.f32 %v5422, 0.0
    %v5449 = vmax.f32 %v5423, 0.0
    %v5450 = vmax.f32 %v5424, 0.0
    %v5451 = vmax.f32 %v5425, 0.0
    %v5452 = vmax.f32 %v5426, 0.0
    %v5453 = vmax.f32 %v5427, 0.0
    %v5454 = vmax.f32 %v5428, 0.0
    %v5455 = vmax.f32 %v5429, 0.0
    %v5456 = vmax.f32 %v5430, 0.0
    %v5457 = vmax.f32 %v5431, 0.0
    %v5458 = vmax.f32 %v5432, 0.0
    %v5459 = vmax.f32 %v5433, 0.0
    %v5460 = vmax.f32 %v5434, 0.0
    %v5461 = vmax.f32 %v5435, 0.0
    %v5462 = vmax.f32 %v5436, 0.0
    %v5463 = vmax.f32 %v5437, 0.0
    %v5464 = vmax.f32 %v5438, 0.0
    %v5465 = vmax.f32 %v5439, 0.0
    %v5466 = vmax.f32 %v5440, 0.0
    %v5467 = vmax.f32 %v5441, 0.0
    %v5468 = vmax.f32 %v5442, 0.0
    %v5469 = vpack.c.bf16 %v5444, %v5443
    %v5470 = vpack.c.bf16 %v5446, %v5445
    %v5471 = vpack.c.bf16 %v5448, %v5447
    %v5472 = vpack.c.bf16 %v5450, %v5449
    %v5473 = vpack.c.bf16 %v5452, %v5451
    %v5474 = vpack.c.bf16 %v5454, %v5453
    %v5475 = vpack.c.bf16 %v5456, %v5455
    %v5476 = vpack.c.bf16 %v5458, %v5457
    %v5477 = vpack.c.bf16 %v5460, %v5459
    %v5478 = vpack.c.bf16 %v5462, %v5461
    %v5479 = vpack.c.bf16 %v5464, %v5463
    %v5480 = vpack.c.bf16 %v5466, %v5465
    %v5481 = vpack.c.bf16 %v5468, %v5467
    %v5482 = vld [vmem:[%s11] sm:$0xf]
    %v5483 = vld [vmem:[%s11 + $0x4] sm:$0xf]
    %v5484 = vld [vmem:[%s11 + $0x8] sm:$0xf]
    %v5485 = vld [vmem:[%s11 + $0xc] sm:$0xf]
    %v5490 = vunpack.c.l.b16 %v5482
    %v5491 = vunpack.c.l.b16 %v5483
    %v5492 = vunpack.c.l.b16 %v5484
    %v5493 = vunpack.c.l.b16 %v5485
    %v5494 = vpack.c.b16 %v5491, %v5490
    %v5495 = vpack.c.b16 %v5493, %v5492
    %vm5498 = vcmask 261120
    %v5500 = vsel %vm5498, %v5266, 0
    %v5503 = vsel %vm5498, %v5267, 0
    %v5506 = vsel %vm5498, %v5268, 0
    %v5509 = vsel %vm5498, %v5269, 0
    %v5512 = vsel %vm5498, %v5270, 0
    %v5515 = vsel %vm5498, %v5271, 0
    %v5518 = vsel %vm5498, %v5272, 0
    %v5521 = vsel %vm5498, %v5273, 0
    %v5524 = vsel %vm5498, %v5274, 0
    %v5527 = vsel %vm5498, %v5275, 0
    %v5530 = vsel %vm5498, %v5276, 0
    %v5533 = vsel %vm5498, %v5277, 0
    %v5536 = vsel %vm5498, %v5278, 0
    %5538 = vmatprep.subr.bf16.mxu0 0
    %5539 = vmatpush1.bf16.msra.mxu0 %v5494
    %5540 = vmatprep.subr.bf16.mxu0 0
    %5541 = vmatpush1.bf16.msra.mxu0 %v5495
    %5542 = vmatprep.subr.bf16.mxu0 0
    %5543 = vmatpush1.bf16.msra.mxu0 0
    %5544 = vmatprep.subr.bf16.mxu0 0
    %5545 = vmatpush1.bf16.msra.mxu0 0
    %5546 = vmatprep.subr.bf16.mxu0 0
    %5547 = vmatpush1.bf16.msra.mxu0 0
    %5548 = vmatprep.subr.bf16.mxu0 0
    %5549 = vmatpush1.bf16.msra.mxu0 0
    %5550 = vmatprep.subr.bf16.mxu0 0
    %5551 = vmatpush1.bf16.msra.mxu0 0
    %5552 = vmatprep.subr.bf16.mxu0 0
    %5553 = vmatpush1.bf16.msra.mxu0 0
    %5554 = vmatprep.subr.bf16.mxu0 0
    %5555 = vmatpush1.bf16.msra.mxu0 0
    %5556 = vmatprep.subr.bf16.mxu0 0
    %5557 = vmatpush1.bf16.msra.mxu0 0
    %5558 = vmatprep.subr.bf16.mxu0 0
    %5559 = vmatpush1.bf16.msra.mxu0 0
    %5560 = vmatprep.subr.bf16.mxu0 0
    %5561 = vmatpush1.bf16.msra.mxu0 0
    %5562 = vmatprep.subr.bf16.mxu0 0
    %5563 = vmatpush1.bf16.msra.mxu0 0
    %5564 = vmatprep.subr.bf16.mxu0 0
    %5565 = vmatpush1.bf16.msra.mxu0 0
    %5566 = vmatprep.subr.bf16.mxu0 0
    %5567 = vmatpush1.bf16.msra.mxu0 0
    %5568 = vmatprep.subr.bf16.mxu0 0
    %5569 = vmatpush1.bf16.msra.mxu0 0
    %5570 = vmatprep.mubr.bf16.mxu0 0
    %5571 = vmatmul.mubr.bf16.gmra.mrb[0].mxu0 %v5500
    %v5572 = vpop.f32.mrb[0].mxu0
    %v5573 = vadd.f32 0.0, %v5572
    %v5574 = vpop.f32.mrb[0].mxu0
    %v5575 = vpop.f32.mrb[0].mxu0
    %v5576 = vadd.f32 0.0, %v5575
    %v5577 = vpop.f32.mrb[0].mxu0
    %5578 = vmatprep.mubr.bf16.mxu0 0
    %5579 = vmatmul.mubr.bf16.gmra.mrb[0].mxu0 %v5503
    %v5580 = vpop.f32.mrb[0].mxu0
    %v5581 = vadd.f32 0.0, %v5580
    %v5582 = vpop.f32.mrb[0].mxu0
    %v5583 = vpop.f32.mrb[0].mxu0
    %v5584 = vadd.f32 0.0, %v5583
    %v5585 = vpop.f32.mrb[0].mxu0
    %5586 = vmatprep.mubr.bf16.mxu0 0
    %5587 = vmatmul.mubr.bf16.gmra.mrb[0].mxu0 %v5506
    %v5588 = vpop.f32.mrb[0].mxu0
    %v5589 = vadd.f32 0.0, %v5588
    %v5590 = vpop.f32.mrb[0].mxu0
    %v5591 = vpop.f32.mrb[0].mxu0
    %v5592 = vadd.f32 0.0, %v5591
    %v5593 = vpop.f32.mrb[0].mxu0
    %5594 = vmatprep.mubr.bf16.mxu0 0
    %5595 = vmatmul.mubr.bf16.gmra.mrb[0].mxu0 %v5509
    %v5596 = vpop.f32.mrb[0].mxu0
    %v5597 = vadd.f32 0.0, %v5596
    %v5598 = vpop.f32.mrb[0].mxu0
    %v5599 = vpop.f32.mrb[0].mxu0
    %v5600 = vadd.f32 0.0, %v5599
    %v5601 = vpop.f32.mrb[0].mxu0
    %5602 = vmatprep.mubr.bf16.mxu0 0
    %5603 = vmatmul.mubr.bf16.gmra.mrb[0].mxu0 %v5512
    %v5604 = vpop.f32.mrb[0].mxu0
    %v5605 = vadd.f32 0.0, %v5604
    %v5606 = vpop.f32.mrb[0].mxu0
    %v5607 = vpop.f32.mrb[0].mxu0
    %v5608 = vadd.f32 0.0, %v5607
    %v5609 = vpop.f32.mrb[0].mxu0
    %5610 = vmatprep.mubr.bf16.mxu0 0
    %5611 = vmatmul.mubr.bf16.gmra.mrb[0].mxu0 %v5515
    %v5612 = vpop.f32.mrb[0].mxu0
    %v5613 = vadd.f32 0.0, %v5612
    %v5614 = vpop.f32.mrb[0].mxu0
    %v5615 = vpop.f32.mrb[0].mxu0
    %v5616 = vadd.f32 0.0, %v5615
    %v5617 = vpop.f32.mrb[0].mxu0
    %5618 = vmatprep.mubr.bf16.mxu0 0
    %5619 = vmatmul.mubr.bf16.gmra.mrb[0].mxu0 %v5518
    %v5620 = vpop.f32.mrb[0].mxu0
    %v5621 = vadd.f32 0.0, %v5620
    %v5622 = vpop.f32.mrb[0].mxu0
    %v5623 = vpop.f32.mrb[0].mxu0
    %v5624 = vadd.f32 0.0, %v5623
    %v5625 = vpop.f32.mrb[0].mxu0
    %5626 = vmatprep.mubr.bf16.mxu0 0
    %5627 = vmatmul.mubr.bf16.gmra.mrb[0].mxu0 %v5521
    %v5628 = vpop.f32.mrb[0].mxu0
    %v5629 = vadd.f32 0.0, %v5628
    %v5630 = vpop.f32.mrb[0].mxu0
    %v5631 = vpop.f32.mrb[0].mxu0
    %v5632 = vadd.f32 0.0, %v5631
    %v5633 = vpop.f32.mrb[0].mxu0
    %5634 = vmatprep.mubr.bf16.mxu0 0
    %5635 = vmatmul.mubr.bf16.gmra.mrb[0].mxu0 %v5524
    %v5636 = vpop.f32.mrb[0].mxu0
    %v5637 = vadd.f32 0.0, %v5636
    %v5638 = vpop.f32.mrb[0].mxu0
    %v5639 = vpop.f32.mrb[0].mxu0
    %v5640 = vadd.f32 0.0, %v5639
    %v5641 = vpop.f32.mrb[0].mxu0
    %5642 = vmatprep.mubr.bf16.mxu0 0
    %5643 = vmatmul.mubr.bf16.gmra.mrb[0].mxu0 %v5527
    %v5644 = vpop.f32.mrb[0].mxu0
    %v5645 = vadd.f32 0.0, %v5644
    %v5646 = vpop.f32.mrb[0].mxu0
    %v5647 = vpop.f32.mrb[0].mxu0
    %v5648 = vadd.f32 0.0, %v5647
    %v5649 = vpop.f32.mrb[0].mxu0
    %5650 = vmatprep.mubr.bf16.mxu0 0
    %5651 = vmatmul.mubr.bf16.gmra.mrb[0].mxu0 %v5530
    %v5652 = vpop.f32.mrb[0].mxu0
    %v5653 = vadd.f32 0.0, %v5652
    %v5654 = vpop.f32.mrb[0].mxu0
    %v5655 = vpop.f32.mrb[0].mxu0
    %v5656 = vadd.f32 0.0, %v5655
    %v5657 = vpop.f32.mrb[0].mxu0
    %5658 = vmatprep.mubr.bf16.mxu0 0
    %5659 = vmatmul.mubr.bf16.gmra.mrb[0].mxu0 %v5533
    %v5660 = vpop.f32.mrb[0].mxu0
    %v5661 = vadd.f32 0.0, %v5660
    %v5662 = vpop.f32.mrb[0].mxu0
    %v5663 = vpop.f32.mrb[0].mxu0
    %v5664 = vadd.f32 0.0, %v5663
    %v5665 = vpop.f32.mrb[0].mxu0
    %5666 = vmatprep.mubr.bf16.mxu0 0
    %5667 = vmatmul.mubr.bf16.gmra.mrb[0].mxu0 %v5536
    %v5668 = vpop.f32.mrb[0].mxu0
    %v5669 = vadd.f32 0.0, %v5668
    %v5670 = vpop.f32.mrb[0].mxu0
    %v5671 = vpop.f32.mrb[0].mxu0
    %v5672 = vadd.f32 0.0, %v5671
    %v5673 = vpop.f32.mrb[0].mxu0
    %5674 = vdwg.mxu0
    %v5675 = vld [vmem:[%s12] sm:$0xf]
    %v5676 = vld [vmem:[%s12 + $0x4] sm:$0xf]
    %v5677 = vld [vmem:[%s12 + $0x8] sm:$0xf]
    %v5678 = vld [vmem:[%s12 + $0xc] sm:$0xf]
    %v5683 = vunpack.c.l.b16 %v5675
    %v5684 = vunpack.c.l.b16 %v5676
    %v5685 = vunpack.c.l.b16 %v5677
    %v5686 = vunpack.c.l.b16 %v5678
    %v5687 = vpack.c.b16 %v5684, %v5683
    %v5688 = vpack.c.b16 %v5686, %v5685
    %v5692 = vsel %vm5498, %v5469, 0
    %v5695 = vsel %vm5498, %v5470, 0
    %v5698 = vsel %vm5498, %v5471, 0
    %v5701 = vsel %vm5498, %v5472, 0
    %v5704 = vsel %vm5498, %v5473, 0
    %v5707 = vsel %vm5498, %v5474, 0
    %v5710 = vsel %vm5498, %v5475, 0
    %v5713 = vsel %vm5498, %v5476, 0
    %v5716 = vsel %vm5498, %v5477, 0
    %v5719 = vsel %vm5498, %v5478, 0
    %v5722 = vsel %vm5498, %v5479, 0
    %v5725 = vsel %vm5498, %v5480, 0
    %v5728 = vsel %vm5498, %v5481, 0
    %5730 = vmatprep.subr.bf16.mxu0 0
    %5731 = vmatpush1.bf16.msra.mxu0 %v5687
    %5732 = vmatprep.subr.bf16.mxu0 0
    %5733 = vmatpush1.bf16.msra.mxu0 %v5688
    %5734 = vmatprep.subr.bf16.mxu0 0
    %5735 = vmatpush1.bf16.msra.mxu0 0
    %5736 = vmatprep.subr.bf16.mxu0 0
    %5737 = vmatpush1.bf16.msra.mxu0 0
    %5738 = vmatprep.subr.bf16.mxu0 0
    %5739 = vmatpush1.bf16.msra.mxu0 0
    %5740 = vmatprep.subr.bf16.mxu0 0
    %5741 = vmatpush1.bf16.msra.mxu0 0
    %5742 = vmatprep.subr.bf16.mxu0 0
    %5743 = vmatpush1.bf16.msra.mxu0 0
    %5744 = vmatprep.subr.bf16.mxu0 0
    %5745 = vmatpush1.bf16.msra.mxu0 0
    %5746 = vmatprep.subr.bf16.mxu0 0
    %5747 = vmatpush1.bf16.msra.mxu0 0
    %5748 = vmatprep.subr.bf16.mxu0 0
    %5749 = vmatpush1.bf16.msra.mxu0 0
    %5750 = vmatprep.subr.bf16.mxu0 0
    %5751 = vmatpush1.bf16.msra.mxu0 0
    %5752 = vmatprep.subr.bf16.mxu0 0
    %5753 = vmatpush1.bf16.msra.mxu0 0
    %5754 = vmatprep.subr.bf16.mxu0 0
    %5755 = vmatpush1.bf16.msra.mxu0 0
    %5756 = vmatprep.subr.bf16.mxu0 0
    %5757 = vmatpush1.bf16.msra.mxu0 0
    %5758 = vmatprep.subr.bf16.mxu0 0
    %5759 = vmatpush1.bf16.msra.mxu0 0
    %5760 = vmatprep.subr.bf16.mxu0 0
    %5761 = vmatpush1.bf16.msra.mxu0 0
    %5762 = vmatprep.mubr.bf16.mxu0 0
    %5763 = vmatmul.mubr.bf16.gmra.mrb[0].mxu0 %v5692
    %v5764 = vpop.f32.mrb[0].mxu0
    %v5765 = vadd.f32 0.0, %v5764
    %v5766 = vpop.f32.mrb[0].mxu0
    %v5767 = vpop.f32.mrb[0].mxu0
    %v5768 = vadd.f32 0.0, %v5767
    %v5769 = vpop.f32.mrb[0].mxu0
    %5770 = vmatprep.mubr.bf16.mxu0 0
    %5771 = vmatmul.mubr.bf16.gmra.mrb[0].mxu0 %v5695
    %v5772 = vpop.f32.mrb[0].mxu0
    %v5773 = vadd.f32 0.0, %v5772
    %v5774 = vpop.f32.mrb[0].mxu0
    %v5775 = vpop.f32.mrb[0].mxu0
    %v5776 = vadd.f32 0.0, %v5775
    %v5777 = vpop.f32.mrb[0].mxu0
    %5778 = vmatprep.mubr.bf16.mxu0 0
    %5779 = vmatmul.mubr.bf16.gmra.mrb[0].mxu0 %v5698
    %v5780 = vpop.f32.mrb[0].mxu0
    %v5781 = vadd.f32 0.0, %v5780
    %v5782 = vpop.f32.mrb[0].mxu0
    %v5783 = vpop.f32.mrb[0].mxu0
    %v5784 = vadd.f32 0.0, %v5783
    %v5785 = vpop.f32.mrb[0].mxu0
    %5786 = vmatprep.mubr.bf16.mxu0 0
    %5787 = vmatmul.mubr.bf16.gmra.mrb[0].mxu0 %v5701
    %v5788 = vpop.f32.mrb[0].mxu0
    %v5789 = vadd.f32 0.0, %v5788
    %v5790 = vpop.f32.mrb[0].mxu0
    %v5791 = vpop.f32.mrb[0].mxu0
    %v5792 = vadd.f32 0.0, %v5791
    %v5793 = vpop.f32.mrb[0].mxu0
    %5794 = vmatprep.mubr.bf16.mxu0 0
    %5795 = vmatmul.mubr.bf16.gmra.mrb[0].mxu0 %v5704
    %v5796 = vpop.f32.mrb[0].mxu0
    %v5797 = vadd.f32 0.0, %v5796
    %v5798 = vpop.f32.mrb[0].mxu0
    %v5799 = vpop.f32.mrb[0].mxu0
    %v5800 = vadd.f32 0.0, %v5799
    %v5801 = vpop.f32.mrb[0].mxu0
    %5802 = vmatprep.mubr.bf16.mxu0 0
    %5803 = vmatmul.mubr.bf16.gmra.mrb[0].mxu0 %v5707
    %v5804 = vpop.f32.mrb[0].mxu0
    %v5805 = vadd.f32 0.0, %v5804
    %v5806 = vpop.f32.mrb[0].mxu0
    %v5807 = vpop.f32.mrb[0].mxu0
    %v5808 = vadd.f32 0.0, %v5807
    %v5809 = vpop.f32.mrb[0].mxu0
    %5810 = vmatprep.mubr.bf16.mxu0 0
    %5811 = vmatmul.mubr.bf16.gmra.mrb[0].mxu0 %v5710
    %v5812 = vpop.f32.mrb[0].mxu0
    %v5813 = vadd.f32 0.0, %v5812
    %v5814 = vpop.f32.mrb[0].mxu0
    %v5815 = vpop.f32.mrb[0].mxu0
    %v5816 = vadd.f32 0.0, %v5815
    %v5817 = vpop.f32.mrb[0].mxu0
    %5818 = vmatprep.mubr.bf16.mxu0 0
    %5819 = vmatmul.mubr.bf16.gmra.mrb[0].mxu0 %v5713
    %v5820 = vpop.f32.mrb[0].mxu0
    %v5821 = vadd.f32 0.0, %v5820
    %v5822 = vpop.f32.mrb[0].mxu0
    %v5823 = vpop.f32.mrb[0].mxu0
    %v5824 = vadd.f32 0.0, %v5823
    %v5825 = vpop.f32.mrb[0].mxu0
    %5826 = vmatprep.mubr.bf16.mxu0 0
    %5827 = vmatmul.mubr.bf16.gmra.mrb[0].mxu0 %v5716
    %v5828 = vpop.f32.mrb[0].mxu0
    %v5829 = vadd.f32 0.0, %v5828
    %v5830 = vpop.f32.mrb[0].mxu0
    %v5831 = vpop.f32.mrb[0].mxu0
    %v5832 = vadd.f32 0.0, %v5831
    %v5833 = vpop.f32.mrb[0].mxu0
    %5834 = vmatprep.mubr.bf16.mxu0 0
    %5835 = vmatmul.mubr.bf16.gmra.mrb[0].mxu0 %v5719
    %v5836 = vpop.f32.mrb[0].mxu0
    %v5837 = vadd.f32 0.0, %v5836
    %v5838 = vpop.f32.mrb[0].mxu0
    %v5839 = vpop.f32.mrb[0].mxu0
    %v5840 = vadd.f32 0.0, %v5839
    %v5841 = vpop.f32.mrb[0].mxu0
    %5842 = vmatprep.mubr.bf16.mxu0 0
    %5843 = vmatmul.mubr.bf16.gmra.mrb[0].mxu0 %v5722
    %v5844 = vpop.f32.mrb[0].mxu0
    %v5845 = vadd.f32 0.0, %v5844
    %v5846 = vpop.f32.mrb[0].mxu0
    %v5847 = vpop.f32.mrb[0].mxu0
    %v5848 = vadd.f32 0.0, %v5847
    %v5849 = vpop.f32.mrb[0].mxu0
    %5850 = vmatprep.mubr.bf16.mxu0 0
    %5851 = vmatmul.mubr.bf16.gmra.mrb[0].mxu0 %v5725
    %v5852 = vpop.f32.mrb[0].mxu0
    %v5853 = vadd.f32 0.0, %v5852
    %v5854 = vpop.f32.mrb[0].mxu0
    %v5855 = vpop.f32.mrb[0].mxu0
    %v5856 = vadd.f32 0.0, %v5855
    %v5857 = vpop.f32.mrb[0].mxu0
    %5858 = vmatprep.mubr.bf16.mxu0 0
    %5859 = vmatmul.mubr.bf16.gmra.mrb[0].mxu0 %v5728
    %v5860 = vpop.f32.mrb[0].mxu0
    %v5861 = vadd.f32 0.0, %v5860
    %v5862 = vpop.f32.mrb[0].mxu0
    %v5863 = vpop.f32.mrb[0].mxu0
    %v5864 = vadd.f32 0.0, %v5863
    %v5865 = vpop.f32.mrb[0].mxu0
    %5866 = vdwg.mxu0
    %v5869 = vunpack.c.l.b16 %v5047
    %v5870 = vunpack.c.l.b16 %v5048
    %v5871 = vpack.c.b16 %v5870, %v5869
    %vm5872 = vcmask 97280
    %v5874 = vsel %vm5872, %v5034, 0
    %v5877 = vsel %vm5872, %v5035, 0
    %v5880 = vsel %vm5872, %v5036, 0
    %v5883 = vsel %vm5872, %v5037, 0
    %v5886 = vsel %vm5872, %v5038, 0
    %v5889 = vsel %vm5872, %v5039, 0
    %v5892 = vsel %vm5872, %v5040, 0
    %v5895 = vsel %vm5872, %v5041, 0
    %v5898 = vsel %vm5872, %v5042, 0
    %v5901 = vsel %vm5872, %v5043, 0
    %v5904 = vsel %vm5872, %v5044, 0
    %v5907 = vsel %vm5872, %v5045, 0
    %v5910 = vsel %vm5872, %v5046, 0
    %vm5912 = vcmask 1045504
    %v5914 = vsel %vm5912, %v5871, 0
    %5916 = vmatprep.subr.bf16.mxu0 0
    %5917 = vmatpush1.bf16.msra.mxu0 %v5914
    %5918 = vmatprep.subr.bf16.mxu0 0
    %5919 = vmatpush1.bf16.msra.mxu0 0
    %5920 = vmatprep.subr.bf16.mxu0 0
    %5921 = vmatpush1.bf16.msra.mxu0 0
    %5922 = vmatprep.subr.bf16.mxu0 0
    %5923 = vmatpush1.bf16.msra.mxu0 0
    %5924 = vmatprep.subr.bf16.mxu0 0
    %5925 = vmatpush1.bf16.msra.mxu0 0
    %5926 = vmatprep.subr.bf16.mxu0 0
    %5927 = vmatpush1.bf16.msra.mxu0 0
    %5928 = vmatprep.subr.bf16.mxu0 0
    %5929 = vmatpush1.bf16.msra.mxu0 0
    %5930 = vmatprep.subr.bf16.mxu0 0
    %5931 = vmatpush1.bf16.msra.mxu0 0
    %5932 = vmatprep.subr.bf16.mxu0 0
    %5933 = vmatpush1.bf16.msra.mxu0 0
    %5934 = vmatprep.subr.bf16.mxu0 0
    %5935 = vmatpush1.bf16.msra.mxu0 0
    %5936 = vmatprep.subr.bf16.mxu0 0
    %5937 = vmatpush1.bf16.msra.mxu0 0
    %5938 = vmatprep.subr.bf16.mxu0 0
    %5939 = vmatpush1.bf16.msra.mxu0 0
    %5940 = vmatprep.subr.bf16.mxu0 0
    %5941 = vmatpush1.bf16.msra.mxu0 0
    %5942 = vmatprep.subr.bf16.mxu0 0
    %5943 = vmatpush1.bf16.msra.mxu0 0
    %5944 = vmatprep.subr.bf16.mxu0 0
    %5945 = vmatpush1.bf16.msra.mxu0 0
    %5946 = vmatprep.subr.bf16.mxu0 0
    %5947 = vmatpush1.bf16.msra.mxu0 0
    %5948 = vmatprep.mubr.bf16.mxu0 0
    %5949 = vmatmul.mubr.bf16.gmra.mrb[0].mxu0 %v5874
    %v5950 = vpop.f32.mrb[0].mxu0
    %v5951 = vadd.f32 %v5573, %v5950
    %v5952 = vpop.f32.mrb[0].mxu0
    %v5953 = vpop.f32.mrb[0].mxu0
    %v5954 = vadd.f32 %v5576, %v5953
    %v5955 = vpop.f32.mrb[0].mxu0
    %5956 = vmatprep.mubr.bf16.mxu0 0
    %5957 = vmatmul.mubr.bf16.gmra.mrb[0].mxu0 %v5877
    %v5958 = vpop.f32.mrb[0].mxu0
    %v5959 = vadd.f32 %v5581, %v5958
    %v5960 = vpop.f32.mrb[0].mxu0
    %v5961 = vpop.f32.mrb[0].mxu0
    %v5962 = vadd.f32 %v5584, %v5961
    %v5963 = vpop.f32.mrb[0].mxu0
    %5964 = vmatprep.mubr.bf16.mxu0 0
    %5965 = vmatmul.mubr.bf16.gmra.mrb[0].mxu0 %v5880
    %v5966 = vpop.f32.mrb[0].mxu0
    %v5967 = vadd.f32 %v5589, %v5966
    %v5968 = vpop.f32.mrb[0].mxu0
    %v5969 = vpop.f32.mrb[0].mxu0
    %v5970 = vadd.f32 %v5592, %v5969
    %v5971 = vpop.f32.mrb[0].mxu0
    %5972 = vmatprep.mubr.bf16.mxu0 0
    %5973 = vmatmul.mubr.bf16.gmra.mrb[0].mxu0 %v5883
    %v5974 = vpop.f32.mrb[0].mxu0
    %v5975 = vadd.f32 %v5597, %v5974
    %v5976 = vpop.f32.mrb[0].mxu0
    %v5977 = vpop.f32.mrb[0].mxu0
    %v5978 = vadd.f32 %v5600, %v5977
    %v5979 = vpop.f32.mrb[0].mxu0
    %5980 = vmatprep.mubr.bf16.mxu0 0
    %5981 = vmatmul.mubr.bf16.gmra.mrb[0].mxu0 %v5886
    %v5982 = vpop.f32.mrb[0].mxu0
    %v5983 = vadd.f32 %v5605, %v5982
    %v5984 = vpop.f32.mrb[0].mxu0
    %v5985 = vpop.f32.mrb[0].mxu0
    %v5986 = vadd.f32 %v5608, %v5985
    %v5987 = vpop.f32.mrb[0].mxu0
    %5988 = vmatprep.mubr.bf16.mxu0 0
    %5989 = vmatmul.mubr.bf16.gmra.mrb[0].mxu0 %v5889
    %v5990 = vpop.f32.mrb[0].mxu0
    %v5991 = vadd.f32 %v5613, %v5990
    %v5992 = vpop.f32.mrb[0].mxu0
    %v5993 = vpop.f32.mrb[0].mxu0
    %v5994 = vadd.f32 %v5616, %v5993
    %v5995 = vpop.f32.mrb[0].mxu0
    %5996 = vmatprep.mubr.bf16.mxu0 0
    %5997 = vmatmul.mubr.bf16.gmra.mrb[0].mxu0 %v5892
    %v5998 = vpop.f32.mrb[0].mxu0
    %v5999 = vadd.f32 %v5621, %v5998
    %v6000 = vpop.f32.mrb[0].mxu0
    %v6001 = vpop.f32.mrb[0].mxu0
    %v6002 = vadd.f32 %v5624, %v6001
    %v6003 = vpop.f32.mrb[0].mxu0
    %6004 = vmatprep.mubr.bf16.mxu0 0
    %6005 = vmatmul.mubr.bf16.gmra.mrb[0].mxu0 %v5895
    %v6006 = vpop.f32.mrb[0].mxu0
    %v6007 = vadd.f32 %v5629, %v6006
    %v6008 = vpop.f32.mrb[0].mxu0
    %v6009 = vpop.f32.mrb[0].mxu0
    %v6010 = vadd.f32 %v5632, %v6009
    %v6011 = vpop.f32.mrb[0].mxu0
    %6012 = vmatprep.mubr.bf16.mxu0 0
    %6013 = vmatmul.mubr.bf16.gmra.mrb[0].mxu0 %v5898
    %v6014 = vpop.f32.mrb[0].mxu0
    %v6015 = vadd.f32 %v5637, %v6014
    %v6016 = vpop.f32.mrb[0].mxu0
    %v6017 = vpop.f32.mrb[0].mxu0
    %v6018 = vadd.f32 %v5640, %v6017
    %v6019 = vpop.f32.mrb[0].mxu0
    %6020 = vmatprep.mubr.bf16.mxu0 0
    %6021 = vmatmul.mubr.bf16.gmra.mrb[0].mxu0 %v5901
    %v6022 = vpop.f32.mrb[0].mxu0
    %v6023 = vadd.f32 %v5645, %v6022
    %v6024 = vpop.f32.mrb[0].mxu0
    %v6025 = vpop.f32.mrb[0].mxu0
    %v6026 = vadd.f32 %v5648, %v6025
    %v6027 = vpop.f32.mrb[0].mxu0
    %6028 = vmatprep.mubr.bf16.mxu0 0
    %6029 = vmatmul.mubr.bf16.gmra.mrb[0].mxu0 %v5904
    %v6030 = vpop.f32.mrb[0].mxu0
    %v6031 = vadd.f32 %v5653, %v6030
    %v6032 = vpop.f32.mrb[0].mxu0
    %v6033 = vpop.f32.mrb[0].mxu0
    %v6034 = vadd.f32 %v5656, %v6033
    %v6035 = vpop.f32.mrb[0].mxu0
    %6036 = vmatprep.mubr.bf16.mxu0 0
    %6037 = vmatmul.mubr.bf16.gmra.mrb[0].mxu0 %v5907
    %v6038 = vpop.f32.mrb[0].mxu0
    %v6039 = vadd.f32 %v5661, %v6038
    %v6040 = vpop.f32.mrb[0].mxu0
    %v6041 = vpop.f32.mrb[0].mxu0
    %v6042 = vadd.f32 %v5664, %v6041
    %v6043 = vpop.f32.mrb[0].mxu0
    %6044 = vmatprep.mubr.bf16.mxu0 0
    %6045 = vmatmul.mubr.bf16.gmra.mrb[0].mxu0 %v5910
    %v6046 = vpop.f32.mrb[0].mxu0
    %v6047 = vadd.f32 %v5669, %v6046
    %v6048 = vpop.f32.mrb[0].mxu0
    %v6049 = vpop.f32.mrb[0].mxu0
    %v6050 = vadd.f32 %v5672, %v6049
    %v6051 = vpop.f32.mrb[0].mxu0
    %6052 = vdwg.mxu0
    %v6053 = vadd.f32 %v5951, %v5765
    %v6054 = vadd.f32 %v5954, %v5768
    %v6055 = vadd.f32 %v5959, %v5773
    %v6056 = vadd.f32 %v5962, %v5776
    %v6057 = vadd.f32 %v5967, %v5781
    %v6058 = vadd.f32 %v5970, %v5784
    %v6059 = vadd.f32 %v5975, %v5789
    %v6060 = vadd.f32 %v5978, %v5792
    %v6061 = vadd.f32 %v5983, %v5797
    %v6062 = vadd.f32 %v5986, %v5800
    %v6063 = vadd.f32 %v5991, %v5805
    %v6064 = vadd.f32 %v5994, %v5808
    %v6065 = vadd.f32 %v5999, %v5813
    %v6066 = vadd.f32 %v6002, %v5816
    %v6067 = vadd.f32 %v6007, %v5821
    %v6068 = vadd.f32 %v6010, %v5824
    %v6069 = vadd.f32 %v6015, %v5829
    %v6070 = vadd.f32 %v6018, %v5832
    %v6071 = vadd.f32 %v6023, %v5837
    %v6072 = vadd.f32 %v6026, %v5840
    %v6073 = vadd.f32 %v6031, %v5845
    %v6074 = vadd.f32 %v6034, %v5848
    %v6075 = vadd.f32 %v6039, %v5853
    %v6076 = vadd.f32 %v6042, %v5856
    %v6077 = vadd.f32 %v6047, %v5861
    %v6078 = vadd.f32 %v6050, %v5864
    %6079 = vset.pattern.permute.xlu0 4
    %6080 = vperm.xlu0 %6079, %v72
    %v6081 = vpop.permute.xlu0 %6080
    %6083 = vset.pattern.permute.xlu0 4
    %6084 = vperm.xlu0 %6083, %v73
    %v6085 = vpop.permute.xlu0 %6084
    %6087 = vset.pattern.permute.xlu0 4
    %6088 = vperm.xlu0 %6087, %v74
    %v6089 = vpop.permute.xlu0 %6088
    %6091 = vset.pattern.permute.xlu0 4
    %6092 = vperm.xlu0 %6091, %v75
    %v6093 = vpop.permute.xlu0 %6092
    %6095 = vset.pattern.permute.xlu0 4
    %6096 = vperm.xlu0 %6095, %v76
    %v6097 = vpop.permute.xlu0 %6096
    %6099 = vset.pattern.permute.xlu0 4
    %6100 = vperm.xlu0 %6099, %v77
    %v6101 = vpop.permute.xlu0 %6100
    %6103 = vset.pattern.permute.xlu0 4
    %6104 = vperm.xlu0 %6103, %v78
    %v6105 = vpop.permute.xlu0 %6104
    %6107 = vset.pattern.permute.xlu0 4
    %6108 = vperm.xlu0 %6107, %v79
    %v6109 = vpop.permute.xlu0 %6108
    %6111 = vset.pattern.permute.xlu0 4
    %6112 = vperm.xlu0 %6111, %v80
    %v6113 = vpop.permute.xlu0 %6112
    %6115 = vset.pattern.permute.xlu0 4
    %6116 = vperm.xlu0 %6115, %v81
    %v6117 = vpop.permute.xlu0 %6116
    %6119 = vset.pattern.permute.xlu0 4
    %6120 = vperm.xlu0 %6119, %v82
    %v6121 = vpop.permute.xlu0 %6120
    %6123 = vset.pattern.permute.xlu0 4
    %6124 = vperm.xlu0 %6123, %v83
    %v6125 = vpop.permute.xlu0 %6124
    %6127 = vset.pattern.permute.xlu0 4
    %6128 = vperm.xlu0 %6127, %v84
    %v6129 = vpop.permute.xlu0 %6128
    %6131 = vset.pattern.permute.xlu0 4
    %6132 = vperm.xlu0 %6131, %v85
    %v6133 = vpop.permute.xlu0 %6132
    %6135 = vset.pattern.permute.xlu0 4
    %6136 = vperm.xlu0 %6135, %v86
    %v6137 = vpop.permute.xlu0 %6136
    %6139 = vset.pattern.permute.xlu0 4
    %6140 = vperm.xlu0 %6139, %v87
    %v6141 = vpop.permute.xlu0 %6140
    %6143 = vset.pattern.permute.xlu0 4
    %6144 = vperm.xlu0 %6143, %v88
    %v6145 = vpop.permute.xlu0 %6144
    %6147 = vset.pattern.permute.xlu0 4
    %6148 = vperm.xlu0 %6147, %v89
    %v6149 = vpop.permute.xlu0 %6148
    %6151 = vset.pattern.permute.xlu0 4
    %6152 = vperm.xlu0 %6151, %v90
    %v6153 = vpop.permute.xlu0 %6152
    %6155 = vset.pattern.permute.xlu0 4
    %6156 = vperm.xlu0 %6155, %v91
    %v6157 = vpop.permute.xlu0 %6156
    %6159 = vset.pattern.permute.xlu0 4
    %6160 = vperm.xlu0 %6159, %v92
    %v6161 = vpop.permute.xlu0 %6160
    %6163 = vset.pattern.permute.xlu0 4
    %6164 = vperm.xlu0 %6163, %v93
    %v6165 = vpop.permute.xlu0 %6164
    %6167 = vset.pattern.permute.xlu0 4
    %6168 = vperm.xlu0 %6167, %v94
    %v6169 = vpop.permute.xlu0 %6168
    %6171 = vset.pattern.permute.xlu0 4
    %6172 = vperm.xlu0 %6171, %v95
    %v6173 = vpop.permute.xlu0 %6172
    %6175 = vset.pattern.permute.xlu0 4
    %6176 = vperm.xlu0 %6175, %v96
    %v6177 = vpop.permute.xlu0 %6176
    %6179 = vset.pattern.permute.xlu0 4
    %6180 = vperm.xlu0 %6179, %v97
    %v6181 = vpop.permute.xlu0 %6180
    %v6183 = vlaneseq
    %v6184 = vshrl.u32 %v6183, 7
    %v6185 = vsub.s32 1, %v6184
    %v6186 = vrot.slane %v98, %v6185
    %v6187 = vmul.f32 %v6081, %v6186
    %v6188 = vmul.f32 %v6085, %v6186
    %v6189 = vmul.f32 %v6089, %v6186
    %v6190 = vmul.f32 %v6093, %v6186
    %v6191 = vmul.f32 %v6097, %v6186
    %v6192 = vmul.f32 %v6101, %v6186
    %v6193 = vmul.f32 %v6105, %v6186
    %v6194 = vmul.f32 %v6109, %v6186
    %v6195 = vmul.f32 %v6113, %v6186
    %v6196 = vmul.f32 %v6117, %v6186
    %v6197 = vmul.f32 %v6121, %v6186
    %v6198 = vmul.f32 %v6125, %v6186
    %v6199 = vmul.f32 %v6129, %v6186
    %v6200 = vmul.f32 %v6133, %v6186
    %v6201 = vmul.f32 %v6137, %v6186
    %v6202 = vmul.f32 %v6141, %v6186
    %v6203 = vmul.f32 %v6145, %v6186
    %v6204 = vmul.f32 %v6149, %v6186
    %v6205 = vmul.f32 %v6153, %v6186
    %v6206 = vmul.f32 %v6157, %v6186
    %v6207 = vmul.f32 %v6161, %v6186
    %v6208 = vmul.f32 %v6165, %v6186
    %v6209 = vmul.f32 %v6169, %v6186
    %v6210 = vmul.f32 %v6173, %v6186
    %v6211 = vmul.f32 %v6177, %v6186
    %v6212 = vmul.f32 %v6181, %v6186
    %v6213 = vadd.f32 %v6053, %v6187
    %v6214 = vadd.f32 %v6054, %v6188
    %v6215 = vadd.f32 %v6055, %v6189
    %v6216 = vadd.f32 %v6056, %v6190
    %v6217 = vadd.f32 %v6057, %v6191
    %v6218 = vadd.f32 %v6058, %v6192
    %v6219 = vadd.f32 %v6059, %v6193
    %v6220 = vadd.f32 %v6060, %v6194
    %v6221 = vadd.f32 %v6061, %v6195
    %v6222 = vadd.f32 %v6062, %v6196
    %v6223 = vadd.f32 %v6063, %v6197
    %v6224 = vadd.f32 %v6064, %v6198
    %v6225 = vadd.f32 %v6065, %v6199
    %v6226 = vadd.f32 %v6066, %v6200
    %v6227 = vadd.f32 %v6067, %v6201
    %v6228 = vadd.f32 %v6068, %v6202
    %v6229 = vadd.f32 %v6069, %v6203
    %v6230 = vadd.f32 %v6070, %v6204
    %v6231 = vadd.f32 %v6071, %v6205
    %v6232 = vadd.f32 %v6072, %v6206
    %v6233 = vadd.f32 %v6073, %v6207
    %v6234 = vadd.f32 %v6074, %v6208
    %v6235 = vadd.f32 %v6075, %v6209
    %v6236 = vadd.f32 %v6076, %v6210
    %v6237 = vadd.f32 %v6077, %v6211
    %v6238 = vadd.f32 %v6078, %v6212
    %6239 = vset.pattern.permute.xlu0 5
    %6240 = vperm.xlu0 %6239, %v72
    %v6241 = vpop.permute.xlu0 %6240
    %6243 = vset.pattern.permute.xlu0 5
    %6244 = vperm.xlu0 %6243, %v73
    %v6245 = vpop.permute.xlu0 %6244
    %6247 = vset.pattern.permute.xlu0 5
    %6248 = vperm.xlu0 %6247, %v74
    %v6249 = vpop.permute.xlu0 %6248
    %6251 = vset.pattern.permute.xlu0 5
    %6252 = vperm.xlu0 %6251, %v75
    %v6253 = vpop.permute.xlu0 %6252
    %6255 = vset.pattern.permute.xlu0 5
    %6256 = vperm.xlu0 %6255, %v76
    %v6257 = vpop.permute.xlu0 %6256
    %6259 = vset.pattern.permute.xlu0 5
    %6260 = vperm.xlu0 %6259, %v77
    %v6261 = vpop.permute.xlu0 %6260
    %6263 = vset.pattern.permute.xlu0 5
    %6264 = vperm.xlu0 %6263, %v78
    %v6265 = vpop.permute.xlu0 %6264
    %6267 = vset.pattern.permute.xlu0 5
    %6268 = vperm.xlu0 %6267, %v79
    %v6269 = vpop.permute.xlu0 %6268
    %6271 = vset.pattern.permute.xlu0 5
    %6272 = vperm.xlu0 %6271, %v80
    %v6273 = vpop.permute.xlu0 %6272
    %6275 = vset.pattern.permute.xlu0 5
    %6276 = vperm.xlu0 %6275, %v81
    %v6277 = vpop.permute.xlu0 %6276
    %6279 = vset.pattern.permute.xlu0 5
    %6280 = vperm.xlu0 %6279, %v82
    %v6281 = vpop.permute.xlu0 %6280
    %6283 = vset.pattern.permute.xlu0 5
    %6284 = vperm.xlu0 %6283, %v83
    %v6285 = vpop.permute.xlu0 %6284
    %6287 = vset.pattern.permute.xlu0 5
    %6288 = vperm.xlu0 %6287, %v84
    %v6289 = vpop.permute.xlu0 %6288
    %6291 = vset.pattern.permute.xlu0 5
    %6292 = vperm.xlu0 %6291, %v85
    %v6293 = vpop.permute.xlu0 %6292
    %6295 = vset.pattern.permute.xlu0 5
    %6296 = vperm.xlu0 %6295, %v86
    %v6297 = vpop.permute.xlu0 %6296
    %6299 = vset.pattern.permute.xlu0 5
    %6300 = vperm.xlu0 %6299, %v87
    %v6301 = vpop.permute.xlu0 %6300
    %6303 = vset.pattern.permute.xlu0 5
    %6304 = vperm.xlu0 %6303, %v88
    %v6305 = vpop.permute.xlu0 %6304
    %6307 = vset.pattern.permute.xlu0 5
    %6308 = vperm.xlu0 %6307, %v89
    %v6309 = vpop.permute.xlu0 %6308
    %6311 = vset.pattern.permute.xlu0 5
    %6312 = vperm.xlu0 %6311, %v90
    %v6313 = vpop.permute.xlu0 %6312
    %6315 = vset.pattern.permute.xlu0 5
    %6316 = vperm.xlu0 %6315, %v91
    %v6317 = vpop.permute.xlu0 %6316
    %6319 = vset.pattern.permute.xlu0 5
    %6320 = vperm.xlu0 %6319, %v92
    %v6321 = vpop.permute.xlu0 %6320
    %6323 = vset.pattern.permute.xlu0 5
    %6324 = vperm.xlu0 %6323, %v93
    %v6325 = vpop.permute.xlu0 %6324
    %6327 = vset.pattern.permute.xlu0 5
    %6328 = vperm.xlu0 %6327, %v94
    %v6329 = vpop.permute.xlu0 %6328
    %6331 = vset.pattern.permute.xlu0 5
    %6332 = vperm.xlu0 %6331, %v95
    %v6333 = vpop.permute.xlu0 %6332
    %6335 = vset.pattern.permute.xlu0 5
    %6336 = vperm.xlu0 %6335, %v96
    %v6337 = vpop.permute.xlu0 %6336
    %6339 = vset.pattern.permute.xlu0 5
    %6340 = vperm.xlu0 %6339, %v97
    %v6341 = vpop.permute.xlu0 %6340
    %v6343 = vlaneseq
    %v6344 = vshrl.u32 %v6343, 7
    %v6345 = vsub.s32 2, %v6344
    %v6346 = vrot.slane %v98, %v6345
    %v6347 = vmul.f32 %v6241, %v6346
    %v6348 = vmul.f32 %v6245, %v6346
    %v6349 = vmul.f32 %v6249, %v6346
    %v6350 = vmul.f32 %v6253, %v6346
    %v6351 = vmul.f32 %v6257, %v6346
    %v6352 = vmul.f32 %v6261, %v6346
    %v6353 = vmul.f32 %v6265, %v6346
    %v6354 = vmul.f32 %v6269, %v6346
    %v6355 = vmul.f32 %v6273, %v6346
    %v6356 = vmul.f32 %v6277, %v6346
    %v6357 = vmul.f32 %v6281, %v6346
    %v6358 = vmul.f32 %v6285, %v6346
    %v6359 = vmul.f32 %v6289, %v6346
    %v6360 = vmul.f32 %v6293, %v6346
    %v6361 = vmul.f32 %v6297, %v6346
    %v6362 = vmul.f32 %v6301, %v6346
    %v6363 = vmul.f32 %v6305, %v6346
    %v6364 = vmul.f32 %v6309, %v6346
    %v6365 = vmul.f32 %v6313, %v6346
    %v6366 = vmul.f32 %v6317, %v6346
    %v6367 = vmul.f32 %v6321, %v6346
    %v6368 = vmul.f32 %v6325, %v6346
    %v6369 = vmul.f32 %v6329, %v6346
    %v6370 = vmul.f32 %v6333, %v6346
    %v6371 = vmul.f32 %v6337, %v6346
    %v6372 = vmul.f32 %v6341, %v6346
    %v6373 = vadd.f32 %v6213, %v6347
    %v6374 = vadd.f32 %v6214, %v6348
    %v6375 = vadd.f32 %v6215, %v6349
    %v6376 = vadd.f32 %v6216, %v6350
    %v6377 = vadd.f32 %v6217, %v6351
    %v6378 = vadd.f32 %v6218, %v6352
    %v6379 = vadd.f32 %v6219, %v6353
    %v6380 = vadd.f32 %v6220, %v6354
    %v6381 = vadd.f32 %v6221, %v6355
    %v6382 = vadd.f32 %v6222, %v6356
    %v6383 = vadd.f32 %v6223, %v6357
    %v6384 = vadd.f32 %v6224, %v6358
    %v6385 = vadd.f32 %v6225, %v6359
    %v6386 = vadd.f32 %v6226, %v6360
    %v6387 = vadd.f32 %v6227, %v6361
    %v6388 = vadd.f32 %v6228, %v6362
    %v6389 = vadd.f32 %v6229, %v6363
    %v6390 = vadd.f32 %v6230, %v6364
    %v6391 = vadd.f32 %v6231, %v6365
    %v6392 = vadd.f32 %v6232, %v6366
    %v6393 = vadd.f32 %v6233, %v6367
    %v6394 = vadd.f32 %v6234, %v6368
    %v6395 = vadd.f32 %v6235, %v6369
    %v6396 = vadd.f32 %v6236, %v6370
    %v6397 = vadd.f32 %v6237, %v6371
    %v6398 = vadd.f32 %v6238, %v6372
    %v6399 = vlaneseq
    %v6400 = vshrl.u32 %v6399, 7
    %v6401 = vsub.s32 3, %v6400
    %v6402 = vrot.slane %v98, %v6401
    %v6403 = vadd.f32 %v6373, %v6402
    %v6404 = vadd.f32 %v6374, %v6402
    %v6405 = vadd.f32 %v6375, %v6402
    %v6406 = vadd.f32 %v6376, %v6402
    %v6407 = vadd.f32 %v6377, %v6402
    %v6408 = vadd.f32 %v6378, %v6402
    %v6409 = vadd.f32 %v6379, %v6402
    %v6410 = vadd.f32 %v6380, %v6402
    %v6411 = vadd.f32 %v6381, %v6402
    %v6412 = vadd.f32 %v6382, %v6402
    %v6413 = vadd.f32 %v6383, %v6402
    %v6414 = vadd.f32 %v6384, %v6402
    %v6415 = vadd.f32 %v6385, %v6402
    %v6416 = vadd.f32 %v6386, %v6402
    %v6417 = vadd.f32 %v6387, %v6402
    %v6418 = vadd.f32 %v6388, %v6402
    %v6419 = vadd.f32 %v6389, %v6402
    %v6420 = vadd.f32 %v6390, %v6402
    %v6421 = vadd.f32 %v6391, %v6402
    %v6422 = vadd.f32 %v6392, %v6402
    %v6423 = vadd.f32 %v6393, %v6402
    %v6424 = vadd.f32 %v6394, %v6402
    %v6425 = vadd.f32 %v6395, %v6402
    %v6426 = vadd.f32 %v6396, %v6402
    %v6427 = vadd.f32 %v6397, %v6402
    %v6428 = vadd.f32 %v6398, %v6402
    %v6429 = vmax.f32 %v6403, 0.0
    %v6430 = vmax.f32 %v6404, 0.0
    %v6431 = vmax.f32 %v6405, 0.0
    %v6432 = vmax.f32 %v6406, 0.0
    %v6433 = vmax.f32 %v6407, 0.0
    %v6434 = vmax.f32 %v6408, 0.0
    %v6435 = vmax.f32 %v6409, 0.0
    %v6436 = vmax.f32 %v6410, 0.0
    %v6437 = vmax.f32 %v6411, 0.0
    %v6438 = vmax.f32 %v6412, 0.0
    %v6439 = vmax.f32 %v6413, 0.0
    %v6440 = vmax.f32 %v6414, 0.0
    %v6441 = vmax.f32 %v6415, 0.0
    %v6442 = vmax.f32 %v6416, 0.0
    %v6443 = vmax.f32 %v6417, 0.0
    %v6444 = vmax.f32 %v6418, 0.0
    %v6445 = vmax.f32 %v6419, 0.0
    %v6446 = vmax.f32 %v6420, 0.0
    %v6447 = vmax.f32 %v6421, 0.0
    %v6448 = vmax.f32 %v6422, 0.0
    %v6449 = vmax.f32 %v6423, 0.0
    %v6450 = vmax.f32 %v6424, 0.0
    %v6451 = vmax.f32 %v6425, 0.0
    %v6452 = vmax.f32 %v6426, 0.0
    %v6453 = vmax.f32 %v6427, 0.0
    %v6454 = vmax.f32 %v6428, 0.0
    %v6455 = vpack.c.bf16 %v6430, %v6429
    %v6456 = vpack.c.bf16 %v6432, %v6431
    %v6457 = vpack.c.bf16 %v6434, %v6433
    %v6458 = vpack.c.bf16 %v6436, %v6435
    %v6459 = vpack.c.bf16 %v6438, %v6437
    %v6460 = vpack.c.bf16 %v6440, %v6439
    %v6461 = vpack.c.bf16 %v6442, %v6441
    %v6462 = vpack.c.bf16 %v6444, %v6443
    %v6463 = vpack.c.bf16 %v6446, %v6445
    %v6464 = vpack.c.bf16 %v6448, %v6447
    %v6465 = vpack.c.bf16 %v6450, %v6449
    %v6466 = vpack.c.bf16 %v6452, %v6451
    %v6467 = vpack.c.bf16 %v6454, %v6453
    %v6468 = vld [vmem:[%s14] sm:$0xf]
    %v6469 = vld [vmem:[%s14 + $0x4] sm:$0xf]
    %v6470 = vld [vmem:[%s14 + $0x8] sm:$0xf]
    %v6471 = vld [vmem:[%s14 + $0xc] sm:$0xf]
    %v6472 = vld [vmem:[%s14 + $0x10] sm:$0xf]
    %v6473 = vld [vmem:[%s14 + $0x14] sm:$0xf]
    %v6474 = vld [vmem:[%s14 + $0x18] sm:$0xf]
    %v6475 = vld [vmem:[%s14 + $0x1c] sm:$0xf]
    %v6476 = vld [vmem:[%s14 + $0x20] sm:$0xf]
    %v6477 = vld [vmem:[%s14 + $0x24] sm:$0xf]
    %v6478 = vld [vmem:[%s14 + $0x28] sm:$0xf]
    %v6479 = vld [vmem:[%s14 + $0x2c] sm:$0xf]
    %v6480 = vld [vmem:[%s14 + $0x30] sm:$0xf]
    %v6481 = vld [vmem:[%s14 + $0x34] sm:$0xf]
    %v6482 = vld [vmem:[%s14 + $0x38] sm:$0xf]
    %v6483 = vld [vmem:[%s14 + $0x3c] sm:$0xf]
    %v6484 = vlaneseq
    %v6485 = vshrl.u32 %v6484, 7
    %v6486 = vsub.s32 4, %v6485
    %v6487 = vrot.slane %v98, %v6486
    %v6504 = vunpack.c.l.b16 %v6468
    %v6505 = vunpack.c.l.b16 %v6469
    %v6506 = vunpack.c.l.b16 %v6470
    %v6507 = vunpack.c.l.b16 %v6471
    %v6508 = vunpack.c.l.b16 %v6472
    %v6509 = vunpack.c.l.b16 %v6473
    %v6510 = vunpack.c.l.b16 %v6474
    %v6511 = vunpack.c.l.b16 %v6475
    %v6512 = vunpack.c.l.b16 %v6476
    %v6513 = vunpack.c.l.b16 %v6477
    %v6514 = vunpack.c.l.b16 %v6478
    %v6515 = vunpack.c.l.b16 %v6479
    %v6516 = vunpack.c.l.b16 %v6480
    %v6517 = vunpack.c.l.b16 %v6481
    %v6518 = vunpack.c.l.b16 %v6482
    %v6519 = vunpack.c.l.b16 %v6483
    %v6520 = vpack.c.b16 %v6505, %v6504
    %v6521 = vpack.c.b16 %v6507, %v6506
    %v6522 = vpack.c.b16 %v6509, %v6508
    %v6523 = vpack.c.b16 %v6511, %v6510
    %v6524 = vpack.c.b16 %v6513, %v6512
    %v6525 = vpack.c.b16 %v6515, %v6514
    %v6526 = vpack.c.b16 %v6517, %v6516
    %v6527 = vpack.c.b16 %v6519, %v6518
    %6536 = vmatprep.subr.bf16.mxu0 0
    %6537 = vmatpush1.bf16.msra.mxu0 %v6520
    %6538 = vmatprep.subr.bf16.mxu0 0
    %6539 = vmatpush1.bf16.msra.mxu0 %v6521
    %6540 = vmatprep.subr.bf16.mxu0 0
    %6541 = vmatpush1.bf16.msra.mxu0 %v6522
    %6542 = vmatprep.subr.bf16.mxu0 0
    %6543 = vmatpush1.bf16.msra.mxu0 %v6523
    %6544 = vmatprep.subr.bf16.mxu0 0
    %6545 = vmatpush1.bf16.msra.mxu0 %v6524
    %6546 = vmatprep.subr.bf16.mxu0 0
    %6547 = vmatpush1.bf16.msra.mxu0 %v6525
    %6548 = vmatprep.subr.bf16.mxu0 0
    %6549 = vmatpush1.bf16.msra.mxu0 %v6526
    %6550 = vmatprep.subr.bf16.mxu0 0
    %6551 = vmatpush1.bf16.msra.mxu0 %v6527
    %6552 = vmatprep.subr.bf16.mxu0 0
    %6553 = vmatpush1.bf16.msra.mxu0 0
    %6554 = vmatprep.subr.bf16.mxu0 0
    %6555 = vmatpush1.bf16.msra.mxu0 0
    %6556 = vmatprep.subr.bf16.mxu0 0
    %6557 = vmatpush1.bf16.msra.mxu0 0
    %6558 = vmatprep.subr.bf16.mxu0 0
    %6559 = vmatpush1.bf16.msra.mxu0 0
    %6560 = vmatprep.subr.bf16.mxu0 0
    %6561 = vmatpush1.bf16.msra.mxu0 0
    %6562 = vmatprep.subr.bf16.mxu0 0
    %6563 = vmatpush1.bf16.msra.mxu0 0
    %6564 = vmatprep.subr.bf16.mxu0 0
    %6565 = vmatpush1.bf16.msra.mxu0 0
    %6566 = vmatprep.subr.bf16.mxu0 0
    %6567 = vmatpush1.bf16.msra.mxu0 0
    %6568 = vmatprep.mubr.bf16.mxu0 0
    %6569 = vmatmul.mubr.bf16.gmra.mrb[0].mxu0 %v6455
    %v6570 = vpop.f32.mrb[0].mxu0
    %v6571 = vadd.f32 %v6487, %v6570
    %v6572 = vpop.f32.mrb[0].mxu0
    %v6573 = vpop.f32.mrb[0].mxu0
    %v6574 = vadd.f32 %v6487, %v6573
    %v6575 = vpop.f32.mrb[0].mxu0
    %6576 = vmatprep.mubr.bf16.mxu0 0
    %6577 = vmatmul.mubr.bf16.gmra.mrb[0].mxu0 %v6456
    %v6578 = vpop.f32.mrb[0].mxu0
    %v6579 = vadd.f32 %v6487, %v6578
    %v6580 = vpop.f32.mrb[0].mxu0
    %v6581 = vpop.f32.mrb[0].mxu0
    %v6582 = vadd.f32 %v6487, %v6581
    %v6583 = vpop.f32.mrb[0].mxu0
    %6584 = vmatprep.mubr.bf16.mxu0 0
    %6585 = vmatmul.mubr.bf16.gmra.mrb[0].mxu0 %v6457
    %v6586 = vpop.f32.mrb[0].mxu0
    %v6587 = vadd.f32 %v6487, %v6586
    %v6588 = vpop.f32.mrb[0].mxu0
    %v6589 = vpop.f32.mrb[0].mxu0
    %v6590 = vadd.f32 %v6487, %v6589
    %v6591 = vpop.f32.mrb[0].mxu0
    %6592 = vmatprep.mubr.bf16.mxu0 0
    %6593 = vmatmul.mubr.bf16.gmra.mrb[0].mxu0 %v6458
    %v6594 = vpop.f32.mrb[0].mxu0
    %v6595 = vadd.f32 %v6487, %v6594
    %v6596 = vpop.f32.mrb[0].mxu0
    %v6597 = vpop.f32.mrb[0].mxu0
    %v6598 = vadd.f32 %v6487, %v6597
    %v6599 = vpop.f32.mrb[0].mxu0
    %6600 = vmatprep.mubr.bf16.mxu0 0
    %6601 = vmatmul.mubr.bf16.gmra.mrb[0].mxu0 %v6459
    %v6602 = vpop.f32.mrb[0].mxu0
    %v6603 = vadd.f32 %v6487, %v6602
    %v6604 = vpop.f32.mrb[0].mxu0
    %v6605 = vpop.f32.mrb[0].mxu0
    %v6606 = vadd.f32 %v6487, %v6605
    %v6607 = vpop.f32.mrb[0].mxu0
    %6608 = vmatprep.mubr.bf16.mxu0 0
    %6609 = vmatmul.mubr.bf16.gmra.mrb[0].mxu0 %v6460
    %v6610 = vpop.f32.mrb[0].mxu0
    %v6611 = vadd.f32 %v6487, %v6610
    %v6612 = vpop.f32.mrb[0].mxu0
    %v6613 = vpop.f32.mrb[0].mxu0
    %v6614 = vadd.f32 %v6487, %v6613
    %v6615 = vpop.f32.mrb[0].mxu0
    %6616 = vmatprep.mubr.bf16.mxu0 0
    %6617 = vmatmul.mubr.bf16.gmra.mrb[0].mxu0 %v6461
    %v6618 = vpop.f32.mrb[0].mxu0
    %v6619 = vadd.f32 %v6487, %v6618
    %v6620 = vpop.f32.mrb[0].mxu0
    %v6621 = vpop.f32.mrb[0].mxu0
    %v6622 = vadd.f32 %v6487, %v6621
    %v6623 = vpop.f32.mrb[0].mxu0
    %6624 = vmatprep.mubr.bf16.mxu0 0
    %6625 = vmatmul.mubr.bf16.gmra.mrb[0].mxu0 %v6462
    %v6626 = vpop.f32.mrb[0].mxu0
    %v6627 = vadd.f32 %v6487, %v6626
    %v6628 = vpop.f32.mrb[0].mxu0
    %v6629 = vpop.f32.mrb[0].mxu0
    %v6630 = vadd.f32 %v6487, %v6629
    %v6631 = vpop.f32.mrb[0].mxu0
    %6632 = vmatprep.mubr.bf16.mxu0 0
    %6633 = vmatmul.mubr.bf16.gmra.mrb[0].mxu0 %v6463
    %v6634 = vpop.f32.mrb[0].mxu0
    %v6635 = vadd.f32 %v6487, %v6634
    %v6636 = vpop.f32.mrb[0].mxu0
    %v6637 = vpop.f32.mrb[0].mxu0
    %v6638 = vadd.f32 %v6487, %v6637
    %v6639 = vpop.f32.mrb[0].mxu0
    %6640 = vmatprep.mubr.bf16.mxu0 0
    %6641 = vmatmul.mubr.bf16.gmra.mrb[0].mxu0 %v6464
    %v6642 = vpop.f32.mrb[0].mxu0
    %v6643 = vadd.f32 %v6487, %v6642
    %v6644 = vpop.f32.mrb[0].mxu0
    %v6645 = vpop.f32.mrb[0].mxu0
    %v6646 = vadd.f32 %v6487, %v6645
    %v6647 = vpop.f32.mrb[0].mxu0
    %6648 = vmatprep.mubr.bf16.mxu0 0
    %6649 = vmatmul.mubr.bf16.gmra.mrb[0].mxu0 %v6465
    %v6650 = vpop.f32.mrb[0].mxu0
    %v6651 = vadd.f32 %v6487, %v6650
    %v6652 = vpop.f32.mrb[0].mxu0
    %v6653 = vpop.f32.mrb[0].mxu0
    %v6654 = vadd.f32 %v6487, %v6653
    %v6655 = vpop.f32.mrb[0].mxu0
    %6656 = vmatprep.mubr.bf16.mxu0 0
    %6657 = vmatmul.mubr.bf16.gmra.mrb[0].mxu0 %v6466
    %v6658 = vpop.f32.mrb[0].mxu0
    %v6659 = vadd.f32 %v6487, %v6658
    %v6660 = vpop.f32.mrb[0].mxu0
    %v6661 = vpop.f32.mrb[0].mxu0
    %v6662 = vadd.f32 %v6487, %v6661
    %v6663 = vpop.f32.mrb[0].mxu0
    %6664 = vmatprep.mubr.bf16.mxu0 0
    %6665 = vmatmul.mubr.bf16.gmra.mrb[0].mxu0 %v6467
    %v6666 = vpop.f32.mrb[0].mxu0
    %v6667 = vadd.f32 %v6487, %v6666
    %v6668 = vpop.f32.mrb[0].mxu0
    %v6669 = vpop.f32.mrb[0].mxu0
    %v6670 = vadd.f32 %v6487, %v6669
    %v6671 = vpop.f32.mrb[0].mxu0
    %6672 = vdwg.mxu0
    %v6673 = vmax.f32 %v6571, 0.0
    %v6674 = vmax.f32 %v6574, 0.0
    %v6675 = vmax.f32 %v6579, 0.0
    %v6676 = vmax.f32 %v6582, 0.0
    %v6677 = vmax.f32 %v6587, 0.0
    %v6678 = vmax.f32 %v6590, 0.0
    %v6679 = vmax.f32 %v6595, 0.0
    %v6680 = vmax.f32 %v6598, 0.0
    %v6681 = vmax.f32 %v6603, 0.0
    %v6682 = vmax.f32 %v6606, 0.0
    %v6683 = vmax.f32 %v6611, 0.0
    %v6684 = vmax.f32 %v6614, 0.0
    %v6685 = vmax.f32 %v6619, 0.0
    %v6686 = vmax.f32 %v6622, 0.0
    %v6687 = vmax.f32 %v6627, 0.0
    %v6688 = vmax.f32 %v6630, 0.0
    %v6689 = vmax.f32 %v6635, 0.0
    %v6690 = vmax.f32 %v6638, 0.0
    %v6691 = vmax.f32 %v6643, 0.0
    %v6692 = vmax.f32 %v6646, 0.0
    %v6693 = vmax.f32 %v6651, 0.0
    %v6694 = vmax.f32 %v6654, 0.0
    %v6695 = vmax.f32 %v6659, 0.0
    %v6696 = vmax.f32 %v6662, 0.0
    %v6697 = vmax.f32 %v6667, 0.0
    %v6698 = vmax.f32 %v6670, 0.0
    %v6699 = vpack.c.bf16 %v6674, %v6673
    %v6700 = vpack.c.bf16 %v6676, %v6675
    %v6701 = vpack.c.bf16 %v6678, %v6677
    %v6702 = vpack.c.bf16 %v6680, %v6679
    %v6703 = vpack.c.bf16 %v6682, %v6681
    %v6704 = vpack.c.bf16 %v6684, %v6683
    %v6705 = vpack.c.bf16 %v6686, %v6685
    %v6706 = vpack.c.bf16 %v6688, %v6687
    %v6707 = vpack.c.bf16 %v6690, %v6689
    %v6708 = vpack.c.bf16 %v6692, %v6691
    %v6709 = vpack.c.bf16 %v6694, %v6693
    %v6710 = vpack.c.bf16 %v6696, %v6695
    %v6711 = vpack.c.bf16 %v6698, %v6697
    %v6712 = vld [vmem:[%s15] sm:$0xf]
    %v6713 = vld [vmem:[%s15 + $0x4] sm:$0xf]
    %v6714 = vld [vmem:[%s15 + $0x8] sm:$0xf]
    %v6715 = vld [vmem:[%s15 + $0xc] sm:$0xf]
    %v6716 = vld [vmem:[%s15 + $0x10] sm:$0xf]
    %v6717 = vld [vmem:[%s15 + $0x14] sm:$0xf]
    %v6718 = vld [vmem:[%s15 + $0x18] sm:$0xf]
    %v6719 = vld [vmem:[%s15 + $0x1c] sm:$0xf]
    %v6720 = vld [vmem:[%s15 + $0x20] sm:$0xf]
    %v6721 = vld [vmem:[%s15 + $0x24] sm:$0xf]
    %v6722 = vld [vmem:[%s15 + $0x28] sm:$0xf]
    %v6723 = vld [vmem:[%s15 + $0x2c] sm:$0xf]
    %v6724 = vld [vmem:[%s15 + $0x30] sm:$0xf]
    %v6725 = vld [vmem:[%s15 + $0x34] sm:$0xf]
    %v6726 = vld [vmem:[%s15 + $0x38] sm:$0xf]
    %v6727 = vld [vmem:[%s15 + $0x3c] sm:$0xf]
    %v6728 = vlaneseq
    %v6729 = vshrl.u32 %v6728, 7
    %v6730 = vsub.s32 1, %v6729
    %v6731 = vrot.slane %v99, %v6730
    %v6748 = vunpack.c.l.b16 %v6712
    %v6749 = vunpack.c.l.b16 %v6713
    %v6750 = vunpack.c.l.b16 %v6714
    %v6751 = vunpack.c.l.b16 %v6715
    %v6752 = vunpack.c.l.b16 %v6716
    %v6753 = vunpack.c.l.b16 %v6717
    %v6754 = vunpack.c.l.b16 %v6718
    %v6755 = vunpack.c.l.b16 %v6719
    %v6756 = vunpack.c.l.b16 %v6720
    %v6757 = vunpack.c.l.b16 %v6721
    %v6758 = vunpack.c.l.b16 %v6722
    %v6759 = vunpack.c.l.b16 %v6723
    %v6760 = vunpack.c.l.b16 %v6724
    %v6761 = vunpack.c.l.b16 %v6725
    %v6762 = vunpack.c.l.b16 %v6726
    %v6763 = vunpack.c.l.b16 %v6727
    %v6764 = vpack.c.b16 %v6749, %v6748
    %v6765 = vpack.c.b16 %v6751, %v6750
    %v6766 = vpack.c.b16 %v6753, %v6752
    %v6767 = vpack.c.b16 %v6755, %v6754
    %v6768 = vpack.c.b16 %v6757, %v6756
    %v6769 = vpack.c.b16 %v6759, %v6758
    %v6770 = vpack.c.b16 %v6761, %v6760
    %v6771 = vpack.c.b16 %v6763, %v6762
    %6780 = vmatprep.subr.bf16.mxu0 0
    %6781 = vmatpush1.bf16.msra.mxu0 %v6764
    %6782 = vmatprep.subr.bf16.mxu0 0
    %6783 = vmatpush1.bf16.msra.mxu0 %v6765
    %6784 = vmatprep.subr.bf16.mxu0 0
    %6785 = vmatpush1.bf16.msra.mxu0 %v6766
    %6786 = vmatprep.subr.bf16.mxu0 0
    %6787 = vmatpush1.bf16.msra.mxu0 %v6767
    %6788 = vmatprep.subr.bf16.mxu0 0
    %6789 = vmatpush1.bf16.msra.mxu0 %v6768
    %6790 = vmatprep.subr.bf16.mxu0 0
    %6791 = vmatpush1.bf16.msra.mxu0 %v6769
    %6792 = vmatprep.subr.bf16.mxu0 0
    %6793 = vmatpush1.bf16.msra.mxu0 %v6770
    %6794 = vmatprep.subr.bf16.mxu0 0
    %6795 = vmatpush1.bf16.msra.mxu0 %v6771
    %6796 = vmatprep.subr.bf16.mxu0 0
    %6797 = vmatpush1.bf16.msra.mxu0 0
    %6798 = vmatprep.subr.bf16.mxu0 0
    %6799 = vmatpush1.bf16.msra.mxu0 0
    %6800 = vmatprep.subr.bf16.mxu0 0
    %6801 = vmatpush1.bf16.msra.mxu0 0
    %6802 = vmatprep.subr.bf16.mxu0 0
    %6803 = vmatpush1.bf16.msra.mxu0 0
    %6804 = vmatprep.subr.bf16.mxu0 0
    %6805 = vmatpush1.bf16.msra.mxu0 0
    %6806 = vmatprep.subr.bf16.mxu0 0
    %6807 = vmatpush1.bf16.msra.mxu0 0
    %6808 = vmatprep.subr.bf16.mxu0 0
    %6809 = vmatpush1.bf16.msra.mxu0 0
    %6810 = vmatprep.subr.bf16.mxu0 0
    %6811 = vmatpush1.bf16.msra.mxu0 0
    %6812 = vmatprep.mubr.bf16.mxu0 0
    %6813 = vmatmul.mubr.bf16.gmra.mrb[0].mxu0 %v6699
    %v6814 = vpop.f32.mrb[0].mxu0
    %v6815 = vadd.f32 %v6731, %v6814
    %v6816 = vpop.f32.mrb[0].mxu0
    %v6817 = vpop.f32.mrb[0].mxu0
    %v6818 = vadd.f32 %v6731, %v6817
    %v6819 = vpop.f32.mrb[0].mxu0
    %6820 = vmatprep.mubr.bf16.mxu0 0
    %6821 = vmatmul.mubr.bf16.gmra.mrb[0].mxu0 %v6700
    %v6822 = vpop.f32.mrb[0].mxu0
    %v6823 = vadd.f32 %v6731, %v6822
    %v6824 = vpop.f32.mrb[0].mxu0
    %v6825 = vpop.f32.mrb[0].mxu0
    %v6826 = vadd.f32 %v6731, %v6825
    %v6827 = vpop.f32.mrb[0].mxu0
    %6828 = vmatprep.mubr.bf16.mxu0 0
    %6829 = vmatmul.mubr.bf16.gmra.mrb[0].mxu0 %v6701
    %v6830 = vpop.f32.mrb[0].mxu0
    %v6831 = vadd.f32 %v6731, %v6830
    %v6832 = vpop.f32.mrb[0].mxu0
    %v6833 = vpop.f32.mrb[0].mxu0
    %v6834 = vadd.f32 %v6731, %v6833
    %v6835 = vpop.f32.mrb[0].mxu0
    %6836 = vmatprep.mubr.bf16.mxu0 0
    %6837 = vmatmul.mubr.bf16.gmra.mrb[0].mxu0 %v6702
    %v6838 = vpop.f32.mrb[0].mxu0
    %v6839 = vadd.f32 %v6731, %v6838
    %v6840 = vpop.f32.mrb[0].mxu0
    %v6841 = vpop.f32.mrb[0].mxu0
    %v6842 = vadd.f32 %v6731, %v6841
    %v6843 = vpop.f32.mrb[0].mxu0
    %6844 = vmatprep.mubr.bf16.mxu0 0
    %6845 = vmatmul.mubr.bf16.gmra.mrb[0].mxu0 %v6703
    %v6846 = vpop.f32.mrb[0].mxu0
    %v6847 = vadd.f32 %v6731, %v6846
    %v6848 = vpop.f32.mrb[0].mxu0
    %v6849 = vpop.f32.mrb[0].mxu0
    %v6850 = vadd.f32 %v6731, %v6849
    %v6851 = vpop.f32.mrb[0].mxu0
    %6852 = vmatprep.mubr.bf16.mxu0 0
    %6853 = vmatmul.mubr.bf16.gmra.mrb[0].mxu0 %v6704
    %v6854 = vpop.f32.mrb[0].mxu0
    %v6855 = vadd.f32 %v6731, %v6854
    %v6856 = vpop.f32.mrb[0].mxu0
    %v6857 = vpop.f32.mrb[0].mxu0
    %v6858 = vadd.f32 %v6731, %v6857
    %v6859 = vpop.f32.mrb[0].mxu0
    %6860 = vmatprep.mubr.bf16.mxu0 0
    %6861 = vmatmul.mubr.bf16.gmra.mrb[0].mxu0 %v6705
    %v6862 = vpop.f32.mrb[0].mxu0
    %v6863 = vadd.f32 %v6731, %v6862
    %v6864 = vpop.f32.mrb[0].mxu0
    %v6865 = vpop.f32.mrb[0].mxu0
    %v6866 = vadd.f32 %v6731, %v6865
    %v6867 = vpop.f32.mrb[0].mxu0
    %6868 = vmatprep.mubr.bf16.mxu0 0
    %6869 = vmatmul.mubr.bf16.gmra.mrb[0].mxu0 %v6706
    %v6870 = vpop.f32.mrb[0].mxu0
    %v6871 = vadd.f32 %v6731, %v6870
    %v6872 = vpop.f32.mrb[0].mxu0
    %v6873 = vpop.f32.mrb[0].mxu0
    %v6874 = vadd.f32 %v6731, %v6873
    %v6875 = vpop.f32.mrb[0].mxu0
    %6876 = vmatprep.mubr.bf16.mxu0 0
    %6877 = vmatmul.mubr.bf16.gmra.mrb[0].mxu0 %v6707
    %v6878 = vpop.f32.mrb[0].mxu0
    %v6879 = vadd.f32 %v6731, %v6878
    %v6880 = vpop.f32.mrb[0].mxu0
    %v6881 = vpop.f32.mrb[0].mxu0
    %v6882 = vadd.f32 %v6731, %v6881
    %v6883 = vpop.f32.mrb[0].mxu0
    %6884 = vmatprep.mubr.bf16.mxu0 0
    %6885 = vmatmul.mubr.bf16.gmra.mrb[0].mxu0 %v6708
    %v6886 = vpop.f32.mrb[0].mxu0
    %v6887 = vadd.f32 %v6731, %v6886
    %v6888 = vpop.f32.mrb[0].mxu0
    %v6889 = vpop.f32.mrb[0].mxu0
    %v6890 = vadd.f32 %v6731, %v6889
    %v6891 = vpop.f32.mrb[0].mxu0
    %6892 = vmatprep.mubr.bf16.mxu0 0
    %6893 = vmatmul.mubr.bf16.gmra.mrb[0].mxu0 %v6709
    %v6894 = vpop.f32.mrb[0].mxu0
    %v6895 = vadd.f32 %v6731, %v6894
    %v6896 = vpop.f32.mrb[0].mxu0
    %v6897 = vpop.f32.mrb[0].mxu0
    %v6898 = vadd.f32 %v6731, %v6897
    %v6899 = vpop.f32.mrb[0].mxu0
    %6900 = vmatprep.mubr.bf16.mxu0 0
    %6901 = vmatmul.mubr.bf16.gmra.mrb[0].mxu0 %v6710
    %v6902 = vpop.f32.mrb[0].mxu0
    %v6903 = vadd.f32 %v6731, %v6902
    %v6904 = vpop.f32.mrb[0].mxu0
    %v6905 = vpop.f32.mrb[0].mxu0
    %v6906 = vadd.f32 %v6731, %v6905
    %v6907 = vpop.f32.mrb[0].mxu0
    %6908 = vmatprep.mubr.bf16.mxu0 0
    %6909 = vmatmul.mubr.bf16.gmra.mrb[0].mxu0 %v6711
    %v6910 = vpop.f32.mrb[0].mxu0
    %v6911 = vadd.f32 %v6731, %v6910
    %v6912 = vpop.f32.mrb[0].mxu0
    %v6913 = vpop.f32.mrb[0].mxu0
    %v6914 = vadd.f32 %v6731, %v6913
    %v6915 = vpop.f32.mrb[0].mxu0
    %6916 = vdwg.mxu0
    %v6917 = vmax.f32 %v6815, 0.0
    %v6918 = vmax.f32 %v6818, 0.0
    %v6919 = vmax.f32 %v6823, 0.0
    %v6920 = vmax.f32 %v6826, 0.0
    %v6921 = vmax.f32 %v6831, 0.0
    %v6922 = vmax.f32 %v6834, 0.0
    %v6923 = vmax.f32 %v6839, 0.0
    %v6924 = vmax.f32 %v6842, 0.0
    %v6925 = vmax.f32 %v6847, 0.0
    %v6926 = vmax.f32 %v6850, 0.0
    %v6927 = vmax.f32 %v6855, 0.0
    %v6928 = vmax.f32 %v6858, 0.0
    %v6929 = vmax.f32 %v6863, 0.0
    %v6930 = vmax.f32 %v6866, 0.0
    %v6931 = vmax.f32 %v6871, 0.0
    %v6932 = vmax.f32 %v6874, 0.0
    %v6933 = vmax.f32 %v6879, 0.0
    %v6934 = vmax.f32 %v6882, 0.0
    %v6935 = vmax.f32 %v6887, 0.0
    %v6936 = vmax.f32 %v6890, 0.0
    %v6937 = vmax.f32 %v6895, 0.0
    %v6938 = vmax.f32 %v6898, 0.0
    %v6939 = vmax.f32 %v6903, 0.0
    %v6940 = vmax.f32 %v6906, 0.0
    %v6941 = vmax.f32 %v6911, 0.0
    %v6942 = vmax.f32 %v6914, 0.0
    %v6943 = vpack.c.bf16 %v6918, %v6917
    %v6944 = vpack.c.bf16 %v6920, %v6919
    %v6945 = vpack.c.bf16 %v6922, %v6921
    %v6946 = vpack.c.bf16 %v6924, %v6923
    %v6947 = vpack.c.bf16 %v6926, %v6925
    %v6948 = vpack.c.bf16 %v6928, %v6927
    %v6949 = vpack.c.bf16 %v6930, %v6929
    %v6950 = vpack.c.bf16 %v6932, %v6931
    %v6951 = vpack.c.bf16 %v6934, %v6933
    %v6952 = vpack.c.bf16 %v6936, %v6935
    %v6953 = vpack.c.bf16 %v6938, %v6937
    %v6954 = vpack.c.bf16 %v6940, %v6939
    %v6955 = vpack.c.bf16 %v6942, %v6941
    %v6956 = vld [vmem:[%s17] sm:$0xf]
    %v6957 = vld [vmem:[%s17 + $0x4] sm:$0xf]
    %v6958 = vld [vmem:[%s17 + $0x8] sm:$0xf]
    %v6959 = vld [vmem:[%s17 + $0xc] sm:$0xf]
    %v6960 = vld [vmem:[%s17 + $0x10] sm:$0xf]
    %v6961 = vld [vmem:[%s17 + $0x14] sm:$0xf]
    %v6962 = vld [vmem:[%s17 + $0x18] sm:$0xf]
    %v6963 = vld [vmem:[%s17 + $0x1c] sm:$0xf]
    %v6964 = vlaneseq
    %v6965 = vshrl.u32 %v6964, 7
    %v6966 = vsub.s32 2, %v6965
    %v6967 = vrot.slane %v99, %v6966
    %v6976 = vunpack.c.l.b16 %v6956
    %v6977 = vunpack.c.l.b16 %v6957
    %v6978 = vunpack.c.l.b16 %v6958
    %v6979 = vunpack.c.l.b16 %v6959
    %v6980 = vunpack.c.l.b16 %v6960
    %v6981 = vunpack.c.l.b16 %v6961
    %v6982 = vunpack.c.l.b16 %v6962
    %v6983 = vunpack.c.l.b16 %v6963
    %v6984 = vpack.c.b16 %v6977, %v6976
    %v6985 = vpack.c.b16 %v6979, %v6978
    %v6986 = vpack.c.b16 %v6981, %v6980
    %v6987 = vpack.c.b16 %v6983, %v6982
    %v6993 = vsel %vm1135, %v6943, 0
    %v6996 = vsel %vm1135, %v6944, 0
    %v6999 = vsel %vm1135, %v6945, 0
    %v7002 = vsel %vm1135, %v6946, 0
    %v7005 = vsel %vm1135, %v6947, 0
    %v7008 = vsel %vm1135, %v6948, 0
    %v7011 = vsel %vm1135, %v6949, 0
    %v7014 = vsel %vm1135, %v6950, 0
    %v7017 = vsel %vm1135, %v6951, 0
    %v7020 = vsel %vm1135, %v6952, 0
    %v7023 = vsel %vm1135, %v6953, 0
    %v7026 = vsel %vm1135, %v6954, 0
    %v7029 = vsel %vm1135, %v6955, 0
    %7031 = vmatprep.subr.bf16.mxu0 0
    %7032 = vmatpush1.bf16.msra.mxu0 %v6984
    %7033 = vmatprep.subr.bf16.mxu0 0
    %7034 = vmatpush1.bf16.msra.mxu0 %v6985
    %7035 = vmatprep.subr.bf16.mxu0 0
    %7036 = vmatpush1.bf16.msra.mxu0 %v6986
    %7037 = vmatprep.subr.bf16.mxu0 0
    %7038 = vmatpush1.bf16.msra.mxu0 %v6987
    %7039 = vmatprep.subr.bf16.mxu0 0
    %7040 = vmatpush1.bf16.msra.mxu0 0
    %7041 = vmatprep.subr.bf16.mxu0 0
    %7042 = vmatpush1.bf16.msra.mxu0 0
    %7043 = vmatprep.subr.bf16.mxu0 0
    %7044 = vmatpush1.bf16.msra.mxu0 0
    %7045 = vmatprep.subr.bf16.mxu0 0
    %7046 = vmatpush1.bf16.msra.mxu0 0
    %7047 = vmatprep.subr.bf16.mxu0 0
    %7048 = vmatpush1.bf16.msra.mxu0 0
    %7049 = vmatprep.subr.bf16.mxu0 0
    %7050 = vmatpush1.bf16.msra.mxu0 0
    %7051 = vmatprep.subr.bf16.mxu0 0
    %7052 = vmatpush1.bf16.msra.mxu0 0
    %7053 = vmatprep.subr.bf16.mxu0 0
    %7054 = vmatpush1.bf16.msra.mxu0 0
    %7055 = vmatprep.subr.bf16.mxu0 0
    %7056 = vmatpush1.bf16.msra.mxu0 0
    %7057 = vmatprep.subr.bf16.mxu0 0
    %7058 = vmatpush1.bf16.msra.mxu0 0
    %7059 = vmatprep.subr.bf16.mxu0 0
    %7060 = vmatpush1.bf16.msra.mxu0 0
    %7061 = vmatprep.subr.bf16.mxu0 0
    %7062 = vmatpush1.bf16.msra.mxu0 0
    %7063 = vmatprep.mubr.bf16.mxu0 0
    %7064 = vmatmul.mubr.bf16.gmra.mrb[0].mxu0 %v6993
    %v7065 = vpop.f32.mrb[0].mxu0
    %v7066 = vadd.f32 %v6967, %v7065
    %v7067 = vpop.f32.mrb[0].mxu0
    %v7068 = vpop.f32.mrb[0].mxu0
    %v7069 = vadd.f32 %v6967, %v7068
    %v7070 = vpop.f32.mrb[0].mxu0
    %7071 = vmatprep.mubr.bf16.mxu0 0
    %7072 = vmatmul.mubr.bf16.gmra.mrb[0].mxu0 %v6996
    %v7073 = vpop.f32.mrb[0].mxu0
    %v7074 = vadd.f32 %v6967, %v7073
    %v7075 = vpop.f32.mrb[0].mxu0
    %v7076 = vpop.f32.mrb[0].mxu0
    %v7077 = vadd.f32 %v6967, %v7076
    %v7078 = vpop.f32.mrb[0].mxu0
    %7079 = vmatprep.mubr.bf16.mxu0 0
    %7080 = vmatmul.mubr.bf16.gmra.mrb[0].mxu0 %v6999
    %v7081 = vpop.f32.mrb[0].mxu0
    %v7082 = vadd.f32 %v6967, %v7081
    %v7083 = vpop.f32.mrb[0].mxu0
    %v7084 = vpop.f32.mrb[0].mxu0
    %v7085 = vadd.f32 %v6967, %v7084
    %v7086 = vpop.f32.mrb[0].mxu0
    %7087 = vmatprep.mubr.bf16.mxu0 0
    %7088 = vmatmul.mubr.bf16.gmra.mrb[0].mxu0 %v7002
    %v7089 = vpop.f32.mrb[0].mxu0
    %v7090 = vadd.f32 %v6967, %v7089
    %v7091 = vpop.f32.mrb[0].mxu0
    %v7092 = vpop.f32.mrb[0].mxu0
    %v7093 = vadd.f32 %v6967, %v7092
    %v7094 = vpop.f32.mrb[0].mxu0
    %7095 = vmatprep.mubr.bf16.mxu0 0
    %7096 = vmatmul.mubr.bf16.gmra.mrb[0].mxu0 %v7005
    %v7097 = vpop.f32.mrb[0].mxu0
    %v7098 = vadd.f32 %v6967, %v7097
    %v7099 = vpop.f32.mrb[0].mxu0
    %v7100 = vpop.f32.mrb[0].mxu0
    %v7101 = vadd.f32 %v6967, %v7100
    %v7102 = vpop.f32.mrb[0].mxu0
    %7103 = vmatprep.mubr.bf16.mxu0 0
    %7104 = vmatmul.mubr.bf16.gmra.mrb[0].mxu0 %v7008
    %v7105 = vpop.f32.mrb[0].mxu0
    %v7106 = vadd.f32 %v6967, %v7105
    %v7107 = vpop.f32.mrb[0].mxu0
    %v7108 = vpop.f32.mrb[0].mxu0
    %v7109 = vadd.f32 %v6967, %v7108
    %v7110 = vpop.f32.mrb[0].mxu0
    %7111 = vmatprep.mubr.bf16.mxu0 0
    %7112 = vmatmul.mubr.bf16.gmra.mrb[0].mxu0 %v7011
    %v7113 = vpop.f32.mrb[0].mxu0
    %v7114 = vadd.f32 %v6967, %v7113
    %v7115 = vpop.f32.mrb[0].mxu0
    %v7116 = vpop.f32.mrb[0].mxu0
    %v7117 = vadd.f32 %v6967, %v7116
    %v7118 = vpop.f32.mrb[0].mxu0
    %7119 = vmatprep.mubr.bf16.mxu0 0
    %7120 = vmatmul.mubr.bf16.gmra.mrb[0].mxu0 %v7014
    %v7121 = vpop.f32.mrb[0].mxu0
    %v7122 = vadd.f32 %v6967, %v7121
    %v7123 = vpop.f32.mrb[0].mxu0
    %v7124 = vpop.f32.mrb[0].mxu0
    %v7125 = vadd.f32 %v6967, %v7124
    %v7126 = vpop.f32.mrb[0].mxu0
    %7127 = vmatprep.mubr.bf16.mxu0 0
    %7128 = vmatmul.mubr.bf16.gmra.mrb[0].mxu0 %v7017
    %v7129 = vpop.f32.mrb[0].mxu0
    %v7130 = vadd.f32 %v6967, %v7129
    %v7131 = vpop.f32.mrb[0].mxu0
    %v7132 = vpop.f32.mrb[0].mxu0
    %v7133 = vadd.f32 %v6967, %v7132
    %v7134 = vpop.f32.mrb[0].mxu0
    %7135 = vmatprep.mubr.bf16.mxu0 0
    %7136 = vmatmul.mubr.bf16.gmra.mrb[0].mxu0 %v7020
    %v7137 = vpop.f32.mrb[0].mxu0
    %v7138 = vadd.f32 %v6967, %v7137
    %v7139 = vpop.f32.mrb[0].mxu0
    %v7140 = vpop.f32.mrb[0].mxu0
    %v7141 = vadd.f32 %v6967, %v7140
    %v7142 = vpop.f32.mrb[0].mxu0
    %7143 = vmatprep.mubr.bf16.mxu0 0
    %7144 = vmatmul.mubr.bf16.gmra.mrb[0].mxu0 %v7023
    %v7145 = vpop.f32.mrb[0].mxu0
    %v7146 = vadd.f32 %v6967, %v7145
    %v7147 = vpop.f32.mrb[0].mxu0
    %v7148 = vpop.f32.mrb[0].mxu0
    %v7149 = vadd.f32 %v6967, %v7148
    %v7150 = vpop.f32.mrb[0].mxu0
    %7151 = vmatprep.mubr.bf16.mxu0 0
    %7152 = vmatmul.mubr.bf16.gmra.mrb[0].mxu0 %v7026
    %v7153 = vpop.f32.mrb[0].mxu0
    %v7154 = vadd.f32 %v6967, %v7153
    %v7155 = vpop.f32.mrb[0].mxu0
    %v7156 = vpop.f32.mrb[0].mxu0
    %v7157 = vadd.f32 %v6967, %v7156
    %v7158 = vpop.f32.mrb[0].mxu0
    %7159 = vmatprep.mubr.bf16.mxu0 0
    %7160 = vmatmul.mubr.bf16.gmra.mrb[0].mxu0 %v7029
    %v7161 = vpop.f32.mrb[0].mxu0
    %v7162 = vadd.f32 %v6967, %v7161
    %v7163 = vpop.f32.mrb[0].mxu0
    %v7164 = vpop.f32.mrb[0].mxu0
    %v7165 = vadd.f32 %v6967, %v7164
    %v7166 = vpop.f32.mrb[0].mxu0
    %7167 = vdwg.mxu0
    %v7168 = vmax.f32 %v7066, 0.0
    %v7169 = vmax.f32 %v7069, 0.0
    %v7170 = vmax.f32 %v7074, 0.0
    %v7171 = vmax.f32 %v7077, 0.0
    %v7172 = vmax.f32 %v7082, 0.0
    %v7173 = vmax.f32 %v7085, 0.0
    %v7174 = vmax.f32 %v7090, 0.0
    %v7175 = vmax.f32 %v7093, 0.0
    %v7176 = vmax.f32 %v7098, 0.0
    %v7177 = vmax.f32 %v7101, 0.0
    %v7178 = vmax.f32 %v7106, 0.0
    %v7179 = vmax.f32 %v7109, 0.0
    %v7180 = vmax.f32 %v7114, 0.0
    %v7181 = vmax.f32 %v7117, 0.0
    %v7182 = vmax.f32 %v7122, 0.0
    %v7183 = vmax.f32 %v7125, 0.0
    %v7184 = vmax.f32 %v7130, 0.0
    %v7185 = vmax.f32 %v7133, 0.0
    %v7186 = vmax.f32 %v7138, 0.0
    %v7187 = vmax.f32 %v7141, 0.0
    %v7188 = vmax.f32 %v7146, 0.0
    %v7189 = vmax.f32 %v7149, 0.0
    %v7190 = vmax.f32 %v7154, 0.0
    %v7191 = vmax.f32 %v7157, 0.0
    %v7192 = vmax.f32 %v7162, 0.0
    %v7193 = vmax.f32 %v7165, 0.0
    %v7194 = vlaneseq
    %v7195 = vshrl.u32 %v7194, 7
    %v7196 = vsub.s32 3, %v7195
    %v7197 = vrot.slane %v99, %v7196
    %v7198 = vmul.f32 %v7168, %v7197
    %v7199 = vmul.f32 %v7169, %v7197
    %v7200 = vmul.f32 %v7170, %v7197
    %v7201 = vmul.f32 %v7171, %v7197
    %v7202 = vmul.f32 %v7172, %v7197
    %v7203 = vmul.f32 %v7173, %v7197
    %v7204 = vmul.f32 %v7174, %v7197
    %v7205 = vmul.f32 %v7175, %v7197
    %v7206 = vmul.f32 %v7176, %v7197
    %v7207 = vmul.f32 %v7177, %v7197
    %v7208 = vmul.f32 %v7178, %v7197
    %v7209 = vmul.f32 %v7179, %v7197
    %v7210 = vmul.f32 %v7180, %v7197
    %v7211 = vmul.f32 %v7181, %v7197
    %v7212 = vmul.f32 %v7182, %v7197
    %v7213 = vmul.f32 %v7183, %v7197
    %v7214 = vmul.f32 %v7184, %v7197
    %v7215 = vmul.f32 %v7185, %v7197
    %v7216 = vmul.f32 %v7186, %v7197
    %v7217 = vmul.f32 %v7187, %v7197
    %v7218 = vmul.f32 %v7188, %v7197
    %v7219 = vmul.f32 %v7189, %v7197
    %v7220 = vmul.f32 %v7190, %v7197
    %v7221 = vmul.f32 %v7191, %v7197
    %v7222 = vmul.f32 %v7192, %v7197
    %v7223 = vmul.f32 %v7193, %v7197
    %v7224 = vsel %vm1135, %v7198, 0.0
    %7225 = vadd.xlane.f32.xlu0 %v7224
    %v7226 = vpop.xlane.xlu0 %7225
    %v7227 = vsel %vm1135, %v7199, 0.0
    %7228 = vadd.xlane.f32.xlu0 %v7227
    %v7229 = vpop.xlane.xlu0 %7228
    %v7230 = vsel %vm1135, %v7200, 0.0
    %7231 = vadd.xlane.f32.xlu0 %v7230
    %v7232 = vpop.xlane.xlu0 %7231
    %v7233 = vsel %vm1135, %v7201, 0.0
    %7234 = vadd.xlane.f32.xlu0 %v7233
    %v7235 = vpop.xlane.xlu0 %7234
    %v7236 = vsel %vm1135, %v7202, 0.0
    %7237 = vadd.xlane.f32.xlu0 %v7236
    %v7238 = vpop.xlane.xlu0 %7237
    %v7239 = vsel %vm1135, %v7203, 0.0
    %7240 = vadd.xlane.f32.xlu0 %v7239
    %v7241 = vpop.xlane.xlu0 %7240
    %v7242 = vsel %vm1135, %v7204, 0.0
    %7243 = vadd.xlane.f32.xlu0 %v7242
    %v7244 = vpop.xlane.xlu0 %7243
    %v7245 = vsel %vm1135, %v7205, 0.0
    %7246 = vadd.xlane.f32.xlu0 %v7245
    %v7247 = vpop.xlane.xlu0 %7246
    %v7248 = vsel %vm1135, %v7206, 0.0
    %7249 = vadd.xlane.f32.xlu0 %v7248
    %v7250 = vpop.xlane.xlu0 %7249
    %v7251 = vsel %vm1135, %v7207, 0.0
    %7252 = vadd.xlane.f32.xlu0 %v7251
    %v7253 = vpop.xlane.xlu0 %7252
    %v7254 = vsel %vm1135, %v7208, 0.0
    %7255 = vadd.xlane.f32.xlu0 %v7254
    %v7256 = vpop.xlane.xlu0 %7255
    %v7257 = vsel %vm1135, %v7209, 0.0
    %7258 = vadd.xlane.f32.xlu0 %v7257
    %v7259 = vpop.xlane.xlu0 %7258
    %v7260 = vsel %vm1135, %v7210, 0.0
    %7261 = vadd.xlane.f32.xlu0 %v7260
    %v7262 = vpop.xlane.xlu0 %7261
    %v7263 = vsel %vm1135, %v7211, 0.0
    %7264 = vadd.xlane.f32.xlu0 %v7263
    %v7265 = vpop.xlane.xlu0 %7264
    %v7266 = vsel %vm1135, %v7212, 0.0
    %7267 = vadd.xlane.f32.xlu0 %v7266
    %v7268 = vpop.xlane.xlu0 %7267
    %v7269 = vsel %vm1135, %v7213, 0.0
    %7270 = vadd.xlane.f32.xlu0 %v7269
    %v7271 = vpop.xlane.xlu0 %7270
    %v7272 = vsel %vm1135, %v7214, 0.0
    %7273 = vadd.xlane.f32.xlu0 %v7272
    %v7274 = vpop.xlane.xlu0 %7273
    %v7275 = vsel %vm1135, %v7215, 0.0
    %7276 = vadd.xlane.f32.xlu0 %v7275
    %v7277 = vpop.xlane.xlu0 %7276
    %v7278 = vsel %vm1135, %v7216, 0.0
    %7279 = vadd.xlane.f32.xlu0 %v7278
    %v7280 = vpop.xlane.xlu0 %7279
    %v7281 = vsel %vm1135, %v7217, 0.0
    %7282 = vadd.xlane.f32.xlu0 %v7281
    %v7283 = vpop.xlane.xlu0 %7282
    %v7284 = vsel %vm1135, %v7218, 0.0
    %7285 = vadd.xlane.f32.xlu0 %v7284
    %v7286 = vpop.xlane.xlu0 %7285
    %v7287 = vsel %vm1135, %v7219, 0.0
    %7288 = vadd.xlane.f32.xlu0 %v7287
    %v7289 = vpop.xlane.xlu0 %7288
    %v7290 = vsel %vm1135, %v7220, 0.0
    %7291 = vadd.xlane.f32.xlu0 %v7290
    %v7292 = vpop.xlane.xlu0 %7291
    %v7293 = vsel %vm1135, %v7221, 0.0
    %7294 = vadd.xlane.f32.xlu0 %v7293
    %v7295 = vpop.xlane.xlu0 %7294
    %v7296 = vsel %vm1135, %v7222, 0.0
    %7297 = vadd.xlane.f32.xlu0 %v7296
    %v7298 = vpop.xlane.xlu0 %7297
    %v7299 = vsel %vm1135, %v7223, 0.0
    %7300 = vadd.xlane.f32.xlu0 %v7299
    %v7301 = vpop.xlane.xlu0 %7300
    %v7302 = vlaneseq
    %v7303 = vshrl.u32 %v7302, 7
    %v7304 = vsub.s32 4, %v7303
    %v7305 = vrot.slane %v99, %v7304
    %v7306 = vadd.f32 %v7226, %v7305
    %v7307 = vadd.f32 %v7229, %v7305
    %v7308 = vadd.f32 %v7232, %v7305
    %v7309 = vadd.f32 %v7235, %v7305
    %v7310 = vadd.f32 %v7238, %v7305
    %v7311 = vadd.f32 %v7241, %v7305
    %v7312 = vadd.f32 %v7244, %v7305
    %v7313 = vadd.f32 %v7247, %v7305
    %v7314 = vadd.f32 %v7250, %v7305
    %v7315 = vadd.f32 %v7253, %v7305
    %v7316 = vadd.f32 %v7256, %v7305
    %v7317 = vadd.f32 %v7259, %v7305
    %v7318 = vadd.f32 %v7262, %v7305
    %v7319 = vadd.f32 %v7265, %v7305
    %v7320 = vadd.f32 %v7268, %v7305
    %v7321 = vadd.f32 %v7271, %v7305
    %v7322 = vadd.f32 %v7274, %v7305
    %v7323 = vadd.f32 %v7277, %v7305
    %v7324 = vadd.f32 %v7280, %v7305
    %v7325 = vadd.f32 %v7283, %v7305
    %v7326 = vadd.f32 %v7286, %v7305
    %v7327 = vadd.f32 %v7289, %v7305
    %v7328 = vadd.f32 %v7292, %v7305
    %v7329 = vadd.f32 %v7295, %v7305
    %v7330 = vadd.f32 %v7298, %v7305
    %v7331 = vadd.f32 %v7301, %v7305
    %v7332 = vxor.u32 %v7306, 2147483648
    %v7333 = vxor.u32 %v7307, 2147483648
    %v7334 = vxor.u32 %v7308, 2147483648
    %v7335 = vxor.u32 %v7309, 2147483648
    %v7336 = vxor.u32 %v7310, 2147483648
    %v7337 = vxor.u32 %v7311, 2147483648
    %v7338 = vxor.u32 %v7312, 2147483648
    %v7339 = vxor.u32 %v7313, 2147483648
    %v7340 = vxor.u32 %v7314, 2147483648
    %v7341 = vxor.u32 %v7315, 2147483648
    %v7342 = vxor.u32 %v7316, 2147483648
    %v7343 = vxor.u32 %v7317, 2147483648
    %v7344 = vxor.u32 %v7318, 2147483648
    %v7345 = vxor.u32 %v7319, 2147483648
    %v7346 = vxor.u32 %v7320, 2147483648
    %v7347 = vxor.u32 %v7321, 2147483648
    %v7348 = vxor.u32 %v7322, 2147483648
    %v7349 = vxor.u32 %v7323, 2147483648
    %v7350 = vxor.u32 %v7324, 2147483648
    %v7351 = vxor.u32 %v7325, 2147483648
    %v7352 = vxor.u32 %v7326, 2147483648
    %v7353 = vxor.u32 %v7327, 2147483648
    %v7354 = vxor.u32 %v7328, 2147483648
    %v7355 = vxor.u32 %v7329, 2147483648
    %v7356 = vxor.u32 %v7330, 2147483648
    %v7357 = vxor.u32 %v7331, 2147483648
    %v7358 = vmul.f32 %v7332, 1.442695
    %v7359 = vpow.pop %v7358
    %v7360 = vmul.f32 %v7333, 1.442695
    %v7361 = vpow.pop %v7360
    %v7362 = vmul.f32 %v7334, 1.442695
    %v7363 = vpow.pop %v7362
    %v7364 = vmul.f32 %v7335, 1.442695
    %v7365 = vpow.pop %v7364
    %v7366 = vmul.f32 %v7336, 1.442695
    %v7367 = vpow.pop %v7366
    %v7368 = vmul.f32 %v7337, 1.442695
    %v7369 = vpow.pop %v7368
    %v7370 = vmul.f32 %v7338, 1.442695
    %v7371 = vpow.pop %v7370
    %v7372 = vmul.f32 %v7339, 1.442695
    %v7373 = vpow.pop %v7372
    %v7374 = vmul.f32 %v7340, 1.442695
    %v7375 = vpow.pop %v7374
    %v7376 = vmul.f32 %v7341, 1.442695
    %v7377 = vpow.pop %v7376
    %v7378 = vmul.f32 %v7342, 1.442695
    %v7379 = vpow.pop %v7378
    %v7380 = vmul.f32 %v7343, 1.442695
    %v7381 = vpow.pop %v7380
    %v7382 = vmul.f32 %v7344, 1.442695
    %v7383 = vpow.pop %v7382
    %v7384 = vmul.f32 %v7345, 1.442695
    %v7385 = vpow.pop %v7384
    %v7386 = vmul.f32 %v7346, 1.442695
    %v7387 = vpow.pop %v7386
    %v7388 = vmul.f32 %v7347, 1.442695
    %v7389 = vpow.pop %v7388
    %v7390 = vmul.f32 %v7348, 1.442695
    %v7391 = vpow.pop %v7390
    %v7392 = vmul.f32 %v7349, 1.442695
    %v7393 = vpow.pop %v7392
    %v7394 = vmul.f32 %v7350, 1.442695
    %v7395 = vpow.pop %v7394
    %v7396 = vmul.f32 %v7351, 1.442695
    %v7397 = vpow.pop %v7396
    %v7398 = vmul.f32 %v7352, 1.442695
    %v7399 = vpow.pop %v7398
    %v7400 = vmul.f32 %v7353, 1.442695
    %v7401 = vpow.pop %v7400
    %v7402 = vmul.f32 %v7354, 1.442695
    %v7403 = vpow.pop %v7402
    %v7404 = vmul.f32 %v7355, 1.442695
    %v7405 = vpow.pop %v7404
    %v7406 = vmul.f32 %v7356, 1.442695
    %v7407 = vpow.pop %v7406
    %v7408 = vmul.f32 %v7357, 1.442695
    %v7409 = vpow.pop %v7408
    %v7410 = vadd.f32 %v7359, 1.0
    %v7411 = vadd.f32 %v7361, 1.0
    %v7412 = vadd.f32 %v7363, 1.0
    %v7413 = vadd.f32 %v7365, 1.0
    %v7414 = vadd.f32 %v7367, 1.0
    %v7415 = vadd.f32 %v7369, 1.0
    %v7416 = vadd.f32 %v7371, 1.0
    %v7417 = vadd.f32 %v7373, 1.0
    %v7418 = vadd.f32 %v7375, 1.0
    %v7419 = vadd.f32 %v7377, 1.0
    %v7420 = vadd.f32 %v7379, 1.0
    %v7421 = vadd.f32 %v7381, 1.0
    %v7422 = vadd.f32 %v7383, 1.0
    %v7423 = vadd.f32 %v7385, 1.0
    %v7424 = vadd.f32 %v7387, 1.0
    %v7425 = vadd.f32 %v7389, 1.0
    %v7426 = vadd.f32 %v7391, 1.0
    %v7427 = vadd.f32 %v7393, 1.0
    %v7428 = vadd.f32 %v7395, 1.0
    %v7429 = vadd.f32 %v7397, 1.0
    %v7430 = vadd.f32 %v7399, 1.0
    %v7431 = vadd.f32 %v7401, 1.0
    %v7432 = vadd.f32 %v7403, 1.0
    %v7433 = vadd.f32 %v7405, 1.0
    %v7434 = vadd.f32 %v7407, 1.0
    %v7435 = vadd.f32 %v7409, 1.0
    %v7436 = vrcp.pop %v7410
    %v7437 = vmul.f32 1.0, %v7436
    %v7438 = vrcp.pop %v7411
    %v7439 = vmul.f32 1.0, %v7438
    %v7440 = vrcp.pop %v7412
    %v7441 = vmul.f32 1.0, %v7440
    %v7442 = vrcp.pop %v7413
    %v7443 = vmul.f32 1.0, %v7442
    %v7444 = vrcp.pop %v7414
    %v7445 = vmul.f32 1.0, %v7444
    %v7446 = vrcp.pop %v7415
    %v7447 = vmul.f32 1.0, %v7446
    %v7448 = vrcp.pop %v7416
    %v7449 = vmul.f32 1.0, %v7448
    %v7450 = vrcp.pop %v7417
    %v7451 = vmul.f32 1.0, %v7450
    %v7452 = vrcp.pop %v7418
    %v7453 = vmul.f32 1.0, %v7452
    %v7454 = vrcp.pop %v7419
    %v7455 = vmul.f32 1.0, %v7454
    %v7456 = vrcp.pop %v7420
    %v7457 = vmul.f32 1.0, %v7456
    %v7458 = vrcp.pop %v7421
    %v7459 = vmul.f32 1.0, %v7458
    %v7460 = vrcp.pop %v7422
    %v7461 = vmul.f32 1.0, %v7460
    %v7462 = vrcp.pop %v7423
    %v7463 = vmul.f32 1.0, %v7462
    %v7464 = vrcp.pop %v7424
    %v7465 = vmul.f32 1.0, %v7464
    %v7466 = vrcp.pop %v7425
    %v7467 = vmul.f32 1.0, %v7466
    %v7468 = vrcp.pop %v7426
    %v7469 = vmul.f32 1.0, %v7468
    %v7470 = vrcp.pop %v7427
    %v7471 = vmul.f32 1.0, %v7470
    %v7472 = vrcp.pop %v7428
    %v7473 = vmul.f32 1.0, %v7472
    %v7474 = vrcp.pop %v7429
    %v7475 = vmul.f32 1.0, %v7474
    %v7476 = vrcp.pop %v7430
    %v7477 = vmul.f32 1.0, %v7476
    %v7478 = vrcp.pop %v7431
    %v7479 = vmul.f32 1.0, %v7478
    %v7480 = vrcp.pop %v7432
    %v7481 = vmul.f32 1.0, %v7480
    %v7482 = vrcp.pop %v7433
    %v7483 = vmul.f32 1.0, %v7482
    %v7484 = vrcp.pop %v7434
    %v7485 = vmul.f32 1.0, %v7484
    %v7486 = vrcp.pop %v7435
    %v7487 = vmul.f32 1.0, %v7486
    %7489 = vset.pattern.permute.xlu0 0
    %7490 = vperm.xlu0 %7489, %v7437
    %v7491 = vpop.permute.xlu0 %7490
    %7494 = vset.pattern.permute.xlu0 0
    %7495 = vperm.xlu0 %7494, %v7439
    %v7496 = vpop.permute.xlu0 %7495
    %7499 = vset.pattern.permute.xlu0 0
    %7500 = vperm.xlu0 %7499, %v7441
    %v7501 = vpop.permute.xlu0 %7500
    %7504 = vset.pattern.permute.xlu0 0
    %7505 = vperm.xlu0 %7504, %v7443
    %v7506 = vpop.permute.xlu0 %7505
    %7509 = vset.pattern.permute.xlu0 0
    %7510 = vperm.xlu0 %7509, %v7445
    %v7511 = vpop.permute.xlu0 %7510
    %7514 = vset.pattern.permute.xlu0 0
    %7515 = vperm.xlu0 %7514, %v7447
    %v7516 = vpop.permute.xlu0 %7515
    %7519 = vset.pattern.permute.xlu0 0
    %7520 = vperm.xlu0 %7519, %v7449
    %v7521 = vpop.permute.xlu0 %7520
    %7524 = vset.pattern.permute.xlu0 0
    %7525 = vperm.xlu0 %7524, %v7451
    %v7526 = vpop.permute.xlu0 %7525
    %7529 = vset.pattern.permute.xlu0 0
    %7530 = vperm.xlu0 %7529, %v7453
    %v7531 = vpop.permute.xlu0 %7530
    %7534 = vset.pattern.permute.xlu0 0
    %7535 = vperm.xlu0 %7534, %v7455
    %v7536 = vpop.permute.xlu0 %7535
    %7539 = vset.pattern.permute.xlu0 0
    %7540 = vperm.xlu0 %7539, %v7457
    %v7541 = vpop.permute.xlu0 %7540
    %7544 = vset.pattern.permute.xlu0 0
    %7545 = vperm.xlu0 %7544, %v7459
    %v7546 = vpop.permute.xlu0 %7545
    %7549 = vset.pattern.permute.xlu0 0
    %7550 = vperm.xlu0 %7549, %v7461
    %v7551 = vpop.permute.xlu0 %7550
    %7554 = vset.pattern.permute.xlu0 0
    %7555 = vperm.xlu0 %7554, %v7463
    %v7556 = vpop.permute.xlu0 %7555
    %7559 = vset.pattern.permute.xlu0 0
    %7560 = vperm.xlu0 %7559, %v7465
    %v7561 = vpop.permute.xlu0 %7560
    %7564 = vset.pattern.permute.xlu0 0
    %7565 = vperm.xlu0 %7564, %v7467
    %v7566 = vpop.permute.xlu0 %7565
    %7569 = vset.pattern.permute.xlu0 0
    %7570 = vperm.xlu0 %7569, %v7469
    %v7571 = vpop.permute.xlu0 %7570
    %7574 = vset.pattern.permute.xlu0 0
    %7575 = vperm.xlu0 %7574, %v7471
    %v7576 = vpop.permute.xlu0 %7575
    %7579 = vset.pattern.permute.xlu0 0
    %7580 = vperm.xlu0 %7579, %v7473
    %v7581 = vpop.permute.xlu0 %7580
    %7584 = vset.pattern.permute.xlu0 0
    %7585 = vperm.xlu0 %7584, %v7475
    %v7586 = vpop.permute.xlu0 %7585
    %7589 = vset.pattern.permute.xlu0 0
    %7590 = vperm.xlu0 %7589, %v7477
    %v7591 = vpop.permute.xlu0 %7590
    %7594 = vset.pattern.permute.xlu0 0
    %7595 = vperm.xlu0 %7594, %v7479
    %v7596 = vpop.permute.xlu0 %7595
    %7599 = vset.pattern.permute.xlu0 0
    %7600 = vperm.xlu0 %7599, %v7481
    %v7601 = vpop.permute.xlu0 %7600
    %7604 = vset.pattern.permute.xlu0 0
    %7605 = vperm.xlu0 %7604, %v7483
    %v7606 = vpop.permute.xlu0 %7605
    %7609 = vset.pattern.permute.xlu0 0
    %7610 = vperm.xlu0 %7609, %v7485
    %v7611 = vpop.permute.xlu0 %7610
    %7614 = vset.pattern.permute.xlu0 0
    %7615 = vperm.xlu0 %7614, %v7487
    %v7616 = vpop.permute.xlu0 %7615
    %v7618 = vmul.f32 %v6917, %v7491
    %v7619 = vmul.f32 %v6918, %v7496
    %v7620 = vmul.f32 %v6919, %v7501
    %v7621 = vmul.f32 %v6920, %v7506
    %v7622 = vmul.f32 %v6921, %v7511
    %v7623 = vmul.f32 %v6922, %v7516
    %v7624 = vmul.f32 %v6923, %v7521
    %v7625 = vmul.f32 %v6924, %v7526
    %v7626 = vmul.f32 %v6925, %v7531
    %v7627 = vmul.f32 %v6926, %v7536
    %v7628 = vmul.f32 %v6927, %v7541
    %v7629 = vmul.f32 %v6928, %v7546
    %v7630 = vmul.f32 %v6929, %v7551
    %v7631 = vmul.f32 %v6930, %v7556
    %v7632 = vmul.f32 %v6931, %v7561
    %v7633 = vmul.f32 %v6932, %v7566
    %v7634 = vmul.f32 %v6933, %v7571
    %v7635 = vmul.f32 %v6934, %v7576
    %v7636 = vmul.f32 %v6935, %v7581
    %v7637 = vmul.f32 %v6936, %v7586
    %v7638 = vmul.f32 %v6937, %v7591
    %v7639 = vmul.f32 %v6938, %v7596
    %v7640 = vmul.f32 %v6939, %v7601
    %v7641 = vmul.f32 %v6940, %v7606
    %v7642 = vmul.f32 %v6941, %v7611
    %v7643 = vmul.f32 %v6942, %v7616
    %v7644 = vadd.f32 %v7618, %v4592
    %v7645 = vadd.f32 %v7619, %v4595
    %v7646 = vadd.f32 %v7620, %v4600
    %v7647 = vadd.f32 %v7621, %v4603
    %v7648 = vadd.f32 %v7622, %v4608
    %v7649 = vadd.f32 %v7623, %v4611
    %v7650 = vadd.f32 %v7624, %v4616
    %v7651 = vadd.f32 %v7625, %v4619
    %v7652 = vadd.f32 %v7626, %v4624
    %v7653 = vadd.f32 %v7627, %v4627
    %v7654 = vadd.f32 %v7628, %v4632
    %v7655 = vadd.f32 %v7629, %v4635
    %v7656 = vadd.f32 %v7630, %v4640
    %v7657 = vadd.f32 %v7631, %v4643
    %v7658 = vadd.f32 %v7632, %v4648
    %v7659 = vadd.f32 %v7633, %v4651
    %v7660 = vadd.f32 %v7634, %v4656
    %v7661 = vadd.f32 %v7635, %v4659
    %v7662 = vadd.f32 %v7636, %v4664
    %v7663 = vadd.f32 %v7637, %v4667
    %v7664 = vadd.f32 %v7638, %v4672
    %v7665 = vadd.f32 %v7639, %v4675
    %v7666 = vadd.f32 %v7640, %v4680
    %v7667 = vadd.f32 %v7641, %v4683
    %v7668 = vadd.f32 %v7642, %v4688
    %v7669 = vadd.f32 %v7643, %v4691
    %7670 = vst.msk [vmem:[%s18] sm:$0xff] %vm1135, %v7644
    %7671 = vst.msk [vmem:[%s18 + $0x8] sm:$0xff] %vm1135, %v7645
    %7672 = vst.msk [vmem:[%s18 + $0x10] sm:$0xff] %vm1135, %v7646
    %7673 = vst.msk [vmem:[%s18 + $0x18] sm:$0xff] %vm1135, %v7647
    %7674 = vst.msk [vmem:[%s18 + $0x20] sm:$0xff] %vm1135, %v7648
    %7675 = vst.msk [vmem:[%s18 + $0x28] sm:$0xff] %vm1135, %v7649
    %7676 = vst.msk [vmem:[%s18 + $0x30] sm:$0xff] %vm1135, %v7650
    %7677 = vst.msk [vmem:[%s18 + $0x38] sm:$0xff] %vm1135, %v7651
    %7678 = vst.msk [vmem:[%s18 + $0x40] sm:$0xff] %vm1135, %v7652
    %7679 = vst.msk [vmem:[%s18 + $0x48] sm:$0xff] %vm1135, %v7653
    %7680 = vst.msk [vmem:[%s18 + $0x50] sm:$0xff] %vm1135, %v7654
    %7681 = vst.msk [vmem:[%s18 + $0x58] sm:$0xff] %vm1135, %v7655
    %7682 = vst.msk [vmem:[%s18 + $0x60] sm:$0xff] %vm1135, %v7656
    %7683 = vst.msk [vmem:[%s18 + $0x68] sm:$0xff] %vm1135, %v7657
    %7684 = vst.msk [vmem:[%s18 + $0x70] sm:$0xff] %vm1135, %v7658
    %7685 = vst.msk [vmem:[%s18 + $0x78] sm:$0xff] %vm1135, %v7659
    %7686 = vst.msk [vmem:[%s18 + $0x80] sm:$0xff] %vm1135, %v7660
    %7687 = vst.msk [vmem:[%s18 + $0x88] sm:$0xff] %vm1135, %v7661
    %7688 = vst.msk [vmem:[%s18 + $0x90] sm:$0xff] %vm1135, %v7662
    %7689 = vst.msk [vmem:[%s18 + $0x98] sm:$0xff] %vm1135, %v7663
    %7690 = vst.msk [vmem:[%s18 + $0xa0] sm:$0xff] %vm1135, %v7664
    %7691 = vst.msk [vmem:[%s18 + $0xa8] sm:$0xff] %vm1135, %v7665
    %7692 = vst.msk [vmem:[%s18 + $0xb0] sm:$0xff] %vm1135, %v7666
    %7693 = vst.msk [vmem:[%s18 + $0xb8] sm:$0xff] %vm1135, %v7667
    %7694 = vst.msk [vmem:[%s18 + $0xc0] sm:$0xff] %vm1135, %v7668
    %7695 = vst.msk [vmem:[%s18 + $0xc8] sm:$0xff] %vm1135, %v7669
    // Predicated region
    $region78: #{_lambda_.1} parent=1 // pred_check
      _
    $region79: #{_lambda_.1} parent=1 // pred_check_branch
      %7697 = sbr.rel (0) target = $region81
    $region80: #{_lambda_.1} parent=1 // pred_region
      _
    $region81: #{_lambda_.1} parent=1 // pred_fallthru
      _
    // Predicated region
    $region82: #{_lambda_.1} parent=1 // pred_check
      _
    $region83: #{_lambda_.1} parent=1 // pred_check_branch
      %7699 = sbr.rel (0) target = $region85
    $region84: #{_lambda_.1} parent=1 // pred_region
      _
    $region85: #{_lambda_.1} parent=1 // pred_fallthru
      _
    %7700 = vsyncpa [#allocation3], 1

</llo_original>
